<compile_context>
chip_gen: v5e
topology: v5e:2x2
jax: 0.10.0
libtpu: 0.0.40
codegen_flags: <defaults>
</compile_context>

<pallas_src>
import functools

import numpy as np

import jax
import jax.numpy as jnp
from jax import lax
from jax.experimental import pallas as pl
from jax.experimental.pallas import tpu as pltpu


def _round8(n):
    return ((n + 7) // 8) * 8


# ----------------------------------------------------------------------------------
# Fused kernel: all Conv2dBlocks + AdaptiveAvgPool2d(1) + 1x1 conv in one pallas_call.
# ----------------------------------------------------------------------------------
def _build_fused_kernel(layer_meta, blk_n, hpad_last, k_last):
    """layer_meta: per-layer static info dicts {'kind','kh','q','rows_in'}."""

    def kernel(x_ref, *refs):
        o_ref = refs[-1]
        w = refs[:-1]
        idx = 0
        x = x_ref[...]                                  # (BLK_N*Hpad0, Wp0*C0) f32
        y = None
        for lm in layer_meta:
            kh, q, rows_in = lm["kh"], lm["q"], lm["rows_in"]
            if lm["kind"] == "roll":
                # Stride-1 layer: row gather via XLU sublane roll (no S matmul).
                t_ref, mask_ref, b_ref = w[idx], w[idx + 1], w[idx + 2]
                idx += 3
                acc = b_ref[...]                        # f32 (R, K_out) bias plane
                for dh in range(kh):                    # static unroll
                    shift = (q - dh) % rows_in
                    rolled = x if shift == 0 else pltpu.roll(x, shift=shift, axis=0)
                    acc = acc + jnp.dot(rolled.astype(jnp.bfloat16), t_ref[dh],
                                        preferred_element_type=jnp.float32)
                acc = acc * mask_ref[...]               # zero pad / wrapped rows
            else:
                # Strided layer: block-diagonal 0/1 row-select matmul (batched over
                # the whole BLK_N sample block), then the fat Toeplitz matmul.
                t_ref, s_ref, b_ref = w[idx], w[idx + 1], w[idx + 2]
                idx += 3
                xb = x if x.dtype == jnp.bfloat16 else x.astype(jnp.bfloat16)
                acc = b_ref[...]
                for dh in range(kh):                    # static unroll
                    rows = jnp.dot(s_ref[dh], xb,
                                   preferred_element_type=jnp.float32
                                   ).astype(jnp.bfloat16)
                    acc = acc + jnp.dot(rows, t_ref[dh],
                                        preferred_element_type=jnp.float32)
            y = jnp.maximum(acc, 0.0)                   # f32 ReLU (norm='none')
            x = y.astype(jnp.bfloat16)                  # bf16 operand for next layer

        # Head: AdaptiveAvgPool2d(1) + 1x1 conv folded into (row-sum) @ P + b.
        p_ref, bh_ref = w[idx], w[idx + 1]
        pooled = jnp.sum(y.reshape(blk_n, hpad_last, k_last), axis=1)   # f32 (BLK_N, K)
        out = jnp.dot(pooled.astype(jnp.bfloat16), p_ref[...],
                      preferred_element_type=jnp.float32) + bh_ref[...]
        o_ref[0] = out                                  # lane-dense (BLK_N, 128) store

    return kernel


# ----------------------------------------------------------------------------------
# pallas_call wrapper (one call for the whole network)
# ----------------------------------------------------------------------------------
def style_encoder_forward(x_nchw, weights, *, meta):
    blk_n = meta["blk_n"]
    p0, hpad0, wp0, c0 = meta["p0"], meta["hpad0"], meta["wp0"], meta["c0"]
    H = meta["h"]
    out_lanes, style_dim = meta["out_lanes"], meta["style_dim"]
    N = x_nchw.shape[0]
    assert N % blk_n == 0, (N, blk_n)
    num_blocks = N // blk_n

    # NCHW -> NHWC, zero pad (layer-0 conv pad + round rows to a sublane multiple),
    # pack lane-dense as (rows, Wp*C) and stack the batch along rows.
    xt = jnp.transpose(x_nchw, (0, 2, 3, 1)).astype(jnp.float32)
    xt = jnp.pad(xt, ((0, 0), (p0, hpad0 - H - p0), (p0, p0), (0, 0)))
    x_packed = xt.reshape(N * hpad0, wp0 * c0)

    kernel = _build_fused_kernel(meta["layer_meta"], blk_n,
                                 meta["hpad_last"], meta["k_last"])

    in_specs = [pl.BlockSpec((blk_n * hpad0, wp0 * c0), lambda g: (g, 0))]
    for arr in weights:   # constant-index full-array blocks (DMA'd once)
        in_specs.append(pl.BlockSpec(arr.shape, lambda g, _nd=arr.ndim: (0,) * _nd))

    out = pl.pallas_call(
        kernel,
        out_shape=jax.ShapeDtypeStruct((num_blocks, blk_n, out_lanes), jnp.float32),
        grid_spec=pltpu.PrefetchScalarGridSpec(
            num_scalar_prefetch=0,
            grid=(num_blocks,),
            in_specs=in_specs,
            out_specs=pl.BlockSpec((1, blk_n, out_lanes), lambda g: (g, 0, 0)),
        ),
        compiler_params=pltpu.CompilerParams(dimension_semantics=("parallel",)),
    )(x_packed, *weights)

    return out.reshape(N, out_lanes)[:, :style_dim].reshape(N, style_dim, 1, 1)


# ----------------------------------------------------------------------------------
# Host-side one-time parameter folding (plain numpy)
# ----------------------------------------------------------------------------------
def make_layer_cfgs(n_downsample, input_dim, dim):
    """Mirror StyleEncoder.__init__: (Cin, Cout, kernel, stride, pad) per Conv2dBlock."""
    cfgs = [(input_dim, dim, 7, 1, 3)]
    d = dim
    for _ in range(2):
        cfgs.append((d, 2 * d, 4, 2, 1))
        d *= 2
    for _ in range(n_downsample - 2):
        cfgs.append((d, d, 4, 2, 1))
    return cfgs, d


def fold_params(cfgs, conv_params, head_params, H, W, style_dim, blk_n, *, use_roll=True):
    weights, layer_meta = [], []
    h_data, w_data = H, W
    hpad_in = _round8(H + 2 * cfgs[0][4])
    q = 0
    last = None
    for li, ((ci, co, k, s, p), (wt, bias)) in enumerate(zip(cfgs, conv_params)):
        q = cfgs[li + 1][4] if li + 1 < len(cfgs) else 0   # NEXT layer's padding
        wt = np.asarray(wt, np.float32)
        bias = np.asarray(bias, np.float32)
        wp_in = w_data + 2 * p
        ho = (h_data + 2 * p - k) // s + 1
        wo = (w_data + 2 * p - k) // s + 1
        hop, wop = ho + 2 * q, wo + 2 * q
        hpad_out = _round8(hop)
        k_in, k_out = wp_in * ci, wop * co
        r_in, r_out = blk_n * hpad_in, blk_n * hpad_out

        # Toeplitz-folded weights over the packed width axis; next layer's zero
        # padding (q) is fused into the output columns.
        T = np.zeros((k, k_in, k_out), np.float32)
        for dh in range(k):
            for j in range(wo):
                for dw in range(k):
                    wcol = j * s + dw
                    T[dh, wcol * ci:(wcol + 1) * ci,
                         (j + q) * co:(j + q + 1) * co] = wt[:, :, dh, dw].T

        # Bias plane: zero in every padding row/column so padding survives bias+ReLU.
        Bs = np.zeros((hpad_out, k_out), np.float32)
        Bs[q:q + ho, q * co:(q + wo) * co] = np.tile(bias, wo)
        B = np.tile(Bs, (blk_n, 1))

        if use_roll and s == 1 and hpad_in == hpad_out:
            # Row gather done with sublane rolls (XLU) -> no S matmul; a row mask
            # zeroes the padding rows (and any wrapped/cross-sample garbage).
            mask = np.zeros((r_out, 1), np.float32)
            for n in range(blk_n):
                mask[n * hpad_out + q:n * hpad_out + q + ho, 0] = 1.0
            weights += [jnp.asarray(T, jnp.bfloat16),
                        jnp.asarray(mask, jnp.float32),
                        jnp.asarray(B, jnp.float32)]
            layer_meta.append(dict(kind="roll", kh=k, q=q, rows_in=r_in))
        else:
            # Block-diagonal 0/1 row-select matrices (exact in bf16), batched over
            # the whole BLK_N sample block.
            S = np.zeros((k, r_out, r_in), np.float32)
            for dh in range(k):
                for n in range(blk_n):
                    for i in range(ho):
                        S[dh, n * hpad_out + q + i, n * hpad_in + i * s + dh] = 1.0
            weights += [jnp.asarray(T, jnp.bfloat16),
                        jnp.asarray(S, jnp.bfloat16),
                        jnp.asarray(B, jnp.float32)]
            layer_meta.append(dict(kind="select", kh=k, q=q, rows_in=r_in))

        h_data, w_data = ho, wo
        hpad_in = hpad_out
        last = dict(ho=ho, wo=wo, hpad=hpad_out, k_out=k_out)

    assert q == 0  # head folding assumes the last conv block emits an unpadded plane

    # Head: AdaptiveAvgPool2d(1) + 1x1 conv folded into (row-sum) @ P + b; output is
    # lane-padded to a multiple of 128 so the store is unmasked / lane-dense.
    w_fc, b_fc = head_params
    wf = np.asarray(w_fc, np.float32)[:, :, 0, 0]          # (style_dim, C_last)
    sd = wf.shape[0]
    out_lanes = ((sd + 127) // 128) * 128
    P = np.zeros((last["k_out"], out_lanes), np.float32)
    P[:, :sd] = np.tile(wf.T / float(last["ho"] * last["wo"]), (last["wo"], 1))
    bh = np.zeros((1, out_lanes), np.float32)
    bh[0, :sd] = np.asarray(b_fc, np.float32)
    weights += [jnp.asarray(P, jnp.bfloat16), jnp.asarray(bh, jnp.float32)]

    meta = dict(
        blk_n=blk_n,
        p0=cfgs[0][4], c0=cfgs[0][0], h=H, w=W,
        hpad0=_round8(H + 2 * cfgs[0][4]), wp0=W + 2 * cfgs[0][4],
        layer_meta=tuple(layer_meta),
        hpad_last=last["hpad"], k_last=last["k_out"],
        style_dim=sd, out_lanes=out_lanes,
    )
    return tuple(weights), meta


# ----------------------------------------------------------------------------------
# Pure-JAX reference (sanity check only)
# ----------------------------------------------------------------------------------
def _ref_forward(x_nchw, cfgs, conv_params, head_params):
    y = x_nchw.astype(jnp.float32)
    for (ci, co, k, s, p), (w, b) in zip(cfgs, conv_params):
        y = lax.conv_general_dilated(
            y, w, (s, s), ((p, p), (p, p)),
            dimension_numbers=("NCHW", "OIHW", "NCHW"),
            precision=lax.Precision.HIGHEST)
        y = jnp.maximum(y + b.reshape(1, -1, 1, 1), 0.0)
    w_fc, b_fc = head_params
    pooled = jnp.mean(y, axis=(2, 3))                                   # (N, C)
    out = pooled @ w_fc[:, :, 0, 0].T + b_fc.reshape(1, -1)             # (N, style_dim)
    return out.reshape(out.shape[0], -1, 1, 1)


def init_params(key, cfgs, last_dim, style_dim):
    keys = jax.random.split(key, 2 * len(cfgs) + 2)
    conv_params = []
    for li, (ci, co, k, s, p) in enumerate(cfgs):
        fan_in = ci * k * k
        w = jax.random.normal(keys[2 * li], (co, ci, k, k), jnp.float32) * (2.0 / fan_in) ** 0.5
        b = 0.05 * jax.random.normal(keys[2 * li + 1], (co,), jnp.float32)
        conv_params.append((w, b))
    w_fc = jax.random.normal(keys[-2], (style_dim, last_dim, 1, 1), jnp.float32) * (1.0 / last_dim) ** 0.5
    b_fc = 0.05 * jax.random.normal(keys[-1], (style_dim,), jnp.float32)
    return conv_params, (w_fc, b_fc)


# ----------------------------------------------------------------------------------
if __name__ == "__main__":
    # StyleEncoder(n_downsample=2, input_dim=3, dim=8, style_dim=8,
    #              norm='none', activ='relu', pad_type='zero') on 16x16 input, batch 8.
    N, input_dim, H, W = 8, 3, 16, 16
    n_downsample, dim, style_dim = 2, 8, 8
    BLK_N = 4         # samples per grid step -> grid=(2,): even, so both v7x TCs get work

    cfgs, last_dim = make_layer_cfgs(n_downsample, input_dim, dim)

    key = jax.random.PRNGKey(0)
    kx, kp = jax.random.split(key)
    x = jax.random.normal(kx, (N, input_dim, H, W), dtype=jnp.float32)
    conv_params, head_params = init_params(kp, cfgs, last_dim, style_dim)

    def _run(use_roll):
        weights, meta = fold_params(cfgs, conv_params, head_params, H, W,
                                    style_dim, BLK_N, use_roll=use_roll)
        fwd = jax.jit(functools.partial(style_encoder_forward, meta=meta))
        return jax.block_until_ready(fwd(x, weights))

    try:
        out = _run(use_roll=True)      # XLU sublane-roll row gather for the stride-1 layer
    except Exception:                  # toolchain without sublane roll -> S-select matmul
        out = _run(use_roll=False)

    ref = jax.block_until_ready(_ref_forward(x, cfgs, conv_params, head_params))
    assert out.shape == (N, style_dim, 1, 1), out.shape
    # bf16 MXU operands with f32 accumulation -> bf16-appropriate tolerance.
    assert jnp.allclose(out, ref, atol=3e-2, rtol=3e-2), float(jnp.max(jnp.abs(out - ref)))

    print("KERNEL_OK")
</pallas_src>

<mosaic_0001>
module attributes {stable_mosaic.version = 11 : i64} {
  func.func @kernel(%arg0: i32, %arg1: memref<96x66xf32, #tpu.memory_space<vmem>>, %arg2: memref<7x66x144xbf16, #tpu.memory_space<vmem>>, %arg3: memref<96x1xf32, #tpu.memory_space<vmem>>, %arg4: memref<96x144xf32, #tpu.memory_space<vmem>>, %arg5: memref<4x144x160xbf16, #tpu.memory_space<vmem>>, %arg6: memref<4x64x96xbf16, #tpu.memory_space<vmem>>, %arg7: memref<64x160xf32, #tpu.memory_space<vmem>>, %arg8: memref<4x160x128xbf16, #tpu.memory_space<vmem>>, %arg9: memref<4x32x64xbf16, #tpu.memory_space<vmem>>, %arg10: memref<32x128xf32, #tpu.memory_space<vmem>>, %arg11: memref<128x128xbf16, #tpu.memory_space<vmem>>, %arg12: memref<1x128xf32, #tpu.memory_space<vmem>>, %arg13: memref<1x4x128xf32, #tpu.memory_space<vmem>>) attributes {dimension_semantics = [#tpu.dimension_semantics<parallel>], iteration_bounds = array<i64: 2>, scalar_prefetch = 0 : i64, scratch_operands = 0 : i64, tpu.core_type = #tpu.core_type<tc>, window_params = [{transform_indices = @transform_0, window_bounds = array<i64: 96, 66>}, {pipeline_mode = #tpu.pipeline_mode<synchronous>, transform_indices = @transform_1, window_bounds = array<i64: 7, 66, 144>}, {pipeline_mode = #tpu.pipeline_mode<synchronous>, transform_indices = @transform_2, window_bounds = array<i64: 96, 1>}, {pipeline_mode = #tpu.pipeline_mode<synchronous>, transform_indices = @transform_3, window_bounds = array<i64: 96, 144>}, {pipeline_mode = #tpu.pipeline_mode<synchronous>, transform_indices = @transform_4, window_bounds = array<i64: 4, 144, 160>}, {pipeline_mode = #tpu.pipeline_mode<synchronous>, transform_indices = @transform_5, window_bounds = array<i64: 4, 64, 96>}, {pipeline_mode = #tpu.pipeline_mode<synchronous>, transform_indices = @transform_6, window_bounds = array<i64: 64, 160>}, {pipeline_mode = #tpu.pipeline_mode<synchronous>, transform_indices = @transform_7, window_bounds = array<i64: 4, 160, 128>}, {pipeline_mode = #tpu.pipeline_mode<synchronous>, transform_indices = @transform_8, window_bounds = array<i64: 4, 32, 64>}, {pipeline_mode = #tpu.pipeline_mode<synchronous>, transform_indices = @transform_9, window_bounds = array<i64: 32, 128>}, {pipeline_mode = #tpu.pipeline_mode<synchronous>, transform_indices = @transform_10, window_bounds = array<i64: 128, 128>}, {pipeline_mode = #tpu.pipeline_mode<synchronous>, transform_indices = @transform_11, window_bounds = array<i64: 1, 128>}, {transform_indices = @transform_12, window_bounds = array<i64: 1, 4, 128>}]} {
    %c0 = arith.constant 0 : index
    %c0_0 = arith.constant 0 : index
    %0 = vector.load %arg1[%c0, %c0_0] : memref<96x66xf32, #tpu.memory_space<vmem>>, vector<96x66xf32>
    %c0_1 = arith.constant 0 : index
    %c0_2 = arith.constant 0 : index
    %1 = vector.load %arg4[%c0_1, %c0_2] : memref<96x144xf32, #tpu.memory_space<vmem>>, vector<96x144xf32>
    %c1_i32 = arith.constant 1 : i32
    %2 = tpu.dynamic_rotate %0 by %c1_i32 dim 0 : vector<96x66xf32>, i32 -> vector<96x66xf32>
    %3 = arith.truncf %2 : vector<96x66xf32> to vector<96x66xbf16>
    %c0_3 = arith.constant 0 : index
    %c0_4 = arith.constant 0 : index
    %c0_5 = arith.constant 0 : index
    %4 = vector.load %arg2[%c0_3, %c0_4, %c0_5] : memref<7x66x144xbf16, #tpu.memory_space<vmem>>, vector<1x66x144xbf16>
    %5 = vector.shape_cast %4 : vector<1x66x144xbf16> to vector<66x144xbf16>
    %cst = arith.constant dense<0.000000e+00> : vector<96x144xf32>
    %6 = tpu.matmul %3, %5, %cst {dimension_numbers = #tpu.dot_dimension_numbers<[1], [0], [0], [1], [0, 0, 1, 1], [], []>} : vector<96x66xbf16>, vector<66x144xbf16>, vector<96x144xf32> -> vector<96x144xf32>
    %7 = arith.addf %1, %6 : vector<96x144xf32>
    %8 = arith.truncf %0 : vector<96x66xf32> to vector<96x66xbf16>
    %c1 = arith.constant 1 : index
    %c0_6 = arith.constant 0 : index
    %c0_7 = arith.constant 0 : index
    %9 = vector.load %arg2[%c1, %c0_6, %c0_7] : memref<7x66x144xbf16, #tpu.memory_space<vmem>>, vector<1x66x144xbf16>
    %10 = vector.shape_cast %9 : vector<1x66x144xbf16> to vector<66x144xbf16>
    %cst_8 = arith.constant dense<0.000000e+00> : vector<96x144xf32>
    %11 = tpu.matmul %8, %10, %cst_8 {dimension_numbers = #tpu.dot_dimension_numbers<[1], [0], [0], [1], [0, 0, 1, 1], [], []>} : vector<96x66xbf16>, vector<66x144xbf16>, vector<96x144xf32> -> vector<96x144xf32>
    %12 = arith.addf %7, %11 : vector<96x144xf32>
    %c95_i32 = arith.constant 95 : i32
    %13 = tpu.dynamic_rotate %0 by %c95_i32 dim 0 : vector<96x66xf32>, i32 -> vector<96x66xf32>
    %14 = arith.truncf %13 : vector<96x66xf32> to vector<96x66xbf16>
    %c2 = arith.constant 2 : index
    %c0_9 = arith.constant 0 : index
    %c0_10 = arith.constant 0 : index
    %15 = vector.load %arg2[%c2, %c0_9, %c0_10] : memref<7x66x144xbf16, #tpu.memory_space<vmem>>, vector<1x66x144xbf16>
    %16 = vector.shape_cast %15 : vector<1x66x144xbf16> to vector<66x144xbf16>
    %cst_11 = arith.constant dense<0.000000e+00> : vector<96x144xf32>
    %17 = tpu.matmul %14, %16, %cst_11 {dimension_numbers = #tpu.dot_dimension_numbers<[1], [0], [0], [1], [0, 0, 1, 1], [], []>} : vector<96x66xbf16>, vector<66x144xbf16>, vector<96x144xf32> -> vector<96x144xf32>
    %18 = arith.addf %12, %17 : vector<96x144xf32>
    %c94_i32 = arith.constant 94 : i32
    %19 = tpu.dynamic_rotate %0 by %c94_i32 dim 0 : vector<96x66xf32>, i32 -> vector<96x66xf32>
    %20 = arith.truncf %19 : vector<96x66xf32> to vector<96x66xbf16>
    %c3 = arith.constant 3 : index
    %c0_12 = arith.constant 0 : index
    %c0_13 = arith.constant 0 : index
    %21 = vector.load %arg2[%c3, %c0_12, %c0_13] : memref<7x66x144xbf16, #tpu.memory_space<vmem>>, vector<1x66x144xbf16>
    %22 = vector.shape_cast %21 : vector<1x66x144xbf16> to vector<66x144xbf16>
    %cst_14 = arith.constant dense<0.000000e+00> : vector<96x144xf32>
    %23 = tpu.matmul %20, %22, %cst_14 {dimension_numbers = #tpu.dot_dimension_numbers<[1], [0], [0], [1], [0, 0, 1, 1], [], []>} : vector<96x66xbf16>, vector<66x144xbf16>, vector<96x144xf32> -> vector<96x144xf32>
    %24 = arith.addf %18, %23 : vector<96x144xf32>
    %c93_i32 = arith.constant 93 : i32
    %25 = tpu.dynamic_rotate %0 by %c93_i32 dim 0 : vector<96x66xf32>, i32 -> vector<96x66xf32>
    %26 = arith.truncf %25 : vector<96x66xf32> to vector<96x66xbf16>
    %c4 = arith.constant 4 : index
    %c0_15 = arith.constant 0 : index
    %c0_16 = arith.constant 0 : index
    %27 = vector.load %arg2[%c4, %c0_15, %c0_16] : memref<7x66x144xbf16, #tpu.memory_space<vmem>>, vector<1x66x144xbf16>
    %28 = vector.shape_cast %27 : vector<1x66x144xbf16> to vector<66x144xbf16>
    %cst_17 = arith.constant dense<0.000000e+00> : vector<96x144xf32>
    %29 = tpu.matmul %26, %28, %cst_17 {dimension_numbers = #tpu.dot_dimension_numbers<[1], [0], [0], [1], [0, 0, 1, 1], [], []>} : vector<96x66xbf16>, vector<66x144xbf16>, vector<96x144xf32> -> vector<96x144xf32>
    %30 = arith.addf %24, %29 : vector<96x144xf32>
    %c92_i32 = arith.constant 92 : i32
    %31 = tpu.dynamic_rotate %0 by %c92_i32 dim 0 : vector<96x66xf32>, i32 -> vector<96x66xf32>
    %32 = arith.truncf %31 : vector<96x66xf32> to vector<96x66xbf16>
    %c5 = arith.constant 5 : index
    %c0_18 = arith.constant 0 : index
    %c0_19 = arith.constant 0 : index
    %33 = vector.load %arg2[%c5, %c0_18, %c0_19] : memref<7x66x144xbf16, #tpu.memory_space<vmem>>, vector<1x66x144xbf16>
    %34 = vector.shape_cast %33 : vector<1x66x144xbf16> to vector<66x144xbf16>
    %cst_20 = arith.constant dense<0.000000e+00> : vector<96x144xf32>
    %35 = tpu.matmul %32, %34, %cst_20 {dimension_numbers = #tpu.dot_dimension_numbers<[1], [0], [0], [1], [0, 0, 1, 1], [], []>} : vector<96x66xbf16>, vector<66x144xbf16>, vector<96x144xf32> -> vector<96x144xf32>
    %36 = arith.addf %30, %35 : vector<96x144xf32>
    %c91_i32 = arith.constant 91 : i32
    %37 = tpu.dynamic_rotate %0 by %c91_i32 dim 0 : vector<96x66xf32>, i32 -> vector<96x66xf32>
    %38 = arith.truncf %37 : vector<96x66xf32> to vector<96x66xbf16>
    %c6 = arith.constant 6 : index
    %c0_21 = arith.constant 0 : index
    %c0_22 = arith.constant 0 : index
    %39 = vector.load %arg2[%c6, %c0_21, %c0_22] : memref<7x66x144xbf16, #tpu.memory_space<vmem>>, vector<1x66x144xbf16>
    %40 = vector.shape_cast %39 : vector<1x66x144xbf16> to vector<66x144xbf16>
    %cst_23 = arith.constant dense<0.000000e+00> : vector<96x144xf32>
    %41 = tpu.matmul %38, %40, %cst_23 {dimension_numbers = #tpu.dot_dimension_numbers<[1], [0], [0], [1], [0, 0, 1, 1], [], []>} : vector<96x66xbf16>, vector<66x144xbf16>, vector<96x144xf32> -> vector<96x144xf32>
    %42 = arith.addf %36, %41 : vector<96x144xf32>
    %c0_24 = arith.constant 0 : index
    %c0_25 = arith.constant 0 : index
    %43 = vector.load %arg3[%c0_24, %c0_25] : memref<96x1xf32, #tpu.memory_space<vmem>>, vector<96x1xf32>
    %44 = vector.broadcast %43 : vector<96x1xf32> to vector<96x144xf32>
    %45 = arith.mulf %42, %44 : vector<96x144xf32>
    %cst_26 = arith.constant 0.000000e+00 : f32
    %46 = vector.broadcast %cst_26 : f32 to vector<96x144xf32>
    %47 = arith.maximumf %45, %46 : vector<96x144xf32>
    %48 = arith.truncf %47 : vector<96x144xf32> to vector<96x144xbf16>
    %c0_27 = arith.constant 0 : index
    %c0_28 = arith.constant 0 : index
    %49 = vector.load %arg7[%c0_27, %c0_28] : memref<64x160xf32, #tpu.memory_space<vmem>>, vector<64x160xf32>
    %c0_29 = arith.constant 0 : index
    %c0_30 = arith.constant 0 : index
    %c0_31 = arith.constant 0 : index
    %50 = vector.load %arg6[%c0_29, %c0_30, %c0_31] : memref<4x64x96xbf16, #tpu.memory_space<vmem>>, vector<1x64x96xbf16>
    %51 = vector.shape_cast %50 : vector<1x64x96xbf16> to vector<64x96xbf16>
    %cst_32 = arith.constant dense<0.000000e+00> : vector<64x144xf32>
    %52 = tpu.matmul %51, %48, %cst_32 {dimension_numbers = #tpu.dot_dimension_numbers<[1], [0], [0], [1], [0, 0, 1, 1], [], []>} : vector<64x96xbf16>, vector<96x144xbf16>, vector<64x144xf32> -> vector<64x144xf32>
    %53 = arith.truncf %52 : vector<64x144xf32> to vector<64x144xbf16>
    %c0_33 = arith.constant 0 : index
    %c0_34 = arith.constant 0 : index
    %c0_35 = arith.constant 0 : index
    %54 = vector.load %arg5[%c0_33, %c0_34, %c0_35] : memref<4x144x160xbf16, #tpu.memory_space<vmem>>, vector<1x144x160xbf16>
    %55 = vector.shape_cast %54 : vector<1x144x160xbf16> to vector<144x160xbf16>
    %cst_36 = arith.constant dense<0.000000e+00> : vector<64x160xf32>
    %56 = tpu.matmul %53, %55, %cst_36 {dimension_numbers = #tpu.dot_dimension_numbers<[1], [0], [0], [1], [0, 0, 1, 1], [], []>} : vector<64x144xbf16>, vector<144x160xbf16>, vector<64x160xf32> -> vector<64x160xf32>
    %57 = arith.addf %49, %56 : vector<64x160xf32>
    %c1_37 = arith.constant 1 : index
    %c0_38 = arith.constant 0 : index
    %c0_39 = arith.constant 0 : index
    %58 = vector.load %arg6[%c1_37, %c0_38, %c0_39] : memref<4x64x96xbf16, #tpu.memory_space<vmem>>, vector<1x64x96xbf16>
    %59 = vector.shape_cast %58 : vector<1x64x96xbf16> to vector<64x96xbf16>
    %cst_40 = arith.constant dense<0.000000e+00> : vector<64x144xf32>
    %60 = tpu.matmul %59, %48, %cst_40 {dimension_numbers = #tpu.dot_dimension_numbers<[1], [0], [0], [1], [0, 0, 1, 1], [], []>} : vector<64x96xbf16>, vector<96x144xbf16>, vector<64x144xf32> -> vector<64x144xf32>
    %61 = arith.truncf %60 : vector<64x144xf32> to vector<64x144xbf16>
    %c1_41 = arith.constant 1 : index
    %c0_42 = arith.constant 0 : index
    %c0_43 = arith.constant 0 : index
    %62 = vector.load %arg5[%c1_41, %c0_42, %c0_43] : memref<4x144x160xbf16, #tpu.memory_space<vmem>>, vector<1x144x160xbf16>
    %63 = vector.shape_cast %62 : vector<1x144x160xbf16> to vector<144x160xbf16>
    %cst_44 = arith.constant dense<0.000000e+00> : vector<64x160xf32>
    %64 = tpu.matmul %61, %63, %cst_44 {dimension_numbers = #tpu.dot_dimension_numbers<[1], [0], [0], [1], [0, 0, 1, 1], [], []>} : vector<64x144xbf16>, vector<144x160xbf16>, vector<64x160xf32> -> vector<64x160xf32>
    %65 = arith.addf %57, %64 : vector<64x160xf32>
    %c2_45 = arith.constant 2 : index
    %c0_46 = arith.constant 0 : index
    %c0_47 = arith.constant 0 : index
    %66 = vector.load %arg6[%c2_45, %c0_46, %c0_47] : memref<4x64x96xbf16, #tpu.memory_space<vmem>>, vector<1x64x96xbf16>
    %67 = vector.shape_cast %66 : vector<1x64x96xbf16> to vector<64x96xbf16>
    %cst_48 = arith.constant dense<0.000000e+00> : vector<64x144xf32>
    %68 = tpu.matmul %67, %48, %cst_48 {dimension_numbers = #tpu.dot_dimension_numbers<[1], [0], [0], [1], [0, 0, 1, 1], [], []>} : vector<64x96xbf16>, vector<96x144xbf16>, vector<64x144xf32> -> vector<64x144xf32>
    %69 = arith.truncf %68 : vector<64x144xf32> to vector<64x144xbf16>
    %c2_49 = arith.constant 2 : index
    %c0_50 = arith.constant 0 : index
    %c0_51 = arith.constant 0 : index
    %70 = vector.load %arg5[%c2_49, %c0_50, %c0_51] : memref<4x144x160xbf16, #tpu.memory_space<vmem>>, vector<1x144x160xbf16>
    %71 = vector.shape_cast %70 : vector<1x144x160xbf16> to vector<144x160xbf16>
    %cst_52 = arith.constant dense<0.000000e+00> : vector<64x160xf32>
    %72 = tpu.matmul %69, %71, %cst_52 {dimension_numbers = #tpu.dot_dimension_numbers<[1], [0], [0], [1], [0, 0, 1, 1], [], []>} : vector<64x144xbf16>, vector<144x160xbf16>, vector<64x160xf32> -> vector<64x160xf32>
    %73 = arith.addf %65, %72 : vector<64x160xf32>
    %c3_53 = arith.constant 3 : index
    %c0_54 = arith.constant 0 : index
    %c0_55 = arith.constant 0 : index
    %74 = vector.load %arg6[%c3_53, %c0_54, %c0_55] : memref<4x64x96xbf16, #tpu.memory_space<vmem>>, vector<1x64x96xbf16>
    %75 = vector.shape_cast %74 : vector<1x64x96xbf16> to vector<64x96xbf16>
    %cst_56 = arith.constant dense<0.000000e+00> : vector<64x144xf32>
    %76 = tpu.matmul %75, %48, %cst_56 {dimension_numbers = #tpu.dot_dimension_numbers<[1], [0], [0], [1], [0, 0, 1, 1], [], []>} : vector<64x96xbf16>, vector<96x144xbf16>, vector<64x144xf32> -> vector<64x144xf32>
    %77 = arith.truncf %76 : vector<64x144xf32> to vector<64x144xbf16>
    %c3_57 = arith.constant 3 : index
    %c0_58 = arith.constant 0 : index
    %c0_59 = arith.constant 0 : index
    %78 = vector.load %arg5[%c3_57, %c0_58, %c0_59] : memref<4x144x160xbf16, #tpu.memory_space<vmem>>, vector<1x144x160xbf16>
    %79 = vector.shape_cast %78 : vector<1x144x160xbf16> to vector<144x160xbf16>
    %cst_60 = arith.constant dense<0.000000e+00> : vector<64x160xf32>
    %80 = tpu.matmul %77, %79, %cst_60 {dimension_numbers = #tpu.dot_dimension_numbers<[1], [0], [0], [1], [0, 0, 1, 1], [], []>} : vector<64x144xbf16>, vector<144x160xbf16>, vector<64x160xf32> -> vector<64x160xf32>
    %81 = arith.addf %73, %80 : vector<64x160xf32>
    %cst_61 = arith.constant 0.000000e+00 : f32
    %82 = vector.broadcast %cst_61 : f32 to vector<64x160xf32>
    %83 = arith.maximumf %81, %82 : vector<64x160xf32>
    %84 = arith.truncf %83 : vector<64x160xf32> to vector<64x160xbf16>
    %c0_62 = arith.constant 0 : index
    %c0_63 = arith.constant 0 : index
    %85 = vector.load %arg10[%c0_62, %c0_63] : memref<32x128xf32, #tpu.memory_space<vmem>>, vector<32x128xf32>
    %c0_64 = arith.constant 0 : index
    %c0_65 = arith.constant 0 : index
    %c0_66 = arith.constant 0 : index
    %86 = vector.load %arg9[%c0_64, %c0_65, %c0_66] : memref<4x32x64xbf16, #tpu.memory_space<vmem>>, vector<1x32x64xbf16>
    %87 = vector.shape_cast %86 : vector<1x32x64xbf16> to vector<32x64xbf16>
    %cst_67 = arith.constant dense<0.000000e+00> : vector<32x160xf32>
    %88 = tpu.matmul %87, %84, %cst_67 {dimension_numbers = #tpu.dot_dimension_numbers<[1], [0], [0], [1], [0, 0, 1, 1], [], []>} : vector<32x64xbf16>, vector<64x160xbf16>, vector<32x160xf32> -> vector<32x160xf32>
    %89 = arith.truncf %88 : vector<32x160xf32> to vector<32x160xbf16>
    %c0_68 = arith.constant 0 : index
    %c0_69 = arith.constant 0 : index
    %c0_70 = arith.constant 0 : index
    %90 = vector.load %arg8[%c0_68, %c0_69, %c0_70] : memref<4x160x128xbf16, #tpu.memory_space<vmem>>, vector<1x160x128xbf16>
    %91 = vector.shape_cast %90 : vector<1x160x128xbf16> to vector<160x128xbf16>
    %cst_71 = arith.constant dense<0.000000e+00> : vector<32x128xf32>
    %92 = tpu.matmul %89, %91, %cst_71 {dimension_numbers = #tpu.dot_dimension_numbers<[1], [0], [0], [1], [0, 0, 1, 1], [], []>} : vector<32x160xbf16>, vector<160x128xbf16>, vector<32x128xf32> -> vector<32x128xf32>
    %93 = arith.addf %85, %92 : vector<32x128xf32>
    %c1_72 = arith.constant 1 : index
    %c0_73 = arith.constant 0 : index
    %c0_74 = arith.constant 0 : index
    %94 = vector.load %arg9[%c1_72, %c0_73, %c0_74] : memref<4x32x64xbf16, #tpu.memory_space<vmem>>, vector<1x32x64xbf16>
    %95 = vector.shape_cast %94 : vector<1x32x64xbf16> to vector<32x64xbf16>
    %cst_75 = arith.constant dense<0.000000e+00> : vector<32x160xf32>
    %96 = tpu.matmul %95, %84, %cst_75 {dimension_numbers = #tpu.dot_dimension_numbers<[1], [0], [0], [1], [0, 0, 1, 1], [], []>} : vector<32x64xbf16>, vector<64x160xbf16>, vector<32x160xf32> -> vector<32x160xf32>
    %97 = arith.truncf %96 : vector<32x160xf32> to vector<32x160xbf16>
    %c1_76 = arith.constant 1 : index
    %c0_77 = arith.constant 0 : index
    %c0_78 = arith.constant 0 : index
    %98 = vector.load %arg8[%c1_76, %c0_77, %c0_78] : memref<4x160x128xbf16, #tpu.memory_space<vmem>>, vector<1x160x128xbf16>
    %99 = vector.shape_cast %98 : vector<1x160x128xbf16> to vector<160x128xbf16>
    %cst_79 = arith.constant dense<0.000000e+00> : vector<32x128xf32>
    %100 = tpu.matmul %97, %99, %cst_79 {dimension_numbers = #tpu.dot_dimension_numbers<[1], [0], [0], [1], [0, 0, 1, 1], [], []>} : vector<32x160xbf16>, vector<160x128xbf16>, vector<32x128xf32> -> vector<32x128xf32>
    %101 = arith.addf %93, %100 : vector<32x128xf32>
    %c2_80 = arith.constant 2 : index
    %c0_81 = arith.constant 0 : index
    %c0_82 = arith.constant 0 : index
    %102 = vector.load %arg9[%c2_80, %c0_81, %c0_82] : memref<4x32x64xbf16, #tpu.memory_space<vmem>>, vector<1x32x64xbf16>
    %103 = vector.shape_cast %102 : vector<1x32x64xbf16> to vector<32x64xbf16>
    %cst_83 = arith.constant dense<0.000000e+00> : vector<32x160xf32>
    %104 = tpu.matmul %103, %84, %cst_83 {dimension_numbers = #tpu.dot_dimension_numbers<[1], [0], [0], [1], [0, 0, 1, 1], [], []>} : vector<32x64xbf16>, vector<64x160xbf16>, vector<32x160xf32> -> vector<32x160xf32>
    %105 = arith.truncf %104 : vector<32x160xf32> to vector<32x160xbf16>
    %c2_84 = arith.constant 2 : index
    %c0_85 = arith.constant 0 : index
    %c0_86 = arith.constant 0 : index
    %106 = vector.load %arg8[%c2_84, %c0_85, %c0_86] : memref<4x160x128xbf16, #tpu.memory_space<vmem>>, vector<1x160x128xbf16>
    %107 = vector.shape_cast %106 : vector<1x160x128xbf16> to vector<160x128xbf16>
    %cst_87 = arith.constant dense<0.000000e+00> : vector<32x128xf32>
    %108 = tpu.matmul %105, %107, %cst_87 {dimension_numbers = #tpu.dot_dimension_numbers<[1], [0], [0], [1], [0, 0, 1, 1], [], []>} : vector<32x160xbf16>, vector<160x128xbf16>, vector<32x128xf32> -> vector<32x128xf32>
    %109 = arith.addf %101, %108 : vector<32x128xf32>
    %c3_88 = arith.constant 3 : index
    %c0_89 = arith.constant 0 : index
    %c0_90 = arith.constant 0 : index
    %110 = vector.load %arg9[%c3_88, %c0_89, %c0_90] : memref<4x32x64xbf16, #tpu.memory_space<vmem>>, vector<1x32x64xbf16>
    %111 = vector.shape_cast %110 : vector<1x32x64xbf16> to vector<32x64xbf16>
    %cst_91 = arith.constant dense<0.000000e+00> : vector<32x160xf32>
    %112 = tpu.matmul %111, %84, %cst_91 {dimension_numbers = #tpu.dot_dimension_numbers<[1], [0], [0], [1], [0, 0, 1, 1], [], []>} : vector<32x64xbf16>, vector<64x160xbf16>, vector<32x160xf32> -> vector<32x160xf32>
    %113 = arith.truncf %112 : vector<32x160xf32> to vector<32x160xbf16>
    %c3_92 = arith.constant 3 : index
    %c0_93 = arith.constant 0 : index
    %c0_94 = arith.constant 0 : index
    %114 = vector.load %arg8[%c3_92, %c0_93, %c0_94] : memref<4x160x128xbf16, #tpu.memory_space<vmem>>, vector<1x160x128xbf16>
    %115 = vector.shape_cast %114 : vector<1x160x128xbf16> to vector<160x128xbf16>
    %cst_95 = arith.constant dense<0.000000e+00> : vector<32x128xf32>
    %116 = tpu.matmul %113, %115, %cst_95 {dimension_numbers = #tpu.dot_dimension_numbers<[1], [0], [0], [1], [0, 0, 1, 1], [], []>} : vector<32x160xbf16>, vector<160x128xbf16>, vector<32x128xf32> -> vector<32x128xf32>
    %117 = arith.addf %109, %116 : vector<32x128xf32>
    %cst_96 = arith.constant 0.000000e+00 : f32
    %118 = vector.broadcast %cst_96 : f32 to vector<32x128xf32>
    %119 = arith.maximumf %117, %118 : vector<32x128xf32>
    %120 = vector.shape_cast %119 : vector<32x128xf32> to vector<4x8x128xf32>
    %cst_97 = arith.constant dense<0.000000e+00> : vector<4x128xf32>
    %121 = vector.multi_reduction <add>, %120, %cst_97 [1] : vector<4x8x128xf32> to vector<4x128xf32>
    %122 = arith.truncf %121 : vector<4x128xf32> to vector<4x128xbf16>
    %c0_98 = arith.constant 0 : index
    %c0_99 = arith.constant 0 : index
    %123 = vector.load %arg11[%c0_98, %c0_99] : memref<128x128xbf16, #tpu.memory_space<vmem>>, vector<128x128xbf16>
    %cst_100 = arith.constant dense<0.000000e+00> : vector<4x128xf32>
    %124 = tpu.matmul %122, %123, %cst_100 {dimension_numbers = #tpu.dot_dimension_numbers<[1], [0], [0], [1], [0, 0, 1, 1], [], []>} : vector<4x128xbf16>, vector<128x128xbf16>, vector<4x128xf32> -> vector<4x128xf32>
    %c0_101 = arith.constant 0 : index
    %c0_102 = arith.constant 0 : index
    %125 = vector.load %arg12[%c0_101, %c0_102] : memref<1x128xf32, #tpu.memory_space<vmem>>, vector<1x128xf32>
    %126 = vector.broadcast %125 : vector<1x128xf32> to vector<4x128xf32>
    %127 = arith.addf %124, %126 : vector<4x128xf32>
    %c0_103 = arith.constant 0 : index
    %c0_104 = arith.constant 0 : index
    %c0_105 = arith.constant 0 : index
    %128 = vector.load %arg13[%c0_103, %c0_104, %c0_105] : memref<1x4x128xf32, #tpu.memory_space<vmem>>, vector<1x4x128xf32>
    %129 = vector.shape_cast %128 : vector<1x4x128xf32> to vector<4x128xf32>
    %130 = vector.shape_cast %127 : vector<4x128xf32> to vector<1x4x128xf32>
    tpu.vector_store %arg13[%c0_103, %c0_104, %c0_105], %130 {strides = array<i32>} : memref<1x4x128xf32, #tpu.memory_space<vmem>>, vector<1x4x128xf32>,
    return
  }
  func.func @transform_0(%arg0: i32) -> (i32, i32) {
    %c0_i32 = arith.constant 0 : i32
    %c0_i32_0 = arith.constant 0 : i32
    return %arg0, %c0_i32 : i32, i32
  }
  func.func @transform_1(%arg0: i32) -> (i32, i32, i32) {
    %c0_i32 = arith.constant 0 : i32
    %c0_i32_0 = arith.constant 0 : i32
    %c0_i32_1 = arith.constant 0 : i32
    %c0_i32_2 = arith.constant 0 : i32
    return %c0_i32, %c0_i32_0, %c0_i32_1 : i32, i32, i32
  }
  func.func @transform_2(%arg0: i32) -> (i32, i32) {
    %c0_i32 = arith.constant 0 : i32
    %c0_i32_0 = arith.constant 0 : i32
    %c0_i32_1 = arith.constant 0 : i32
    return %c0_i32, %c0_i32_0 : i32, i32
  }
  func.func @transform_3(%arg0: i32) -> (i32, i32) {
    %c0_i32 = arith.constant 0 : i32
    %c0_i32_0 = arith.constant 0 : i32
    %c0_i32_1 = arith.constant 0 : i32
    return %c0_i32, %c0_i32_0 : i32, i32
  }
  func.func @transform_4(%arg0: i32) -> (i32, i32, i32) {
    %c0_i32 = arith.constant 0 : i32
    %c0_i32_0 = arith.constant 0 : i32
    %c0_i32_1 = arith.constant 0 : i32
    %c0_i32_2 = arith.constant 0 : i32
    return %c0_i32, %c0_i32_0, %c0_i32_1 : i32, i32, i32
  }
  func.func @transform_5(%arg0: i32) -> (i32, i32, i32) {
    %c0_i32 = arith.constant 0 : i32
    %c0_i32_0 = arith.constant 0 : i32
    %c0_i32_1 = arith.constant 0 : i32
    %c0_i32_2 = arith.constant 0 : i32
    return %c0_i32, %c0_i32_0, %c0_i32_1 : i32, i32, i32
  }
  func.func @transform_6(%arg0: i32) -> (i32, i32) {
    %c0_i32 = arith.constant 0 : i32
    %c0_i32_0 = arith.constant 0 : i32
    %c0_i32_1 = arith.constant 0 : i32
    return %c0_i32, %c0_i32_0 : i32, i32
  }
  func.func @transform_7(%arg0: i32) -> (i32, i32, i32) {
    %c0_i32 = arith.constant 0 : i32
    %c0_i32_0 = arith.constant 0 : i32
    %c0_i32_1 = arith.constant 0 : i32
    %c0_i32_2 = arith.constant 0 : i32
    return %c0_i32, %c0_i32_0, %c0_i32_1 : i32, i32, i32
  }
  func.func @transform_8(%arg0: i32) -> (i32, i32, i32) {
    %c0_i32 = arith.constant 0 : i32
    %c0_i32_0 = arith.constant 0 : i32
    %c0_i32_1 = arith.constant 0 : i32
    %c0_i32_2 = arith.constant 0 : i32
    return %c0_i32, %c0_i32_0, %c0_i32_1 : i32, i32, i32
  }
  func.func @transform_9(%arg0: i32) -> (i32, i32) {
    %c0_i32 = arith.constant 0 : i32
    %c0_i32_0 = arith.constant 0 : i32
    %c0_i32_1 = arith.constant 0 : i32
    return %c0_i32, %c0_i32_0 : i32, i32
  }
  func.func @transform_10(%arg0: i32) -> (i32, i32) {
    %c0_i32 = arith.constant 0 : i32
    %c0_i32_0 = arith.constant 0 : i32
    %c0_i32_1 = arith.constant 0 : i32
    return %c0_i32, %c0_i32_0 : i32, i32
  }
  func.func @transform_11(%arg0: i32) -> (i32, i32) {
    %c0_i32 = arith.constant 0 : i32
    %c0_i32_0 = arith.constant 0 : i32
    %c0_i32_1 = arith.constant 0 : i32
    return %c0_i32, %c0_i32_0 : i32, i32
  }
  func.func @transform_12(%arg0: i32) -> (i32, i32, i32) {
    %c0_i32 = arith.constant 0 : i32
    %c0_i32_0 = arith.constant 0 : i32
    %c0_i32_1 = arith.constant 0 : i32
    return %arg0, %c0_i32, %c0_i32_0 : i32, i32, i32
  }
}

module attributes {stable_mosaic.version = 11 : i64} {
  func.func @kernel(%arg0: i32, %arg1: memref<96x66xf32, #tpu.memory_space<vmem>>, %arg2: memref<7x66x144xbf16, #tpu.memory_space<vmem>>, %arg3: memref<7x96x96xbf16, #tpu.memory_space<vmem>>, %arg4: memref<96x144xf32, #tpu.memory_space<vmem>>, %arg5: memref<4x144x160xbf16, #tpu.memory_space<vmem>>, %arg6: memref<4x64x96xbf16, #tpu.memory_space<vmem>>, %arg7: memref<64x160xf32, #tpu.memory_space<vmem>>, %arg8: memref<4x160x128xbf16, #tpu.memory_space<vmem>>, %arg9: memref<4x32x64xbf16, #tpu.memory_space<vmem>>, %arg10: memref<32x128xf32, #tpu.memory_space<vmem>>, %arg11: memref<128x128xbf16, #tpu.memory_space<vmem>>, %arg12: memref<1x128xf32, #tpu.memory_space<vmem>>, %arg13: memref<1x4x128xf32, #tpu.memory_space<vmem>>) attributes {dimension_semantics = [#tpu.dimension_semantics<parallel>], iteration_bounds = array<i64: 2>, scalar_prefetch = 0 : i64, scratch_operands = 0 : i64, tpu.core_type = #tpu.core_type<tc>, window_params = [{transform_indices = @transform_0, window_bounds = array<i64: 96, 66>}, {pipeline_mode = #tpu.pipeline_mode<synchronous>, transform_indices = @transform_1, window_bounds = array<i64: 7, 66, 144>}, {pipeline_mode = #tpu.pipeline_mode<synchronous>, transform_indices = @transform_2, window_bounds = array<i64: 7, 96, 96>}, {pipeline_mode = #tpu.pipeline_mode<synchronous>, transform_indices = @transform_3, window_bounds = array<i64: 96, 144>}, {pipeline_mode = #tpu.pipeline_mode<synchronous>, transform_indices = @transform_4, window_bounds = array<i64: 4, 144, 160>}, {pipeline_mode = #tpu.pipeline_mode<synchronous>, transform_indices = @transform_5, window_bounds = array<i64: 4, 64, 96>}, {pipeline_mode = #tpu.pipeline_mode<synchronous>, transform_indices = @transform_6, window_bounds = array<i64: 64, 160>}, {pipeline_mode = #tpu.pipeline_mode<synchronous>, transform_indices = @transform_7, window_bounds = array<i64: 4, 160, 128>}, {pipeline_mode = #tpu.pipeline_mode<synchronous>, transform_indices = @transform_8, window_bounds = array<i64: 4, 32, 64>}, {pipeline_mode = #tpu.pipeline_mode<synchronous>, transform_indices = @transform_9, window_bounds = array<i64: 32, 128>}, {pipeline_mode = #tpu.pipeline_mode<synchronous>, transform_indices = @transform_10, window_bounds = array<i64: 128, 128>}, {pipeline_mode = #tpu.pipeline_mode<synchronous>, transform_indices = @transform_11, window_bounds = array<i64: 1, 128>}, {transform_indices = @transform_12, window_bounds = array<i64: 1, 4, 128>}]} {
    %c0 = arith.constant 0 : index
    %c0_0 = arith.constant 0 : index
    %0 = vector.load %arg1[%c0, %c0_0] : memref<96x66xf32, #tpu.memory_space<vmem>>, vector<96x66xf32>
    %1 = arith.truncf %0 : vector<96x66xf32> to vector<96x66xbf16>
    %c0_1 = arith.constant 0 : index
    %c0_2 = arith.constant 0 : index
    %2 = vector.load %arg4[%c0_1, %c0_2] : memref<96x144xf32, #tpu.memory_space<vmem>>, vector<96x144xf32>
    %c0_3 = arith.constant 0 : index
    %c0_4 = arith.constant 0 : index
    %c0_5 = arith.constant 0 : index
    %3 = vector.load %arg3[%c0_3, %c0_4, %c0_5] : memref<7x96x96xbf16, #tpu.memory_space<vmem>>, vector<1x96x96xbf16>
    %4 = vector.shape_cast %3 : vector<1x96x96xbf16> to vector<96x96xbf16>
    %cst = arith.constant dense<0.000000e+00> : vector<96x66xf32>
    %5 = tpu.matmul %4, %1, %cst {dimension_numbers = #tpu.dot_dimension_numbers<[1], [0], [0], [1], [0, 0, 1, 1], [], []>} : vector<96x96xbf16>, vector<96x66xbf16>, vector<96x66xf32> -> vector<96x66xf32>
    %6 = arith.truncf %5 : vector<96x66xf32> to vector<96x66xbf16>
    %c0_6 = arith.constant 0 : index
    %c0_7 = arith.constant 0 : index
    %c0_8 = arith.constant 0 : index
    %7 = vector.load %arg2[%c0_6, %c0_7, %c0_8] : memref<7x66x144xbf16, #tpu.memory_space<vmem>>, vector<1x66x144xbf16>
    %8 = vector.shape_cast %7 : vector<1x66x144xbf16> to vector<66x144xbf16>
    %cst_9 = arith.constant dense<0.000000e+00> : vector<96x144xf32>
    %9 = tpu.matmul %6, %8, %cst_9 {dimension_numbers = #tpu.dot_dimension_numbers<[1], [0], [0], [1], [0, 0, 1, 1], [], []>} : vector<96x66xbf16>, vector<66x144xbf16>, vector<96x144xf32> -> vector<96x144xf32>
    %10 = arith.addf %2, %9 : vector<96x144xf32>
    %c1 = arith.constant 1 : index
    %c0_10 = arith.constant 0 : index
    %c0_11 = arith.constant 0 : index
    %11 = vector.load %arg3[%c1, %c0_10, %c0_11] : memref<7x96x96xbf16, #tpu.memory_space<vmem>>, vector<1x96x96xbf16>
    %12 = vector.shape_cast %11 : vector<1x96x96xbf16> to vector<96x96xbf16>
    %cst_12 = arith.constant dense<0.000000e+00> : vector<96x66xf32>
    %13 = tpu.matmul %12, %1, %cst_12 {dimension_numbers = #tpu.dot_dimension_numbers<[1], [0], [0], [1], [0, 0, 1, 1], [], []>} : vector<96x96xbf16>, vector<96x66xbf16>, vector<96x66xf32> -> vector<96x66xf32>
    %14 = arith.truncf %13 : vector<96x66xf32> to vector<96x66xbf16>
    %c1_13 = arith.constant 1 : index
    %c0_14 = arith.constant 0 : index
    %c0_15 = arith.constant 0 : index
    %15 = vector.load %arg2[%c1_13, %c0_14, %c0_15] : memref<7x66x144xbf16, #tpu.memory_space<vmem>>, vector<1x66x144xbf16>
    %16 = vector.shape_cast %15 : vector<1x66x144xbf16> to vector<66x144xbf16>
    %cst_16 = arith.constant dense<0.000000e+00> : vector<96x144xf32>
    %17 = tpu.matmul %14, %16, %cst_16 {dimension_numbers = #tpu.dot_dimension_numbers<[1], [0], [0], [1], [0, 0, 1, 1], [], []>} : vector<96x66xbf16>, vector<66x144xbf16>, vector<96x144xf32> -> vector<96x144xf32>
    %18 = arith.addf %10, %17 : vector<96x144xf32>
    %c2 = arith.constant 2 : index
    %c0_17 = arith.constant 0 : index
    %c0_18 = arith.constant 0 : index
    %19 = vector.load %arg3[%c2, %c0_17, %c0_18] : memref<7x96x96xbf16, #tpu.memory_space<vmem>>, vector<1x96x96xbf16>
    %20 = vector.shape_cast %19 : vector<1x96x96xbf16> to vector<96x96xbf16>
    %cst_19 = arith.constant dense<0.000000e+00> : vector<96x66xf32>
    %21 = tpu.matmul %20, %1, %cst_19 {dimension_numbers = #tpu.dot_dimension_numbers<[1], [0], [0], [1], [0, 0, 1, 1], [], []>} : vector<96x96xbf16>, vector<96x66xbf16>, vector<96x66xf32> -> vector<96x66xf32>
    %22 = arith.truncf %21 : vector<96x66xf32> to vector<96x66xbf16>
    %c2_20 = arith.constant 2 : index
    %c0_21 = arith.constant 0 : index
    %c0_22 = arith.constant 0 : index
    %23 = vector.load %arg2[%c2_20, %c0_21, %c0_22] : memref<7x66x144xbf16, #tpu.memory_space<vmem>>, vector<1x66x144xbf16>
    %24 = vector.shape_cast %23 : vector<1x66x144xbf16> to vector<66x144xbf16>
    %cst_23 = arith.constant dense<0.000000e+00> : vector<96x144xf32>
    %25 = tpu.matmul %22, %24, %cst_23 {dimension_numbers = #tpu.dot_dimension_numbers<[1], [0], [0], [1], [0, 0, 1, 1], [], []>} : vector<96x66xbf16>, vector<66x144xbf16>, vector<96x144xf32> -> vector<96x144xf32>
    %26 = arith.addf %18, %25 : vector<96x144xf32>
    %c3 = arith.constant 3 : index
    %c0_24 = arith.constant 0 : index
    %c0_25 = arith.constant 0 : index
    %27 = vector.load %arg3[%c3, %c0_24, %c0_25] : memref<7x96x96xbf16, #tpu.memory_space<vmem>>, vector<1x96x96xbf16>
    %28 = vector.shape_cast %27 : vector<1x96x96xbf16> to vector<96x96xbf16>
    %cst_26 = arith.constant dense<0.000000e+00> : vector<96x66xf32>
    %29 = tpu.matmul %28, %1, %cst_26 {dimension_numbers = #tpu.dot_dimension_numbers<[1], [0], [0], [1], [0, 0, 1, 1], [], []>} : vector<96x96xbf16>, vector<96x66xbf16>, vector<96x66xf32> -> vector<96x66xf32>
    %30 = arith.truncf %29 : vector<96x66xf32> to vector<96x66xbf16>
    %c3_27 = arith.constant 3 : index
    %c0_28 = arith.constant 0 : index
    %c0_29 = arith.constant 0 : index
    %31 = vector.load %arg2[%c3_27, %c0_28, %c0_29] : memref<7x66x144xbf16, #tpu.memory_space<vmem>>, vector<1x66x144xbf16>
    %32 = vector.shape_cast %31 : vector<1x66x144xbf16> to vector<66x144xbf16>
    %cst_30 = arith.constant dense<0.000000e+00> : vector<96x144xf32>
    %33 = tpu.matmul %30, %32, %cst_30 {dimension_numbers = #tpu.dot_dimension_numbers<[1], [0], [0], [1], [0, 0, 1, 1], [], []>} : vector<96x66xbf16>, vector<66x144xbf16>, vector<96x144xf32> -> vector<96x144xf32>
    %34 = arith.addf %26, %33 : vector<96x144xf32>
    %c4 = arith.constant 4 : index
    %c0_31 = arith.constant 0 : index
    %c0_32 = arith.constant 0 : index
    %35 = vector.load %arg3[%c4, %c0_31, %c0_32] : memref<7x96x96xbf16, #tpu.memory_space<vmem>>, vector<1x96x96xbf16>
    %36 = vector.shape_cast %35 : vector<1x96x96xbf16> to vector<96x96xbf16>
    %cst_33 = arith.constant dense<0.000000e+00> : vector<96x66xf32>
    %37 = tpu.matmul %36, %1, %cst_33 {dimension_numbers = #tpu.dot_dimension_numbers<[1], [0], [0], [1], [0, 0, 1, 1], [], []>} : vector<96x96xbf16>, vector<96x66xbf16>, vector<96x66xf32> -> vector<96x66xf32>
    %38 = arith.truncf %37 : vector<96x66xf32> to vector<96x66xbf16>
    %c4_34 = arith.constant 4 : index
    %c0_35 = arith.constant 0 : index
    %c0_36 = arith.constant 0 : index
    %39 = vector.load %arg2[%c4_34, %c0_35, %c0_36] : memref<7x66x144xbf16, #tpu.memory_space<vmem>>, vector<1x66x144xbf16>
    %40 = vector.shape_cast %39 : vector<1x66x144xbf16> to vector<66x144xbf16>
    %cst_37 = arith.constant dense<0.000000e+00> : vector<96x144xf32>
    %41 = tpu.matmul %38, %40, %cst_37 {dimension_numbers = #tpu.dot_dimension_numbers<[1], [0], [0], [1], [0, 0, 1, 1], [], []>} : vector<96x66xbf16>, vector<66x144xbf16>, vector<96x144xf32> -> vector<96x144xf32>
    %42 = arith.addf %34, %41 : vector<96x144xf32>
    %c5 = arith.constant 5 : index
    %c0_38 = arith.constant 0 : index
    %c0_39 = arith.constant 0 : index
    %43 = vector.load %arg3[%c5, %c0_38, %c0_39] : memref<7x96x96xbf16, #tpu.memory_space<vmem>>, vector<1x96x96xbf16>
    %44 = vector.shape_cast %43 : vector<1x96x96xbf16> to vector<96x96xbf16>
    %cst_40 = arith.constant dense<0.000000e+00> : vector<96x66xf32>
    %45 = tpu.matmul %44, %1, %cst_40 {dimension_numbers = #tpu.dot_dimension_numbers<[1], [0], [0], [1], [0, 0, 1, 1], [], []>} : vector<96x96xbf16>, vector<96x66xbf16>, vector<96x66xf32> -> vector<96x66xf32>
    %46 = arith.truncf %45 : vector<96x66xf32> to vector<96x66xbf16>
    %c5_41 = arith.constant 5 : index
    %c0_42 = arith.constant 0 : index
    %c0_43 = arith.constant 0 : index
    %47 = vector.load %arg2[%c5_41, %c0_42, %c0_43] : memref<7x66x144xbf16, #tpu.memory_space<vmem>>, vector<1x66x144xbf16>
    %48 = vector.shape_cast %47 : vector<1x66x144xbf16> to vector<66x144xbf16>
    %cst_44 = arith.constant dense<0.000000e+00> : vector<96x144xf32>
    %49 = tpu.matmul %46, %48, %cst_44 {dimension_numbers = #tpu.dot_dimension_numbers<[1], [0], [0], [1], [0, 0, 1, 1], [], []>} : vector<96x66xbf16>, vector<66x144xbf16>, vector<96x144xf32> -> vector<96x144xf32>
    %50 = arith.addf %42, %49 : vector<96x144xf32>
    %c6 = arith.constant 6 : index
    %c0_45 = arith.constant 0 : index
    %c0_46 = arith.constant 0 : index
    %51 = vector.load %arg3[%c6, %c0_45, %c0_46] : memref<7x96x96xbf16, #tpu.memory_space<vmem>>, vector<1x96x96xbf16>
    %52 = vector.shape_cast %51 : vector<1x96x96xbf16> to vector<96x96xbf16>
    %cst_47 = arith.constant dense<0.000000e+00> : vector<96x66xf32>
    %53 = tpu.matmul %52, %1, %cst_47 {dimension_numbers = #tpu.dot_dimension_numbers<[1], [0], [0], [1], [0, 0, 1, 1], [], []>} : vector<96x96xbf16>, vector<96x66xbf16>, vector<96x66xf32> -> vector<96x66xf32>
    %54 = arith.truncf %53 : vector<96x66xf32> to vector<96x66xbf16>
    %c6_48 = arith.constant 6 : index
    %c0_49 = arith.constant 0 : index
    %c0_50 = arith.constant 0 : index
    %55 = vector.load %arg2[%c6_48, %c0_49, %c0_50] : memref<7x66x144xbf16, #tpu.memory_space<vmem>>, vector<1x66x144xbf16>
    %56 = vector.shape_cast %55 : vector<1x66x144xbf16> to vector<66x144xbf16>
    %cst_51 = arith.constant dense<0.000000e+00> : vector<96x144xf32>
    %57 = tpu.matmul %54, %56, %cst_51 {dimension_numbers = #tpu.dot_dimension_numbers<[1], [0], [0], [1], [0, 0, 1, 1], [], []>} : vector<96x66xbf16>, vector<66x144xbf16>, vector<96x144xf32> -> vector<96x144xf32>
    %58 = arith.addf %50, %57 : vector<96x144xf32>
    %cst_52 = arith.constant 0.000000e+00 : f32
    %59 = vector.broadcast %cst_52 : f32 to vector<96x144xf32>
    %60 = arith.maximumf %58, %59 : vector<96x144xf32>
    %61 = arith.truncf %60 : vector<96x144xf32> to vector<96x144xbf16>
    %c0_53 = arith.constant 0 : index
    %c0_54 = arith.constant 0 : index
    %62 = vector.load %arg7[%c0_53, %c0_54] : memref<64x160xf32, #tpu.memory_space<vmem>>, vector<64x160xf32>
    %c0_55 = arith.constant 0 : index
    %c0_56 = arith.constant 0 : index
    %c0_57 = arith.constant 0 : index
    %63 = vector.load %arg6[%c0_55, %c0_56, %c0_57] : memref<4x64x96xbf16, #tpu.memory_space<vmem>>, vector<1x64x96xbf16>
    %64 = vector.shape_cast %63 : vector<1x64x96xbf16> to vector<64x96xbf16>
    %cst_58 = arith.constant dense<0.000000e+00> : vector<64x144xf32>
    %65 = tpu.matmul %64, %61, %cst_58 {dimension_numbers = #tpu.dot_dimension_numbers<[1], [0], [0], [1], [0, 0, 1, 1], [], []>} : vector<64x96xbf16>, vector<96x144xbf16>, vector<64x144xf32> -> vector<64x144xf32>
    %66 = arith.truncf %65 : vector<64x144xf32> to vector<64x144xbf16>
    %c0_59 = arith.constant 0 : index
    %c0_60 = arith.constant 0 : index
    %c0_61 = arith.constant 0 : index
    %67 = vector.load %arg5[%c0_59, %c0_60, %c0_61] : memref<4x144x160xbf16, #tpu.memory_space<vmem>>, vector<1x144x160xbf16>
    %68 = vector.shape_cast %67 : vector<1x144x160xbf16> to vector<144x160xbf16>
    %cst_62 = arith.constant dense<0.000000e+00> : vector<64x160xf32>
    %69 = tpu.matmul %66, %68, %cst_62 {dimension_numbers = #tpu.dot_dimension_numbers<[1], [0], [0], [1], [0, 0, 1, 1], [], []>} : vector<64x144xbf16>, vector<144x160xbf16>, vector<64x160xf32> -> vector<64x160xf32>
    %70 = arith.addf %62, %69 : vector<64x160xf32>
    %c1_63 = arith.constant 1 : index
    %c0_64 = arith.constant 0 : index
    %c0_65 = arith.constant 0 : index
    %71 = vector.load %arg6[%c1_63, %c0_64, %c0_65] : memref<4x64x96xbf16, #tpu.memory_space<vmem>>, vector<1x64x96xbf16>
    %72 = vector.shape_cast %71 : vector<1x64x96xbf16> to vector<64x96xbf16>
    %cst_66 = arith.constant dense<0.000000e+00> : vector<64x144xf32>
    %73 = tpu.matmul %72, %61, %cst_66 {dimension_numbers = #tpu.dot_dimension_numbers<[1], [0], [0], [1], [0, 0, 1, 1], [], []>} : vector<64x96xbf16>, vector<96x144xbf16>, vector<64x144xf32> -> vector<64x144xf32>
    %74 = arith.truncf %73 : vector<64x144xf32> to vector<64x144xbf16>
    %c1_67 = arith.constant 1 : index
    %c0_68 = arith.constant 0 : index
    %c0_69 = arith.constant 0 : index
    %75 = vector.load %arg5[%c1_67, %c0_68, %c0_69] : memref<4x144x160xbf16, #tpu.memory_space<vmem>>, vector<1x144x160xbf16>
    %76 = vector.shape_cast %75 : vector<1x144x160xbf16> to vector<144x160xbf16>
    %cst_70 = arith.constant dense<0.000000e+00> : vector<64x160xf32>
    %77 = tpu.matmul %74, %76, %cst_70 {dimension_numbers = #tpu.dot_dimension_numbers<[1], [0], [0], [1], [0, 0, 1, 1], [], []>} : vector<64x144xbf16>, vector<144x160xbf16>, vector<64x160xf32> -> vector<64x160xf32>
    %78 = arith.addf %70, %77 : vector<64x160xf32>
    %c2_71 = arith.constant 2 : index
    %c0_72 = arith.constant 0 : index
    %c0_73 = arith.constant 0 : index
    %79 = vector.load %arg6[%c2_71, %c0_72, %c0_73] : memref<4x64x96xbf16, #tpu.memory_space<vmem>>, vector<1x64x96xbf16>
    %80 = vector.shape_cast %79 : vector<1x64x96xbf16> to vector<64x96xbf16>
    %cst_74 = arith.constant dense<0.000000e+00> : vector<64x144xf32>
    %81 = tpu.matmul %80, %61, %cst_74 {dimension_numbers = #tpu.dot_dimension_numbers<[1], [0], [0], [1], [0, 0, 1, 1], [], []>} : vector<64x96xbf16>, vector<96x144xbf16>, vector<64x144xf32> -> vector<64x144xf32>
    %82 = arith.truncf %81 : vector<64x144xf32> to vector<64x144xbf16>
    %c2_75 = arith.constant 2 : index
    %c0_76 = arith.constant 0 : index
    %c0_77 = arith.constant 0 : index
    %83 = vector.load %arg5[%c2_75, %c0_76, %c0_77] : memref<4x144x160xbf16, #tpu.memory_space<vmem>>, vector<1x144x160xbf16>
    %84 = vector.shape_cast %83 : vector<1x144x160xbf16> to vector<144x160xbf16>
    %cst_78 = arith.constant dense<0.000000e+00> : vector<64x160xf32>
    %85 = tpu.matmul %82, %84, %cst_78 {dimension_numbers = #tpu.dot_dimension_numbers<[1], [0], [0], [1], [0, 0, 1, 1], [], []>} : vector<64x144xbf16>, vector<144x160xbf16>, vector<64x160xf32> -> vector<64x160xf32>
    %86 = arith.addf %78, %85 : vector<64x160xf32>
    %c3_79 = arith.constant 3 : index
    %c0_80 = arith.constant 0 : index
    %c0_81 = arith.constant 0 : index
    %87 = vector.load %arg6[%c3_79, %c0_80, %c0_81] : memref<4x64x96xbf16, #tpu.memory_space<vmem>>, vector<1x64x96xbf16>
    %88 = vector.shape_cast %87 : vector<1x64x96xbf16> to vector<64x96xbf16>
    %cst_82 = arith.constant dense<0.000000e+00> : vector<64x144xf32>
    %89 = tpu.matmul %88, %61, %cst_82 {dimension_numbers = #tpu.dot_dimension_numbers<[1], [0], [0], [1], [0, 0, 1, 1], [], []>} : vector<64x96xbf16>, vector<96x144xbf16>, vector<64x144xf32> -> vector<64x144xf32>
    %90 = arith.truncf %89 : vector<64x144xf32> to vector<64x144xbf16>
    %c3_83 = arith.constant 3 : index
    %c0_84 = arith.constant 0 : index
    %c0_85 = arith.constant 0 : index
    %91 = vector.load %arg5[%c3_83, %c0_84, %c0_85] : memref<4x144x160xbf16, #tpu.memory_space<vmem>>, vector<1x144x160xbf16>
    %92 = vector.shape_cast %91 : vector<1x144x160xbf16> to vector<144x160xbf16>
    %cst_86 = arith.constant dense<0.000000e+00> : vector<64x160xf32>
    %93 = tpu.matmul %90, %92, %cst_86 {dimension_numbers = #tpu.dot_dimension_numbers<[1], [0], [0], [1], [0, 0, 1, 1], [], []>} : vector<64x144xbf16>, vector<144x160xbf16>, vector<64x160xf32> -> vector<64x160xf32>
    %94 = arith.addf %86, %93 : vector<64x160xf32>
    %cst_87 = arith.constant 0.000000e+00 : f32
    %95 = vector.broadcast %cst_87 : f32 to vector<64x160xf32>
    %96 = arith.maximumf %94, %95 : vector<64x160xf32>
    %97 = arith.truncf %96 : vector<64x160xf32> to vector<64x160xbf16>
    %c0_88 = arith.constant 0 : index
    %c0_89 = arith.constant 0 : index
    %98 = vector.load %arg10[%c0_88, %c0_89] : memref<32x128xf32, #tpu.memory_space<vmem>>, vector<32x128xf32>
    %c0_90 = arith.constant 0 : index
    %c0_91 = arith.constant 0 : index
    %c0_92 = arith.constant 0 : index
    %99 = vector.load %arg9[%c0_90, %c0_91, %c0_92] : memref<4x32x64xbf16, #tpu.memory_space<vmem>>, vector<1x32x64xbf16>
    %100 = vector.shape_cast %99 : vector<1x32x64xbf16> to vector<32x64xbf16>
    %cst_93 = arith.constant dense<0.000000e+00> : vector<32x160xf32>
    %101 = tpu.matmul %100, %97, %cst_93 {dimension_numbers = #tpu.dot_dimension_numbers<[1], [0], [0], [1], [0, 0, 1, 1], [], []>} : vector<32x64xbf16>, vector<64x160xbf16>, vector<32x160xf32> -> vector<32x160xf32>
    %102 = arith.truncf %101 : vector<32x160xf32> to vector<32x160xbf16>
    %c0_94 = arith.constant 0 : index
    %c0_95 = arith.constant 0 : index
    %c0_96 = arith.constant 0 : index
    %103 = vector.load %arg8[%c0_94, %c0_95, %c0_96] : memref<4x160x128xbf16, #tpu.memory_space<vmem>>, vector<1x160x128xbf16>
    %104 = vector.shape_cast %103 : vector<1x160x128xbf16> to vector<160x128xbf16>
    %cst_97 = arith.constant dense<0.000000e+00> : vector<32x128xf32>
    %105 = tpu.matmul %102, %104, %cst_97 {dimension_numbers = #tpu.dot_dimension_numbers<[1], [0], [0], [1], [0, 0, 1, 1], [], []>} : vector<32x160xbf16>, vector<160x128xbf16>, vector<32x128xf32> -> vector<32x128xf32>
    %106 = arith.addf %98, %105 : vector<32x128xf32>
    %c1_98 = arith.constant 1 : index
    %c0_99 = arith.constant 0 : index
    %c0_100 = arith.constant 0 : index
    %107 = vector.load %arg9[%c1_98, %c0_99, %c0_100] : memref<4x32x64xbf16, #tpu.memory_space<vmem>>, vector<1x32x64xbf16>
    %108 = vector.shape_cast %107 : vector<1x32x64xbf16> to vector<32x64xbf16>
    %cst_101 = arith.constant dense<0.000000e+00> : vector<32x160xf32>
    %109 = tpu.matmul %108, %97, %cst_101 {dimension_numbers = #tpu.dot_dimension_numbers<[1], [0], [0], [1], [0, 0, 1, 1], [], []>} : vector<32x64xbf16>, vector<64x160xbf16>, vector<32x160xf32> -> vector<32x160xf32>
    %110 = arith.truncf %109 : vector<32x160xf32> to vector<32x160xbf16>
    %c1_102 = arith.constant 1 : index
    %c0_103 = arith.constant 0 : index
    %c0_104 = arith.constant 0 : index
    %111 = vector.load %arg8[%c1_102, %c0_103, %c0_104] : memref<4x160x128xbf16, #tpu.memory_space<vmem>>, vector<1x160x128xbf16>
    %112 = vector.shape_cast %111 : vector<1x160x128xbf16> to vector<160x128xbf16>
    %cst_105 = arith.constant dense<0.000000e+00> : vector<32x128xf32>
    %113 = tpu.matmul %110, %112, %cst_105 {dimension_numbers = #tpu.dot_dimension_numbers<[1], [0], [0], [1], [0, 0, 1, 1], [], []>} : vector<32x160xbf16>, vector<160x128xbf16>, vector<32x128xf32> -> vector<32x128xf32>
    %114 = arith.addf %106, %113 : vector<32x128xf32>
    %c2_106 = arith.constant 2 : index
    %c0_107 = arith.constant 0 : index
    %c0_108 = arith.constant 0 : index
    %115 = vector.load %arg9[%c2_106, %c0_107, %c0_108] : memref<4x32x64xbf16, #tpu.memory_space<vmem>>, vector<1x32x64xbf16>
    %116 = vector.shape_cast %115 : vector<1x32x64xbf16> to vector<32x64xbf16>
    %cst_109 = arith.constant dense<0.000000e+00> : vector<32x160xf32>
    %117 = tpu.matmul %116, %97, %cst_109 {dimension_numbers = #tpu.dot_dimension_numbers<[1], [0], [0], [1], [0, 0, 1, 1], [], []>} : vector<32x64xbf16>, vector<64x160xbf16>, vector<32x160xf32> -> vector<32x160xf32>
    %118 = arith.truncf %117 : vector<32x160xf32> to vector<32x160xbf16>
    %c2_110 = arith.constant 2 : index
    %c0_111 = arith.constant 0 : index
    %c0_112 = arith.constant 0 : index
    %119 = vector.load %arg8[%c2_110, %c0_111, %c0_112] : memref<4x160x128xbf16, #tpu.memory_space<vmem>>, vector<1x160x128xbf16>
    %120 = vector.shape_cast %119 : vector<1x160x128xbf16> to vector<160x128xbf16>
    %cst_113 = arith.constant dense<0.000000e+00> : vector<32x128xf32>
    %121 = tpu.matmul %118, %120, %cst_113 {dimension_numbers = #tpu.dot_dimension_numbers<[1], [0], [0], [1], [0, 0, 1, 1], [], []>} : vector<32x160xbf16>, vector<160x128xbf16>, vector<32x128xf32> -> vector<32x128xf32>
    %122 = arith.addf %114, %121 : vector<32x128xf32>
    %c3_114 = arith.constant 3 : index
    %c0_115 = arith.constant 0 : index
    %c0_116 = arith.constant 0 : index
    %123 = vector.load %arg9[%c3_114, %c0_115, %c0_116] : memref<4x32x64xbf16, #tpu.memory_space<vmem>>, vector<1x32x64xbf16>
    %124 = vector.shape_cast %123 : vector<1x32x64xbf16> to vector<32x64xbf16>
    %cst_117 = arith.constant dense<0.000000e+00> : vector<32x160xf32>
    %125 = tpu.matmul %124, %97, %cst_117 {dimension_numbers = #tpu.dot_dimension_numbers<[1], [0], [0], [1], [0, 0, 1, 1], [], []>} : vector<32x64xbf16>, vector<64x160xbf16>, vector<32x160xf32> -> vector<32x160xf32>
    %126 = arith.truncf %125 : vector<32x160xf32> to vector<32x160xbf16>
    %c3_118 = arith.constant 3 : index
    %c0_119 = arith.constant 0 : index
    %c0_120 = arith.constant 0 : index
    %127 = vector.load %arg8[%c3_118, %c0_119, %c0_120] : memref<4x160x128xbf16, #tpu.memory_space<vmem>>, vector<1x160x128xbf16>
    %128 = vector.shape_cast %127 : vector<1x160x128xbf16> to vector<160x128xbf16>
    %cst_121 = arith.constant dense<0.000000e+00> : vector<32x128xf32>
    %129 = tpu.matmul %126, %128, %cst_121 {dimension_numbers = #tpu.dot_dimension_numbers<[1], [0], [0], [1], [0, 0, 1, 1], [], []>} : vector<32x160xbf16>, vector<160x128xbf16>, vector<32x128xf32> -> vector<32x128xf32>
    %130 = arith.addf %122, %129 : vector<32x128xf32>
    %cst_122 = arith.constant 0.000000e+00 : f32
    %131 = vector.broadcast %cst_122 : f32 to vector<32x128xf32>
    %132 = arith.maximumf %130, %131 : vector<32x128xf32>
    %133 = vector.shape_cast %132 : vector<32x128xf32> to vector<4x8x128xf32>
    %cst_123 = arith.constant dense<0.000000e+00> : vector<4x128xf32>
    %134 = vector.multi_reduction <add>, %133, %cst_123 [1] : vector<4x8x128xf32> to vector<4x128xf32>
    %135 = arith.truncf %134 : vector<4x128xf32> to vector<4x128xbf16>
    %c0_124 = arith.constant 0 : index
    %c0_125 = arith.constant 0 : index
    %136 = vector.load %arg11[%c0_124, %c0_125] : memref<128x128xbf16, #tpu.memory_space<vmem>>, vector<128x128xbf16>
    %cst_126 = arith.constant dense<0.000000e+00> : vector<4x128xf32>
    %137 = tpu.matmul %135, %136, %cst_126 {dimension_numbers = #tpu.dot_dimension_numbers<[1], [0], [0], [1], [0, 0, 1, 1], [], []>} : vector<4x128xbf16>, vector<128x128xbf16>, vector<4x128xf32> -> vector<4x128xf32>
    %c0_127 = arith.constant 0 : index
    %c0_128 = arith.constant 0 : index
    %138 = vector.load %arg12[%c0_127, %c0_128] : memref<1x128xf32, #tpu.memory_space<vmem>>, vector<1x128xf32>
    %139 = vector.broadcast %138 : vector<1x128xf32> to vector<4x128xf32>
    %140 = arith.addf %137, %139 : vector<4x128xf32>
    %c0_129 = arith.constant 0 : index
    %c0_130 = arith.constant 0 : index
    %c0_131 = arith.constant 0 : index
    %141 = vector.load %arg13[%c0_129, %c0_130, %c0_131] : memref<1x4x128xf32, #tpu.memory_space<vmem>>, vector<1x4x128xf32>
    %142 = vector.shape_cast %141 : vector<1x4x128xf32> to vector<4x128xf32>
    %143 = vector.shape_cast %140 : vector<4x128xf32> to vector<1x4x128xf32>
    tpu.vector_store %arg13[%c0_129, %c0_130, %c0_131], %143 {strides = array<i32>} : memref<1x4x128xf32, #tpu.memory_space<vmem>>, vector<1x4x128xf32>,
    return
  }
  func.func @transform_0(%arg0: i32) -> (i32, i32) {
    %c0_i32 = arith.constant 0 : i32
    %c0_i32_0 = arith.constant 0 : i32
    return %arg0, %c0_i32 : i32, i32
  }
  func.func @transform_1(%arg0: i32) -> (i32, i32, i32) {
    %c0_i32 = arith.constant 0 : i32
    %c0_i32_0 = arith.constant 0 : i32
    %c0_i32_1 = arith.constant 0 : i32
    %c0_i32_2 = arith.constant 0 : i32
    return %c0_i32, %c0_i32_0, %c0_i32_1 : i32, i32, i32
  }
  func.func @transform_2(%arg0: i32) -> (i32, i32, i32) {
    %c0_i32 = arith.constant 0 : i32
    %c0_i32_0 = arith.constant 0 : i32
    %c0_i32_1 = arith.constant 0 : i32
    %c0_i32_2 = arith.constant 0 : i32
    return %c0_i32, %c0_i32_0, %c0_i32_1 : i32, i32, i32
  }
  func.func @transform_3(%arg0: i32) -> (i32, i32) {
    %c0_i32 = arith.constant 0 : i32
    %c0_i32_0 = arith.constant 0 : i32
    %c0_i32_1 = arith.constant 0 : i32
    return %c0_i32, %c0_i32_0 : i32, i32
  }
  func.func @transform_4(%arg0: i32) -> (i32, i32, i32) {
    %c0_i32 = arith.constant 0 : i32
    %c0_i32_0 = arith.constant 0 : i32
    %c0_i32_1 = arith.constant 0 : i32
    %c0_i32_2 = arith.constant 0 : i32
    return %c0_i32, %c0_i32_0, %c0_i32_1 : i32, i32, i32
  }
  func.func @transform_5(%arg0: i32) -> (i32, i32, i32) {
    %c0_i32 = arith.constant 0 : i32
    %c0_i32_0 = arith.constant 0 : i32
    %c0_i32_1 = arith.constant 0 : i32
    %c0_i32_2 = arith.constant 0 : i32
    return %c0_i32, %c0_i32_0, %c0_i32_1 : i32, i32, i32
  }
  func.func @transform_6(%arg0: i32) -> (i32, i32) {
    %c0_i32 = arith.constant 0 : i32
    %c0_i32_0 = arith.constant 0 : i32
    %c0_i32_1 = arith.constant 0 : i32
    return %c0_i32, %c0_i32_0 : i32, i32
  }
  func.func @transform_7(%arg0: i32) -> (i32, i32, i32) {
    %c0_i32 = arith.constant 0 : i32
    %c0_i32_0 = arith.constant 0 : i32
    %c0_i32_1 = arith.constant 0 : i32
    %c0_i32_2 = arith.constant 0 : i32
    return %c0_i32, %c0_i32_0, %c0_i32_1 : i32, i32, i32
  }
  func.func @transform_8(%arg0: i32) -> (i32, i32, i32) {
    %c0_i32 = arith.constant 0 : i32
    %c0_i32_0 = arith.constant 0 : i32
    %c0_i32_1 = arith.constant 0 : i32
    %c0_i32_2 = arith.constant 0 : i32
    return %c0_i32, %c0_i32_0, %c0_i32_1 : i32, i32, i32
  }
  func.func @transform_9(%arg0: i32) -> (i32, i32) {
    %c0_i32 = arith.constant 0 : i32
    %c0_i32_0 = arith.constant 0 : i32
    %c0_i32_1 = arith.constant 0 : i32
    return %c0_i32, %c0_i32_0 : i32, i32
  }
  func.func @transform_10(%arg0: i32) -> (i32, i32) {
    %c0_i32 = arith.constant 0 : i32
    %c0_i32_0 = arith.constant 0 : i32
    %c0_i32_1 = arith.constant 0 : i32
    return %c0_i32, %c0_i32_0 : i32, i32
  }
  func.func @transform_11(%arg0: i32) -> (i32, i32) {
    %c0_i32 = arith.constant 0 : i32
    %c0_i32_0 = arith.constant 0 : i32
    %c0_i32_1 = arith.constant 0 : i32
    return %c0_i32, %c0_i32_0 : i32, i32
  }
  func.func @transform_12(%arg0: i32) -> (i32, i32, i32) {
    %c0_i32 = arith.constant 0 : i32
    %c0_i32_0 = arith.constant 0 : i32
    %c0_i32_1 = arith.constant 0 : i32
    return %arg0, %c0_i32, %c0_i32_0 : i32, i32, i32
  }
}

</mosaic_0001>

<llo_original>
// kernel: style_encoder_forward.1
$region0: #{style_encoder_forward.1}
  #allocation0 [shape = 'u32[]', space=smem, size = 0x4, offset = 0x4, fixed_abs, tag = 'smem constant byte address 0x4 - core index']
  #allocation1 [shape = 'u32[72,128]{1,0:T(1,128)}', space=vmem, size = 0x9000, scoped, tag = 'internal scratch']
  %s0 = inlined_call_operand.vmem [shape: f32[192,66], index: 0, kind: input, shape index: {}]
  %s1 = inlined_call_operand.vmem [shape: bf16[7,66,144], index: 1, kind: input, shape index: {}]
  %s2 = inlined_call_operand.vmem [shape: f32[96,1], index: 2, kind: input, shape index: {}]
  %s3 = inlined_call_operand.vmem [shape: f32[96,144], index: 3, kind: input, shape index: {}]
  %s4 = inlined_call_operand.vmem [shape: bf16[4,144,160], index: 4, kind: input, shape index: {}]
  %s5 = inlined_call_operand.vmem [shape: bf16[4,64,96], index: 5, kind: input, shape index: {}]
  %s6 = inlined_call_operand.vmem [shape: f32[64,160], index: 6, kind: input, shape index: {}]
  %s7 = inlined_call_operand.vmem [shape: bf16[4,160,128], index: 7, kind: input, shape index: {}]
  %s8 = inlined_call_operand.vmem [shape: bf16[4,32,64], index: 8, kind: input, shape index: {}]
  %s9 = inlined_call_operand.vmem [shape: f32[32,128], index: 9, kind: input, shape index: {}]
  %s10 = inlined_call_operand.vmem [shape: bf16[128,128], index: 10, kind: input, shape index: {}]
  %s11 = inlined_call_operand.vmem [shape: f32[1,128], index: 11, kind: input, shape index: {}]
  %s12 = inlined_call_operand.hbm [shape: f32[2,4,128], index: 12, kind: output, shape index: {}]
  %s13 = sld [smem:[#allocation0]]
  $region81: #{style_encoder_forward.1} parent=0
    _
  %s15 = ssub.s32 1, %s13
  %s16 = scalar_select 0, %s15, %s13
  $region1: #{style_encoder_forward.1} parent=0
    #allocation2 [shape = 'u8[4096]{0}', space=vmem, size = 0x1000, scoped, tag = 'output window, operand 0']
    #allocation3 [shape = 's32[2]{0}', space=sflag, size = 0x8, scoped, tag = 'scoped memory for style_encoder_forward.1']
    %17 = vsyncpa [#allocation3], 0
    %s18 = scalar_lea.sflag [#allocation3], 1
    %19 = vsyncpa %s18, 0
    loop: start=0, step=1, limit=4
    $region2: #{style_encoder_forward.1} parent=1 // loop_pre_header
      _
    $region3: #{style_encoder_forward.1} parent=1 // loop_header
      %s21 = sphi 0, %s25
      %p22 = scmp.ge.s32.totalorder %s21, 4
      %s31 = sphi 0, %s33
      %s34 = sphi 0, %s31
      %s35 = sphi 0, %s34
      %s51 = sphi 0, %s35
      %s55 = sphi 0, %s55
      %s57 = sphi 0, %s55
      %s58 = sphi 0, %s57
      %s72 = sphi 0, %s58
      %s76 = sphi 0, %s76
      %s78 = sphi 0, %s76
      %s79 = sphi 0, %s78
      %s93 = sphi 0, %s79
      %s97 = sphi 0, %s97
      %s99 = sphi 0, %s97
      %s100 = sphi 0, %s99
      %s114 = sphi 0, %s100
      %s118 = sphi 0, %s118
      %s120 = sphi 0, %s118
      %s121 = sphi 0, %s120
      %s135 = sphi 0, %s121
      %s139 = sphi 0, %s139
      %s141 = sphi 0, %s139
      %s142 = sphi 0, %s141
      %s156 = sphi 0, %s142
      %s160 = sphi 0, %s160
      %s162 = sphi 0, %s160
      %s163 = sphi 0, %s162
      %s177 = sphi 0, %s163
      %s181 = sphi 0, %s181
      %s183 = sphi 0, %s181
      %s184 = sphi 0, %s183
      %s198 = sphi 0, %s184
      %s202 = sphi 0, %s202
      %s204 = sphi 0, %s202
      %s205 = sphi 0, %s204
      %s219 = sphi 0, %s205
      %s223 = sphi 0, %s223
      %s225 = sphi 0, %s223
      %s226 = sphi 0, %s225
      %s240 = sphi 0, %s226
      %s244 = sphi 0, %s244
      %s246 = sphi 0, %s244
      %s247 = sphi 0, %s246
      %s261 = sphi 0, %s247
      %s265 = sphi 0, %s265
      %s267 = sphi 0, %s265
      %s268 = sphi 0, %s267
      %s282 = sphi 0, %s268
      %s288 = sphi 0, %s290
      %s291 = sphi 0, %s288
      %s292 = sphi 0, %s291
      %s308 = sphi 0, %s292
    $region4: #{style_encoder_forward.1} parent=1 // loop_header_branch
      %24 = sbr.rel (%p22) target = $region8
    $region5: #{style_encoder_forward.1} parent=1 // loop_body
      %s26 = ssub.s32 %s21, 1
      %s27 = ssub.s32 %s21, 2
      %s28 = sadd.s32 %s21, 1
      %s29 = ssub.s32 %s21, %s28
      %p30 = scmp.eq.s32.totalorder %s29, 0
      %s32 = sadd.s32 %s31, 1
      %s33 = scalar_select %p30, %s31, %s32
      %p36 = pneg %p30
      %p37 = scmp.eq.s32.totalorder %s21, 1
      %p38 = por %p36, %p37
      %p39 = scmp.ne.s32.totalorder %s31, %s34
      %p40 = scmp.eq.s32.totalorder %s21, 0
      %p41 = por %p39, %p40
      %p42 = scmp.ne.s32.totalorder %s31, %s34
      %p43 = scmp.eq.s32.totalorder %s26, 1
      %p44 = por %p42, %p43
      %p45 = scmp.ne.s32.totalorder %s34, %s35
      %p46 = scmp.eq.s32.totalorder %s26, 0
      %p47 = por %p45, %p46
      %p48 = scmp.ne.s32.totalorder %s34, %s35
      %p49 = scmp.eq.s32.totalorder %s27, 1
      %p50 = por %p48, %p49
      %p52 = scmp.ne.s32.totalorder %s35, %s51
      %p53 = scmp.eq.s32.totalorder %s27, 0
      %p54 = por %p52, %p53
      %s56 = sadd.s32 %s55, 1
      %p59 = scmp.eq.s32.totalorder %s21, 1
      %p60 = scmp.ne.s32.totalorder %s55, %s57
      %p61 = scmp.eq.s32.totalorder %s21, 0
      %p62 = por %p60, %p61
      %p63 = scmp.ne.s32.totalorder %s55, %s57
      %p64 = scmp.eq.s32.totalorder %s26, 1
      %p65 = por %p63, %p64
      %p66 = scmp.ne.s32.totalorder %s57, %s58
      %p67 = scmp.eq.s32.totalorder %s26, 0
      %p68 = por %p66, %p67
      %p69 = scmp.ne.s32.totalorder %s57, %s58
      %p70 = scmp.eq.s32.totalorder %s27, 1
      %p71 = por %p69, %p70
      %p73 = scmp.ne.s32.totalorder %s58, %s72
      %p74 = scmp.eq.s32.totalorder %s27, 0
      %p75 = por %p73, %p74
      %s77 = sadd.s32 %s76, 1
      %p80 = scmp.eq.s32.totalorder %s21, 1
      %p81 = scmp.ne.s32.totalorder %s76, %s78
      %p82 = scmp.eq.s32.totalorder %s21, 0
      %p83 = por %p81, %p82
      %p84 = scmp.ne.s32.totalorder %s76, %s78
      %p85 = scmp.eq.s32.totalorder %s26, 1
      %p86 = por %p84, %p85
      %p87 = scmp.ne.s32.totalorder %s78, %s79
      %p88 = scmp.eq.s32.totalorder %s26, 0
      %p89 = por %p87, %p88
      %p90 = scmp.ne.s32.totalorder %s78, %s79
      %p91 = scmp.eq.s32.totalorder %s27, 1
      %p92 = por %p90, %p91
      %p94 = scmp.ne.s32.totalorder %s79, %s93
      %p95 = scmp.eq.s32.totalorder %s27, 0
      %p96 = por %p94, %p95
      %s98 = sadd.s32 %s97, 1
      %p101 = scmp.eq.s32.totalorder %s21, 1
      %p102 = scmp.ne.s32.totalorder %s97, %s99
      %p103 = scmp.eq.s32.totalorder %s21, 0
      %p104 = por %p102, %p103
      %p105 = scmp.ne.s32.totalorder %s97, %s99
      %p106 = scmp.eq.s32.totalorder %s26, 1
      %p107 = por %p105, %p106
      %p108 = scmp.ne.s32.totalorder %s99, %s100
      %p109 = scmp.eq.s32.totalorder %s26, 0
      %p110 = por %p108, %p109
      %p111 = scmp.ne.s32.totalorder %s99, %s100
      %p112 = scmp.eq.s32.totalorder %s27, 1
      %p113 = por %p111, %p112
      %p115 = scmp.ne.s32.totalorder %s100, %s114
      %p116 = scmp.eq.s32.totalorder %s27, 0
      %p117 = por %p115, %p116
      %s119 = sadd.s32 %s118, 1
      %p122 = scmp.eq.s32.totalorder %s21, 1
      %p123 = scmp.ne.s32.totalorder %s118, %s120
      %p124 = scmp.eq.s32.totalorder %s21, 0
      %p125 = por %p123, %p124
      %p126 = scmp.ne.s32.totalorder %s118, %s120
      %p127 = scmp.eq.s32.totalorder %s26, 1
      %p128 = por %p126, %p127
      %p129 = scmp.ne.s32.totalorder %s120, %s121
      %p130 = scmp.eq.s32.totalorder %s26, 0
      %p131 = por %p129, %p130
      %p132 = scmp.ne.s32.totalorder %s120, %s121
      %p133 = scmp.eq.s32.totalorder %s27, 1
      %p134 = por %p132, %p133
      %p136 = scmp.ne.s32.totalorder %s121, %s135
      %p137 = scmp.eq.s32.totalorder %s27, 0
      %p138 = por %p136, %p137
      %s140 = sadd.s32 %s139, 1
      %p143 = scmp.eq.s32.totalorder %s21, 1
      %p144 = scmp.ne.s32.totalorder %s139, %s141
      %p145 = scmp.eq.s32.totalorder %s21, 0
      %p146 = por %p144, %p145
      %p147 = scmp.ne.s32.totalorder %s139, %s141
      %p148 = scmp.eq.s32.totalorder %s26, 1
      %p149 = por %p147, %p148
      %p150 = scmp.ne.s32.totalorder %s141, %s142
      %p151 = scmp.eq.s32.totalorder %s26, 0
      %p152 = por %p150, %p151
      %p153 = scmp.ne.s32.totalorder %s141, %s142
      %p154 = scmp.eq.s32.totalorder %s27, 1
      %p155 = por %p153, %p154
      %p157 = scmp.ne.s32.totalorder %s142, %s156
      %p158 = scmp.eq.s32.totalorder %s27, 0
      %p159 = por %p157, %p158
      %s161 = sadd.s32 %s160, 1
      %p164 = scmp.eq.s32.totalorder %s21, 1
      %p165 = scmp.ne.s32.totalorder %s160, %s162
      %p166 = scmp.eq.s32.totalorder %s21, 0
      %p167 = por %p165, %p166
      %p168 = scmp.ne.s32.totalorder %s160, %s162
      %p169 = scmp.eq.s32.totalorder %s26, 1
      %p170 = por %p168, %p169
      %p171 = scmp.ne.s32.totalorder %s162, %s163
      %p172 = scmp.eq.s32.totalorder %s26, 0
      %p173 = por %p171, %p172
      %p174 = scmp.ne.s32.totalorder %s162, %s163
      %p175 = scmp.eq.s32.totalorder %s27, 1
      %p176 = por %p174, %p175
      %p178 = scmp.ne.s32.totalorder %s163, %s177
      %p179 = scmp.eq.s32.totalorder %s27, 0
      %p180 = por %p178, %p179
      %s182 = sadd.s32 %s181, 1
      %p185 = scmp.eq.s32.totalorder %s21, 1
      %p186 = scmp.ne.s32.totalorder %s181, %s183
      %p187 = scmp.eq.s32.totalorder %s21, 0
      %p188 = por %p186, %p187
      %p189 = scmp.ne.s32.totalorder %s181, %s183
      %p190 = scmp.eq.s32.totalorder %s26, 1
      %p191 = por %p189, %p190
      %p192 = scmp.ne.s32.totalorder %s183, %s184
      %p193 = scmp.eq.s32.totalorder %s26, 0
      %p194 = por %p192, %p193
      %p195 = scmp.ne.s32.totalorder %s183, %s184
      %p196 = scmp.eq.s32.totalorder %s27, 1
      %p197 = por %p195, %p196
      %p199 = scmp.ne.s32.totalorder %s184, %s198
      %p200 = scmp.eq.s32.totalorder %s27, 0
      %p201 = por %p199, %p200
      %s203 = sadd.s32 %s202, 1
      %p206 = scmp.eq.s32.totalorder %s21, 1
      %p207 = scmp.ne.s32.totalorder %s202, %s204
      %p208 = scmp.eq.s32.totalorder %s21, 0
      %p209 = por %p207, %p208
      %p210 = scmp.ne.s32.totalorder %s202, %s204
      %p211 = scmp.eq.s32.totalorder %s26, 1
      %p212 = por %p210, %p211
      %p213 = scmp.ne.s32.totalorder %s204, %s205
      %p214 = scmp.eq.s32.totalorder %s26, 0
      %p215 = por %p213, %p214
      %p216 = scmp.ne.s32.totalorder %s204, %s205
      %p217 = scmp.eq.s32.totalorder %s27, 1
      %p218 = por %p216, %p217
      %p220 = scmp.ne.s32.totalorder %s205, %s219
      %p221 = scmp.eq.s32.totalorder %s27, 0
      %p222 = por %p220, %p221
      %s224 = sadd.s32 %s223, 1
      %p227 = scmp.eq.s32.totalorder %s21, 1
      %p228 = scmp.ne.s32.totalorder %s223, %s225
      %p229 = scmp.eq.s32.totalorder %s21, 0
      %p230 = por %p228, %p229
      %p231 = scmp.ne.s32.totalorder %s223, %s225
      %p232 = scmp.eq.s32.totalorder %s26, 1
      %p233 = por %p231, %p232
      %p234 = scmp.ne.s32.totalorder %s225, %s226
      %p235 = scmp.eq.s32.totalorder %s26, 0
      %p236 = por %p234, %p235
      %p237 = scmp.ne.s32.totalorder %s225, %s226
      %p238 = scmp.eq.s32.totalorder %s27, 1
      %p239 = por %p237, %p238
      %p241 = scmp.ne.s32.totalorder %s226, %s240
      %p242 = scmp.eq.s32.totalorder %s27, 0
      %p243 = por %p241, %p242
      %s245 = sadd.s32 %s244, 1
      %p248 = scmp.eq.s32.totalorder %s21, 1
      %p249 = scmp.ne.s32.totalorder %s244, %s246
      %p250 = scmp.eq.s32.totalorder %s21, 0
      %p251 = por %p249, %p250
      %p252 = scmp.ne.s32.totalorder %s244, %s246
      %p253 = scmp.eq.s32.totalorder %s26, 1
      %p254 = por %p252, %p253
      %p255 = scmp.ne.s32.totalorder %s246, %s247
      %p256 = scmp.eq.s32.totalorder %s26, 0
      %p257 = por %p255, %p256
      %p258 = scmp.ne.s32.totalorder %s246, %s247
      %p259 = scmp.eq.s32.totalorder %s27, 1
      %p260 = por %p258, %p259
      %p262 = scmp.ne.s32.totalorder %s247, %s261
      %p263 = scmp.eq.s32.totalorder %s27, 0
      %p264 = por %p262, %p263
      %s266 = sadd.s32 %s265, 1
      %p269 = scmp.eq.s32.totalorder %s21, 1
      %p270 = scmp.ne.s32.totalorder %s265, %s267
      %p271 = scmp.eq.s32.totalorder %s21, 0
      %p272 = por %p270, %p271
      %p273 = scmp.ne.s32.totalorder %s265, %s267
      %p274 = scmp.eq.s32.totalorder %s26, 1
      %p275 = por %p273, %p274
      %p276 = scmp.ne.s32.totalorder %s267, %s268
      %p277 = scmp.eq.s32.totalorder %s26, 0
      %p278 = por %p276, %p277
      %p279 = scmp.ne.s32.totalorder %s267, %s268
      %p280 = scmp.eq.s32.totalorder %s27, 1
      %p281 = por %p279, %p280
      %p283 = scmp.ne.s32.totalorder %s268, %s282
      %p284 = scmp.eq.s32.totalorder %s27, 0
      %p285 = por %p283, %p284
      %s286 = ssub.s32 %s21, %s28
      %p287 = scmp.eq.s32.totalorder %s286, 0
      %s289 = sadd.s32 %s288, 1
      %s290 = scalar_select %p287, %s288, %s289
      %p293 = pneg %p287
      %p294 = scmp.eq.s32.totalorder %s21, 1
      %p295 = por %p293, %p294
      %p296 = scmp.ne.s32.totalorder %s288, %s291
      %p297 = scmp.eq.s32.totalorder %s21, 0
      %p298 = por %p296, %p297
      %p299 = scmp.ne.s32.totalorder %s288, %s291
      %p300 = scmp.eq.s32.totalorder %s26, 1
      %p301 = por %p299, %p300
      %p302 = scmp.ne.s32.totalorder %s291, %s292
      %p303 = scmp.eq.s32.totalorder %s26, 0
      %p304 = por %p302, %p303
      %p305 = scmp.ne.s32.totalorder %s291, %s292
      %p306 = scmp.eq.s32.totalorder %s27, 1
      %p307 = por %p305, %p306
      %p309 = scmp.ne.s32.totalorder %s292, %s308
      %p310 = scmp.eq.s32.totalorder %s27, 0
      %p311 = por %p309, %p310
      %p312 = scmp.le.s32.totalorder 1, %s21
      %p313 = scmp.lt.s32.totalorder %s21, 3
      %p314 = pnand %p312, %p313
      %p315 = pneg %p314
      // Predicated region
      $region9: #{style_encoder_forward.1} parent=5 // pred_check
        _
      $region10: #{style_encoder_forward.1} parent=5 // pred_check_branch
        %317 = sbr.rel (%p314) target = $region12
      $region11: #{style_encoder_forward.1} parent=5 // pred_region
        %s318 = ssub.s32 %s21, 1
        // Predicated region
        $region13: #{style_encoder_forward.1} parent=11 // pred_check
          %p319 = pneg %p68
        $region14: #{style_encoder_forward.1} parent=11 // pred_check_branch
          %321 = sbr.rel (%p319) target = $region16
        $region15: #{style_encoder_forward.1} parent=11 // pred_region
          _
        $region16: #{style_encoder_forward.1} parent=11 // pred_fallthru
          _
        // Predicated region
        $region17: #{style_encoder_forward.1} parent=11 // pred_check
          %p322 = pneg %p89
        $region18: #{style_encoder_forward.1} parent=11 // pred_check_branch
          %324 = sbr.rel (%p322) target = $region20
        $region19: #{style_encoder_forward.1} parent=11 // pred_region
          _
        $region20: #{style_encoder_forward.1} parent=11 // pred_fallthru
          _
        // Predicated region
        $region21: #{style_encoder_forward.1} parent=11 // pred_check
          %p325 = pneg %p110
        $region22: #{style_encoder_forward.1} parent=11 // pred_check_branch
          %327 = sbr.rel (%p325) target = $region24
        $region23: #{style_encoder_forward.1} parent=11 // pred_region
          _
        $region24: #{style_encoder_forward.1} parent=11 // pred_fallthru
          _
        // Predicated region
        $region25: #{style_encoder_forward.1} parent=11 // pred_check
          %p328 = pneg %p131
        $region26: #{style_encoder_forward.1} parent=11 // pred_check_branch
          %330 = sbr.rel (%p328) target = $region28
        $region27: #{style_encoder_forward.1} parent=11 // pred_region
          _
        $region28: #{style_encoder_forward.1} parent=11 // pred_fallthru
          _
        // Predicated region
        $region29: #{style_encoder_forward.1} parent=11 // pred_check
          %p331 = pneg %p152
        $region30: #{style_encoder_forward.1} parent=11 // pred_check_branch
          %333 = sbr.rel (%p331) target = $region32
        $region31: #{style_encoder_forward.1} parent=11 // pred_region
          _
        $region32: #{style_encoder_forward.1} parent=11 // pred_fallthru
          _
        // Predicated region
        $region33: #{style_encoder_forward.1} parent=11 // pred_check
          %p334 = pneg %p173
        $region34: #{style_encoder_forward.1} parent=11 // pred_check_branch
          %336 = sbr.rel (%p334) target = $region36
        $region35: #{style_encoder_forward.1} parent=11 // pred_region
          _
        $region36: #{style_encoder_forward.1} parent=11 // pred_fallthru
          _
        // Predicated region
        $region37: #{style_encoder_forward.1} parent=11 // pred_check
          %p337 = pneg %p194
        $region38: #{style_encoder_forward.1} parent=11 // pred_check_branch
          %339 = sbr.rel (%p337) target = $region40
        $region39: #{style_encoder_forward.1} parent=11 // pred_region
          _
        $region40: #{style_encoder_forward.1} parent=11 // pred_fallthru
          _
        // Predicated region
        $region41: #{style_encoder_forward.1} parent=11 // pred_check
          %p340 = pneg %p215
        $region42: #{style_encoder_forward.1} parent=11 // pred_check_branch
          %342 = sbr.rel (%p340) target = $region44
        $region43: #{style_encoder_forward.1} parent=11 // pred_region
          _
        $region44: #{style_encoder_forward.1} parent=11 // pred_fallthru
          _
        // Predicated region
        $region45: #{style_encoder_forward.1} parent=11 // pred_check
          %p343 = pneg %p236
        $region46: #{style_encoder_forward.1} parent=11 // pred_check_branch
          %345 = sbr.rel (%p343) target = $region48
        $region47: #{style_encoder_forward.1} parent=11 // pred_region
          _
        $region48: #{style_encoder_forward.1} parent=11 // pred_fallthru
          _
        // Predicated region
        $region49: #{style_encoder_forward.1} parent=11 // pred_check
          %p346 = pneg %p257
        $region50: #{style_encoder_forward.1} parent=11 // pred_check_branch
          %348 = sbr.rel (%p346) target = $region52
        $region51: #{style_encoder_forward.1} parent=11 // pred_region
          _
        $region52: #{style_encoder_forward.1} parent=11 // pred_fallthru
          _
        // Predicated region
        $region53: #{style_encoder_forward.1} parent=11 // pred_check
          %p349 = pneg %p278
        $region54: #{style_encoder_forward.1} parent=11 // pred_check_branch
          %351 = sbr.rel (%p349) target = $region56
        $region55: #{style_encoder_forward.1} parent=11 // pred_region
          _
        $region56: #{style_encoder_forward.1} parent=11 // pred_fallthru
          _
      $region12: #{style_encoder_forward.1} parent=5 // pred_fallthru
        _
      %p352 = scmp.lt.s32.totalorder %s21, 2
      // Predicated region
      $region57: #{style_encoder_forward.1} parent=5 // pred_check
        %p353 = pneg %p352
      $region58: #{style_encoder_forward.1} parent=5 // pred_check_branch
        %355 = sbr.rel (%p353) target = $region60
      $region59: #{style_encoder_forward.1} parent=5 // pred_region
        // Predicated region
        $region61: #{style_encoder_forward.1} parent=59 // pred_check
          %p356 = pneg %p41
        $region62: #{style_encoder_forward.1} parent=59 // pred_check_branch
          %358 = sbr.rel (%p356) target = $region64
        $region63: #{style_encoder_forward.1} parent=59 // pred_region
          %s359 = smul.u32 12, %s21
          %p360 = scmp.lt.s32.totalorder %s359, 23
          %s361 = scalar_select %p360, %s359, 23
          %s362 = smul.addr %s361, 8
          %s363 = scalar_lea.vmem %s0, %s362
          %s364 = smul.u32 12, %s21
        $region64: #{style_encoder_forward.1} parent=59 // pred_fallthru
          _
      $region60: #{style_encoder_forward.1} parent=5 // pred_fallthru
        _
      %p365 = scmp.le.s32.totalorder 1, %s21
      %p366 = scmp.lt.s32.totalorder %s21, 3
      %p367 = pnand %p365, %p366
      %p368 = pneg %p367
      // Predicated region
      $region65: #{style_encoder_forward.1} parent=5 // pred_check
        _
      $region66: #{style_encoder_forward.1} parent=5 // pred_check_branch
        %370 = sbr.rel (%p367) target = $region68
      $region67: #{style_encoder_forward.1} parent=5 // pred_region
        %s371 = ssub.s32 %s21, 1
        %s372 = smul.u32 12, %s26
        %p373 = scmp.lt.s32.totalorder %s372, 23
        %s374 = scalar_select %p373, %s372, 23
        %s375 = smul.addr %s374, 8
        %s376 = scalar_lea.vmem %s0, %s375
        %p377 = pneg %p47
        %p378 = pneg %p44
        %p379 = pneg %p68
        %p380 = pneg %p65
        %p381 = pneg %p89
        %p382 = pneg %p86
        %p383 = pneg %p110
        %p384 = pneg %p107
        %p385 = pneg %p131
        %p386 = pneg %p128
        %p387 = pneg %p152
        %p388 = pneg %p149
        %p389 = pneg %p173
        %p390 = pneg %p170
        %p391 = pneg %p194
        %p392 = pneg %p191
        %p393 = pneg %p215
        %p394 = pneg %p212
        %p395 = pneg %p236
        %p396 = pneg %p233
        %p397 = pneg %p257
        %p398 = pneg %p254
        %p399 = pneg %p278
        %p400 = pneg %p275
        %p401 = pneg %p304
        %p402 = pneg %p301
        %s403 = sand.u32 %s291, 1
        %s404 = scalar_lea.sflag [#allocation3], %s403
        %s405 = sand.u32 %s291, 1
        %s406 = smul.addr %s405, 4
        %s407 = scalar_lea.vmem [#allocation2], %s406
        %s408 = smul.u32 12, %s26
        %p409 = scmp.lt.s32.totalorder %s408, 23
        %s410 = scalar_select %p409, %s408, 23
        %s411 = smul.addr %s410, 8
        %s412 = scalar_lea.vmem %s0, %s411
        %s413 = smul.u32 12, %s26
        %v415 = vld [vmem:[%s412] sm:$0xff]
        %v416 = vld [vmem:[%s412 + $0x8] sm:$0xff]
        %v417 = vld [vmem:[%s412 + $0x10] sm:$0xff]
        %v418 = vld [vmem:[%s412 + $0x18] sm:$0xff]
        %v419 = vld [vmem:[%s412 + $0x20] sm:$0xff]
        %v420 = vld [vmem:[%s412 + $0x28] sm:$0xff]
        %v421 = vld [vmem:[%s412 + $0x30] sm:$0xff]
        %v422 = vld [vmem:[%s412 + $0x38] sm:$0xff]
        %v423 = vld [vmem:[%s412 + $0x40] sm:$0xff]
        %v424 = vld [vmem:[%s412 + $0x48] sm:$0xff]
        %v425 = vld [vmem:[%s412 + $0x50] sm:$0xff]
        %v426 = vld [vmem:[%s412 + $0x58] sm:$0xff]
        %v427 = vld [vmem:[%s3] sm:$0xff]
        %v428 = vld [vmem:[%s3 + $0x8] sm:$0xff]
        %v429 = vld [vmem:[%s3 + $0x10] sm:$0xff]
        %v430 = vld [vmem:[%s3 + $0x18] sm:$0xff]
        %v431 = vld [vmem:[%s3 + $0x20] sm:$0xff]
        %v432 = vld [vmem:[%s3 + $0x28] sm:$0xff]
        %v433 = vld [vmem:[%s3 + $0x30] sm:$0xff]
        %v434 = vld [vmem:[%s3 + $0x38] sm:$0xff]
        %v435 = vld [vmem:[%s3 + $0x40] sm:$0xff]
        %v436 = vld [vmem:[%s3 + $0x48] sm:$0xff]
        %v437 = vld [vmem:[%s3 + $0x50] sm:$0xff]
        %v438 = vld [vmem:[%s3 + $0x58] sm:$0xff]
        %v439 = vld [vmem:[%s3 + $0x60] sm:$0xff]
        %v440 = vld [vmem:[%s3 + $0x68] sm:$0xff]
        %v441 = vld [vmem:[%s3 + $0x70] sm:$0xff]
        %v442 = vld [vmem:[%s3 + $0x78] sm:$0xff]
        %v443 = vld [vmem:[%s3 + $0x80] sm:$0xff]
        %v444 = vld [vmem:[%s3 + $0x88] sm:$0xff]
        %v445 = vld [vmem:[%s3 + $0x90] sm:$0xff]
        %v446 = vld [vmem:[%s3 + $0x98] sm:$0xff]
        %v447 = vld [vmem:[%s3 + $0xa0] sm:$0xff]
        %v448 = vld [vmem:[%s3 + $0xa8] sm:$0xff]
        %v449 = vld [vmem:[%s3 + $0xb0] sm:$0xff]
        %v450 = vld [vmem:[%s3 + $0xb8] sm:$0xff]
        %v451 = vrot.slane %v415, 7
        %v452 = vrot.slane %v416, 7
        %v453 = vrot.slane %v417, 7
        %v454 = vrot.slane %v418, 7
        %v455 = vrot.slane %v419, 7
        %v456 = vrot.slane %v420, 7
        %v457 = vrot.slane %v421, 7
        %v458 = vrot.slane %v422, 7
        %v459 = vrot.slane %v423, 7
        %v460 = vrot.slane %v424, 7
        %v461 = vrot.slane %v425, 7
        %v462 = vrot.slane %v426, 7
        %v463 = vlaneseq
        %v464 = vshrl.u32 %v463, 7
        %vm465 = vcmp.lt.s32.totalorder %v464, 1
        %v466 = vsel %vm465, %v461, %v462
        %v467 = vsel %vm465, %v460, %v461
        %v468 = vsel %vm465, %v459, %v460
        %v469 = vsel %vm465, %v458, %v459
        %v470 = vsel %vm465, %v457, %v458
        %v471 = vsel %vm465, %v456, %v457
        %v472 = vsel %vm465, %v455, %v456
        %v473 = vsel %vm465, %v454, %v455
        %v474 = vsel %vm465, %v453, %v454
        %v475 = vsel %vm465, %v452, %v453
        %v476 = vsel %vm465, %v451, %v452
        %v477 = vsel %vm465, %v462, %v451
        %v478 = vpack.c.bf16 %v476, %v477
        %v479 = vpack.c.bf16 %v474, %v475
        %v480 = vpack.c.bf16 %v472, %v473
        %v481 = vpack.c.bf16 %v470, %v471
        %v482 = vpack.c.bf16 %v468, %v469
        %v483 = vpack.c.bf16 %v466, %v467
        %v484 = vld [vmem:[%s1] sm:$0xff]
        %v485 = vld [vmem:[%s1 + $0x8] sm:$0xff]
        %v486 = vld [vmem:[%s1 + $0x10] sm:$0xff]
        %v487 = vld [vmem:[%s1 + $0x18] sm:$0xff]
        %v488 = vld [vmem:[%s1 + $0x20] sm:$0xff]
        %v489 = vld [vmem:[%s1 + $0x28] sm:$0xff]
        %v490 = vld [vmem:[%s1 + $0x30] sm:$0xff]
        %v491 = vld [vmem:[%s1 + $0x38] sm:$0xff]
        %v492 = vld [vmem:[%s1 + $0x40] sm:$0x11]
        %v502 = vunpack.c.l.b16 %v484
        %v503 = vunpack.c.h.b16 %v484
        %v504 = vunpack.c.l.b16 %v485
        %v505 = vunpack.c.h.b16 %v485
        %v506 = vunpack.c.l.b16 %v486
        %v507 = vunpack.c.h.b16 %v486
        %v508 = vunpack.c.l.b16 %v487
        %v509 = vunpack.c.h.b16 %v487
        %v510 = vunpack.c.l.b16 %v488
        %v511 = vunpack.c.h.b16 %v488
        %v512 = vunpack.c.l.b16 %v489
        %v513 = vunpack.c.h.b16 %v489
        %v514 = vunpack.c.l.b16 %v490
        %v515 = vunpack.c.h.b16 %v490
        %v516 = vunpack.c.l.b16 %v491
        %v517 = vunpack.c.h.b16 %v491
        %v518 = vunpack.c.l.b16 %v492
        %v519 = vunpack.c.h.b16 %v492
        %v520 = vpack.c.b16 %v504, %v502
        %v521 = vpack.c.b16 %v505, %v503
        %v522 = vpack.c.b16 %v508, %v506
        %v523 = vpack.c.b16 %v509, %v507
        %v524 = vpack.c.b16 %v512, %v510
        %v525 = vpack.c.b16 %v513, %v511
        %v526 = vpack.c.b16 %v516, %v514
        %v527 = vpack.c.b16 %v517, %v515
        %v528 = vpack.c.b16 %v518, %v518
        %v529 = vpack.c.b16 %v519, %v519
        %vm538 = vcmask 539648
        %v540 = vsel %vm538, %v478, 0
        %v543 = vsel %vm538, %v479, 0
        %v546 = vsel %vm538, %v480, 0
        %v549 = vsel %vm538, %v481, 0
        %v552 = vsel %vm538, %v482, 0
        %v555 = vsel %vm538, %v483, 0
        %vm557 = vcmask 1040384
        %v559 = vsel %vm557, %v528, 0
        %v562 = vsel %vm557, %v529, 0
        %564 = vmatpush.bf16.msra.mxu0 0
        %565 = vmatpush.bf16.msra.mxu0 0
        %566 = vmatpush.bf16.msra.mxu0 0
        %567 = vmatpush.bf16.msra.mxu0 %v559
        %568 = vmatpush.bf16.msra.mxu0 %v526
        %569 = vmatpush.bf16.msra.mxu0 %v524
        %570 = vmatpush.bf16.msra.mxu0 %v522
        %571 = vmatpush.bf16.msra.mxu0 %v520
        %572 = vmatmul.bf16.gmra.mxu0 %v540
        %v573 = vpop.f32.mrf.mxu0
        %v574 = vadd.f32 0.0, %v573
        %v575 = vpop.f32.mrf.mxu0
        %v576 = vadd.f32 0.0, %v575
        %577 = vmatmul.bf16.gmra.mxu0 %v543
        %v578 = vpop.f32.mrf.mxu0
        %v579 = vadd.f32 0.0, %v578
        %v580 = vpop.f32.mrf.mxu0
        %v581 = vadd.f32 0.0, %v580
        %582 = vmatmul.bf16.gmra.mxu0 %v546
        %v583 = vpop.f32.mrf.mxu0
        %v584 = vadd.f32 0.0, %v583
        %v585 = vpop.f32.mrf.mxu0
        %v586 = vadd.f32 0.0, %v585
        %587 = vmatmul.bf16.gmra.mxu0 %v549
        %v588 = vpop.f32.mrf.mxu0
        %v589 = vadd.f32 0.0, %v588
        %v590 = vpop.f32.mrf.mxu0
        %v591 = vadd.f32 0.0, %v590
        %592 = vmatmul.bf16.gmra.mxu0 %v552
        %v593 = vpop.f32.mrf.mxu0
        %v594 = vadd.f32 0.0, %v593
        %v595 = vpop.f32.mrf.mxu0
        %v596 = vadd.f32 0.0, %v595
        %597 = vmatmul.bf16.gmra.mxu0 %v555
        %v598 = vpop.f32.mrf.mxu0
        %v599 = vadd.f32 0.0, %v598
        %v600 = vpop.f32.mrf.mxu0
        %v601 = vadd.f32 0.0, %v600
        %602 = vdwg.mxu0
        %603 = vmatpush.bf16.msra.mxu0 0
        %604 = vmatpush.bf16.msra.mxu0 0
        %605 = vmatpush.bf16.msra.mxu0 0
        %606 = vmatpush.bf16.msra.mxu0 %v562
        %607 = vmatpush.bf16.msra.mxu0 %v527
        %608 = vmatpush.bf16.msra.mxu0 %v525
        %609 = vmatpush.bf16.msra.mxu0 %v523
        %610 = vmatpush.bf16.msra.mxu0 %v521
        %611 = vmatmul.bf16.gmra.mxu0 %v540
        %v612 = vpop.f32.mrf.mxu0
        %v613 = vadd.f32 0.0, %v612
        %v614 = vpop.f32.mrf.mxu0
        %v615 = vadd.f32 0.0, %v614
        %616 = vmatmul.bf16.gmra.mxu0 %v543
        %v617 = vpop.f32.mrf.mxu0
        %v618 = vadd.f32 0.0, %v617
        %v619 = vpop.f32.mrf.mxu0
        %v620 = vadd.f32 0.0, %v619
        %621 = vmatmul.bf16.gmra.mxu0 %v546
        %v622 = vpop.f32.mrf.mxu0
        %v623 = vadd.f32 0.0, %v622
        %v624 = vpop.f32.mrf.mxu0
        %v625 = vadd.f32 0.0, %v624
        %626 = vmatmul.bf16.gmra.mxu0 %v549
        %v627 = vpop.f32.mrf.mxu0
        %v628 = vadd.f32 0.0, %v627
        %v629 = vpop.f32.mrf.mxu0
        %v630 = vadd.f32 0.0, %v629
        %631 = vmatmul.bf16.gmra.mxu0 %v552
        %v632 = vpop.f32.mrf.mxu0
        %v633 = vadd.f32 0.0, %v632
        %v634 = vpop.f32.mrf.mxu0
        %v635 = vadd.f32 0.0, %v634
        %636 = vmatmul.bf16.gmra.mxu0 %v555
        %v637 = vpop.f32.mrf.mxu0
        %v638 = vadd.f32 0.0, %v637
        %v639 = vpop.f32.mrf.mxu0
        %v640 = vadd.f32 0.0, %v639
        %641 = vdwg.mxu0
        %v642 = vadd.f32 %v427, %v574
        %v643 = vadd.f32 %v428, %v613
        %v644 = vadd.f32 %v429, %v576
        %v645 = vadd.f32 %v430, %v615
        %v646 = vadd.f32 %v431, %v579
        %v647 = vadd.f32 %v432, %v618
        %v648 = vadd.f32 %v433, %v581
        %v649 = vadd.f32 %v434, %v620
        %v650 = vadd.f32 %v435, %v584
        %v651 = vadd.f32 %v436, %v623
        %v652 = vadd.f32 %v437, %v586
        %v653 = vadd.f32 %v438, %v625
        %v654 = vadd.f32 %v439, %v589
        %v655 = vadd.f32 %v440, %v628
        %v656 = vadd.f32 %v441, %v591
        %v657 = vadd.f32 %v442, %v630
        %v658 = vadd.f32 %v443, %v594
        %v659 = vadd.f32 %v444, %v633
        %v660 = vadd.f32 %v445, %v596
        %v661 = vadd.f32 %v446, %v635
        %v662 = vadd.f32 %v447, %v599
        %v663 = vadd.f32 %v448, %v638
        %v664 = vadd.f32 %v449, %v601
        %v665 = vadd.f32 %v450, %v640
        %v666 = vpack.c.bf16 %v416, %v415
        %v667 = vpack.c.bf16 %v418, %v417
        %v668 = vpack.c.bf16 %v420, %v419
        %v669 = vpack.c.bf16 %v422, %v421
        %v670 = vpack.c.bf16 %v424, %v423
        %v671 = vpack.c.bf16 %v426, %v425
        %s672 = scalar_lea.vmem %s1, 72
        %v673 = vld [vmem:[%s672] sm:$0xff]
        %v674 = vld [vmem:[%s672 + $0x8] sm:$0xff]
        %v675 = vld [vmem:[%s672 + $0x10] sm:$0xff]
        %v676 = vld [vmem:[%s672 + $0x18] sm:$0xff]
        %v677 = vld [vmem:[%s672 + $0x20] sm:$0xff]
        %v678 = vld [vmem:[%s672 + $0x28] sm:$0xff]
        %v679 = vld [vmem:[%s672 + $0x30] sm:$0xff]
        %v680 = vld [vmem:[%s672 + $0x38] sm:$0xff]
        %v681 = vld [vmem:[%s672 + $0x40] sm:$0x11]
        %v691 = vunpack.c.l.b16 %v673
        %v692 = vunpack.c.h.b16 %v673
        %v693 = vunpack.c.l.b16 %v674
        %v694 = vunpack.c.h.b16 %v674
        %v695 = vunpack.c.l.b16 %v675
        %v696 = vunpack.c.h.b16 %v675
        %v697 = vunpack.c.l.b16 %v676
        %v698 = vunpack.c.h.b16 %v676
        %v699 = vunpack.c.l.b16 %v677
        %v700 = vunpack.c.h.b16 %v677
        %v701 = vunpack.c.l.b16 %v678
        %v702 = vunpack.c.h.b16 %v678
        %v703 = vunpack.c.l.b16 %v679
        %v704 = vunpack.c.h.b16 %v679
        %v705 = vunpack.c.l.b16 %v680
        %v706 = vunpack.c.h.b16 %v680
        %v707 = vunpack.c.l.b16 %v681
        %v708 = vunpack.c.h.b16 %v681
        %v709 = vpack.c.b16 %v693, %v691
        %v710 = vpack.c.b16 %v694, %v692
        %v711 = vpack.c.b16 %v697, %v695
        %v712 = vpack.c.b16 %v698, %v696
        %v713 = vpack.c.b16 %v701, %v699
        %v714 = vpack.c.b16 %v702, %v700
        %v715 = vpack.c.b16 %v705, %v703
        %v716 = vpack.c.b16 %v706, %v704
        %v717 = vpack.c.b16 %v707, %v707
        %v718 = vpack.c.b16 %v708, %v708
        %v728 = vsel %vm538, %v666, 0
        %v731 = vsel %vm538, %v667, 0
        %v734 = vsel %vm538, %v668, 0
        %v737 = vsel %vm538, %v669, 0
        %v740 = vsel %vm538, %v670, 0
        %v743 = vsel %vm538, %v671, 0
        %v746 = vsel %vm557, %v717, 0
        %v749 = vsel %vm557, %v718, 0
        %751 = vmatpush.bf16.msra.mxu0 0
        %752 = vmatpush.bf16.msra.mxu0 0
        %753 = vmatpush.bf16.msra.mxu0 0
        %754 = vmatpush.bf16.msra.mxu0 %v746
        %755 = vmatpush.bf16.msra.mxu0 %v715
        %756 = vmatpush.bf16.msra.mxu0 %v713
        %757 = vmatpush.bf16.msra.mxu0 %v711
        %758 = vmatpush.bf16.msra.mxu0 %v709
        %759 = vmatmul.bf16.gmra.mxu0 %v728
        %v760 = vpop.f32.mrf.mxu0
        %v761 = vadd.f32 0.0, %v760
        %v762 = vpop.f32.mrf.mxu0
        %v763 = vadd.f32 0.0, %v762
        %764 = vmatmul.bf16.gmra.mxu0 %v731
        %v765 = vpop.f32.mrf.mxu0
        %v766 = vadd.f32 0.0, %v765
        %v767 = vpop.f32.mrf.mxu0
        %v768 = vadd.f32 0.0, %v767
        %769 = vmatmul.bf16.gmra.mxu0 %v734
        %v770 = vpop.f32.mrf.mxu0
        %v771 = vadd.f32 0.0, %v770
        %v772 = vpop.f32.mrf.mxu0
        %v773 = vadd.f32 0.0, %v772
        %774 = vmatmul.bf16.gmra.mxu0 %v737
        %v775 = vpop.f32.mrf.mxu0
        %v776 = vadd.f32 0.0, %v775
        %v777 = vpop.f32.mrf.mxu0
        %v778 = vadd.f32 0.0, %v777
        %779 = vmatmul.bf16.gmra.mxu0 %v740
        %v780 = vpop.f32.mrf.mxu0
        %v781 = vadd.f32 0.0, %v780
        %v782 = vpop.f32.mrf.mxu0
        %v783 = vadd.f32 0.0, %v782
        %784 = vmatmul.bf16.gmra.mxu0 %v743
        %v785 = vpop.f32.mrf.mxu0
        %v786 = vadd.f32 0.0, %v785
        %v787 = vpop.f32.mrf.mxu0
        %v788 = vadd.f32 0.0, %v787
        %789 = vdwg.mxu0
        %790 = vmatpush.bf16.msra.mxu0 0
        %791 = vmatpush.bf16.msra.mxu0 0
        %792 = vmatpush.bf16.msra.mxu0 0
        %793 = vmatpush.bf16.msra.mxu0 %v749
        %794 = vmatpush.bf16.msra.mxu0 %v716
        %795 = vmatpush.bf16.msra.mxu0 %v714
        %796 = vmatpush.bf16.msra.mxu0 %v712
        %797 = vmatpush.bf16.msra.mxu0 %v710
        %798 = vmatmul.bf16.gmra.mxu0 %v728
        %v799 = vpop.f32.mrf.mxu0
        %v800 = vadd.f32 0.0, %v799
        %v801 = vpop.f32.mrf.mxu0
        %v802 = vadd.f32 0.0, %v801
        %803 = vmatmul.bf16.gmra.mxu0 %v731
        %v804 = vpop.f32.mrf.mxu0
        %v805 = vadd.f32 0.0, %v804
        %v806 = vpop.f32.mrf.mxu0
        %v807 = vadd.f32 0.0, %v806
        %808 = vmatmul.bf16.gmra.mxu0 %v734
        %v809 = vpop.f32.mrf.mxu0
        %v810 = vadd.f32 0.0, %v809
        %v811 = vpop.f32.mrf.mxu0
        %v812 = vadd.f32 0.0, %v811
        %813 = vmatmul.bf16.gmra.mxu0 %v737
        %v814 = vpop.f32.mrf.mxu0
        %v815 = vadd.f32 0.0, %v814
        %v816 = vpop.f32.mrf.mxu0
        %v817 = vadd.f32 0.0, %v816
        %818 = vmatmul.bf16.gmra.mxu0 %v740
        %v819 = vpop.f32.mrf.mxu0
        %v820 = vadd.f32 0.0, %v819
        %v821 = vpop.f32.mrf.mxu0
        %v822 = vadd.f32 0.0, %v821
        %823 = vmatmul.bf16.gmra.mxu0 %v743
        %v824 = vpop.f32.mrf.mxu0
        %v825 = vadd.f32 0.0, %v824
        %v826 = vpop.f32.mrf.mxu0
        %v827 = vadd.f32 0.0, %v826
        %828 = vdwg.mxu0
        %v829 = vadd.f32 %v642, %v761
        %v830 = vadd.f32 %v643, %v800
        %v831 = vadd.f32 %v644, %v763
        %v832 = vadd.f32 %v645, %v802
        %v833 = vadd.f32 %v646, %v766
        %v834 = vadd.f32 %v647, %v805
        %v835 = vadd.f32 %v648, %v768
        %v836 = vadd.f32 %v649, %v807
        %v837 = vadd.f32 %v650, %v771
        %v838 = vadd.f32 %v651, %v810
        %v839 = vadd.f32 %v652, %v773
        %v840 = vadd.f32 %v653, %v812
        %v841 = vadd.f32 %v654, %v776
        %v842 = vadd.f32 %v655, %v815
        %v843 = vadd.f32 %v656, %v778
        %v844 = vadd.f32 %v657, %v817
        %v845 = vadd.f32 %v658, %v781
        %v846 = vadd.f32 %v659, %v820
        %v847 = vadd.f32 %v660, %v783
        %v848 = vadd.f32 %v661, %v822
        %v849 = vadd.f32 %v662, %v786
        %v850 = vadd.f32 %v663, %v825
        %v851 = vadd.f32 %v664, %v788
        %v852 = vadd.f32 %v665, %v827
        %v853 = vrot.slane %v415, 1
        %v854 = vrot.slane %v416, 1
        %v855 = vrot.slane %v417, 1
        %v856 = vrot.slane %v418, 1
        %v857 = vrot.slane %v419, 1
        %v858 = vrot.slane %v420, 1
        %v859 = vrot.slane %v421, 1
        %v860 = vrot.slane %v422, 1
        %v861 = vrot.slane %v423, 1
        %v862 = vrot.slane %v424, 1
        %v863 = vrot.slane %v425, 1
        %v864 = vrot.slane %v426, 1
        %vm865 = vcmp.lt.s32.totalorder %v464, 7
        %v866 = vsel %vm865, %v863, %v864
        %v867 = vsel %vm865, %v862, %v863
        %v868 = vsel %vm865, %v861, %v862
        %v869 = vsel %vm865, %v860, %v861
        %v870 = vsel %vm865, %v859, %v860
        %v871 = vsel %vm865, %v858, %v859
        %v872 = vsel %vm865, %v857, %v858
        %v873 = vsel %vm865, %v856, %v857
        %v874 = vsel %vm865, %v855, %v856
        %v875 = vsel %vm865, %v854, %v855
        %v876 = vsel %vm865, %v853, %v854
        %v877 = vsel %vm865, %v864, %v853
        %v878 = vpack.c.bf16 %v875, %v876
        %v879 = vpack.c.bf16 %v873, %v874
        %v880 = vpack.c.bf16 %v871, %v872
        %v881 = vpack.c.bf16 %v869, %v870
        %v882 = vpack.c.bf16 %v867, %v868
        %v883 = vpack.c.bf16 %v877, %v866
        %s884 = scalar_lea.vmem %s1, 144
        %v885 = vld [vmem:[%s884] sm:$0xff]
        %v886 = vld [vmem:[%s884 + $0x8] sm:$0xff]
        %v887 = vld [vmem:[%s884 + $0x10] sm:$0xff]
        %v888 = vld [vmem:[%s884 + $0x18] sm:$0xff]
        %v889 = vld [vmem:[%s884 + $0x20] sm:$0xff]
        %v890 = vld [vmem:[%s884 + $0x28] sm:$0xff]
        %v891 = vld [vmem:[%s884 + $0x30] sm:$0xff]
        %v892 = vld [vmem:[%s884 + $0x38] sm:$0xff]
        %v893 = vld [vmem:[%s884 + $0x40] sm:$0x11]
        %v903 = vunpack.c.l.b16 %v885
        %v904 = vunpack.c.h.b16 %v885
        %v905 = vunpack.c.l.b16 %v886
        %v906 = vunpack.c.h.b16 %v886
        %v907 = vunpack.c.l.b16 %v887
        %v908 = vunpack.c.h.b16 %v887
        %v909 = vunpack.c.l.b16 %v888
        %v910 = vunpack.c.h.b16 %v888
        %v911 = vunpack.c.l.b16 %v889
        %v912 = vunpack.c.h.b16 %v889
        %v913 = vunpack.c.l.b16 %v890
        %v914 = vunpack.c.h.b16 %v890
        %v915 = vunpack.c.l.b16 %v891
        %v916 = vunpack.c.h.b16 %v891
        %v917 = vunpack.c.l.b16 %v892
        %v918 = vunpack.c.h.b16 %v892
        %v919 = vunpack.c.l.b16 %v893
        %v920 = vunpack.c.h.b16 %v893
        %v921 = vpack.c.b16 %v905, %v903
        %v922 = vpack.c.b16 %v906, %v904
        %v923 = vpack.c.b16 %v909, %v907
        %v924 = vpack.c.b16 %v910, %v908
        %v925 = vpack.c.b16 %v913, %v911
        %v926 = vpack.c.b16 %v914, %v912
        %v927 = vpack.c.b16 %v917, %v915
        %v928 = vpack.c.b16 %v918, %v916
        %v929 = vpack.c.b16 %v919, %v919
        %v930 = vpack.c.b16 %v920, %v920
        %v940 = vsel %vm538, %v878, 0
        %v943 = vsel %vm538, %v879, 0
        %v946 = vsel %vm538, %v880, 0
        %v949 = vsel %vm538, %v881, 0
        %v952 = vsel %vm538, %v882, 0
        %v955 = vsel %vm538, %v883, 0
        %v958 = vsel %vm557, %v929, 0
        %v961 = vsel %vm557, %v930, 0
        %963 = vmatpush.bf16.msra.mxu0 0
        %964 = vmatpush.bf16.msra.mxu0 0
        %965 = vmatpush.bf16.msra.mxu0 0
        %966 = vmatpush.bf16.msra.mxu0 %v958
        %967 = vmatpush.bf16.msra.mxu0 %v927
        %968 = vmatpush.bf16.msra.mxu0 %v925
        %969 = vmatpush.bf16.msra.mxu0 %v923
        %970 = vmatpush.bf16.msra.mxu0 %v921
        %971 = vmatmul.bf16.gmra.mxu0 %v940
        %v972 = vpop.f32.mrf.mxu0
        %v973 = vadd.f32 0.0, %v972
        %v974 = vpop.f32.mrf.mxu0
        %v975 = vadd.f32 0.0, %v974
        %976 = vmatmul.bf16.gmra.mxu0 %v943
        %v977 = vpop.f32.mrf.mxu0
        %v978 = vadd.f32 0.0, %v977
        %v979 = vpop.f32.mrf.mxu0
        %v980 = vadd.f32 0.0, %v979
        %981 = vmatmul.bf16.gmra.mxu0 %v946
        %v982 = vpop.f32.mrf.mxu0
        %v983 = vadd.f32 0.0, %v982
        %v984 = vpop.f32.mrf.mxu0
        %v985 = vadd.f32 0.0, %v984
        %986 = vmatmul.bf16.gmra.mxu0 %v949
        %v987 = vpop.f32.mrf.mxu0
        %v988 = vadd.f32 0.0, %v987
        %v989 = vpop.f32.mrf.mxu0
        %v990 = vadd.f32 0.0, %v989
        %991 = vmatmul.bf16.gmra.mxu0 %v952
        %v992 = vpop.f32.mrf.mxu0
        %v993 = vadd.f32 0.0, %v992
        %v994 = vpop.f32.mrf.mxu0
        %v995 = vadd.f32 0.0, %v994
        %996 = vmatmul.bf16.gmra.mxu0 %v955
        %v997 = vpop.f32.mrf.mxu0
        %v998 = vadd.f32 0.0, %v997
        %v999 = vpop.f32.mrf.mxu0
        %v1000 = vadd.f32 0.0, %v999
        %1001 = vdwg.mxu0
        %1002 = vmatpush.bf16.msra.mxu0 0
        %1003 = vmatpush.bf16.msra.mxu0 0
        %1004 = vmatpush.bf16.msra.mxu0 0
        %1005 = vmatpush.bf16.msra.mxu0 %v961
        %1006 = vmatpush.bf16.msra.mxu0 %v928
        %1007 = vmatpush.bf16.msra.mxu0 %v926
        %1008 = vmatpush.bf16.msra.mxu0 %v924
        %1009 = vmatpush.bf16.msra.mxu0 %v922
        %1010 = vmatmul.bf16.gmra.mxu0 %v940
        %v1011 = vpop.f32.mrf.mxu0
        %v1012 = vadd.f32 0.0, %v1011
        %v1013 = vpop.f32.mrf.mxu0
        %v1014 = vadd.f32 0.0, %v1013
        %1015 = vmatmul.bf16.gmra.mxu0 %v943
        %v1016 = vpop.f32.mrf.mxu0
        %v1017 = vadd.f32 0.0, %v1016
        %v1018 = vpop.f32.mrf.mxu0
        %v1019 = vadd.f32 0.0, %v1018
        %1020 = vmatmul.bf16.gmra.mxu0 %v946
        %v1021 = vpop.f32.mrf.mxu0
        %v1022 = vadd.f32 0.0, %v1021
        %v1023 = vpop.f32.mrf.mxu0
        %v1024 = vadd.f32 0.0, %v1023
        %1025 = vmatmul.bf16.gmra.mxu0 %v949
        %v1026 = vpop.f32.mrf.mxu0
        %v1027 = vadd.f32 0.0, %v1026
        %v1028 = vpop.f32.mrf.mxu0
        %v1029 = vadd.f32 0.0, %v1028
        %1030 = vmatmul.bf16.gmra.mxu0 %v952
        %v1031 = vpop.f32.mrf.mxu0
        %v1032 = vadd.f32 0.0, %v1031
        %v1033 = vpop.f32.mrf.mxu0
        %v1034 = vadd.f32 0.0, %v1033
        %1035 = vmatmul.bf16.gmra.mxu0 %v955
        %v1036 = vpop.f32.mrf.mxu0
        %v1037 = vadd.f32 0.0, %v1036
        %v1038 = vpop.f32.mrf.mxu0
        %v1039 = vadd.f32 0.0, %v1038
        %1040 = vdwg.mxu0
        %v1041 = vadd.f32 %v829, %v973
        %v1042 = vadd.f32 %v830, %v1012
        %v1043 = vadd.f32 %v831, %v975
        %v1044 = vadd.f32 %v832, %v1014
        %v1045 = vadd.f32 %v833, %v978
        %v1046 = vadd.f32 %v834, %v1017
        %v1047 = vadd.f32 %v835, %v980
        %v1048 = vadd.f32 %v836, %v1019
        %v1049 = vadd.f32 %v837, %v983
        %v1050 = vadd.f32 %v838, %v1022
        %v1051 = vadd.f32 %v839, %v985
        %v1052 = vadd.f32 %v840, %v1024
        %v1053 = vadd.f32 %v841, %v988
        %v1054 = vadd.f32 %v842, %v1027
        %v1055 = vadd.f32 %v843, %v990
        %v1056 = vadd.f32 %v844, %v1029
        %v1057 = vadd.f32 %v845, %v993
        %v1058 = vadd.f32 %v846, %v1032
        %v1059 = vadd.f32 %v847, %v995
        %v1060 = vadd.f32 %v848, %v1034
        %v1061 = vadd.f32 %v849, %v998
        %v1062 = vadd.f32 %v850, %v1037
        %v1063 = vadd.f32 %v851, %v1000
        %v1064 = vadd.f32 %v852, %v1039
        %v1065 = vrot.slane %v415, 2
        %v1066 = vrot.slane %v416, 2
        %v1067 = vrot.slane %v417, 2
        %v1068 = vrot.slane %v418, 2
        %v1069 = vrot.slane %v419, 2
        %v1070 = vrot.slane %v420, 2
        %v1071 = vrot.slane %v421, 2
        %v1072 = vrot.slane %v422, 2
        %v1073 = vrot.slane %v423, 2
        %v1074 = vrot.slane %v424, 2
        %v1075 = vrot.slane %v425, 2
        %v1076 = vrot.slane %v426, 2
        %vm1077 = vcmp.lt.s32.totalorder %v464, 6
        %v1078 = vsel %vm1077, %v1075, %v1076
        %v1079 = vsel %vm1077, %v1074, %v1075
        %v1080 = vsel %vm1077, %v1073, %v1074
        %v1081 = vsel %vm1077, %v1072, %v1073
        %v1082 = vsel %vm1077, %v1071, %v1072
        %v1083 = vsel %vm1077, %v1070, %v1071
        %v1084 = vsel %vm1077, %v1069, %v1070
        %v1085 = vsel %vm1077, %v1068, %v1069
        %v1086 = vsel %vm1077, %v1067, %v1068
        %v1087 = vsel %vm1077, %v1066, %v1067
        %v1088 = vsel %vm1077, %v1065, %v1066
        %v1089 = vsel %vm1077, %v1076, %v1065
        %v1090 = vpack.c.bf16 %v1087, %v1088
        %v1091 = vpack.c.bf16 %v1085, %v1086
        %v1092 = vpack.c.bf16 %v1083, %v1084
        %v1093 = vpack.c.bf16 %v1081, %v1082
        %v1094 = vpack.c.bf16 %v1079, %v1080
        %v1095 = vpack.c.bf16 %v1089, %v1078
        %s1096 = scalar_lea.vmem %s1, 216
        %v1097 = vld [vmem:[%s1096] sm:$0xff]
        %v1098 = vld [vmem:[%s1096 + $0x8] sm:$0xff]
        %v1099 = vld [vmem:[%s1096 + $0x10] sm:$0xff]
        %v1100 = vld [vmem:[%s1096 + $0x18] sm:$0xff]
        %v1101 = vld [vmem:[%s1096 + $0x20] sm:$0xff]
        %v1102 = vld [vmem:[%s1096 + $0x28] sm:$0xff]
        %v1103 = vld [vmem:[%s1096 + $0x30] sm:$0xff]
        %v1104 = vld [vmem:[%s1096 + $0x38] sm:$0xff]
        %v1105 = vld [vmem:[%s1096 + $0x40] sm:$0x11]
        %v1115 = vunpack.c.l.b16 %v1097
        %v1116 = vunpack.c.h.b16 %v1097
        %v1117 = vunpack.c.l.b16 %v1098
        %v1118 = vunpack.c.h.b16 %v1098
        %v1119 = vunpack.c.l.b16 %v1099
        %v1120 = vunpack.c.h.b16 %v1099
        %v1121 = vunpack.c.l.b16 %v1100
        %v1122 = vunpack.c.h.b16 %v1100
        %v1123 = vunpack.c.l.b16 %v1101
        %v1124 = vunpack.c.h.b16 %v1101
        %v1125 = vunpack.c.l.b16 %v1102
        %v1126 = vunpack.c.h.b16 %v1102
        %v1127 = vunpack.c.l.b16 %v1103
        %v1128 = vunpack.c.h.b16 %v1103
        %v1129 = vunpack.c.l.b16 %v1104
        %v1130 = vunpack.c.h.b16 %v1104
        %v1131 = vunpack.c.l.b16 %v1105
        %v1132 = vunpack.c.h.b16 %v1105
        %v1133 = vpack.c.b16 %v1117, %v1115
        %v1134 = vpack.c.b16 %v1118, %v1116
        %v1135 = vpack.c.b16 %v1121, %v1119
        %v1136 = vpack.c.b16 %v1122, %v1120
        %v1137 = vpack.c.b16 %v1125, %v1123
        %v1138 = vpack.c.b16 %v1126, %v1124
        %v1139 = vpack.c.b16 %v1129, %v1127
        %v1140 = vpack.c.b16 %v1130, %v1128
        %v1141 = vpack.c.b16 %v1131, %v1131
        %v1142 = vpack.c.b16 %v1132, %v1132
        %v1152 = vsel %vm538, %v1090, 0
        %v1155 = vsel %vm538, %v1091, 0
        %v1158 = vsel %vm538, %v1092, 0
        %v1161 = vsel %vm538, %v1093, 0
        %v1164 = vsel %vm538, %v1094, 0
        %v1167 = vsel %vm538, %v1095, 0
        %v1170 = vsel %vm557, %v1141, 0
        %v1173 = vsel %vm557, %v1142, 0
        %1175 = vmatpush.bf16.msra.mxu0 0
        %1176 = vmatpush.bf16.msra.mxu0 0
        %1177 = vmatpush.bf16.msra.mxu0 0
        %1178 = vmatpush.bf16.msra.mxu0 %v1170
        %1179 = vmatpush.bf16.msra.mxu0 %v1139
        %1180 = vmatpush.bf16.msra.mxu0 %v1137
        %1181 = vmatpush.bf16.msra.mxu0 %v1135
        %1182 = vmatpush.bf16.msra.mxu0 %v1133
        %1183 = vmatmul.bf16.gmra.mxu0 %v1152
        %v1184 = vpop.f32.mrf.mxu0
        %v1185 = vadd.f32 0.0, %v1184
        %v1186 = vpop.f32.mrf.mxu0
        %v1187 = vadd.f32 0.0, %v1186
        %1188 = vmatmul.bf16.gmra.mxu0 %v1155
        %v1189 = vpop.f32.mrf.mxu0
        %v1190 = vadd.f32 0.0, %v1189
        %v1191 = vpop.f32.mrf.mxu0
        %v1192 = vadd.f32 0.0, %v1191
        %1193 = vmatmul.bf16.gmra.mxu0 %v1158
        %v1194 = vpop.f32.mrf.mxu0
        %v1195 = vadd.f32 0.0, %v1194
        %v1196 = vpop.f32.mrf.mxu0
        %v1197 = vadd.f32 0.0, %v1196
        %1198 = vmatmul.bf16.gmra.mxu0 %v1161
        %v1199 = vpop.f32.mrf.mxu0
        %v1200 = vadd.f32 0.0, %v1199
        %v1201 = vpop.f32.mrf.mxu0
        %v1202 = vadd.f32 0.0, %v1201
        %1203 = vmatmul.bf16.gmra.mxu0 %v1164
        %v1204 = vpop.f32.mrf.mxu0
        %v1205 = vadd.f32 0.0, %v1204
        %v1206 = vpop.f32.mrf.mxu0
        %v1207 = vadd.f32 0.0, %v1206
        %1208 = vmatmul.bf16.gmra.mxu0 %v1167
        %v1209 = vpop.f32.mrf.mxu0
        %v1210 = vadd.f32 0.0, %v1209
        %v1211 = vpop.f32.mrf.mxu0
        %v1212 = vadd.f32 0.0, %v1211
        %1213 = vdwg.mxu0
        %1214 = vmatpush.bf16.msra.mxu0 0
        %1215 = vmatpush.bf16.msra.mxu0 0
        %1216 = vmatpush.bf16.msra.mxu0 0
        %1217 = vmatpush.bf16.msra.mxu0 %v1173
        %1218 = vmatpush.bf16.msra.mxu0 %v1140
        %1219 = vmatpush.bf16.msra.mxu0 %v1138
        %1220 = vmatpush.bf16.msra.mxu0 %v1136
        %1221 = vmatpush.bf16.msra.mxu0 %v1134
        %1222 = vmatmul.bf16.gmra.mxu0 %v1152
        %v1223 = vpop.f32.mrf.mxu0
        %v1224 = vadd.f32 0.0, %v1223
        %v1225 = vpop.f32.mrf.mxu0
        %v1226 = vadd.f32 0.0, %v1225
        %1227 = vmatmul.bf16.gmra.mxu0 %v1155
        %v1228 = vpop.f32.mrf.mxu0
        %v1229 = vadd.f32 0.0, %v1228
        %v1230 = vpop.f32.mrf.mxu0
        %v1231 = vadd.f32 0.0, %v1230
        %1232 = vmatmul.bf16.gmra.mxu0 %v1158
        %v1233 = vpop.f32.mrf.mxu0
        %v1234 = vadd.f32 0.0, %v1233
        %v1235 = vpop.f32.mrf.mxu0
        %v1236 = vadd.f32 0.0, %v1235
        %1237 = vmatmul.bf16.gmra.mxu0 %v1161
        %v1238 = vpop.f32.mrf.mxu0
        %v1239 = vadd.f32 0.0, %v1238
        %v1240 = vpop.f32.mrf.mxu0
        %v1241 = vadd.f32 0.0, %v1240
        %1242 = vmatmul.bf16.gmra.mxu0 %v1164
        %v1243 = vpop.f32.mrf.mxu0
        %v1244 = vadd.f32 0.0, %v1243
        %v1245 = vpop.f32.mrf.mxu0
        %v1246 = vadd.f32 0.0, %v1245
        %1247 = vmatmul.bf16.gmra.mxu0 %v1167
        %v1248 = vpop.f32.mrf.mxu0
        %v1249 = vadd.f32 0.0, %v1248
        %v1250 = vpop.f32.mrf.mxu0
        %v1251 = vadd.f32 0.0, %v1250
        %1252 = vdwg.mxu0
        %v1253 = vadd.f32 %v1041, %v1185
        %v1254 = vadd.f32 %v1042, %v1224
        %v1255 = vadd.f32 %v1043, %v1187
        %v1256 = vadd.f32 %v1044, %v1226
        %v1257 = vadd.f32 %v1045, %v1190
        %v1258 = vadd.f32 %v1046, %v1229
        %v1259 = vadd.f32 %v1047, %v1192
        %v1260 = vadd.f32 %v1048, %v1231
        %v1261 = vadd.f32 %v1049, %v1195
        %v1262 = vadd.f32 %v1050, %v1234
        %v1263 = vadd.f32 %v1051, %v1197
        %v1264 = vadd.f32 %v1052, %v1236
        %v1265 = vadd.f32 %v1053, %v1200
        %v1266 = vadd.f32 %v1054, %v1239
        %v1267 = vadd.f32 %v1055, %v1202
        %v1268 = vadd.f32 %v1056, %v1241
        %v1269 = vadd.f32 %v1057, %v1205
        %v1270 = vadd.f32 %v1058, %v1244
        %v1271 = vadd.f32 %v1059, %v1207
        %v1272 = vadd.f32 %v1060, %v1246
        %v1273 = vadd.f32 %v1061, %v1210
        %v1274 = vadd.f32 %v1062, %v1249
        %v1275 = vadd.f32 %v1063, %v1212
        %v1276 = vadd.f32 %v1064, %v1251
        %v1277 = vrot.slane %v415, 3
        %v1278 = vrot.slane %v416, 3
        %v1279 = vrot.slane %v417, 3
        %v1280 = vrot.slane %v418, 3
        %v1281 = vrot.slane %v419, 3
        %v1282 = vrot.slane %v420, 3
        %v1283 = vrot.slane %v421, 3
        %v1284 = vrot.slane %v422, 3
        %v1285 = vrot.slane %v423, 3
        %v1286 = vrot.slane %v424, 3
        %v1287 = vrot.slane %v425, 3
        %v1288 = vrot.slane %v426, 3
        %vm1289 = vcmp.lt.s32.totalorder %v464, 5
        %v1290 = vsel %vm1289, %v1287, %v1288
        %v1291 = vsel %vm1289, %v1286, %v1287
        %v1292 = vsel %vm1289, %v1285, %v1286
        %v1293 = vsel %vm1289, %v1284, %v1285
        %v1294 = vsel %vm1289, %v1283, %v1284
        %v1295 = vsel %vm1289, %v1282, %v1283
        %v1296 = vsel %vm1289, %v1281, %v1282
        %v1297 = vsel %vm1289, %v1280, %v1281
        %v1298 = vsel %vm1289, %v1279, %v1280
        %v1299 = vsel %vm1289, %v1278, %v1279
        %v1300 = vsel %vm1289, %v1277, %v1278
        %v1301 = vsel %vm1289, %v1288, %v1277
        %v1302 = vpack.c.bf16 %v1299, %v1300
        %v1303 = vpack.c.bf16 %v1297, %v1298
        %v1304 = vpack.c.bf16 %v1295, %v1296
        %v1305 = vpack.c.bf16 %v1293, %v1294
        %v1306 = vpack.c.bf16 %v1291, %v1292
        %v1307 = vpack.c.bf16 %v1301, %v1290
        %s1308 = scalar_lea.vmem %s1, 288
        %v1309 = vld [vmem:[%s1308] sm:$0xff]
        %v1310 = vld [vmem:[%s1308 + $0x8] sm:$0xff]
        %v1311 = vld [vmem:[%s1308 + $0x10] sm:$0xff]
        %v1312 = vld [vmem:[%s1308 + $0x18] sm:$0xff]
        %v1313 = vld [vmem:[%s1308 + $0x20] sm:$0xff]
        %v1314 = vld [vmem:[%s1308 + $0x28] sm:$0xff]
        %v1315 = vld [vmem:[%s1308 + $0x30] sm:$0xff]
        %v1316 = vld [vmem:[%s1308 + $0x38] sm:$0xff]
        %v1317 = vld [vmem:[%s1308 + $0x40] sm:$0x11]
        %v1327 = vunpack.c.l.b16 %v1309
        %v1328 = vunpack.c.h.b16 %v1309
        %v1329 = vunpack.c.l.b16 %v1310
        %v1330 = vunpack.c.h.b16 %v1310
        %v1331 = vunpack.c.l.b16 %v1311
        %v1332 = vunpack.c.h.b16 %v1311
        %v1333 = vunpack.c.l.b16 %v1312
        %v1334 = vunpack.c.h.b16 %v1312
        %v1335 = vunpack.c.l.b16 %v1313
        %v1336 = vunpack.c.h.b16 %v1313
        %v1337 = vunpack.c.l.b16 %v1314
        %v1338 = vunpack.c.h.b16 %v1314
        %v1339 = vunpack.c.l.b16 %v1315
        %v1340 = vunpack.c.h.b16 %v1315
        %v1341 = vunpack.c.l.b16 %v1316
        %v1342 = vunpack.c.h.b16 %v1316
        %v1343 = vunpack.c.l.b16 %v1317
        %v1344 = vunpack.c.h.b16 %v1317
        %v1345 = vpack.c.b16 %v1329, %v1327
        %v1346 = vpack.c.b16 %v1330, %v1328
        %v1347 = vpack.c.b16 %v1333, %v1331
        %v1348 = vpack.c.b16 %v1334, %v1332
        %v1349 = vpack.c.b16 %v1337, %v1335
        %v1350 = vpack.c.b16 %v1338, %v1336
        %v1351 = vpack.c.b16 %v1341, %v1339
        %v1352 = vpack.c.b16 %v1342, %v1340
        %v1353 = vpack.c.b16 %v1343, %v1343
        %v1354 = vpack.c.b16 %v1344, %v1344
        %v1364 = vsel %vm538, %v1302, 0
        %v1367 = vsel %vm538, %v1303, 0
        %v1370 = vsel %vm538, %v1304, 0
        %v1373 = vsel %vm538, %v1305, 0
        %v1376 = vsel %vm538, %v1306, 0
        %v1379 = vsel %vm538, %v1307, 0
        %v1382 = vsel %vm557, %v1353, 0
        %v1385 = vsel %vm557, %v1354, 0
        %1387 = vmatpush.bf16.msra.mxu0 0
        %1388 = vmatpush.bf16.msra.mxu0 0
        %1389 = vmatpush.bf16.msra.mxu0 0
        %1390 = vmatpush.bf16.msra.mxu0 %v1382
        %1391 = vmatpush.bf16.msra.mxu0 %v1351
        %1392 = vmatpush.bf16.msra.mxu0 %v1349
        %1393 = vmatpush.bf16.msra.mxu0 %v1347
        %1394 = vmatpush.bf16.msra.mxu0 %v1345
        %1395 = vmatmul.bf16.gmra.mxu0 %v1364
        %v1396 = vpop.f32.mrf.mxu0
        %v1397 = vadd.f32 0.0, %v1396
        %v1398 = vpop.f32.mrf.mxu0
        %v1399 = vadd.f32 0.0, %v1398
        %1400 = vmatmul.bf16.gmra.mxu0 %v1367
        %v1401 = vpop.f32.mrf.mxu0
        %v1402 = vadd.f32 0.0, %v1401
        %v1403 = vpop.f32.mrf.mxu0
        %v1404 = vadd.f32 0.0, %v1403
        %1405 = vmatmul.bf16.gmra.mxu0 %v1370
        %v1406 = vpop.f32.mrf.mxu0
        %v1407 = vadd.f32 0.0, %v1406
        %v1408 = vpop.f32.mrf.mxu0
        %v1409 = vadd.f32 0.0, %v1408
        %1410 = vmatmul.bf16.gmra.mxu0 %v1373
        %v1411 = vpop.f32.mrf.mxu0
        %v1412 = vadd.f32 0.0, %v1411
        %v1413 = vpop.f32.mrf.mxu0
        %v1414 = vadd.f32 0.0, %v1413
        %1415 = vmatmul.bf16.gmra.mxu0 %v1376
        %v1416 = vpop.f32.mrf.mxu0
        %v1417 = vadd.f32 0.0, %v1416
        %v1418 = vpop.f32.mrf.mxu0
        %v1419 = vadd.f32 0.0, %v1418
        %1420 = vmatmul.bf16.gmra.mxu0 %v1379
        %v1421 = vpop.f32.mrf.mxu0
        %v1422 = vadd.f32 0.0, %v1421
        %v1423 = vpop.f32.mrf.mxu0
        %v1424 = vadd.f32 0.0, %v1423
        %1425 = vdwg.mxu0
        %1426 = vmatpush.bf16.msra.mxu0 0
        %1427 = vmatpush.bf16.msra.mxu0 0
        %1428 = vmatpush.bf16.msra.mxu0 0
        %1429 = vmatpush.bf16.msra.mxu0 %v1385
        %1430 = vmatpush.bf16.msra.mxu0 %v1352
        %1431 = vmatpush.bf16.msra.mxu0 %v1350
        %1432 = vmatpush.bf16.msra.mxu0 %v1348
        %1433 = vmatpush.bf16.msra.mxu0 %v1346
        %1434 = vmatmul.bf16.gmra.mxu0 %v1364
        %v1435 = vpop.f32.mrf.mxu0
        %v1436 = vadd.f32 0.0, %v1435
        %v1437 = vpop.f32.mrf.mxu0
        %v1438 = vadd.f32 0.0, %v1437
        %1439 = vmatmul.bf16.gmra.mxu0 %v1367
        %v1440 = vpop.f32.mrf.mxu0
        %v1441 = vadd.f32 0.0, %v1440
        %v1442 = vpop.f32.mrf.mxu0
        %v1443 = vadd.f32 0.0, %v1442
        %1444 = vmatmul.bf16.gmra.mxu0 %v1370
        %v1445 = vpop.f32.mrf.mxu0
        %v1446 = vadd.f32 0.0, %v1445
        %v1447 = vpop.f32.mrf.mxu0
        %v1448 = vadd.f32 0.0, %v1447
        %1449 = vmatmul.bf16.gmra.mxu0 %v1373
        %v1450 = vpop.f32.mrf.mxu0
        %v1451 = vadd.f32 0.0, %v1450
        %v1452 = vpop.f32.mrf.mxu0
        %v1453 = vadd.f32 0.0, %v1452
        %1454 = vmatmul.bf16.gmra.mxu0 %v1376
        %v1455 = vpop.f32.mrf.mxu0
        %v1456 = vadd.f32 0.0, %v1455
        %v1457 = vpop.f32.mrf.mxu0
        %v1458 = vadd.f32 0.0, %v1457
        %1459 = vmatmul.bf16.gmra.mxu0 %v1379
        %v1460 = vpop.f32.mrf.mxu0
        %v1461 = vadd.f32 0.0, %v1460
        %v1462 = vpop.f32.mrf.mxu0
        %v1463 = vadd.f32 0.0, %v1462
        %1464 = vdwg.mxu0
        %v1465 = vadd.f32 %v1253, %v1397
        %v1466 = vadd.f32 %v1254, %v1436
        %v1467 = vadd.f32 %v1255, %v1399
        %v1468 = vadd.f32 %v1256, %v1438
        %v1469 = vadd.f32 %v1257, %v1402
        %v1470 = vadd.f32 %v1258, %v1441
        %v1471 = vadd.f32 %v1259, %v1404
        %v1472 = vadd.f32 %v1260, %v1443
        %v1473 = vadd.f32 %v1261, %v1407
        %v1474 = vadd.f32 %v1262, %v1446
        %v1475 = vadd.f32 %v1263, %v1409
        %v1476 = vadd.f32 %v1264, %v1448
        %v1477 = vadd.f32 %v1265, %v1412
        %v1478 = vadd.f32 %v1266, %v1451
        %v1479 = vadd.f32 %v1267, %v1414
        %v1480 = vadd.f32 %v1268, %v1453
        %v1481 = vadd.f32 %v1269, %v1417
        %v1482 = vadd.f32 %v1270, %v1456
        %v1483 = vadd.f32 %v1271, %v1419
        %v1484 = vadd.f32 %v1272, %v1458
        %v1485 = vadd.f32 %v1273, %v1422
        %v1486 = vadd.f32 %v1274, %v1461
        %v1487 = vadd.f32 %v1275, %v1424
        %v1488 = vadd.f32 %v1276, %v1463
        %v1489 = vrot.slane %v415, 4
        %v1490 = vrot.slane %v416, 4
        %v1491 = vrot.slane %v417, 4
        %v1492 = vrot.slane %v418, 4
        %v1493 = vrot.slane %v419, 4
        %v1494 = vrot.slane %v420, 4
        %v1495 = vrot.slane %v421, 4
        %v1496 = vrot.slane %v422, 4
        %v1497 = vrot.slane %v423, 4
        %v1498 = vrot.slane %v424, 4
        %v1499 = vrot.slane %v425, 4
        %v1500 = vrot.slane %v426, 4
        %vm1501 = vcmp.lt.s32.totalorder %v464, 4
        %v1502 = vsel %vm1501, %v1499, %v1500
        %v1503 = vsel %vm1501, %v1498, %v1499
        %v1504 = vsel %vm1501, %v1497, %v1498
        %v1505 = vsel %vm1501, %v1496, %v1497
        %v1506 = vsel %vm1501, %v1495, %v1496
        %v1507 = vsel %vm1501, %v1494, %v1495
        %v1508 = vsel %vm1501, %v1493, %v1494
        %v1509 = vsel %vm1501, %v1492, %v1493
        %v1510 = vsel %vm1501, %v1491, %v1492
        %v1511 = vsel %vm1501, %v1490, %v1491
        %v1512 = vsel %vm1501, %v1489, %v1490
        %v1513 = vsel %vm1501, %v1500, %v1489
        %v1514 = vpack.c.bf16 %v1511, %v1512
        %v1515 = vpack.c.bf16 %v1509, %v1510
        %v1516 = vpack.c.bf16 %v1507, %v1508
        %v1517 = vpack.c.bf16 %v1505, %v1506
        %v1518 = vpack.c.bf16 %v1503, %v1504
        %v1519 = vpack.c.bf16 %v1513, %v1502
        %s1520 = scalar_lea.vmem %s1, 360
        %v1521 = vld [vmem:[%s1520] sm:$0xff]
        %v1522 = vld [vmem:[%s1520 + $0x8] sm:$0xff]
        %v1523 = vld [vmem:[%s1520 + $0x10] sm:$0xff]
        %v1524 = vld [vmem:[%s1520 + $0x18] sm:$0xff]
        %v1525 = vld [vmem:[%s1520 + $0x20] sm:$0xff]
        %v1526 = vld [vmem:[%s1520 + $0x28] sm:$0xff]
        %v1527 = vld [vmem:[%s1520 + $0x30] sm:$0xff]
        %v1528 = vld [vmem:[%s1520 + $0x38] sm:$0xff]
        %v1529 = vld [vmem:[%s1520 + $0x40] sm:$0x11]
        %v1539 = vunpack.c.l.b16 %v1521
        %v1540 = vunpack.c.h.b16 %v1521
        %v1541 = vunpack.c.l.b16 %v1522
        %v1542 = vunpack.c.h.b16 %v1522
        %v1543 = vunpack.c.l.b16 %v1523
        %v1544 = vunpack.c.h.b16 %v1523
        %v1545 = vunpack.c.l.b16 %v1524
        %v1546 = vunpack.c.h.b16 %v1524
        %v1547 = vunpack.c.l.b16 %v1525
        %v1548 = vunpack.c.h.b16 %v1525
        %v1549 = vunpack.c.l.b16 %v1526
        %v1550 = vunpack.c.h.b16 %v1526
        %v1551 = vunpack.c.l.b16 %v1527
        %v1552 = vunpack.c.h.b16 %v1527
        %v1553 = vunpack.c.l.b16 %v1528
        %v1554 = vunpack.c.h.b16 %v1528
        %v1555 = vunpack.c.l.b16 %v1529
        %v1556 = vunpack.c.h.b16 %v1529
        %v1557 = vpack.c.b16 %v1541, %v1539
        %v1558 = vpack.c.b16 %v1542, %v1540
        %v1559 = vpack.c.b16 %v1545, %v1543
        %v1560 = vpack.c.b16 %v1546, %v1544
        %v1561 = vpack.c.b16 %v1549, %v1547
        %v1562 = vpack.c.b16 %v1550, %v1548
        %v1563 = vpack.c.b16 %v1553, %v1551
        %v1564 = vpack.c.b16 %v1554, %v1552
        %v1565 = vpack.c.b16 %v1555, %v1555
        %v1566 = vpack.c.b16 %v1556, %v1556
        %v1576 = vsel %vm538, %v1514, 0
        %v1579 = vsel %vm538, %v1515, 0
        %v1582 = vsel %vm538, %v1516, 0
        %v1585 = vsel %vm538, %v1517, 0
        %v1588 = vsel %vm538, %v1518, 0
        %v1591 = vsel %vm538, %v1519, 0
        %v1594 = vsel %vm557, %v1565, 0
        %v1597 = vsel %vm557, %v1566, 0
        %1599 = vmatpush.bf16.msra.mxu0 0
        %1600 = vmatpush.bf16.msra.mxu0 0
        %1601 = vmatpush.bf16.msra.mxu0 0
        %1602 = vmatpush.bf16.msra.mxu0 %v1594
        %1603 = vmatpush.bf16.msra.mxu0 %v1563
        %1604 = vmatpush.bf16.msra.mxu0 %v1561
        %1605 = vmatpush.bf16.msra.mxu0 %v1559
        %1606 = vmatpush.bf16.msra.mxu0 %v1557
        %1607 = vmatmul.bf16.gmra.mxu0 %v1576
        %v1608 = vpop.f32.mrf.mxu0
        %v1609 = vadd.f32 0.0, %v1608
        %v1610 = vpop.f32.mrf.mxu0
        %v1611 = vadd.f32 0.0, %v1610
        %1612 = vmatmul.bf16.gmra.mxu0 %v1579
        %v1613 = vpop.f32.mrf.mxu0
        %v1614 = vadd.f32 0.0, %v1613
        %v1615 = vpop.f32.mrf.mxu0
        %v1616 = vadd.f32 0.0, %v1615
        %1617 = vmatmul.bf16.gmra.mxu0 %v1582
        %v1618 = vpop.f32.mrf.mxu0
        %v1619 = vadd.f32 0.0, %v1618
        %v1620 = vpop.f32.mrf.mxu0
        %v1621 = vadd.f32 0.0, %v1620
        %1622 = vmatmul.bf16.gmra.mxu0 %v1585
        %v1623 = vpop.f32.mrf.mxu0
        %v1624 = vadd.f32 0.0, %v1623
        %v1625 = vpop.f32.mrf.mxu0
        %v1626 = vadd.f32 0.0, %v1625
        %1627 = vmatmul.bf16.gmra.mxu0 %v1588
        %v1628 = vpop.f32.mrf.mxu0
        %v1629 = vadd.f32 0.0, %v1628
        %v1630 = vpop.f32.mrf.mxu0
        %v1631 = vadd.f32 0.0, %v1630
        %1632 = vmatmul.bf16.gmra.mxu0 %v1591
        %v1633 = vpop.f32.mrf.mxu0
        %v1634 = vadd.f32 0.0, %v1633
        %v1635 = vpop.f32.mrf.mxu0
        %v1636 = vadd.f32 0.0, %v1635
        %1637 = vdwg.mxu0
        %1638 = vmatpush.bf16.msra.mxu0 0
        %1639 = vmatpush.bf16.msra.mxu0 0
        %1640 = vmatpush.bf16.msra.mxu0 0
        %1641 = vmatpush.bf16.msra.mxu0 %v1597
        %1642 = vmatpush.bf16.msra.mxu0 %v1564
        %1643 = vmatpush.bf16.msra.mxu0 %v1562
        %1644 = vmatpush.bf16.msra.mxu0 %v1560
        %1645 = vmatpush.bf16.msra.mxu0 %v1558
        %1646 = vmatmul.bf16.gmra.mxu0 %v1576
        %v1647 = vpop.f32.mrf.mxu0
        %v1648 = vadd.f32 0.0, %v1647
        %v1649 = vpop.f32.mrf.mxu0
        %v1650 = vadd.f32 0.0, %v1649
        %1651 = vmatmul.bf16.gmra.mxu0 %v1579
        %v1652 = vpop.f32.mrf.mxu0
        %v1653 = vadd.f32 0.0, %v1652
        %v1654 = vpop.f32.mrf.mxu0
        %v1655 = vadd.f32 0.0, %v1654
        %1656 = vmatmul.bf16.gmra.mxu0 %v1582
        %v1657 = vpop.f32.mrf.mxu0
        %v1658 = vadd.f32 0.0, %v1657
        %v1659 = vpop.f32.mrf.mxu0
        %v1660 = vadd.f32 0.0, %v1659
        %1661 = vmatmul.bf16.gmra.mxu0 %v1585
        %v1662 = vpop.f32.mrf.mxu0
        %v1663 = vadd.f32 0.0, %v1662
        %v1664 = vpop.f32.mrf.mxu0
        %v1665 = vadd.f32 0.0, %v1664
        %1666 = vmatmul.bf16.gmra.mxu0 %v1588
        %v1667 = vpop.f32.mrf.mxu0
        %v1668 = vadd.f32 0.0, %v1667
        %v1669 = vpop.f32.mrf.mxu0
        %v1670 = vadd.f32 0.0, %v1669
        %1671 = vmatmul.bf16.gmra.mxu0 %v1591
        %v1672 = vpop.f32.mrf.mxu0
        %v1673 = vadd.f32 0.0, %v1672
        %v1674 = vpop.f32.mrf.mxu0
        %v1675 = vadd.f32 0.0, %v1674
        %1676 = vdwg.mxu0
        %v1677 = vadd.f32 %v1465, %v1609
        %v1678 = vadd.f32 %v1466, %v1648
        %v1679 = vadd.f32 %v1467, %v1611
        %v1680 = vadd.f32 %v1468, %v1650
        %v1681 = vadd.f32 %v1469, %v1614
        %v1682 = vadd.f32 %v1470, %v1653
        %v1683 = vadd.f32 %v1471, %v1616
        %v1684 = vadd.f32 %v1472, %v1655
        %v1685 = vadd.f32 %v1473, %v1619
        %v1686 = vadd.f32 %v1474, %v1658
        %v1687 = vadd.f32 %v1475, %v1621
        %v1688 = vadd.f32 %v1476, %v1660
        %v1689 = vadd.f32 %v1477, %v1624
        %v1690 = vadd.f32 %v1478, %v1663
        %v1691 = vadd.f32 %v1479, %v1626
        %v1692 = vadd.f32 %v1480, %v1665
        %v1693 = vadd.f32 %v1481, %v1629
        %v1694 = vadd.f32 %v1482, %v1668
        %v1695 = vadd.f32 %v1483, %v1631
        %v1696 = vadd.f32 %v1484, %v1670
        %v1697 = vadd.f32 %v1485, %v1634
        %v1698 = vadd.f32 %v1486, %v1673
        %v1699 = vadd.f32 %v1487, %v1636
        %v1700 = vadd.f32 %v1488, %v1675
        %v1701 = vrot.slane %v415, 5
        %v1702 = vrot.slane %v416, 5
        %v1703 = vrot.slane %v417, 5
        %v1704 = vrot.slane %v418, 5
        %v1705 = vrot.slane %v419, 5
        %v1706 = vrot.slane %v420, 5
        %v1707 = vrot.slane %v421, 5
        %v1708 = vrot.slane %v422, 5
        %v1709 = vrot.slane %v423, 5
        %v1710 = vrot.slane %v424, 5
        %v1711 = vrot.slane %v425, 5
        %v1712 = vrot.slane %v426, 5
        %vm1713 = vcmp.lt.s32.totalorder %v464, 3
        %v1714 = vsel %vm1713, %v1711, %v1712
        %v1715 = vsel %vm1713, %v1710, %v1711
        %v1716 = vsel %vm1713, %v1709, %v1710
        %v1717 = vsel %vm1713, %v1708, %v1709
        %v1718 = vsel %vm1713, %v1707, %v1708
        %v1719 = vsel %vm1713, %v1706, %v1707
        %v1720 = vsel %vm1713, %v1705, %v1706
        %v1721 = vsel %vm1713, %v1704, %v1705
        %v1722 = vsel %vm1713, %v1703, %v1704
        %v1723 = vsel %vm1713, %v1702, %v1703
        %v1724 = vsel %vm1713, %v1701, %v1702
        %v1725 = vsel %vm1713, %v1712, %v1701
        %v1726 = vpack.c.bf16 %v1723, %v1724
        %v1727 = vpack.c.bf16 %v1721, %v1722
        %v1728 = vpack.c.bf16 %v1719, %v1720
        %v1729 = vpack.c.bf16 %v1717, %v1718
        %v1730 = vpack.c.bf16 %v1715, %v1716
        %v1731 = vpack.c.bf16 %v1725, %v1714
        %s1732 = scalar_lea.vmem %s1, 432
        %v1733 = vld [vmem:[%s1732] sm:$0xff]
        %v1734 = vld [vmem:[%s1732 + $0x8] sm:$0xff]
        %v1735 = vld [vmem:[%s1732 + $0x10] sm:$0xff]
        %v1736 = vld [vmem:[%s1732 + $0x18] sm:$0xff]
        %v1737 = vld [vmem:[%s1732 + $0x20] sm:$0xff]
        %v1738 = vld [vmem:[%s1732 + $0x28] sm:$0xff]
        %v1739 = vld [vmem:[%s1732 + $0x30] sm:$0xff]
        %v1740 = vld [vmem:[%s1732 + $0x38] sm:$0xff]
        %v1741 = vld [vmem:[%s1732 + $0x40] sm:$0x11]
        %v1751 = vunpack.c.l.b16 %v1733
        %v1752 = vunpack.c.h.b16 %v1733
        %v1753 = vunpack.c.l.b16 %v1734
        %v1754 = vunpack.c.h.b16 %v1734
        %v1755 = vunpack.c.l.b16 %v1735
        %v1756 = vunpack.c.h.b16 %v1735
        %v1757 = vunpack.c.l.b16 %v1736
        %v1758 = vunpack.c.h.b16 %v1736
        %v1759 = vunpack.c.l.b16 %v1737
        %v1760 = vunpack.c.h.b16 %v1737
        %v1761 = vunpack.c.l.b16 %v1738
        %v1762 = vunpack.c.h.b16 %v1738
        %v1763 = vunpack.c.l.b16 %v1739
        %v1764 = vunpack.c.h.b16 %v1739
        %v1765 = vunpack.c.l.b16 %v1740
        %v1766 = vunpack.c.h.b16 %v1740
        %v1767 = vunpack.c.l.b16 %v1741
        %v1768 = vunpack.c.h.b16 %v1741
        %v1769 = vpack.c.b16 %v1753, %v1751
        %v1770 = vpack.c.b16 %v1754, %v1752
        %v1771 = vpack.c.b16 %v1757, %v1755
        %v1772 = vpack.c.b16 %v1758, %v1756
        %v1773 = vpack.c.b16 %v1761, %v1759
        %v1774 = vpack.c.b16 %v1762, %v1760
        %v1775 = vpack.c.b16 %v1765, %v1763
        %v1776 = vpack.c.b16 %v1766, %v1764
        %v1777 = vpack.c.b16 %v1767, %v1767
        %v1778 = vpack.c.b16 %v1768, %v1768
        %v1788 = vsel %vm538, %v1726, 0
        %v1791 = vsel %vm538, %v1727, 0
        %v1794 = vsel %vm538, %v1728, 0
        %v1797 = vsel %vm538, %v1729, 0
        %v1800 = vsel %vm538, %v1730, 0
        %v1803 = vsel %vm538, %v1731, 0
        %v1806 = vsel %vm557, %v1777, 0
        %v1809 = vsel %vm557, %v1778, 0
        %1811 = vmatpush.bf16.msra.mxu0 0
        %1812 = vmatpush.bf16.msra.mxu0 0
        %1813 = vmatpush.bf16.msra.mxu0 0
        %1814 = vmatpush.bf16.msra.mxu0 %v1806
        %1815 = vmatpush.bf16.msra.mxu0 %v1775
        %1816 = vmatpush.bf16.msra.mxu0 %v1773
        %1817 = vmatpush.bf16.msra.mxu0 %v1771
        %1818 = vmatpush.bf16.msra.mxu0 %v1769
        %1819 = vmatmul.bf16.gmra.mxu0 %v1788
        %v1820 = vpop.f32.mrf.mxu0
        %v1821 = vadd.f32 0.0, %v1820
        %v1822 = vpop.f32.mrf.mxu0
        %v1823 = vadd.f32 0.0, %v1822
        %1824 = vmatmul.bf16.gmra.mxu0 %v1791
        %v1825 = vpop.f32.mrf.mxu0
        %v1826 = vadd.f32 0.0, %v1825
        %v1827 = vpop.f32.mrf.mxu0
        %v1828 = vadd.f32 0.0, %v1827
        %1829 = vmatmul.bf16.gmra.mxu0 %v1794
        %v1830 = vpop.f32.mrf.mxu0
        %v1831 = vadd.f32 0.0, %v1830
        %v1832 = vpop.f32.mrf.mxu0
        %v1833 = vadd.f32 0.0, %v1832
        %1834 = vmatmul.bf16.gmra.mxu0 %v1797
        %v1835 = vpop.f32.mrf.mxu0
        %v1836 = vadd.f32 0.0, %v1835
        %v1837 = vpop.f32.mrf.mxu0
        %v1838 = vadd.f32 0.0, %v1837
        %1839 = vmatmul.bf16.gmra.mxu0 %v1800
        %v1840 = vpop.f32.mrf.mxu0
        %v1841 = vadd.f32 0.0, %v1840
        %v1842 = vpop.f32.mrf.mxu0
        %v1843 = vadd.f32 0.0, %v1842
        %1844 = vmatmul.bf16.gmra.mxu0 %v1803
        %v1845 = vpop.f32.mrf.mxu0
        %v1846 = vadd.f32 0.0, %v1845
        %v1847 = vpop.f32.mrf.mxu0
        %v1848 = vadd.f32 0.0, %v1847
        %1849 = vdwg.mxu0
        %1850 = vmatpush.bf16.msra.mxu0 0
        %1851 = vmatpush.bf16.msra.mxu0 0
        %1852 = vmatpush.bf16.msra.mxu0 0
        %1853 = vmatpush.bf16.msra.mxu0 %v1809
        %1854 = vmatpush.bf16.msra.mxu0 %v1776
        %1855 = vmatpush.bf16.msra.mxu0 %v1774
        %1856 = vmatpush.bf16.msra.mxu0 %v1772
        %1857 = vmatpush.bf16.msra.mxu0 %v1770
        %1858 = vmatmul.bf16.gmra.mxu0 %v1788
        %v1859 = vpop.f32.mrf.mxu0
        %v1860 = vadd.f32 0.0, %v1859
        %v1861 = vpop.f32.mrf.mxu0
        %v1862 = vadd.f32 0.0, %v1861
        %1863 = vmatmul.bf16.gmra.mxu0 %v1791
        %v1864 = vpop.f32.mrf.mxu0
        %v1865 = vadd.f32 0.0, %v1864
        %v1866 = vpop.f32.mrf.mxu0
        %v1867 = vadd.f32 0.0, %v1866
        %1868 = vmatmul.bf16.gmra.mxu0 %v1794
        %v1869 = vpop.f32.mrf.mxu0
        %v1870 = vadd.f32 0.0, %v1869
        %v1871 = vpop.f32.mrf.mxu0
        %v1872 = vadd.f32 0.0, %v1871
        %1873 = vmatmul.bf16.gmra.mxu0 %v1797
        %v1874 = vpop.f32.mrf.mxu0
        %v1875 = vadd.f32 0.0, %v1874
        %v1876 = vpop.f32.mrf.mxu0
        %v1877 = vadd.f32 0.0, %v1876
        %1878 = vmatmul.bf16.gmra.mxu0 %v1800
        %v1879 = vpop.f32.mrf.mxu0
        %v1880 = vadd.f32 0.0, %v1879
        %v1881 = vpop.f32.mrf.mxu0
        %v1882 = vadd.f32 0.0, %v1881
        %1883 = vmatmul.bf16.gmra.mxu0 %v1803
        %v1884 = vpop.f32.mrf.mxu0
        %v1885 = vadd.f32 0.0, %v1884
        %v1886 = vpop.f32.mrf.mxu0
        %v1887 = vadd.f32 0.0, %v1886
        %1888 = vdwg.mxu0
        %v1889 = vadd.f32 %v1677, %v1821
        %v1890 = vadd.f32 %v1678, %v1860
        %v1891 = vadd.f32 %v1679, %v1823
        %v1892 = vadd.f32 %v1680, %v1862
        %v1893 = vadd.f32 %v1681, %v1826
        %v1894 = vadd.f32 %v1682, %v1865
        %v1895 = vadd.f32 %v1683, %v1828
        %v1896 = vadd.f32 %v1684, %v1867
        %v1897 = vadd.f32 %v1685, %v1831
        %v1898 = vadd.f32 %v1686, %v1870
        %v1899 = vadd.f32 %v1687, %v1833
        %v1900 = vadd.f32 %v1688, %v1872
        %v1901 = vadd.f32 %v1689, %v1836
        %v1902 = vadd.f32 %v1690, %v1875
        %v1903 = vadd.f32 %v1691, %v1838
        %v1904 = vadd.f32 %v1692, %v1877
        %v1905 = vadd.f32 %v1693, %v1841
        %v1906 = vadd.f32 %v1694, %v1880
        %v1907 = vadd.f32 %v1695, %v1843
        %v1908 = vadd.f32 %v1696, %v1882
        %v1909 = vadd.f32 %v1697, %v1846
        %v1910 = vadd.f32 %v1698, %v1885
        %v1911 = vadd.f32 %v1699, %v1848
        %v1912 = vadd.f32 %v1700, %v1887
        %v1913 = vld [vmem:[%s2] sm:$0xff]
        %v1914 = vld [vmem:[%s2 + $0x8] sm:$0xff]
        %v1915 = vld [vmem:[%s2 + $0x10] sm:$0xff]
        %v1916 = vld [vmem:[%s2 + $0x18] sm:$0xff]
        %v1917 = vld [vmem:[%s2 + $0x20] sm:$0xff]
        %v1918 = vld [vmem:[%s2 + $0x28] sm:$0xff]
        %v1919 = vld [vmem:[%s2 + $0x30] sm:$0xff]
        %v1920 = vld [vmem:[%s2 + $0x38] sm:$0xff]
        %v1921 = vld [vmem:[%s2 + $0x40] sm:$0xff]
        %v1922 = vld [vmem:[%s2 + $0x48] sm:$0xff]
        %v1923 = vld [vmem:[%s2 + $0x50] sm:$0xff]
        %v1924 = vld [vmem:[%s2 + $0x58] sm:$0xff]
        %1926 = vset.pattern.permute.xlu0 0
        %1927 = vperm.xlu0 %1926, %v1913
        %v1928 = vpop.permute.xlu0 %1927
        %1931 = vset.pattern.permute.xlu0 0
        %1932 = vperm.xlu0 %1931, %v1914
        %v1933 = vpop.permute.xlu0 %1932
        %1936 = vset.pattern.permute.xlu0 0
        %1937 = vperm.xlu0 %1936, %v1915
        %v1938 = vpop.permute.xlu0 %1937
        %1941 = vset.pattern.permute.xlu0 0
        %1942 = vperm.xlu0 %1941, %v1916
        %v1943 = vpop.permute.xlu0 %1942
        %1946 = vset.pattern.permute.xlu0 0
        %1947 = vperm.xlu0 %1946, %v1917
        %v1948 = vpop.permute.xlu0 %1947
        %1951 = vset.pattern.permute.xlu0 0
        %1952 = vperm.xlu0 %1951, %v1918
        %v1953 = vpop.permute.xlu0 %1952
        %1956 = vset.pattern.permute.xlu0 0
        %1957 = vperm.xlu0 %1956, %v1919
        %v1958 = vpop.permute.xlu0 %1957
        %1961 = vset.pattern.permute.xlu0 0
        %1962 = vperm.xlu0 %1961, %v1920
        %v1963 = vpop.permute.xlu0 %1962
        %1966 = vset.pattern.permute.xlu0 0
        %1967 = vperm.xlu0 %1966, %v1921
        %v1968 = vpop.permute.xlu0 %1967
        %1971 = vset.pattern.permute.xlu0 0
        %1972 = vperm.xlu0 %1971, %v1922
        %v1973 = vpop.permute.xlu0 %1972
        %1976 = vset.pattern.permute.xlu0 0
        %1977 = vperm.xlu0 %1976, %v1923
        %v1978 = vpop.permute.xlu0 %1977
        %1981 = vset.pattern.permute.xlu0 0
        %1982 = vperm.xlu0 %1981, %v1924
        %v1983 = vpop.permute.xlu0 %1982
        %v1985 = vmul.f32 %v1889, %v1928
        %v1986 = vmul.f32 %v1890, %v1928
        %v1987 = vmul.f32 %v1891, %v1933
        %v1988 = vmul.f32 %v1892, %v1933
        %v1989 = vmul.f32 %v1893, %v1938
        %v1990 = vmul.f32 %v1894, %v1938
        %v1991 = vmul.f32 %v1895, %v1943
        %v1992 = vmul.f32 %v1896, %v1943
        %v1993 = vmul.f32 %v1897, %v1948
        %v1994 = vmul.f32 %v1898, %v1948
        %v1995 = vmul.f32 %v1899, %v1953
        %v1996 = vmul.f32 %v1900, %v1953
        %v1997 = vmul.f32 %v1901, %v1958
        %v1998 = vmul.f32 %v1902, %v1958
        %v1999 = vmul.f32 %v1903, %v1963
        %v2000 = vmul.f32 %v1904, %v1963
        %v2001 = vmul.f32 %v1905, %v1968
        %v2002 = vmul.f32 %v1906, %v1968
        %v2003 = vmul.f32 %v1907, %v1973
        %v2004 = vmul.f32 %v1908, %v1973
        %v2005 = vmul.f32 %v1909, %v1978
        %v2006 = vmul.f32 %v1910, %v1978
        %v2007 = vmul.f32 %v1911, %v1983
        %v2008 = vmul.f32 %v1912, %v1983
        %v2009 = vmax.f32 %v1985, 0.0
        %v2010 = vmax.f32 %v1986, 0.0
        %v2011 = vmax.f32 %v1987, 0.0
        %v2012 = vmax.f32 %v1988, 0.0
        %v2013 = vmax.f32 %v1989, 0.0
        %v2014 = vmax.f32 %v1990, 0.0
        %v2015 = vmax.f32 %v1991, 0.0
        %v2016 = vmax.f32 %v1992, 0.0
        %v2017 = vmax.f32 %v1993, 0.0
        %v2018 = vmax.f32 %v1994, 0.0
        %v2019 = vmax.f32 %v1995, 0.0
        %v2020 = vmax.f32 %v1996, 0.0
        %v2021 = vmax.f32 %v1997, 0.0
        %v2022 = vmax.f32 %v1998, 0.0
        %v2023 = vmax.f32 %v1999, 0.0
        %v2024 = vmax.f32 %v2000, 0.0
        %v2025 = vmax.f32 %v2001, 0.0
        %v2026 = vmax.f32 %v2002, 0.0
        %v2027 = vmax.f32 %v2003, 0.0
        %v2028 = vmax.f32 %v2004, 0.0
        %v2029 = vmax.f32 %v2005, 0.0
        %v2030 = vmax.f32 %v2006, 0.0
        %v2031 = vmax.f32 %v2007, 0.0
        %v2032 = vmax.f32 %v2008, 0.0
        %v2033 = vpack.c.bf16 %v2011, %v2009
        %v2034 = vpack.c.bf16 %v2012, %v2010
        %v2035 = vpack.c.bf16 %v2015, %v2013
        %v2036 = vpack.c.bf16 %v2016, %v2014
        %v2037 = vpack.c.bf16 %v2019, %v2017
        %v2038 = vpack.c.bf16 %v2020, %v2018
        %v2039 = vpack.c.bf16 %v2023, %v2021
        %v2040 = vpack.c.bf16 %v2024, %v2022
        %v2041 = vpack.c.bf16 %v2027, %v2025
        %v2042 = vpack.c.bf16 %v2028, %v2026
        %v2043 = vpack.c.bf16 %v2031, %v2029
        %v2044 = vpack.c.bf16 %v2032, %v2030
        %v2045 = vld [vmem:[%s6] sm:$0xff]
        %v2046 = vld [vmem:[%s6 + $0x8] sm:$0xff]
        %v2047 = vld [vmem:[%s6 + $0x10] sm:$0xff]
        %v2048 = vld [vmem:[%s6 + $0x18] sm:$0xff]
        %v2049 = vld [vmem:[%s6 + $0x20] sm:$0xff]
        %v2050 = vld [vmem:[%s6 + $0x28] sm:$0xff]
        %v2051 = vld [vmem:[%s6 + $0x30] sm:$0xff]
        %v2052 = vld [vmem:[%s6 + $0x38] sm:$0xff]
        %v2053 = vld [vmem:[%s6 + $0x40] sm:$0xff]
        %v2054 = vld [vmem:[%s6 + $0x48] sm:$0xff]
        %v2055 = vld [vmem:[%s6 + $0x50] sm:$0xff]
        %v2056 = vld [vmem:[%s6 + $0x58] sm:$0xff]
        %v2057 = vld [vmem:[%s6 + $0x60] sm:$0xff]
        %v2058 = vld [vmem:[%s6 + $0x68] sm:$0xff]
        %v2059 = vld [vmem:[%s6 + $0x70] sm:$0xff]
        %v2060 = vld [vmem:[%s6 + $0x78] sm:$0xff]
        %v2061 = vld [vmem:[%s5] sm:$0xf]
        %v2062 = vld [vmem:[%s5 + $0x4] sm:$0xf]
        %v2063 = vld [vmem:[%s5 + $0x8] sm:$0xf]
        %v2064 = vld [vmem:[%s5 + $0xc] sm:$0xf]
        %v2065 = vld [vmem:[%s5 + $0x10] sm:$0xf]
        %v2066 = vld [vmem:[%s5 + $0x14] sm:$0xf]
        %v2067 = vld [vmem:[%s5 + $0x18] sm:$0xf]
        %v2068 = vld [vmem:[%s5 + $0x1c] sm:$0xf]
        %v2077 = vunpack.c.l.b16 %v2061
        %v2078 = vunpack.c.l.b16 %v2062
        %v2079 = vunpack.c.l.b16 %v2063
        %v2080 = vunpack.c.l.b16 %v2064
        %v2081 = vunpack.c.l.b16 %v2065
        %v2082 = vunpack.c.l.b16 %v2066
        %v2083 = vunpack.c.l.b16 %v2067
        %v2084 = vunpack.c.l.b16 %v2068
        %v2085 = vpack.c.b16 %v2078, %v2077
        %v2086 = vpack.c.b16 %v2080, %v2079
        %v2087 = vpack.c.b16 %v2082, %v2081
        %v2088 = vpack.c.b16 %v2084, %v2083
        %vm2089 = vcmask 785408
        %v2091 = vsel %vm2089, %v2085, 0
        %v2094 = vsel %vm2089, %v2086, 0
        %v2097 = vsel %vm2089, %v2087, 0
        %v2100 = vsel %vm2089, %v2088, 0
        %2102 = vmatpush.bf16.msra.mxu0 0
        %2103 = vmatpush.bf16.msra.mxu0 0
        %2104 = vmatpush.bf16.msra.mxu0 %v2043
        %2105 = vmatpush.bf16.msra.mxu0 %v2041
        %2106 = vmatpush.bf16.msra.mxu0 %v2039
        %2107 = vmatpush.bf16.msra.mxu0 %v2037
        %2108 = vmatpush.bf16.msra.mxu0 %v2035
        %2109 = vmatpush.bf16.msra.mxu0 %v2033
        %2110 = vmatmul.bf16.gmra.mxu0 %v2091
        %v2111 = vpop.f32.mrf.mxu0
        %v2112 = vadd.f32 0.0, %v2111
        %v2113 = vpop.f32.mrf.mxu0
        %v2114 = vadd.f32 0.0, %v2113
        %2115 = vmatmul.bf16.gmra.mxu0 %v2094
        %v2116 = vpop.f32.mrf.mxu0
        %v2117 = vadd.f32 0.0, %v2116
        %v2118 = vpop.f32.mrf.mxu0
        %v2119 = vadd.f32 0.0, %v2118
        %2120 = vmatmul.bf16.gmra.mxu0 %v2097
        %v2121 = vpop.f32.mrf.mxu0
        %v2122 = vadd.f32 0.0, %v2121
        %v2123 = vpop.f32.mrf.mxu0
        %v2124 = vadd.f32 0.0, %v2123
        %2125 = vmatmul.bf16.gmra.mxu0 %v2100
        %v2126 = vpop.f32.mrf.mxu0
        %v2127 = vadd.f32 0.0, %v2126
        %v2128 = vpop.f32.mrf.mxu0
        %v2129 = vadd.f32 0.0, %v2128
        %2130 = vdwg.mxu0
        %2131 = vmatpush.bf16.msra.mxu0 0
        %2132 = vmatpush.bf16.msra.mxu0 0
        %2133 = vmatpush.bf16.msra.mxu0 %v2044
        %2134 = vmatpush.bf16.msra.mxu0 %v2042
        %2135 = vmatpush.bf16.msra.mxu0 %v2040
        %2136 = vmatpush.bf16.msra.mxu0 %v2038
        %2137 = vmatpush.bf16.msra.mxu0 %v2036
        %2138 = vmatpush.bf16.msra.mxu0 %v2034
        %2139 = vmatmul.bf16.gmra.mxu0 %v2091
        %v2140 = vpop.f32.mrf.mxu0
        %v2141 = vadd.f32 0.0, %v2140
        %v2142 = vpop.f32.mrf.mxu0
        %v2143 = vadd.f32 0.0, %v2142
        %2144 = vmatmul.bf16.gmra.mxu0 %v2094
        %v2145 = vpop.f32.mrf.mxu0
        %v2146 = vadd.f32 0.0, %v2145
        %v2147 = vpop.f32.mrf.mxu0
        %v2148 = vadd.f32 0.0, %v2147
        %2149 = vmatmul.bf16.gmra.mxu0 %v2097
        %v2150 = vpop.f32.mrf.mxu0
        %v2151 = vadd.f32 0.0, %v2150
        %v2152 = vpop.f32.mrf.mxu0
        %v2153 = vadd.f32 0.0, %v2152
        %2154 = vmatmul.bf16.gmra.mxu0 %v2100
        %v2155 = vpop.f32.mrf.mxu0
        %v2156 = vadd.f32 0.0, %v2155
        %v2157 = vpop.f32.mrf.mxu0
        %v2158 = vadd.f32 0.0, %v2157
        %2159 = vdwg.mxu0
        %v2160 = vpack.c.bf16 %v2114, %v2112
        %v2161 = vpack.c.bf16 %v2143, %v2141
        %v2162 = vpack.c.bf16 %v2119, %v2117
        %v2163 = vpack.c.bf16 %v2148, %v2146
        %v2164 = vpack.c.bf16 %v2124, %v2122
        %v2165 = vpack.c.bf16 %v2153, %v2151
        %v2166 = vpack.c.bf16 %v2129, %v2127
        %v2167 = vpack.c.bf16 %v2158, %v2156
        %v2168 = vld [vmem:[%s4] sm:$0xff]
        %v2169 = vld [vmem:[%s4 + $0x8] sm:$0xff]
        %v2170 = vld [vmem:[%s4 + $0x10] sm:$0xff]
        %v2171 = vld [vmem:[%s4 + $0x18] sm:$0xff]
        %v2172 = vld [vmem:[%s4 + $0x20] sm:$0xff]
        %v2173 = vld [vmem:[%s4 + $0x28] sm:$0xff]
        %v2174 = vld [vmem:[%s4 + $0x30] sm:$0xff]
        %v2175 = vld [vmem:[%s4 + $0x38] sm:$0xff]
        %v2176 = vld [vmem:[%s4 + $0x40] sm:$0xff]
        %v2177 = vld [vmem:[%s4 + $0x48] sm:$0xff]
        %v2178 = vld [vmem:[%s4 + $0x50] sm:$0xff]
        %v2179 = vld [vmem:[%s4 + $0x58] sm:$0xff]
        %v2180 = vld [vmem:[%s4 + $0x60] sm:$0xff]
        %v2181 = vld [vmem:[%s4 + $0x68] sm:$0xff]
        %v2182 = vld [vmem:[%s4 + $0x70] sm:$0xff]
        %v2183 = vld [vmem:[%s4 + $0x78] sm:$0xff]
        %v2184 = vld [vmem:[%s4 + $0x80] sm:$0xff]
        %v2185 = vld [vmem:[%s4 + $0x88] sm:$0xff]
        %v2204 = vunpack.c.l.b16 %v2168
        %v2205 = vunpack.c.h.b16 %v2168
        %v2206 = vunpack.c.l.b16 %v2169
        %v2207 = vunpack.c.h.b16 %v2169
        %v2208 = vunpack.c.l.b16 %v2170
        %v2209 = vunpack.c.h.b16 %v2170
        %v2210 = vunpack.c.l.b16 %v2171
        %v2211 = vunpack.c.h.b16 %v2171
        %v2212 = vunpack.c.l.b16 %v2172
        %v2213 = vunpack.c.h.b16 %v2172
        %v2214 = vunpack.c.l.b16 %v2173
        %v2215 = vunpack.c.h.b16 %v2173
        %v2216 = vunpack.c.l.b16 %v2174
        %v2217 = vunpack.c.h.b16 %v2174
        %v2218 = vunpack.c.l.b16 %v2175
        %v2219 = vunpack.c.h.b16 %v2175
        %v2220 = vunpack.c.l.b16 %v2176
        %v2221 = vunpack.c.h.b16 %v2176
        %v2222 = vunpack.c.l.b16 %v2177
        %v2223 = vunpack.c.h.b16 %v2177
        %v2224 = vunpack.c.l.b16 %v2178
        %v2225 = vunpack.c.h.b16 %v2178
        %v2226 = vunpack.c.l.b16 %v2179
        %v2227 = vunpack.c.h.b16 %v2179
        %v2228 = vunpack.c.l.b16 %v2180
        %v2229 = vunpack.c.h.b16 %v2180
        %v2230 = vunpack.c.l.b16 %v2181
        %v2231 = vunpack.c.h.b16 %v2181
        %v2232 = vunpack.c.l.b16 %v2182
        %v2233 = vunpack.c.h.b16 %v2182
        %v2234 = vunpack.c.l.b16 %v2183
        %v2235 = vunpack.c.h.b16 %v2183
        %v2236 = vunpack.c.l.b16 %v2184
        %v2237 = vunpack.c.h.b16 %v2184
        %v2238 = vunpack.c.l.b16 %v2185
        %v2239 = vunpack.c.h.b16 %v2185
        %v2240 = vpack.c.b16 %v2206, %v2204
        %v2241 = vpack.c.b16 %v2207, %v2205
        %v2242 = vpack.c.b16 %v2210, %v2208
        %v2243 = vpack.c.b16 %v2211, %v2209
        %v2244 = vpack.c.b16 %v2214, %v2212
        %v2245 = vpack.c.b16 %v2215, %v2213
        %v2246 = vpack.c.b16 %v2218, %v2216
        %v2247 = vpack.c.b16 %v2219, %v2217
        %v2248 = vpack.c.b16 %v2222, %v2220
        %v2249 = vpack.c.b16 %v2223, %v2221
        %v2250 = vpack.c.b16 %v2226, %v2224
        %v2251 = vpack.c.b16 %v2227, %v2225
        %v2252 = vpack.c.b16 %v2230, %v2228
        %v2253 = vpack.c.b16 %v2231, %v2229
        %v2254 = vpack.c.b16 %v2234, %v2232
        %v2255 = vpack.c.b16 %v2235, %v2233
        %v2256 = vpack.c.b16 %v2238, %v2236
        %v2257 = vpack.c.b16 %v2239, %v2237
        %vm2276 = vcmask 130048
        %v2278 = vsel %vm2276, %v2161, 0
        %v2281 = vsel %vm2276, %v2163, 0
        %v2284 = vsel %vm2276, %v2165, 0
        %v2287 = vsel %vm2276, %v2167, 0
        %2289 = vmatpush.bf16.msra.mxu0 %v2254
        %2290 = vmatpush.bf16.msra.mxu0 %v2252
        %2291 = vmatpush.bf16.msra.mxu0 %v2250
        %2292 = vmatpush.bf16.msra.mxu0 %v2248
        %2293 = vmatpush.bf16.msra.mxu0 %v2246
        %2294 = vmatpush.bf16.msra.mxu0 %v2244
        %2295 = vmatpush.bf16.msra.mxu0 %v2242
        %2296 = vmatpush.bf16.msra.mxu0 %v2240
        %2297 = vmatmul.bf16.gmra.mxu0 %v2160
        %v2298 = vpop.f32.mrf.mxu0
        %v2299 = vadd.f32 0.0, %v2298
        %v2300 = vpop.f32.mrf.mxu0
        %v2301 = vadd.f32 0.0, %v2300
        %2302 = vmatmul.bf16.gmra.mxu0 %v2162
        %v2303 = vpop.f32.mrf.mxu0
        %v2304 = vadd.f32 0.0, %v2303
        %v2305 = vpop.f32.mrf.mxu0
        %v2306 = vadd.f32 0.0, %v2305
        %2307 = vmatmul.bf16.gmra.mxu0 %v2164
        %v2308 = vpop.f32.mrf.mxu0
        %v2309 = vadd.f32 0.0, %v2308
        %v2310 = vpop.f32.mrf.mxu0
        %v2311 = vadd.f32 0.0, %v2310
        %2312 = vmatmul.bf16.gmra.mxu0 %v2166
        %v2313 = vpop.f32.mrf.mxu0
        %v2314 = vadd.f32 0.0, %v2313
        %v2315 = vpop.f32.mrf.mxu0
        %v2316 = vadd.f32 0.0, %v2315
        %2317 = vdwg.mxu0
        %2318 = vmatpush.bf16.msra.mxu0 0
        %2319 = vmatpush.bf16.msra.mxu0 0
        %2320 = vmatpush.bf16.msra.mxu0 0
        %2321 = vmatpush.bf16.msra.mxu0 0
        %2322 = vmatpush.bf16.msra.mxu0 0
        %2323 = vmatpush.bf16.msra.mxu0 0
        %2324 = vmatpush.bf16.msra.mxu0 0
        %2325 = vmatpush.bf16.msra.mxu0 %v2256
        %2326 = vmatmul.bf16.gmra.mxu0 %v2278
        %v2327 = vpop.f32.mrf.mxu0
        %v2328 = vadd.f32 %v2299, %v2327
        %v2329 = vpop.f32.mrf.mxu0
        %v2330 = vadd.f32 %v2301, %v2329
        %2331 = vmatmul.bf16.gmra.mxu0 %v2281
        %v2332 = vpop.f32.mrf.mxu0
        %v2333 = vadd.f32 %v2304, %v2332
        %v2334 = vpop.f32.mrf.mxu0
        %v2335 = vadd.f32 %v2306, %v2334
        %2336 = vmatmul.bf16.gmra.mxu0 %v2284
        %v2337 = vpop.f32.mrf.mxu0
        %v2338 = vadd.f32 %v2309, %v2337
        %v2339 = vpop.f32.mrf.mxu0
        %v2340 = vadd.f32 %v2311, %v2339
        %2341 = vmatmul.bf16.gmra.mxu0 %v2287
        %v2342 = vpop.f32.mrf.mxu0
        %v2343 = vadd.f32 %v2314, %v2342
        %v2344 = vpop.f32.mrf.mxu0
        %v2345 = vadd.f32 %v2316, %v2344
        %2346 = vdwg.mxu0
        %2347 = vmatpush.bf16.msra.mxu0 %v2255
        %2348 = vmatpush.bf16.msra.mxu0 %v2253
        %2349 = vmatpush.bf16.msra.mxu0 %v2251
        %2350 = vmatpush.bf16.msra.mxu0 %v2249
        %2351 = vmatpush.bf16.msra.mxu0 %v2247
        %2352 = vmatpush.bf16.msra.mxu0 %v2245
        %2353 = vmatpush.bf16.msra.mxu0 %v2243
        %2354 = vmatpush.bf16.msra.mxu0 %v2241
        %2355 = vmatmul.bf16.gmra.mxu0 %v2160
        %v2356 = vpop.f32.mrf.mxu0
        %v2357 = vadd.f32 0.0, %v2356
        %v2358 = vpop.f32.mrf.mxu0
        %v2359 = vadd.f32 0.0, %v2358
        %2360 = vmatmul.bf16.gmra.mxu0 %v2162
        %v2361 = vpop.f32.mrf.mxu0
        %v2362 = vadd.f32 0.0, %v2361
        %v2363 = vpop.f32.mrf.mxu0
        %v2364 = vadd.f32 0.0, %v2363
        %2365 = vmatmul.bf16.gmra.mxu0 %v2164
        %v2366 = vpop.f32.mrf.mxu0
        %v2367 = vadd.f32 0.0, %v2366
        %v2368 = vpop.f32.mrf.mxu0
        %v2369 = vadd.f32 0.0, %v2368
        %2370 = vmatmul.bf16.gmra.mxu0 %v2166
        %v2371 = vpop.f32.mrf.mxu0
        %v2372 = vadd.f32 0.0, %v2371
        %v2373 = vpop.f32.mrf.mxu0
        %v2374 = vadd.f32 0.0, %v2373
        %2375 = vdwg.mxu0
        %2376 = vmatpush.bf16.msra.mxu0 0
        %2377 = vmatpush.bf16.msra.mxu0 0
        %2378 = vmatpush.bf16.msra.mxu0 0
        %2379 = vmatpush.bf16.msra.mxu0 0
        %2380 = vmatpush.bf16.msra.mxu0 0
        %2381 = vmatpush.bf16.msra.mxu0 0
        %2382 = vmatpush.bf16.msra.mxu0 0
        %2383 = vmatpush.bf16.msra.mxu0 %v2257
        %2384 = vmatmul.bf16.gmra.mxu0 %v2278
        %v2385 = vpop.f32.mrf.mxu0
        %v2386 = vadd.f32 %v2357, %v2385
        %v2387 = vpop.f32.mrf.mxu0
        %v2388 = vadd.f32 %v2359, %v2387
        %2389 = vmatmul.bf16.gmra.mxu0 %v2281
        %v2390 = vpop.f32.mrf.mxu0
        %v2391 = vadd.f32 %v2362, %v2390
        %v2392 = vpop.f32.mrf.mxu0
        %v2393 = vadd.f32 %v2364, %v2392
        %2394 = vmatmul.bf16.gmra.mxu0 %v2284
        %v2395 = vpop.f32.mrf.mxu0
        %v2396 = vadd.f32 %v2367, %v2395
        %v2397 = vpop.f32.mrf.mxu0
        %v2398 = vadd.f32 %v2369, %v2397
        %2399 = vmatmul.bf16.gmra.mxu0 %v2287
        %v2400 = vpop.f32.mrf.mxu0
        %v2401 = vadd.f32 %v2372, %v2400
        %v2402 = vpop.f32.mrf.mxu0
        %v2403 = vadd.f32 %v2374, %v2402
        %2404 = vdwg.mxu0
        %v2405 = vadd.f32 %v2045, %v2328
        %v2406 = vadd.f32 %v2046, %v2386
        %v2407 = vadd.f32 %v2047, %v2330
        %v2408 = vadd.f32 %v2048, %v2388
        %v2409 = vadd.f32 %v2049, %v2333
        %v2410 = vadd.f32 %v2050, %v2391
        %v2411 = vadd.f32 %v2051, %v2335
        %v2412 = vadd.f32 %v2052, %v2393
        %v2413 = vadd.f32 %v2053, %v2338
        %v2414 = vadd.f32 %v2054, %v2396
        %v2415 = vadd.f32 %v2055, %v2340
        %v2416 = vadd.f32 %v2056, %v2398
        %v2417 = vadd.f32 %v2057, %v2343
        %v2418 = vadd.f32 %v2058, %v2401
        %v2419 = vadd.f32 %v2059, %v2345
        %v2420 = vadd.f32 %v2060, %v2403
        %s2421 = scalar_lea.vmem %s5, 32
        %v2422 = vld [vmem:[%s2421] sm:$0xf]
        %v2423 = vld [vmem:[%s2421 + $0x4] sm:$0xf]
        %v2424 = vld [vmem:[%s2421 + $0x8] sm:$0xf]
        %v2425 = vld [vmem:[%s2421 + $0xc] sm:$0xf]
        %v2426 = vld [vmem:[%s2421 + $0x10] sm:$0xf]
        %v2427 = vld [vmem:[%s2421 + $0x14] sm:$0xf]
        %v2428 = vld [vmem:[%s2421 + $0x18] sm:$0xf]
        %v2429 = vld [vmem:[%s2421 + $0x1c] sm:$0xf]
        %v2438 = vunpack.c.l.b16 %v2422
        %v2439 = vunpack.c.l.b16 %v2423
        %v2440 = vunpack.c.l.b16 %v2424
        %v2441 = vunpack.c.l.b16 %v2425
        %v2442 = vunpack.c.l.b16 %v2426
        %v2443 = vunpack.c.l.b16 %v2427
        %v2444 = vunpack.c.l.b16 %v2428
        %v2445 = vunpack.c.l.b16 %v2429
        %v2446 = vpack.c.b16 %v2439, %v2438
        %v2447 = vpack.c.b16 %v2441, %v2440
        %v2448 = vpack.c.b16 %v2443, %v2442
        %v2449 = vpack.c.b16 %v2445, %v2444
        %v2451 = vsel %vm2089, %v2446, 0
        %v2454 = vsel %vm2089, %v2447, 0
        %v2457 = vsel %vm2089, %v2448, 0
        %v2460 = vsel %vm2089, %v2449, 0
        %2462 = vmatpush.bf16.msra.mxu0 0
        %2463 = vmatpush.bf16.msra.mxu0 0
        %2464 = vmatpush.bf16.msra.mxu0 %v2043
        %2465 = vmatpush.bf16.msra.mxu0 %v2041
        %2466 = vmatpush.bf16.msra.mxu0 %v2039
        %2467 = vmatpush.bf16.msra.mxu0 %v2037
        %2468 = vmatpush.bf16.msra.mxu0 %v2035
        %2469 = vmatpush.bf16.msra.mxu0 %v2033
        %2470 = vmatmul.bf16.gmra.mxu0 %v2451
        %v2471 = vpop.f32.mrf.mxu0
        %v2472 = vadd.f32 0.0, %v2471
        %v2473 = vpop.f32.mrf.mxu0
        %v2474 = vadd.f32 0.0, %v2473
        %2475 = vmatmul.bf16.gmra.mxu0 %v2454
        %v2476 = vpop.f32.mrf.mxu0
        %v2477 = vadd.f32 0.0, %v2476
        %v2478 = vpop.f32.mrf.mxu0
        %v2479 = vadd.f32 0.0, %v2478
        %2480 = vmatmul.bf16.gmra.mxu0 %v2457
        %v2481 = vpop.f32.mrf.mxu0
        %v2482 = vadd.f32 0.0, %v2481
        %v2483 = vpop.f32.mrf.mxu0
        %v2484 = vadd.f32 0.0, %v2483
        %2485 = vmatmul.bf16.gmra.mxu0 %v2460
        %v2486 = vpop.f32.mrf.mxu0
        %v2487 = vadd.f32 0.0, %v2486
        %v2488 = vpop.f32.mrf.mxu0
        %v2489 = vadd.f32 0.0, %v2488
        %2490 = vdwg.mxu0
        %2491 = vmatpush.bf16.msra.mxu0 0
        %2492 = vmatpush.bf16.msra.mxu0 0
        %2493 = vmatpush.bf16.msra.mxu0 %v2044
        %2494 = vmatpush.bf16.msra.mxu0 %v2042
        %2495 = vmatpush.bf16.msra.mxu0 %v2040
        %2496 = vmatpush.bf16.msra.mxu0 %v2038
        %2497 = vmatpush.bf16.msra.mxu0 %v2036
        %2498 = vmatpush.bf16.msra.mxu0 %v2034
        %2499 = vmatmul.bf16.gmra.mxu0 %v2451
        %v2500 = vpop.f32.mrf.mxu0
        %v2501 = vadd.f32 0.0, %v2500
        %v2502 = vpop.f32.mrf.mxu0
        %v2503 = vadd.f32 0.0, %v2502
        %2504 = vmatmul.bf16.gmra.mxu0 %v2454
        %v2505 = vpop.f32.mrf.mxu0
        %v2506 = vadd.f32 0.0, %v2505
        %v2507 = vpop.f32.mrf.mxu0
        %v2508 = vadd.f32 0.0, %v2507
        %2509 = vmatmul.bf16.gmra.mxu0 %v2457
        %v2510 = vpop.f32.mrf.mxu0
        %v2511 = vadd.f32 0.0, %v2510
        %v2512 = vpop.f32.mrf.mxu0
        %v2513 = vadd.f32 0.0, %v2512
        %2514 = vmatmul.bf16.gmra.mxu0 %v2460
        %v2515 = vpop.f32.mrf.mxu0
        %v2516 = vadd.f32 0.0, %v2515
        %v2517 = vpop.f32.mrf.mxu0
        %v2518 = vadd.f32 0.0, %v2517
        %2519 = vdwg.mxu0
        %v2520 = vpack.c.bf16 %v2474, %v2472
        %v2521 = vpack.c.bf16 %v2503, %v2501
        %v2522 = vpack.c.bf16 %v2479, %v2477
        %v2523 = vpack.c.bf16 %v2508, %v2506
        %v2524 = vpack.c.bf16 %v2484, %v2482
        %v2525 = vpack.c.bf16 %v2513, %v2511
        %v2526 = vpack.c.bf16 %v2489, %v2487
        %v2527 = vpack.c.bf16 %v2518, %v2516
        %s2528 = scalar_lea.vmem %s4, 144
        %v2529 = vld [vmem:[%s2528] sm:$0xff]
        %v2530 = vld [vmem:[%s2528 + $0x8] sm:$0xff]
        %v2531 = vld [vmem:[%s2528 + $0x10] sm:$0xff]
        %v2532 = vld [vmem:[%s2528 + $0x18] sm:$0xff]
        %v2533 = vld [vmem:[%s2528 + $0x20] sm:$0xff]
        %v2534 = vld [vmem:[%s2528 + $0x28] sm:$0xff]
        %v2535 = vld [vmem:[%s2528 + $0x30] sm:$0xff]
        %v2536 = vld [vmem:[%s2528 + $0x38] sm:$0xff]
        %v2537 = vld [vmem:[%s2528 + $0x40] sm:$0xff]
        %v2538 = vld [vmem:[%s2528 + $0x48] sm:$0xff]
        %v2539 = vld [vmem:[%s2528 + $0x50] sm:$0xff]
        %v2540 = vld [vmem:[%s2528 + $0x58] sm:$0xff]
        %v2541 = vld [vmem:[%s2528 + $0x60] sm:$0xff]
        %v2542 = vld [vmem:[%s2528 + $0x68] sm:$0xff]
        %v2543 = vld [vmem:[%s2528 + $0x70] sm:$0xff]
        %v2544 = vld [vmem:[%s2528 + $0x78] sm:$0xff]
        %v2545 = vld [vmem:[%s2528 + $0x80] sm:$0xff]
        %v2546 = vld [vmem:[%s2528 + $0x88] sm:$0xff]
        %v2565 = vunpack.c.l.b16 %v2529
        %v2566 = vunpack.c.h.b16 %v2529
        %v2567 = vunpack.c.l.b16 %v2530
        %v2568 = vunpack.c.h.b16 %v2530
        %v2569 = vunpack.c.l.b16 %v2531
        %v2570 = vunpack.c.h.b16 %v2531
        %v2571 = vunpack.c.l.b16 %v2532
        %v2572 = vunpack.c.h.b16 %v2532
        %v2573 = vunpack.c.l.b16 %v2533
        %v2574 = vunpack.c.h.b16 %v2533
        %v2575 = vunpack.c.l.b16 %v2534
        %v2576 = vunpack.c.h.b16 %v2534
        %v2577 = vunpack.c.l.b16 %v2535
        %v2578 = vunpack.c.h.b16 %v2535
        %v2579 = vunpack.c.l.b16 %v2536
        %v2580 = vunpack.c.h.b16 %v2536
        %v2581 = vunpack.c.l.b16 %v2537
        %v2582 = vunpack.c.h.b16 %v2537
        %v2583 = vunpack.c.l.b16 %v2538
        %v2584 = vunpack.c.h.b16 %v2538
        %v2585 = vunpack.c.l.b16 %v2539
        %v2586 = vunpack.c.h.b16 %v2539
        %v2587 = vunpack.c.l.b16 %v2540
        %v2588 = vunpack.c.h.b16 %v2540
        %v2589 = vunpack.c.l.b16 %v2541
        %v2590 = vunpack.c.h.b16 %v2541
        %v2591 = vunpack.c.l.b16 %v2542
        %v2592 = vunpack.c.h.b16 %v2542
        %v2593 = vunpack.c.l.b16 %v2543
        %v2594 = vunpack.c.h.b16 %v2543
        %v2595 = vunpack.c.l.b16 %v2544
        %v2596 = vunpack.c.h.b16 %v2544
        %v2597 = vunpack.c.l.b16 %v2545
        %v2598 = vunpack.c.h.b16 %v2545
        %v2599 = vunpack.c.l.b16 %v2546
        %v2600 = vunpack.c.h.b16 %v2546
        %v2601 = vpack.c.b16 %v2567, %v2565
        %v2602 = vpack.c.b16 %v2568, %v2566
        %v2603 = vpack.c.b16 %v2571, %v2569
        %v2604 = vpack.c.b16 %v2572, %v2570
        %v2605 = vpack.c.b16 %v2575, %v2573
        %v2606 = vpack.c.b16 %v2576, %v2574
        %v2607 = vpack.c.b16 %v2579, %v2577
        %v2608 = vpack.c.b16 %v2580, %v2578
        %v2609 = vpack.c.b16 %v2583, %v2581
        %v2610 = vpack.c.b16 %v2584, %v2582
        %v2611 = vpack.c.b16 %v2587, %v2585
        %v2612 = vpack.c.b16 %v2588, %v2586
        %v2613 = vpack.c.b16 %v2591, %v2589
        %v2614 = vpack.c.b16 %v2592, %v2590
        %v2615 = vpack.c.b16 %v2595, %v2593
        %v2616 = vpack.c.b16 %v2596, %v2594
        %v2617 = vpack.c.b16 %v2599, %v2597
        %v2618 = vpack.c.b16 %v2600, %v2598
        %v2638 = vsel %vm2276, %v2521, 0
        %v2641 = vsel %vm2276, %v2523, 0
        %v2644 = vsel %vm2276, %v2525, 0
        %v2647 = vsel %vm2276, %v2527, 0
        %2649 = vmatpush.bf16.msra.mxu0 %v2615
        %2650 = vmatpush.bf16.msra.mxu0 %v2613
        %2651 = vmatpush.bf16.msra.mxu0 %v2611
        %2652 = vmatpush.bf16.msra.mxu0 %v2609
        %2653 = vmatpush.bf16.msra.mxu0 %v2607
        %2654 = vmatpush.bf16.msra.mxu0 %v2605
        %2655 = vmatpush.bf16.msra.mxu0 %v2603
        %2656 = vmatpush.bf16.msra.mxu0 %v2601
        %2657 = vmatmul.bf16.gmra.mxu0 %v2520
        %v2658 = vpop.f32.mrf.mxu0
        %v2659 = vadd.f32 0.0, %v2658
        %v2660 = vpop.f32.mrf.mxu0
        %v2661 = vadd.f32 0.0, %v2660
        %2662 = vmatmul.bf16.gmra.mxu0 %v2522
        %v2663 = vpop.f32.mrf.mxu0
        %v2664 = vadd.f32 0.0, %v2663
        %v2665 = vpop.f32.mrf.mxu0
        %v2666 = vadd.f32 0.0, %v2665
        %2667 = vmatmul.bf16.gmra.mxu0 %v2524
        %v2668 = vpop.f32.mrf.mxu0
        %v2669 = vadd.f32 0.0, %v2668
        %v2670 = vpop.f32.mrf.mxu0
        %v2671 = vadd.f32 0.0, %v2670
        %2672 = vmatmul.bf16.gmra.mxu0 %v2526
        %v2673 = vpop.f32.mrf.mxu0
        %v2674 = vadd.f32 0.0, %v2673
        %v2675 = vpop.f32.mrf.mxu0
        %v2676 = vadd.f32 0.0, %v2675
        %2677 = vdwg.mxu0
        %2678 = vmatpush.bf16.msra.mxu0 0
        %2679 = vmatpush.bf16.msra.mxu0 0
        %2680 = vmatpush.bf16.msra.mxu0 0
        %2681 = vmatpush.bf16.msra.mxu0 0
        %2682 = vmatpush.bf16.msra.mxu0 0
        %2683 = vmatpush.bf16.msra.mxu0 0
        %2684 = vmatpush.bf16.msra.mxu0 0
        %2685 = vmatpush.bf16.msra.mxu0 %v2617
        %2686 = vmatmul.bf16.gmra.mxu0 %v2638
        %v2687 = vpop.f32.mrf.mxu0
        %v2688 = vadd.f32 %v2659, %v2687
        %v2689 = vpop.f32.mrf.mxu0
        %v2690 = vadd.f32 %v2661, %v2689
        %2691 = vmatmul.bf16.gmra.mxu0 %v2641
        %v2692 = vpop.f32.mrf.mxu0
        %v2693 = vadd.f32 %v2664, %v2692
        %v2694 = vpop.f32.mrf.mxu0
        %v2695 = vadd.f32 %v2666, %v2694
        %2696 = vmatmul.bf16.gmra.mxu0 %v2644
        %v2697 = vpop.f32.mrf.mxu0
        %v2698 = vadd.f32 %v2669, %v2697
        %v2699 = vpop.f32.mrf.mxu0
        %v2700 = vadd.f32 %v2671, %v2699
        %2701 = vmatmul.bf16.gmra.mxu0 %v2647
        %v2702 = vpop.f32.mrf.mxu0
        %v2703 = vadd.f32 %v2674, %v2702
        %v2704 = vpop.f32.mrf.mxu0
        %v2705 = vadd.f32 %v2676, %v2704
        %2706 = vdwg.mxu0
        %2707 = vmatpush.bf16.msra.mxu0 %v2616
        %2708 = vmatpush.bf16.msra.mxu0 %v2614
        %2709 = vmatpush.bf16.msra.mxu0 %v2612
        %2710 = vmatpush.bf16.msra.mxu0 %v2610
        %2711 = vmatpush.bf16.msra.mxu0 %v2608
        %2712 = vmatpush.bf16.msra.mxu0 %v2606
        %2713 = vmatpush.bf16.msra.mxu0 %v2604
        %2714 = vmatpush.bf16.msra.mxu0 %v2602
        %2715 = vmatmul.bf16.gmra.mxu0 %v2520
        %v2716 = vpop.f32.mrf.mxu0
        %v2717 = vadd.f32 0.0, %v2716
        %v2718 = vpop.f32.mrf.mxu0
        %v2719 = vadd.f32 0.0, %v2718
        %2720 = vmatmul.bf16.gmra.mxu0 %v2522
        %v2721 = vpop.f32.mrf.mxu0
        %v2722 = vadd.f32 0.0, %v2721
        %v2723 = vpop.f32.mrf.mxu0
        %v2724 = vadd.f32 0.0, %v2723
        %2725 = vmatmul.bf16.gmra.mxu0 %v2524
        %v2726 = vpop.f32.mrf.mxu0
        %v2727 = vadd.f32 0.0, %v2726
        %v2728 = vpop.f32.mrf.mxu0
        %v2729 = vadd.f32 0.0, %v2728
        %2730 = vmatmul.bf16.gmra.mxu0 %v2526
        %v2731 = vpop.f32.mrf.mxu0
        %v2732 = vadd.f32 0.0, %v2731
        %v2733 = vpop.f32.mrf.mxu0
        %v2734 = vadd.f32 0.0, %v2733
        %2735 = vdwg.mxu0
        %2736 = vmatpush.bf16.msra.mxu0 0
        %2737 = vmatpush.bf16.msra.mxu0 0
        %2738 = vmatpush.bf16.msra.mxu0 0
        %2739 = vmatpush.bf16.msra.mxu0 0
        %2740 = vmatpush.bf16.msra.mxu0 0
        %2741 = vmatpush.bf16.msra.mxu0 0
        %2742 = vmatpush.bf16.msra.mxu0 0
        %2743 = vmatpush.bf16.msra.mxu0 %v2618
        %2744 = vmatmul.bf16.gmra.mxu0 %v2638
        %v2745 = vpop.f32.mrf.mxu0
        %v2746 = vadd.f32 %v2717, %v2745
        %v2747 = vpop.f32.mrf.mxu0
        %v2748 = vadd.f32 %v2719, %v2747
        %2749 = vmatmul.bf16.gmra.mxu0 %v2641
        %v2750 = vpop.f32.mrf.mxu0
        %v2751 = vadd.f32 %v2722, %v2750
        %v2752 = vpop.f32.mrf.mxu0
        %v2753 = vadd.f32 %v2724, %v2752
        %2754 = vmatmul.bf16.gmra.mxu0 %v2644
        %v2755 = vpop.f32.mrf.mxu0
        %v2756 = vadd.f32 %v2727, %v2755
        %v2757 = vpop.f32.mrf.mxu0
        %v2758 = vadd.f32 %v2729, %v2757
        %2759 = vmatmul.bf16.gmra.mxu0 %v2647
        %v2760 = vpop.f32.mrf.mxu0
        %v2761 = vadd.f32 %v2732, %v2760
        %v2762 = vpop.f32.mrf.mxu0
        %v2763 = vadd.f32 %v2734, %v2762
        %2764 = vdwg.mxu0
        %v2765 = vadd.f32 %v2405, %v2688
        %v2766 = vadd.f32 %v2406, %v2746
        %v2767 = vadd.f32 %v2407, %v2690
        %v2768 = vadd.f32 %v2408, %v2748
        %v2769 = vadd.f32 %v2409, %v2693
        %v2770 = vadd.f32 %v2410, %v2751
        %v2771 = vadd.f32 %v2411, %v2695
        %v2772 = vadd.f32 %v2412, %v2753
        %v2773 = vadd.f32 %v2413, %v2698
        %v2774 = vadd.f32 %v2414, %v2756
        %v2775 = vadd.f32 %v2415, %v2700
        %v2776 = vadd.f32 %v2416, %v2758
        %v2777 = vadd.f32 %v2417, %v2703
        %v2778 = vadd.f32 %v2418, %v2761
        %v2779 = vadd.f32 %v2419, %v2705
        %v2780 = vadd.f32 %v2420, %v2763
        %s2781 = scalar_lea.vmem %s5, 64
        %v2782 = vld [vmem:[%s2781] sm:$0xf]
        %v2783 = vld [vmem:[%s2781 + $0x4] sm:$0xf]
        %v2784 = vld [vmem:[%s2781 + $0x8] sm:$0xf]
        %v2785 = vld [vmem:[%s2781 + $0xc] sm:$0xf]
        %v2786 = vld [vmem:[%s2781 + $0x10] sm:$0xf]
        %v2787 = vld [vmem:[%s2781 + $0x14] sm:$0xf]
        %v2788 = vld [vmem:[%s2781 + $0x18] sm:$0xf]
        %v2789 = vld [vmem:[%s2781 + $0x1c] sm:$0xf]
        %v2798 = vunpack.c.l.b16 %v2782
        %v2799 = vunpack.c.l.b16 %v2783
        %v2800 = vunpack.c.l.b16 %v2784
        %v2801 = vunpack.c.l.b16 %v2785
        %v2802 = vunpack.c.l.b16 %v2786
        %v2803 = vunpack.c.l.b16 %v2787
        %v2804 = vunpack.c.l.b16 %v2788
        %v2805 = vunpack.c.l.b16 %v2789
        %v2806 = vpack.c.b16 %v2799, %v2798
        %v2807 = vpack.c.b16 %v2801, %v2800
        %v2808 = vpack.c.b16 %v2803, %v2802
        %v2809 = vpack.c.b16 %v2805, %v2804
        %v2811 = vsel %vm2089, %v2806, 0
        %v2814 = vsel %vm2089, %v2807, 0
        %v2817 = vsel %vm2089, %v2808, 0
        %v2820 = vsel %vm2089, %v2809, 0
        %2822 = vmatpush.bf16.msra.mxu0 0
        %2823 = vmatpush.bf16.msra.mxu0 0
        %2824 = vmatpush.bf16.msra.mxu0 %v2043
        %2825 = vmatpush.bf16.msra.mxu0 %v2041
        %2826 = vmatpush.bf16.msra.mxu0 %v2039
        %2827 = vmatpush.bf16.msra.mxu0 %v2037
        %2828 = vmatpush.bf16.msra.mxu0 %v2035
        %2829 = vmatpush.bf16.msra.mxu0 %v2033
        %2830 = vmatmul.bf16.gmra.mxu0 %v2811
        %v2831 = vpop.f32.mrf.mxu0
        %v2832 = vadd.f32 0.0, %v2831
        %v2833 = vpop.f32.mrf.mxu0
        %v2834 = vadd.f32 0.0, %v2833
        %2835 = vmatmul.bf16.gmra.mxu0 %v2814
        %v2836 = vpop.f32.mrf.mxu0
        %v2837 = vadd.f32 0.0, %v2836
        %v2838 = vpop.f32.mrf.mxu0
        %v2839 = vadd.f32 0.0, %v2838
        %2840 = vmatmul.bf16.gmra.mxu0 %v2817
        %v2841 = vpop.f32.mrf.mxu0
        %v2842 = vadd.f32 0.0, %v2841
        %v2843 = vpop.f32.mrf.mxu0
        %v2844 = vadd.f32 0.0, %v2843
        %2845 = vmatmul.bf16.gmra.mxu0 %v2820
        %v2846 = vpop.f32.mrf.mxu0
        %v2847 = vadd.f32 0.0, %v2846
        %v2848 = vpop.f32.mrf.mxu0
        %v2849 = vadd.f32 0.0, %v2848
        %2850 = vdwg.mxu0
        %2851 = vmatpush.bf16.msra.mxu0 0
        %2852 = vmatpush.bf16.msra.mxu0 0
        %2853 = vmatpush.bf16.msra.mxu0 %v2044
        %2854 = vmatpush.bf16.msra.mxu0 %v2042
        %2855 = vmatpush.bf16.msra.mxu0 %v2040
        %2856 = vmatpush.bf16.msra.mxu0 %v2038
        %2857 = vmatpush.bf16.msra.mxu0 %v2036
        %2858 = vmatpush.bf16.msra.mxu0 %v2034
        %2859 = vmatmul.bf16.gmra.mxu0 %v2811
        %v2860 = vpop.f32.mrf.mxu0
        %v2861 = vadd.f32 0.0, %v2860
        %v2862 = vpop.f32.mrf.mxu0
        %v2863 = vadd.f32 0.0, %v2862
        %2864 = vmatmul.bf16.gmra.mxu0 %v2814
        %v2865 = vpop.f32.mrf.mxu0
        %v2866 = vadd.f32 0.0, %v2865
        %v2867 = vpop.f32.mrf.mxu0
        %v2868 = vadd.f32 0.0, %v2867
        %2869 = vmatmul.bf16.gmra.mxu0 %v2817
        %v2870 = vpop.f32.mrf.mxu0
        %v2871 = vadd.f32 0.0, %v2870
        %v2872 = vpop.f32.mrf.mxu0
        %v2873 = vadd.f32 0.0, %v2872
        %2874 = vmatmul.bf16.gmra.mxu0 %v2820
        %v2875 = vpop.f32.mrf.mxu0
        %v2876 = vadd.f32 0.0, %v2875
        %v2877 = vpop.f32.mrf.mxu0
        %v2878 = vadd.f32 0.0, %v2877
        %2879 = vdwg.mxu0
        %v2880 = vpack.c.bf16 %v2834, %v2832
        %v2881 = vpack.c.bf16 %v2863, %v2861
        %v2882 = vpack.c.bf16 %v2839, %v2837
        %v2883 = vpack.c.bf16 %v2868, %v2866
        %v2884 = vpack.c.bf16 %v2844, %v2842
        %v2885 = vpack.c.bf16 %v2873, %v2871
        %v2886 = vpack.c.bf16 %v2849, %v2847
        %v2887 = vpack.c.bf16 %v2878, %v2876
        %s2888 = scalar_lea.vmem %s4, 288
        %v2889 = vld [vmem:[%s2888] sm:$0xff]
        %v2890 = vld [vmem:[%s2888 + $0x8] sm:$0xff]
        %v2891 = vld [vmem:[%s2888 + $0x10] sm:$0xff]
        %v2892 = vld [vmem:[%s2888 + $0x18] sm:$0xff]
        %v2893 = vld [vmem:[%s2888 + $0x20] sm:$0xff]
        %v2894 = vld [vmem:[%s2888 + $0x28] sm:$0xff]
        %v2895 = vld [vmem:[%s2888 + $0x30] sm:$0xff]
        %v2896 = vld [vmem:[%s2888 + $0x38] sm:$0xff]
        %v2897 = vld [vmem:[%s2888 + $0x40] sm:$0xff]
        %v2898 = vld [vmem:[%s2888 + $0x48] sm:$0xff]
        %v2899 = vld [vmem:[%s2888 + $0x50] sm:$0xff]
        %v2900 = vld [vmem:[%s2888 + $0x58] sm:$0xff]
        %v2901 = vld [vmem:[%s2888 + $0x60] sm:$0xff]
        %v2902 = vld [vmem:[%s2888 + $0x68] sm:$0xff]
        %v2903 = vld [vmem:[%s2888 + $0x70] sm:$0xff]
        %v2904 = vld [vmem:[%s2888 + $0x78] sm:$0xff]
        %v2905 = vld [vmem:[%s2888 + $0x80] sm:$0xff]
        %v2906 = vld [vmem:[%s2888 + $0x88] sm:$0xff]
        %v2925 = vunpack.c.l.b16 %v2889
        %v2926 = vunpack.c.h.b16 %v2889
        %v2927 = vunpack.c.l.b16 %v2890
        %v2928 = vunpack.c.h.b16 %v2890
        %v2929 = vunpack.c.l.b16 %v2891
        %v2930 = vunpack.c.h.b16 %v2891
        %v2931 = vunpack.c.l.b16 %v2892
        %v2932 = vunpack.c.h.b16 %v2892
        %v2933 = vunpack.c.l.b16 %v2893
        %v2934 = vunpack.c.h.b16 %v2893
        %v2935 = vunpack.c.l.b16 %v2894
        %v2936 = vunpack.c.h.b16 %v2894
        %v2937 = vunpack.c.l.b16 %v2895
        %v2938 = vunpack.c.h.b16 %v2895
        %v2939 = vunpack.c.l.b16 %v2896
        %v2940 = vunpack.c.h.b16 %v2896
        %v2941 = vunpack.c.l.b16 %v2897
        %v2942 = vunpack.c.h.b16 %v2897
        %v2943 = vunpack.c.l.b16 %v2898
        %v2944 = vunpack.c.h.b16 %v2898
        %v2945 = vunpack.c.l.b16 %v2899
        %v2946 = vunpack.c.h.b16 %v2899
        %v2947 = vunpack.c.l.b16 %v2900
        %v2948 = vunpack.c.h.b16 %v2900
        %v2949 = vunpack.c.l.b16 %v2901
        %v2950 = vunpack.c.h.b16 %v2901
        %v2951 = vunpack.c.l.b16 %v2902
        %v2952 = vunpack.c.h.b16 %v2902
        %v2953 = vunpack.c.l.b16 %v2903
        %v2954 = vunpack.c.h.b16 %v2903
        %v2955 = vunpack.c.l.b16 %v2904
        %v2956 = vunpack.c.h.b16 %v2904
        %v2957 = vunpack.c.l.b16 %v2905
        %v2958 = vunpack.c.h.b16 %v2905
        %v2959 = vunpack.c.l.b16 %v2906
        %v2960 = vunpack.c.h.b16 %v2906
        %v2961 = vpack.c.b16 %v2927, %v2925
        %v2962 = vpack.c.b16 %v2928, %v2926
        %v2963 = vpack.c.b16 %v2931, %v2929
        %v2964 = vpack.c.b16 %v2932, %v2930
        %v2965 = vpack.c.b16 %v2935, %v2933
        %v2966 = vpack.c.b16 %v2936, %v2934
        %v2967 = vpack.c.b16 %v2939, %v2937
        %v2968 = vpack.c.b16 %v2940, %v2938
        %v2969 = vpack.c.b16 %v2943, %v2941
        %v2970 = vpack.c.b16 %v2944, %v2942
        %v2971 = vpack.c.b16 %v2947, %v2945
        %v2972 = vpack.c.b16 %v2948, %v2946
        %v2973 = vpack.c.b16 %v2951, %v2949
        %v2974 = vpack.c.b16 %v2952, %v2950
        %v2975 = vpack.c.b16 %v2955, %v2953
        %v2976 = vpack.c.b16 %v2956, %v2954
        %v2977 = vpack.c.b16 %v2959, %v2957
        %v2978 = vpack.c.b16 %v2960, %v2958
        %v2998 = vsel %vm2276, %v2881, 0
        %v3001 = vsel %vm2276, %v2883, 0
        %v3004 = vsel %vm2276, %v2885, 0
        %v3007 = vsel %vm2276, %v2887, 0
        %3009 = vmatpush.bf16.msra.mxu0 %v2975
        %3010 = vmatpush.bf16.msra.mxu0 %v2973
        %3011 = vmatpush.bf16.msra.mxu0 %v2971
        %3012 = vmatpush.bf16.msra.mxu0 %v2969
        %3013 = vmatpush.bf16.msra.mxu0 %v2967
        %3014 = vmatpush.bf16.msra.mxu0 %v2965
        %3015 = vmatpush.bf16.msra.mxu0 %v2963
        %3016 = vmatpush.bf16.msra.mxu0 %v2961
        %3017 = vmatmul.bf16.gmra.mxu0 %v2880
        %v3018 = vpop.f32.mrf.mxu0
        %v3019 = vadd.f32 0.0, %v3018
        %v3020 = vpop.f32.mrf.mxu0
        %v3021 = vadd.f32 0.0, %v3020
        %3022 = vmatmul.bf16.gmra.mxu0 %v2882
        %v3023 = vpop.f32.mrf.mxu0
        %v3024 = vadd.f32 0.0, %v3023
        %v3025 = vpop.f32.mrf.mxu0
        %v3026 = vadd.f32 0.0, %v3025
        %3027 = vmatmul.bf16.gmra.mxu0 %v2884
        %v3028 = vpop.f32.mrf.mxu0
        %v3029 = vadd.f32 0.0, %v3028
        %v3030 = vpop.f32.mrf.mxu0
        %v3031 = vadd.f32 0.0, %v3030
        %3032 = vmatmul.bf16.gmra.mxu0 %v2886
        %v3033 = vpop.f32.mrf.mxu0
        %v3034 = vadd.f32 0.0, %v3033
        %v3035 = vpop.f32.mrf.mxu0
        %v3036 = vadd.f32 0.0, %v3035
        %3037 = vdwg.mxu0
        %3038 = vmatpush.bf16.msra.mxu0 0
        %3039 = vmatpush.bf16.msra.mxu0 0
        %3040 = vmatpush.bf16.msra.mxu0 0
        %3041 = vmatpush.bf16.msra.mxu0 0
        %3042 = vmatpush.bf16.msra.mxu0 0
        %3043 = vmatpush.bf16.msra.mxu0 0
        %3044 = vmatpush.bf16.msra.mxu0 0
        %3045 = vmatpush.bf16.msra.mxu0 %v2977
        %3046 = vmatmul.bf16.gmra.mxu0 %v2998
        %v3047 = vpop.f32.mrf.mxu0
        %v3048 = vadd.f32 %v3019, %v3047
        %v3049 = vpop.f32.mrf.mxu0
        %v3050 = vadd.f32 %v3021, %v3049
        %3051 = vmatmul.bf16.gmra.mxu0 %v3001
        %v3052 = vpop.f32.mrf.mxu0
        %v3053 = vadd.f32 %v3024, %v3052
        %v3054 = vpop.f32.mrf.mxu0
        %v3055 = vadd.f32 %v3026, %v3054
        %3056 = vmatmul.bf16.gmra.mxu0 %v3004
        %v3057 = vpop.f32.mrf.mxu0
        %v3058 = vadd.f32 %v3029, %v3057
        %v3059 = vpop.f32.mrf.mxu0
        %v3060 = vadd.f32 %v3031, %v3059
        %3061 = vmatmul.bf16.gmra.mxu0 %v3007
        %v3062 = vpop.f32.mrf.mxu0
        %v3063 = vadd.f32 %v3034, %v3062
        %v3064 = vpop.f32.mrf.mxu0
        %v3065 = vadd.f32 %v3036, %v3064
        %3066 = vdwg.mxu0
        %3067 = vmatpush.bf16.msra.mxu0 %v2976
        %3068 = vmatpush.bf16.msra.mxu0 %v2974
        %3069 = vmatpush.bf16.msra.mxu0 %v2972
        %3070 = vmatpush.bf16.msra.mxu0 %v2970
        %3071 = vmatpush.bf16.msra.mxu0 %v2968
        %3072 = vmatpush.bf16.msra.mxu0 %v2966
        %3073 = vmatpush.bf16.msra.mxu0 %v2964
        %3074 = vmatpush.bf16.msra.mxu0 %v2962
        %3075 = vmatmul.bf16.gmra.mxu0 %v2880
        %v3076 = vpop.f32.mrf.mxu0
        %v3077 = vadd.f32 0.0, %v3076
        %v3078 = vpop.f32.mrf.mxu0
        %v3079 = vadd.f32 0.0, %v3078
        %3080 = vmatmul.bf16.gmra.mxu0 %v2882
        %v3081 = vpop.f32.mrf.mxu0
        %v3082 = vadd.f32 0.0, %v3081
        %v3083 = vpop.f32.mrf.mxu0
        %v3084 = vadd.f32 0.0, %v3083
        %3085 = vmatmul.bf16.gmra.mxu0 %v2884
        %v3086 = vpop.f32.mrf.mxu0
        %v3087 = vadd.f32 0.0, %v3086
        %v3088 = vpop.f32.mrf.mxu0
        %v3089 = vadd.f32 0.0, %v3088
        %3090 = vmatmul.bf16.gmra.mxu0 %v2886
        %v3091 = vpop.f32.mrf.mxu0
        %v3092 = vadd.f32 0.0, %v3091
        %v3093 = vpop.f32.mrf.mxu0
        %v3094 = vadd.f32 0.0, %v3093
        %3095 = vdwg.mxu0
        %3096 = vmatpush.bf16.msra.mxu0 0
        %3097 = vmatpush.bf16.msra.mxu0 0
        %3098 = vmatpush.bf16.msra.mxu0 0
        %3099 = vmatpush.bf16.msra.mxu0 0
        %3100 = vmatpush.bf16.msra.mxu0 0
        %3101 = vmatpush.bf16.msra.mxu0 0
        %3102 = vmatpush.bf16.msra.mxu0 0
        %3103 = vmatpush.bf16.msra.mxu0 %v2978
        %3104 = vmatmul.bf16.gmra.mxu0 %v2998
        %v3105 = vpop.f32.mrf.mxu0
        %v3106 = vadd.f32 %v3077, %v3105
        %v3107 = vpop.f32.mrf.mxu0
        %v3108 = vadd.f32 %v3079, %v3107
        %3109 = vmatmul.bf16.gmra.mxu0 %v3001
        %v3110 = vpop.f32.mrf.mxu0
        %v3111 = vadd.f32 %v3082, %v3110
        %v3112 = vpop.f32.mrf.mxu0
        %v3113 = vadd.f32 %v3084, %v3112
        %3114 = vmatmul.bf16.gmra.mxu0 %v3004
        %v3115 = vpop.f32.mrf.mxu0
        %v3116 = vadd.f32 %v3087, %v3115
        %v3117 = vpop.f32.mrf.mxu0
        %v3118 = vadd.f32 %v3089, %v3117
        %3119 = vmatmul.bf16.gmra.mxu0 %v3007
        %v3120 = vpop.f32.mrf.mxu0
        %v3121 = vadd.f32 %v3092, %v3120
        %v3122 = vpop.f32.mrf.mxu0
        %v3123 = vadd.f32 %v3094, %v3122
        %3124 = vdwg.mxu0
        %v3125 = vadd.f32 %v2765, %v3048
        %v3126 = vadd.f32 %v2766, %v3106
        %v3127 = vadd.f32 %v2767, %v3050
        %v3128 = vadd.f32 %v2768, %v3108
        %v3129 = vadd.f32 %v2769, %v3053
        %v3130 = vadd.f32 %v2770, %v3111
        %v3131 = vadd.f32 %v2771, %v3055
        %v3132 = vadd.f32 %v2772, %v3113
        %v3133 = vadd.f32 %v2773, %v3058
        %v3134 = vadd.f32 %v2774, %v3116
        %v3135 = vadd.f32 %v2775, %v3060
        %v3136 = vadd.f32 %v2776, %v3118
        %v3137 = vadd.f32 %v2777, %v3063
        %v3138 = vadd.f32 %v2778, %v3121
        %v3139 = vadd.f32 %v2779, %v3065
        %v3140 = vadd.f32 %v2780, %v3123
        %s3141 = scalar_lea.vmem %s5, 96
        %v3142 = vld [vmem:[%s3141] sm:$0xf]
        %v3143 = vld [vmem:[%s3141 + $0x4] sm:$0xf]
        %v3144 = vld [vmem:[%s3141 + $0x8] sm:$0xf]
        %v3145 = vld [vmem:[%s3141 + $0xc] sm:$0xf]
        %v3146 = vld [vmem:[%s3141 + $0x10] sm:$0xf]
        %v3147 = vld [vmem:[%s3141 + $0x14] sm:$0xf]
        %v3148 = vld [vmem:[%s3141 + $0x18] sm:$0xf]
        %v3149 = vld [vmem:[%s3141 + $0x1c] sm:$0xf]
        %v3158 = vunpack.c.l.b16 %v3142
        %v3159 = vunpack.c.l.b16 %v3143
        %v3160 = vunpack.c.l.b16 %v3144
        %v3161 = vunpack.c.l.b16 %v3145
        %v3162 = vunpack.c.l.b16 %v3146
        %v3163 = vunpack.c.l.b16 %v3147
        %v3164 = vunpack.c.l.b16 %v3148
        %v3165 = vunpack.c.l.b16 %v3149
        %v3166 = vpack.c.b16 %v3159, %v3158
        %v3167 = vpack.c.b16 %v3161, %v3160
        %v3168 = vpack.c.b16 %v3163, %v3162
        %v3169 = vpack.c.b16 %v3165, %v3164
        %v3171 = vsel %vm2089, %v3166, 0
        %v3174 = vsel %vm2089, %v3167, 0
        %v3177 = vsel %vm2089, %v3168, 0
        %v3180 = vsel %vm2089, %v3169, 0
        %3182 = vmatpush.bf16.msra.mxu0 0
        %3183 = vmatpush.bf16.msra.mxu0 0
        %3184 = vmatpush.bf16.msra.mxu0 %v2043
        %3185 = vmatpush.bf16.msra.mxu0 %v2041
        %3186 = vmatpush.bf16.msra.mxu0 %v2039
        %3187 = vmatpush.bf16.msra.mxu0 %v2037
        %3188 = vmatpush.bf16.msra.mxu0 %v2035
        %3189 = vmatpush.bf16.msra.mxu0 %v2033
        %3190 = vmatmul.bf16.gmra.mxu0 %v3171
        %v3191 = vpop.f32.mrf.mxu0
        %v3192 = vadd.f32 0.0, %v3191
        %v3193 = vpop.f32.mrf.mxu0
        %v3194 = vadd.f32 0.0, %v3193
        %3195 = vmatmul.bf16.gmra.mxu0 %v3174
        %v3196 = vpop.f32.mrf.mxu0
        %v3197 = vadd.f32 0.0, %v3196
        %v3198 = vpop.f32.mrf.mxu0
        %v3199 = vadd.f32 0.0, %v3198
        %3200 = vmatmul.bf16.gmra.mxu0 %v3177
        %v3201 = vpop.f32.mrf.mxu0
        %v3202 = vadd.f32 0.0, %v3201
        %v3203 = vpop.f32.mrf.mxu0
        %v3204 = vadd.f32 0.0, %v3203
        %3205 = vmatmul.bf16.gmra.mxu0 %v3180
        %v3206 = vpop.f32.mrf.mxu0
        %v3207 = vadd.f32 0.0, %v3206
        %v3208 = vpop.f32.mrf.mxu0
        %v3209 = vadd.f32 0.0, %v3208
        %3210 = vdwg.mxu0
        %3211 = vmatpush.bf16.msra.mxu0 0
        %3212 = vmatpush.bf16.msra.mxu0 0
        %3213 = vmatpush.bf16.msra.mxu0 %v2044
        %3214 = vmatpush.bf16.msra.mxu0 %v2042
        %3215 = vmatpush.bf16.msra.mxu0 %v2040
        %3216 = vmatpush.bf16.msra.mxu0 %v2038
        %3217 = vmatpush.bf16.msra.mxu0 %v2036
        %3218 = vmatpush.bf16.msra.mxu0 %v2034
        %3219 = vmatmul.bf16.gmra.mxu0 %v3171
        %v3220 = vpop.f32.mrf.mxu0
        %v3221 = vadd.f32 0.0, %v3220
        %v3222 = vpop.f32.mrf.mxu0
        %v3223 = vadd.f32 0.0, %v3222
        %3224 = vmatmul.bf16.gmra.mxu0 %v3174
        %v3225 = vpop.f32.mrf.mxu0
        %v3226 = vadd.f32 0.0, %v3225
        %v3227 = vpop.f32.mrf.mxu0
        %v3228 = vadd.f32 0.0, %v3227
        %3229 = vmatmul.bf16.gmra.mxu0 %v3177
        %v3230 = vpop.f32.mrf.mxu0
        %v3231 = vadd.f32 0.0, %v3230
        %v3232 = vpop.f32.mrf.mxu0
        %v3233 = vadd.f32 0.0, %v3232
        %3234 = vmatmul.bf16.gmra.mxu0 %v3180
        %v3235 = vpop.f32.mrf.mxu0
        %v3236 = vadd.f32 0.0, %v3235
        %v3237 = vpop.f32.mrf.mxu0
        %v3238 = vadd.f32 0.0, %v3237
        %3239 = vdwg.mxu0
        %v3240 = vpack.c.bf16 %v3194, %v3192
        %v3241 = vpack.c.bf16 %v3223, %v3221
        %v3242 = vpack.c.bf16 %v3199, %v3197
        %v3243 = vpack.c.bf16 %v3228, %v3226
        %v3244 = vpack.c.bf16 %v3204, %v3202
        %v3245 = vpack.c.bf16 %v3233, %v3231
        %v3246 = vpack.c.bf16 %v3209, %v3207
        %v3247 = vpack.c.bf16 %v3238, %v3236
        %s3248 = scalar_lea.vmem %s4, 432
        %v3249 = vld [vmem:[%s3248] sm:$0xff]
        %v3250 = vld [vmem:[%s3248 + $0x8] sm:$0xff]
        %v3251 = vld [vmem:[%s3248 + $0x10] sm:$0xff]
        %v3252 = vld [vmem:[%s3248 + $0x18] sm:$0xff]
        %v3253 = vld [vmem:[%s3248 + $0x20] sm:$0xff]
        %v3254 = vld [vmem:[%s3248 + $0x28] sm:$0xff]
        %v3255 = vld [vmem:[%s3248 + $0x30] sm:$0xff]
        %v3256 = vld [vmem:[%s3248 + $0x38] sm:$0xff]
        %v3257 = vld [vmem:[%s3248 + $0x40] sm:$0xff]
        %v3258 = vld [vmem:[%s3248 + $0x48] sm:$0xff]
        %v3259 = vld [vmem:[%s3248 + $0x50] sm:$0xff]
        %v3260 = vld [vmem:[%s3248 + $0x58] sm:$0xff]
        %v3261 = vld [vmem:[%s3248 + $0x60] sm:$0xff]
        %v3262 = vld [vmem:[%s3248 + $0x68] sm:$0xff]
        %v3263 = vld [vmem:[%s3248 + $0x70] sm:$0xff]
        %v3264 = vld [vmem:[%s3248 + $0x78] sm:$0xff]
        %v3265 = vld [vmem:[%s3248 + $0x80] sm:$0xff]
        %v3266 = vld [vmem:[%s3248 + $0x88] sm:$0xff]
        %v3285 = vunpack.c.l.b16 %v3249
        %v3286 = vunpack.c.h.b16 %v3249
        %v3287 = vunpack.c.l.b16 %v3250
        %v3288 = vunpack.c.h.b16 %v3250
        %v3289 = vunpack.c.l.b16 %v3251
        %v3290 = vunpack.c.h.b16 %v3251
        %v3291 = vunpack.c.l.b16 %v3252
        %v3292 = vunpack.c.h.b16 %v3252
        %v3293 = vunpack.c.l.b16 %v3253
        %v3294 = vunpack.c.h.b16 %v3253
        %v3295 = vunpack.c.l.b16 %v3254
        %v3296 = vunpack.c.h.b16 %v3254
        %v3297 = vunpack.c.l.b16 %v3255
        %v3298 = vunpack.c.h.b16 %v3255
        %v3299 = vunpack.c.l.b16 %v3256
        %v3300 = vunpack.c.h.b16 %v3256
        %v3301 = vunpack.c.l.b16 %v3257
        %v3302 = vunpack.c.h.b16 %v3257
        %v3303 = vunpack.c.l.b16 %v3258
        %v3304 = vunpack.c.h.b16 %v3258
        %v3305 = vunpack.c.l.b16 %v3259
        %v3306 = vunpack.c.h.b16 %v3259
        %v3307 = vunpack.c.l.b16 %v3260
        %v3308 = vunpack.c.h.b16 %v3260
        %v3309 = vunpack.c.l.b16 %v3261
        %v3310 = vunpack.c.h.b16 %v3261
        %v3311 = vunpack.c.l.b16 %v3262
        %v3312 = vunpack.c.h.b16 %v3262
        %v3313 = vunpack.c.l.b16 %v3263
        %v3314 = vunpack.c.h.b16 %v3263
        %v3315 = vunpack.c.l.b16 %v3264
        %v3316 = vunpack.c.h.b16 %v3264
        %v3317 = vunpack.c.l.b16 %v3265
        %v3318 = vunpack.c.h.b16 %v3265
        %v3319 = vunpack.c.l.b16 %v3266
        %v3320 = vunpack.c.h.b16 %v3266
        %v3321 = vpack.c.b16 %v3287, %v3285
        %v3322 = vpack.c.b16 %v3288, %v3286
        %v3323 = vpack.c.b16 %v3291, %v3289
        %v3324 = vpack.c.b16 %v3292, %v3290
        %v3325 = vpack.c.b16 %v3295, %v3293
        %v3326 = vpack.c.b16 %v3296, %v3294
        %v3327 = vpack.c.b16 %v3299, %v3297
        %v3328 = vpack.c.b16 %v3300, %v3298
        %v3329 = vpack.c.b16 %v3303, %v3301
        %v3330 = vpack.c.b16 %v3304, %v3302
        %v3331 = vpack.c.b16 %v3307, %v3305
        %v3332 = vpack.c.b16 %v3308, %v3306
        %v3333 = vpack.c.b16 %v3311, %v3309
        %v3334 = vpack.c.b16 %v3312, %v3310
        %v3335 = vpack.c.b16 %v3315, %v3313
        %v3336 = vpack.c.b16 %v3316, %v3314
        %v3337 = vpack.c.b16 %v3319, %v3317
        %v3338 = vpack.c.b16 %v3320, %v3318
        %v3358 = vsel %vm2276, %v3241, 0
        %v3361 = vsel %vm2276, %v3243, 0
        %v3364 = vsel %vm2276, %v3245, 0
        %v3367 = vsel %vm2276, %v3247, 0
        %3369 = vmatpush.bf16.msra.mxu0 %v3335
        %3370 = vmatpush.bf16.msra.mxu0 %v3333
        %3371 = vmatpush.bf16.msra.mxu0 %v3331
        %3372 = vmatpush.bf16.msra.mxu0 %v3329
        %3373 = vmatpush.bf16.msra.mxu0 %v3327
        %3374 = vmatpush.bf16.msra.mxu0 %v3325
        %3375 = vmatpush.bf16.msra.mxu0 %v3323
        %3376 = vmatpush.bf16.msra.mxu0 %v3321
        %3377 = vmatmul.bf16.gmra.mxu0 %v3240
        %v3378 = vpop.f32.mrf.mxu0
        %v3379 = vadd.f32 0.0, %v3378
        %v3380 = vpop.f32.mrf.mxu0
        %v3381 = vadd.f32 0.0, %v3380
        %3382 = vmatmul.bf16.gmra.mxu0 %v3242
        %v3383 = vpop.f32.mrf.mxu0
        %v3384 = vadd.f32 0.0, %v3383
        %v3385 = vpop.f32.mrf.mxu0
        %v3386 = vadd.f32 0.0, %v3385
        %3387 = vmatmul.bf16.gmra.mxu0 %v3244
        %v3388 = vpop.f32.mrf.mxu0
        %v3389 = vadd.f32 0.0, %v3388
        %v3390 = vpop.f32.mrf.mxu0
        %v3391 = vadd.f32 0.0, %v3390
        %3392 = vmatmul.bf16.gmra.mxu0 %v3246
        %v3393 = vpop.f32.mrf.mxu0
        %v3394 = vadd.f32 0.0, %v3393
        %v3395 = vpop.f32.mrf.mxu0
        %v3396 = vadd.f32 0.0, %v3395
        %3397 = vdwg.mxu0
        %3398 = vmatpush.bf16.msra.mxu0 0
        %3399 = vmatpush.bf16.msra.mxu0 0
        %3400 = vmatpush.bf16.msra.mxu0 0
        %3401 = vmatpush.bf16.msra.mxu0 0
        %3402 = vmatpush.bf16.msra.mxu0 0
        %3403 = vmatpush.bf16.msra.mxu0 0
        %3404 = vmatpush.bf16.msra.mxu0 0
        %3405 = vmatpush.bf16.msra.mxu0 %v3337
        %3406 = vmatmul.bf16.gmra.mxu0 %v3358
        %v3407 = vpop.f32.mrf.mxu0
        %v3408 = vadd.f32 %v3379, %v3407
        %v3409 = vpop.f32.mrf.mxu0
        %v3410 = vadd.f32 %v3381, %v3409
        %3411 = vmatmul.bf16.gmra.mxu0 %v3361
        %v3412 = vpop.f32.mrf.mxu0
        %v3413 = vadd.f32 %v3384, %v3412
        %v3414 = vpop.f32.mrf.mxu0
        %v3415 = vadd.f32 %v3386, %v3414
        %3416 = vmatmul.bf16.gmra.mxu0 %v3364
        %v3417 = vpop.f32.mrf.mxu0
        %v3418 = vadd.f32 %v3389, %v3417
        %v3419 = vpop.f32.mrf.mxu0
        %v3420 = vadd.f32 %v3391, %v3419
        %3421 = vmatmul.bf16.gmra.mxu0 %v3367
        %v3422 = vpop.f32.mrf.mxu0
        %v3423 = vadd.f32 %v3394, %v3422
        %v3424 = vpop.f32.mrf.mxu0
        %v3425 = vadd.f32 %v3396, %v3424
        %3426 = vdwg.mxu0
        %3427 = vmatpush.bf16.msra.mxu0 %v3336
        %3428 = vmatpush.bf16.msra.mxu0 %v3334
        %3429 = vmatpush.bf16.msra.mxu0 %v3332
        %3430 = vmatpush.bf16.msra.mxu0 %v3330
        %3431 = vmatpush.bf16.msra.mxu0 %v3328
        %3432 = vmatpush.bf16.msra.mxu0 %v3326
        %3433 = vmatpush.bf16.msra.mxu0 %v3324
        %3434 = vmatpush.bf16.msra.mxu0 %v3322
        %3435 = vmatmul.bf16.gmra.mxu0 %v3240
        %v3436 = vpop.f32.mrf.mxu0
        %v3437 = vadd.f32 0.0, %v3436
        %v3438 = vpop.f32.mrf.mxu0
        %v3439 = vadd.f32 0.0, %v3438
        %3440 = vmatmul.bf16.gmra.mxu0 %v3242
        %v3441 = vpop.f32.mrf.mxu0
        %v3442 = vadd.f32 0.0, %v3441
        %v3443 = vpop.f32.mrf.mxu0
        %v3444 = vadd.f32 0.0, %v3443
        %3445 = vmatmul.bf16.gmra.mxu0 %v3244
        %v3446 = vpop.f32.mrf.mxu0
        %v3447 = vadd.f32 0.0, %v3446
        %v3448 = vpop.f32.mrf.mxu0
        %v3449 = vadd.f32 0.0, %v3448
        %3450 = vmatmul.bf16.gmra.mxu0 %v3246
        %v3451 = vpop.f32.mrf.mxu0
        %v3452 = vadd.f32 0.0, %v3451
        %v3453 = vpop.f32.mrf.mxu0
        %v3454 = vadd.f32 0.0, %v3453
        %3455 = vdwg.mxu0
        %3456 = vmatpush.bf16.msra.mxu0 0
        %3457 = vmatpush.bf16.msra.mxu0 0
        %3458 = vmatpush.bf16.msra.mxu0 0
        %3459 = vmatpush.bf16.msra.mxu0 0
        %3460 = vmatpush.bf16.msra.mxu0 0
        %3461 = vmatpush.bf16.msra.mxu0 0
        %3462 = vmatpush.bf16.msra.mxu0 0
        %3463 = vmatpush.bf16.msra.mxu0 %v3338
        %3464 = vmatmul.bf16.gmra.mxu0 %v3358
        %v3465 = vpop.f32.mrf.mxu0
        %v3466 = vadd.f32 %v3437, %v3465
        %v3467 = vpop.f32.mrf.mxu0
        %v3468 = vadd.f32 %v3439, %v3467
        %3469 = vmatmul.bf16.gmra.mxu0 %v3361
        %v3470 = vpop.f32.mrf.mxu0
        %v3471 = vadd.f32 %v3442, %v3470
        %v3472 = vpop.f32.mrf.mxu0
        %v3473 = vadd.f32 %v3444, %v3472
        %3474 = vmatmul.bf16.gmra.mxu0 %v3364
        %v3475 = vpop.f32.mrf.mxu0
        %v3476 = vadd.f32 %v3447, %v3475
        %v3477 = vpop.f32.mrf.mxu0
        %v3478 = vadd.f32 %v3449, %v3477
        %3479 = vmatmul.bf16.gmra.mxu0 %v3367
        %v3480 = vpop.f32.mrf.mxu0
        %v3481 = vadd.f32 %v3452, %v3480
        %v3482 = vpop.f32.mrf.mxu0
        %v3483 = vadd.f32 %v3454, %v3482
        %3484 = vdwg.mxu0
        %v3485 = vadd.f32 %v3125, %v3408
        %v3486 = vadd.f32 %v3126, %v3466
        %v3487 = vadd.f32 %v3127, %v3410
        %v3488 = vadd.f32 %v3128, %v3468
        %v3489 = vadd.f32 %v3129, %v3413
        %v3490 = vadd.f32 %v3130, %v3471
        %v3491 = vadd.f32 %v3131, %v3415
        %v3492 = vadd.f32 %v3132, %v3473
        %v3493 = vadd.f32 %v3133, %v3418
        %v3494 = vadd.f32 %v3134, %v3476
        %v3495 = vadd.f32 %v3135, %v3420
        %v3496 = vadd.f32 %v3136, %v3478
        %v3497 = vadd.f32 %v3137, %v3423
        %v3498 = vadd.f32 %v3138, %v3481
        %v3499 = vadd.f32 %v3139, %v3425
        %v3500 = vadd.f32 %v3140, %v3483
        %v3501 = vmax.f32 %v3485, 0.0
        %v3502 = vmax.f32 %v3486, 0.0
        %v3503 = vmax.f32 %v3487, 0.0
        %v3504 = vmax.f32 %v3488, 0.0
        %v3505 = vmax.f32 %v3489, 0.0
        %v3506 = vmax.f32 %v3490, 0.0
        %v3507 = vmax.f32 %v3491, 0.0
        %v3508 = vmax.f32 %v3492, 0.0
        %v3509 = vmax.f32 %v3493, 0.0
        %v3510 = vmax.f32 %v3494, 0.0
        %v3511 = vmax.f32 %v3495, 0.0
        %v3512 = vmax.f32 %v3496, 0.0
        %v3513 = vmax.f32 %v3497, 0.0
        %v3514 = vmax.f32 %v3498, 0.0
        %v3515 = vmax.f32 %v3499, 0.0
        %v3516 = vmax.f32 %v3500, 0.0
        %v3517 = vpack.c.bf16 %v3503, %v3501
        %v3518 = vpack.c.bf16 %v3504, %v3502
        %v3519 = vpack.c.bf16 %v3507, %v3505
        %v3520 = vpack.c.bf16 %v3508, %v3506
        %v3521 = vpack.c.bf16 %v3511, %v3509
        %v3522 = vpack.c.bf16 %v3512, %v3510
        %v3523 = vpack.c.bf16 %v3515, %v3513
        %v3524 = vpack.c.bf16 %v3516, %v3514
        %v3525 = vld [vmem:[%s9] sm:$0xff]
        %v3526 = vld [vmem:[%s9 + $0x8] sm:$0xff]
        %v3527 = vld [vmem:[%s9 + $0x10] sm:$0xff]
        %v3528 = vld [vmem:[%s9 + $0x18] sm:$0xff]
        %v3529 = vld [vmem:[%s8] sm:$0xf]
        %v3530 = vld [vmem:[%s8 + $0x4] sm:$0xf]
        %v3531 = vld [vmem:[%s8 + $0x8] sm:$0xf]
        %v3532 = vld [vmem:[%s8 + $0xc] sm:$0xf]
        %v3537 = vunpack.c.l.b16 %v3529
        %v3538 = vunpack.c.l.b16 %v3530
        %v3539 = vunpack.c.l.b16 %v3531
        %v3540 = vunpack.c.l.b16 %v3532
        %v3541 = vpack.c.b16 %v3538, %v3537
        %v3542 = vpack.c.b16 %v3540, %v3539
        %vm3543 = vcmask 523264
        %v3545 = vsel %vm3543, %v3541, 0
        %v3548 = vsel %vm3543, %v3542, 0
        %3550 = vmatpush.bf16.msra.mxu0 0
        %3551 = vmatpush.bf16.msra.mxu0 0
        %3552 = vmatpush.bf16.msra.mxu0 0
        %3553 = vmatpush.bf16.msra.mxu0 0
        %3554 = vmatpush.bf16.msra.mxu0 %v3523
        %3555 = vmatpush.bf16.msra.mxu0 %v3521
        %3556 = vmatpush.bf16.msra.mxu0 %v3519
        %3557 = vmatpush.bf16.msra.mxu0 %v3517
        %3558 = vmatmul.bf16.gmra.mxu0 %v3545
        %v3559 = vpop.f32.mrf.mxu0
        %v3560 = vadd.f32 0.0, %v3559
        %v3561 = vpop.f32.mrf.mxu0
        %v3562 = vadd.f32 0.0, %v3561
        %3563 = vmatmul.bf16.gmra.mxu0 %v3548
        %v3564 = vpop.f32.mrf.mxu0
        %v3565 = vadd.f32 0.0, %v3564
        %v3566 = vpop.f32.mrf.mxu0
        %v3567 = vadd.f32 0.0, %v3566
        %3568 = vdwg.mxu0
        %3569 = vmatpush.bf16.msra.mxu0 0
        %3570 = vmatpush.bf16.msra.mxu0 0
        %3571 = vmatpush.bf16.msra.mxu0 0
        %3572 = vmatpush.bf16.msra.mxu0 0
        %3573 = vmatpush.bf16.msra.mxu0 %v3524
        %3574 = vmatpush.bf16.msra.mxu0 %v3522
        %3575 = vmatpush.bf16.msra.mxu0 %v3520
        %3576 = vmatpush.bf16.msra.mxu0 %v3518
        %3577 = vmatmul.bf16.gmra.mxu0 %v3545
        %v3578 = vpop.f32.mrf.mxu0
        %v3579 = vadd.f32 0.0, %v3578
        %v3580 = vpop.f32.mrf.mxu0
        %v3581 = vadd.f32 0.0, %v3580
        %3582 = vmatmul.bf16.gmra.mxu0 %v3548
        %v3583 = vpop.f32.mrf.mxu0
        %v3584 = vadd.f32 0.0, %v3583
        %v3585 = vpop.f32.mrf.mxu0
        %v3586 = vadd.f32 0.0, %v3585
        %3587 = vdwg.mxu0
        %v3588 = vpack.c.bf16 %v3562, %v3560
        %v3589 = vpack.c.bf16 %v3581, %v3579
        %v3590 = vpack.c.bf16 %v3567, %v3565
        %v3591 = vpack.c.bf16 %v3586, %v3584
        %v3592 = vld [vmem:[%s7] sm:$0xf]
        %v3593 = vld [vmem:[%s7 + $0x4] sm:$0xf]
        %v3594 = vld [vmem:[%s7 + $0x8] sm:$0xf]
        %v3595 = vld [vmem:[%s7 + $0xc] sm:$0xf]
        %v3596 = vld [vmem:[%s7 + $0x10] sm:$0xf]
        %v3597 = vld [vmem:[%s7 + $0x14] sm:$0xf]
        %v3598 = vld [vmem:[%s7 + $0x18] sm:$0xf]
        %v3599 = vld [vmem:[%s7 + $0x1c] sm:$0xf]
        %v3600 = vld [vmem:[%s7 + $0x20] sm:$0xf]
        %v3601 = vld [vmem:[%s7 + $0x24] sm:$0xf]
        %v3602 = vld [vmem:[%s7 + $0x28] sm:$0xf]
        %v3603 = vld [vmem:[%s7 + $0x2c] sm:$0xf]
        %v3604 = vld [vmem:[%s7 + $0x30] sm:$0xf]
        %v3605 = vld [vmem:[%s7 + $0x34] sm:$0xf]
        %v3606 = vld [vmem:[%s7 + $0x38] sm:$0xf]
        %v3607 = vld [vmem:[%s7 + $0x3c] sm:$0xf]
        %v3608 = vld [vmem:[%s7 + $0x40] sm:$0xf]
        %v3609 = vld [vmem:[%s7 + $0x44] sm:$0xf]
        %v3610 = vld [vmem:[%s7 + $0x48] sm:$0xf]
        %v3611 = vld [vmem:[%s7 + $0x4c] sm:$0xf]
        %v3632 = vunpack.c.l.b16 %v3592
        %v3633 = vunpack.c.l.b16 %v3593
        %v3634 = vunpack.c.l.b16 %v3594
        %v3635 = vunpack.c.l.b16 %v3595
        %v3636 = vunpack.c.l.b16 %v3596
        %v3637 = vunpack.c.l.b16 %v3597
        %v3638 = vunpack.c.l.b16 %v3598
        %v3639 = vunpack.c.l.b16 %v3599
        %v3640 = vunpack.c.l.b16 %v3600
        %v3641 = vunpack.c.l.b16 %v3601
        %v3642 = vunpack.c.l.b16 %v3602
        %v3643 = vunpack.c.l.b16 %v3603
        %v3644 = vunpack.c.l.b16 %v3604
        %v3645 = vunpack.c.l.b16 %v3605
        %v3646 = vunpack.c.l.b16 %v3606
        %v3647 = vunpack.c.l.b16 %v3607
        %v3648 = vunpack.c.l.b16 %v3608
        %v3649 = vunpack.c.l.b16 %v3609
        %v3650 = vunpack.c.l.b16 %v3610
        %v3651 = vunpack.c.l.b16 %v3611
        %v3652 = vpack.c.b16 %v3633, %v3632
        %v3653 = vpack.c.b16 %v3635, %v3634
        %v3654 = vpack.c.b16 %v3637, %v3636
        %v3655 = vpack.c.b16 %v3639, %v3638
        %v3656 = vpack.c.b16 %v3641, %v3640
        %v3657 = vpack.c.b16 %v3643, %v3642
        %v3658 = vpack.c.b16 %v3645, %v3644
        %v3659 = vpack.c.b16 %v3647, %v3646
        %v3660 = vpack.c.b16 %v3649, %v3648
        %v3661 = vpack.c.b16 %v3651, %v3650
        %vm3672 = vcmask 261120
        %v3674 = vsel %vm3672, %v3589, 0
        %v3677 = vsel %vm3672, %v3591, 0
        %3679 = vmatpush.bf16.msra.mxu0 %v3659
        %3680 = vmatpush.bf16.msra.mxu0 %v3658
        %3681 = vmatpush.bf16.msra.mxu0 %v3657
        %3682 = vmatpush.bf16.msra.mxu0 %v3656
        %3683 = vmatpush.bf16.msra.mxu0 %v3655
        %3684 = vmatpush.bf16.msra.mxu0 %v3654
        %3685 = vmatpush.bf16.msra.mxu0 %v3653
        %3686 = vmatpush.bf16.msra.mxu0 %v3652
        %3687 = vmatmul.bf16.gmra.mxu0 %v3588
        %v3688 = vpop.f32.mrf.mxu0
        %v3689 = vadd.f32 0.0, %v3688
        %v3690 = vpop.f32.mrf.mxu0
        %v3691 = vadd.f32 0.0, %v3690
        %3692 = vmatmul.bf16.gmra.mxu0 %v3590
        %v3693 = vpop.f32.mrf.mxu0
        %v3694 = vadd.f32 0.0, %v3693
        %v3695 = vpop.f32.mrf.mxu0
        %v3696 = vadd.f32 0.0, %v3695
        %3697 = vdwg.mxu0
        %3698 = vmatpush.bf16.msra.mxu0 0
        %3699 = vmatpush.bf16.msra.mxu0 0
        %3700 = vmatpush.bf16.msra.mxu0 0
        %3701 = vmatpush.bf16.msra.mxu0 0
        %3702 = vmatpush.bf16.msra.mxu0 0
        %3703 = vmatpush.bf16.msra.mxu0 0
        %3704 = vmatpush.bf16.msra.mxu0 %v3661
        %3705 = vmatpush.bf16.msra.mxu0 %v3660
        %3706 = vmatmul.bf16.gmra.mxu0 %v3674
        %v3707 = vpop.f32.mrf.mxu0
        %v3708 = vadd.f32 %v3689, %v3707
        %v3709 = vpop.f32.mrf.mxu0
        %v3710 = vadd.f32 %v3691, %v3709
        %3711 = vmatmul.bf16.gmra.mxu0 %v3677
        %v3712 = vpop.f32.mrf.mxu0
        %v3713 = vadd.f32 %v3694, %v3712
        %v3714 = vpop.f32.mrf.mxu0
        %v3715 = vadd.f32 %v3696, %v3714
        %3716 = vdwg.mxu0
        %v3717 = vadd.f32 %v3525, %v3708
        %v3718 = vadd.f32 %v3526, %v3710
        %v3719 = vadd.f32 %v3527, %v3713
        %v3720 = vadd.f32 %v3528, %v3715
        %s3721 = scalar_lea.vmem %s8, 16
        %v3722 = vld [vmem:[%s3721] sm:$0xf]
        %v3723 = vld [vmem:[%s3721 + $0x4] sm:$0xf]
        %v3724 = vld [vmem:[%s3721 + $0x8] sm:$0xf]
        %v3725 = vld [vmem:[%s3721 + $0xc] sm:$0xf]
        %v3730 = vunpack.c.l.b16 %v3722
        %v3731 = vunpack.c.l.b16 %v3723
        %v3732 = vunpack.c.l.b16 %v3724
        %v3733 = vunpack.c.l.b16 %v3725
        %v3734 = vpack.c.b16 %v3731, %v3730
        %v3735 = vpack.c.b16 %v3733, %v3732
        %v3737 = vsel %vm3543, %v3734, 0
        %v3740 = vsel %vm3543, %v3735, 0
        %3742 = vmatpush.bf16.msra.mxu0 0
        %3743 = vmatpush.bf16.msra.mxu0 0
        %3744 = vmatpush.bf16.msra.mxu0 0
        %3745 = vmatpush.bf16.msra.mxu0 0
        %3746 = vmatpush.bf16.msra.mxu0 %v3523
        %3747 = vmatpush.bf16.msra.mxu0 %v3521
        %3748 = vmatpush.bf16.msra.mxu0 %v3519
        %3749 = vmatpush.bf16.msra.mxu0 %v3517
        %3750 = vmatmul.bf16.gmra.mxu0 %v3737
        %v3751 = vpop.f32.mrf.mxu0
        %v3752 = vadd.f32 0.0, %v3751
        %v3753 = vpop.f32.mrf.mxu0
        %v3754 = vadd.f32 0.0, %v3753
        %3755 = vmatmul.bf16.gmra.mxu0 %v3740
        %v3756 = vpop.f32.mrf.mxu0
        %v3757 = vadd.f32 0.0, %v3756
        %v3758 = vpop.f32.mrf.mxu0
        %v3759 = vadd.f32 0.0, %v3758
        %3760 = vdwg.mxu0
        %3761 = vmatpush.bf16.msra.mxu0 0
        %3762 = vmatpush.bf16.msra.mxu0 0
        %3763 = vmatpush.bf16.msra.mxu0 0
        %3764 = vmatpush.bf16.msra.mxu0 0
        %3765 = vmatpush.bf16.msra.mxu0 %v3524
        %3766 = vmatpush.bf16.msra.mxu0 %v3522
        %3767 = vmatpush.bf16.msra.mxu0 %v3520
        %3768 = vmatpush.bf16.msra.mxu0 %v3518
        %3769 = vmatmul.bf16.gmra.mxu0 %v3737
        %v3770 = vpop.f32.mrf.mxu0
        %v3771 = vadd.f32 0.0, %v3770
        %v3772 = vpop.f32.mrf.mxu0
        %v3773 = vadd.f32 0.0, %v3772
        %3774 = vmatmul.bf16.gmra.mxu0 %v3740
        %v3775 = vpop.f32.mrf.mxu0
        %v3776 = vadd.f32 0.0, %v3775
        %v3777 = vpop.f32.mrf.mxu0
        %v3778 = vadd.f32 0.0, %v3777
        %3779 = vdwg.mxu0
        %v3780 = vpack.c.bf16 %v3754, %v3752
        %v3781 = vpack.c.bf16 %v3773, %v3771
        %v3782 = vpack.c.bf16 %v3759, %v3757
        %v3783 = vpack.c.bf16 %v3778, %v3776
        %s3784 = scalar_lea.vmem %s7, 80
        %v3785 = vld [vmem:[%s3784] sm:$0xf]
        %v3786 = vld [vmem:[%s3784 + $0x4] sm:$0xf]
        %v3787 = vld [vmem:[%s3784 + $0x8] sm:$0xf]
        %v3788 = vld [vmem:[%s3784 + $0xc] sm:$0xf]
        %v3789 = vld [vmem:[%s3784 + $0x10] sm:$0xf]
        %v3790 = vld [vmem:[%s3784 + $0x14] sm:$0xf]
        %v3791 = vld [vmem:[%s3784 + $0x18] sm:$0xf]
        %v3792 = vld [vmem:[%s3784 + $0x1c] sm:$0xf]
        %v3793 = vld [vmem:[%s3784 + $0x20] sm:$0xf]
        %v3794 = vld [vmem:[%s3784 + $0x24] sm:$0xf]
        %v3795 = vld [vmem:[%s3784 + $0x28] sm:$0xf]
        %v3796 = vld [vmem:[%s3784 + $0x2c] sm:$0xf]
        %v3797 = vld [vmem:[%s3784 + $0x30] sm:$0xf]
        %v3798 = vld [vmem:[%s3784 + $0x34] sm:$0xf]
        %v3799 = vld [vmem:[%s3784 + $0x38] sm:$0xf]
        %v3800 = vld [vmem:[%s3784 + $0x3c] sm:$0xf]
        %v3801 = vld [vmem:[%s3784 + $0x40] sm:$0xf]
        %v3802 = vld [vmem:[%s3784 + $0x44] sm:$0xf]
        %v3803 = vld [vmem:[%s3784 + $0x48] sm:$0xf]
        %v3804 = vld [vmem:[%s3784 + $0x4c] sm:$0xf]
        %v3825 = vunpack.c.l.b16 %v3785
        %v3826 = vunpack.c.l.b16 %v3786
        %v3827 = vunpack.c.l.b16 %v3787
        %v3828 = vunpack.c.l.b16 %v3788
        %v3829 = vunpack.c.l.b16 %v3789
        %v3830 = vunpack.c.l.b16 %v3790
        %v3831 = vunpack.c.l.b16 %v3791
        %v3832 = vunpack.c.l.b16 %v3792
        %v3833 = vunpack.c.l.b16 %v3793
        %v3834 = vunpack.c.l.b16 %v3794
        %v3835 = vunpack.c.l.b16 %v3795
        %v3836 = vunpack.c.l.b16 %v3796
        %v3837 = vunpack.c.l.b16 %v3797
        %v3838 = vunpack.c.l.b16 %v3798
        %v3839 = vunpack.c.l.b16 %v3799
        %v3840 = vunpack.c.l.b16 %v3800
        %v3841 = vunpack.c.l.b16 %v3801
        %v3842 = vunpack.c.l.b16 %v3802
        %v3843 = vunpack.c.l.b16 %v3803
        %v3844 = vunpack.c.l.b16 %v3804
        %v3845 = vpack.c.b16 %v3826, %v3825
        %v3846 = vpack.c.b16 %v3828, %v3827
        %v3847 = vpack.c.b16 %v3830, %v3829
        %v3848 = vpack.c.b16 %v3832, %v3831
        %v3849 = vpack.c.b16 %v3834, %v3833
        %v3850 = vpack.c.b16 %v3836, %v3835
        %v3851 = vpack.c.b16 %v3838, %v3837
        %v3852 = vpack.c.b16 %v3840, %v3839
        %v3853 = vpack.c.b16 %v3842, %v3841
        %v3854 = vpack.c.b16 %v3844, %v3843
        %v3866 = vsel %vm3672, %v3781, 0
        %v3869 = vsel %vm3672, %v3783, 0
        %3871 = vmatpush.bf16.msra.mxu0 %v3852
        %3872 = vmatpush.bf16.msra.mxu0 %v3851
        %3873 = vmatpush.bf16.msra.mxu0 %v3850
        %3874 = vmatpush.bf16.msra.mxu0 %v3849
        %3875 = vmatpush.bf16.msra.mxu0 %v3848
        %3876 = vmatpush.bf16.msra.mxu0 %v3847
        %3877 = vmatpush.bf16.msra.mxu0 %v3846
        %3878 = vmatpush.bf16.msra.mxu0 %v3845
        %3879 = vmatmul.bf16.gmra.mxu0 %v3780
        %v3880 = vpop.f32.mrf.mxu0
        %v3881 = vadd.f32 0.0, %v3880
        %v3882 = vpop.f32.mrf.mxu0
        %v3883 = vadd.f32 0.0, %v3882
        %3884 = vmatmul.bf16.gmra.mxu0 %v3782
        %v3885 = vpop.f32.mrf.mxu0
        %v3886 = vadd.f32 0.0, %v3885
        %v3887 = vpop.f32.mrf.mxu0
        %v3888 = vadd.f32 0.0, %v3887
        %3889 = vdwg.mxu0
        %3890 = vmatpush.bf16.msra.mxu0 0
        %3891 = vmatpush.bf16.msra.mxu0 0
        %3892 = vmatpush.bf16.msra.mxu0 0
        %3893 = vmatpush.bf16.msra.mxu0 0
        %3894 = vmatpush.bf16.msra.mxu0 0
        %3895 = vmatpush.bf16.msra.mxu0 0
        %3896 = vmatpush.bf16.msra.mxu0 %v3854
        %3897 = vmatpush.bf16.msra.mxu0 %v3853
        %3898 = vmatmul.bf16.gmra.mxu0 %v3866
        %v3899 = vpop.f32.mrf.mxu0
        %v3900 = vadd.f32 %v3881, %v3899
        %v3901 = vpop.f32.mrf.mxu0
        %v3902 = vadd.f32 %v3883, %v3901
        %3903 = vmatmul.bf16.gmra.mxu0 %v3869
        %v3904 = vpop.f32.mrf.mxu0
        %v3905 = vadd.f32 %v3886, %v3904
        %v3906 = vpop.f32.mrf.mxu0
        %v3907 = vadd.f32 %v3888, %v3906
        %3908 = vdwg.mxu0
        %v3909 = vadd.f32 %v3717, %v3900
        %v3910 = vadd.f32 %v3718, %v3902
        %v3911 = vadd.f32 %v3719, %v3905
        %v3912 = vadd.f32 %v3720, %v3907
        %s3913 = scalar_lea.vmem %s8, 32
        %v3914 = vld [vmem:[%s3913] sm:$0xf]
        %v3915 = vld [vmem:[%s3913 + $0x4] sm:$0xf]
        %v3916 = vld [vmem:[%s3913 + $0x8] sm:$0xf]
        %v3917 = vld [vmem:[%s3913 + $0xc] sm:$0xf]
        %v3922 = vunpack.c.l.b16 %v3914
        %v3923 = vunpack.c.l.b16 %v3915
        %v3924 = vunpack.c.l.b16 %v3916
        %v3925 = vunpack.c.l.b16 %v3917
        %v3926 = vpack.c.b16 %v3923, %v3922
        %v3927 = vpack.c.b16 %v3925, %v3924
        %v3929 = vsel %vm3543, %v3926, 0
        %v3932 = vsel %vm3543, %v3927, 0
        %3934 = vmatpush.bf16.msra.mxu0 0
        %3935 = vmatpush.bf16.msra.mxu0 0
        %3936 = vmatpush.bf16.msra.mxu0 0
        %3937 = vmatpush.bf16.msra.mxu0 0
        %3938 = vmatpush.bf16.msra.mxu0 %v3523
        %3939 = vmatpush.bf16.msra.mxu0 %v3521
        %3940 = vmatpush.bf16.msra.mxu0 %v3519
        %3941 = vmatpush.bf16.msra.mxu0 %v3517
        %3942 = vmatmul.bf16.gmra.mxu0 %v3929
        %v3943 = vpop.f32.mrf.mxu0
        %v3944 = vadd.f32 0.0, %v3943
        %v3945 = vpop.f32.mrf.mxu0
        %v3946 = vadd.f32 0.0, %v3945
        %3947 = vmatmul.bf16.gmra.mxu0 %v3932
        %v3948 = vpop.f32.mrf.mxu0
        %v3949 = vadd.f32 0.0, %v3948
        %v3950 = vpop.f32.mrf.mxu0
        %v3951 = vadd.f32 0.0, %v3950
        %3952 = vdwg.mxu0
        %3953 = vmatpush.bf16.msra.mxu0 0
        %3954 = vmatpush.bf16.msra.mxu0 0
        %3955 = vmatpush.bf16.msra.mxu0 0
        %3956 = vmatpush.bf16.msra.mxu0 0
        %3957 = vmatpush.bf16.msra.mxu0 %v3524
        %3958 = vmatpush.bf16.msra.mxu0 %v3522
        %3959 = vmatpush.bf16.msra.mxu0 %v3520
        %3960 = vmatpush.bf16.msra.mxu0 %v3518
        %3961 = vmatmul.bf16.gmra.mxu0 %v3929
        %v3962 = vpop.f32.mrf.mxu0
        %v3963 = vadd.f32 0.0, %v3962
        %v3964 = vpop.f32.mrf.mxu0
        %v3965 = vadd.f32 0.0, %v3964
        %3966 = vmatmul.bf16.gmra.mxu0 %v3932
        %v3967 = vpop.f32.mrf.mxu0
        %v3968 = vadd.f32 0.0, %v3967
        %v3969 = vpop.f32.mrf.mxu0
        %v3970 = vadd.f32 0.0, %v3969
        %3971 = vdwg.mxu0
        %v3972 = vpack.c.bf16 %v3946, %v3944
        %v3973 = vpack.c.bf16 %v3965, %v3963
        %v3974 = vpack.c.bf16 %v3951, %v3949
        %v3975 = vpack.c.bf16 %v3970, %v3968
        %s3976 = scalar_lea.vmem %s7, 160
        %v3977 = vld [vmem:[%s3976] sm:$0xf]
        %v3978 = vld [vmem:[%s3976 + $0x4] sm:$0xf]
        %v3979 = vld [vmem:[%s3976 + $0x8] sm:$0xf]
        %v3980 = vld [vmem:[%s3976 + $0xc] sm:$0xf]
        %v3981 = vld [vmem:[%s3976 + $0x10] sm:$0xf]
        %v3982 = vld [vmem:[%s3976 + $0x14] sm:$0xf]
        %v3983 = vld [vmem:[%s3976 + $0x18] sm:$0xf]
        %v3984 = vld [vmem:[%s3976 + $0x1c] sm:$0xf]
        %v3985 = vld [vmem:[%s3976 + $0x20] sm:$0xf]
        %v3986 = vld [vmem:[%s3976 + $0x24] sm:$0xf]
        %v3987 = vld [vmem:[%s3976 + $0x28] sm:$0xf]
        %v3988 = vld [vmem:[%s3976 + $0x2c] sm:$0xf]
        %v3989 = vld [vmem:[%s3976 + $0x30] sm:$0xf]
        %v3990 = vld [vmem:[%s3976 + $0x34] sm:$0xf]
        %v3991 = vld [vmem:[%s3976 + $0x38] sm:$0xf]
        %v3992 = vld [vmem:[%s3976 + $0x3c] sm:$0xf]
        %v3993 = vld [vmem:[%s3976 + $0x40] sm:$0xf]
        %v3994 = vld [vmem:[%s3976 + $0x44] sm:$0xf]
        %v3995 = vld [vmem:[%s3976 + $0x48] sm:$0xf]
        %v3996 = vld [vmem:[%s3976 + $0x4c] sm:$0xf]
        %v4017 = vunpack.c.l.b16 %v3977
        %v4018 = vunpack.c.l.b16 %v3978
        %v4019 = vunpack.c.l.b16 %v3979
        %v4020 = vunpack.c.l.b16 %v3980
        %v4021 = vunpack.c.l.b16 %v3981
        %v4022 = vunpack.c.l.b16 %v3982
        %v4023 = vunpack.c.l.b16 %v3983
        %v4024 = vunpack.c.l.b16 %v3984
        %v4025 = vunpack.c.l.b16 %v3985
        %v4026 = vunpack.c.l.b16 %v3986
        %v4027 = vunpack.c.l.b16 %v3987
        %v4028 = vunpack.c.l.b16 %v3988
        %v4029 = vunpack.c.l.b16 %v3989
        %v4030 = vunpack.c.l.b16 %v3990
        %v4031 = vunpack.c.l.b16 %v3991
        %v4032 = vunpack.c.l.b16 %v3992
        %v4033 = vunpack.c.l.b16 %v3993
        %v4034 = vunpack.c.l.b16 %v3994
        %v4035 = vunpack.c.l.b16 %v3995
        %v4036 = vunpack.c.l.b16 %v3996
        %v4037 = vpack.c.b16 %v4018, %v4017
        %v4038 = vpack.c.b16 %v4020, %v4019
        %v4039 = vpack.c.b16 %v4022, %v4021
        %v4040 = vpack.c.b16 %v4024, %v4023
        %v4041 = vpack.c.b16 %v4026, %v4025
        %v4042 = vpack.c.b16 %v4028, %v4027
        %v4043 = vpack.c.b16 %v4030, %v4029
        %v4044 = vpack.c.b16 %v4032, %v4031
        %v4045 = vpack.c.b16 %v4034, %v4033
        %v4046 = vpack.c.b16 %v4036, %v4035
        %v4058 = vsel %vm3672, %v3973, 0
        %v4061 = vsel %vm3672, %v3975, 0
        %4063 = vmatpush.bf16.msra.mxu0 %v4044
        %4064 = vmatpush.bf16.msra.mxu0 %v4043
        %4065 = vmatpush.bf16.msra.mxu0 %v4042
        %4066 = vmatpush.bf16.msra.mxu0 %v4041
        %4067 = vmatpush.bf16.msra.mxu0 %v4040
        %4068 = vmatpush.bf16.msra.mxu0 %v4039
        %4069 = vmatpush.bf16.msra.mxu0 %v4038
        %4070 = vmatpush.bf16.msra.mxu0 %v4037
        %4071 = vmatmul.bf16.gmra.mxu0 %v3972
        %v4072 = vpop.f32.mrf.mxu0
        %v4073 = vadd.f32 0.0, %v4072
        %v4074 = vpop.f32.mrf.mxu0
        %v4075 = vadd.f32 0.0, %v4074
        %4076 = vmatmul.bf16.gmra.mxu0 %v3974
        %v4077 = vpop.f32.mrf.mxu0
        %v4078 = vadd.f32 0.0, %v4077
        %v4079 = vpop.f32.mrf.mxu0
        %v4080 = vadd.f32 0.0, %v4079
        %4081 = vdwg.mxu0
        %4082 = vmatpush.bf16.msra.mxu0 0
        %4083 = vmatpush.bf16.msra.mxu0 0
        %4084 = vmatpush.bf16.msra.mxu0 0
        %4085 = vmatpush.bf16.msra.mxu0 0
        %4086 = vmatpush.bf16.msra.mxu0 0
        %4087 = vmatpush.bf16.msra.mxu0 0
        %4088 = vmatpush.bf16.msra.mxu0 %v4046
        %4089 = vmatpush.bf16.msra.mxu0 %v4045
        %4090 = vmatmul.bf16.gmra.mxu0 %v4058
        %v4091 = vpop.f32.mrf.mxu0
        %v4092 = vadd.f32 %v4073, %v4091
        %v4093 = vpop.f32.mrf.mxu0
        %v4094 = vadd.f32 %v4075, %v4093
        %4095 = vmatmul.bf16.gmra.mxu0 %v4061
        %v4096 = vpop.f32.mrf.mxu0
        %v4097 = vadd.f32 %v4078, %v4096
        %v4098 = vpop.f32.mrf.mxu0
        %v4099 = vadd.f32 %v4080, %v4098
        %4100 = vdwg.mxu0
        %v4101 = vadd.f32 %v3909, %v4092
        %v4102 = vadd.f32 %v3910, %v4094
        %v4103 = vadd.f32 %v3911, %v4097
        %v4104 = vadd.f32 %v3912, %v4099
        %s4105 = scalar_lea.vmem %s8, 48
        %v4106 = vld [vmem:[%s4105] sm:$0xf]
        %v4107 = vld [vmem:[%s4105 + $0x4] sm:$0xf]
        %v4108 = vld [vmem:[%s4105 + $0x8] sm:$0xf]
        %v4109 = vld [vmem:[%s4105 + $0xc] sm:$0xf]
        %v4114 = vunpack.c.l.b16 %v4106
        %v4115 = vunpack.c.l.b16 %v4107
        %v4116 = vunpack.c.l.b16 %v4108
        %v4117 = vunpack.c.l.b16 %v4109
        %v4118 = vpack.c.b16 %v4115, %v4114
        %v4119 = vpack.c.b16 %v4117, %v4116
        %v4121 = vsel %vm3543, %v4118, 0
        %v4124 = vsel %vm3543, %v4119, 0
        %4126 = vmatpush.bf16.msra.mxu0 0
        %4127 = vmatpush.bf16.msra.mxu0 0
        %4128 = vmatpush.bf16.msra.mxu0 0
        %4129 = vmatpush.bf16.msra.mxu0 0
        %4130 = vmatpush.bf16.msra.mxu0 %v3523
        %4131 = vmatpush.bf16.msra.mxu0 %v3521
        %4132 = vmatpush.bf16.msra.mxu0 %v3519
        %4133 = vmatpush.bf16.msra.mxu0 %v3517
        %4134 = vmatmul.bf16.gmra.mxu0 %v4121
        %v4135 = vpop.f32.mrf.mxu0
        %v4136 = vadd.f32 0.0, %v4135
        %v4137 = vpop.f32.mrf.mxu0
        %v4138 = vadd.f32 0.0, %v4137
        %4139 = vmatmul.bf16.gmra.mxu0 %v4124
        %v4140 = vpop.f32.mrf.mxu0
        %v4141 = vadd.f32 0.0, %v4140
        %v4142 = vpop.f32.mrf.mxu0
        %v4143 = vadd.f32 0.0, %v4142
        %4144 = vdwg.mxu0
        %4145 = vmatpush.bf16.msra.mxu0 0
        %4146 = vmatpush.bf16.msra.mxu0 0
        %4147 = vmatpush.bf16.msra.mxu0 0
        %4148 = vmatpush.bf16.msra.mxu0 0
        %4149 = vmatpush.bf16.msra.mxu0 %v3524
        %4150 = vmatpush.bf16.msra.mxu0 %v3522
        %4151 = vmatpush.bf16.msra.mxu0 %v3520
        %4152 = vmatpush.bf16.msra.mxu0 %v3518
        %4153 = vmatmul.bf16.gmra.mxu0 %v4121
        %v4154 = vpop.f32.mrf.mxu0
        %v4155 = vadd.f32 0.0, %v4154
        %v4156 = vpop.f32.mrf.mxu0
        %v4157 = vadd.f32 0.0, %v4156
        %4158 = vmatmul.bf16.gmra.mxu0 %v4124
        %v4159 = vpop.f32.mrf.mxu0
        %v4160 = vadd.f32 0.0, %v4159
        %v4161 = vpop.f32.mrf.mxu0
        %v4162 = vadd.f32 0.0, %v4161
        %4163 = vdwg.mxu0
        %v4164 = vpack.c.bf16 %v4138, %v4136
        %v4165 = vpack.c.bf16 %v4157, %v4155
        %v4166 = vpack.c.bf16 %v4143, %v4141
        %v4167 = vpack.c.bf16 %v4162, %v4160
        %s4168 = scalar_lea.vmem %s7, 240
        %v4169 = vld [vmem:[%s4168] sm:$0xf]
        %v4170 = vld [vmem:[%s4168 + $0x4] sm:$0xf]
        %v4171 = vld [vmem:[%s4168 + $0x8] sm:$0xf]
        %v4172 = vld [vmem:[%s4168 + $0xc] sm:$0xf]
        %v4173 = vld [vmem:[%s4168 + $0x10] sm:$0xf]
        %v4174 = vld [vmem:[%s4168 + $0x14] sm:$0xf]
        %v4175 = vld [vmem:[%s4168 + $0x18] sm:$0xf]
        %v4176 = vld [vmem:[%s4168 + $0x1c] sm:$0xf]
        %v4177 = vld [vmem:[%s4168 + $0x20] sm:$0xf]
        %v4178 = vld [vmem:[%s4168 + $0x24] sm:$0xf]
        %v4179 = vld [vmem:[%s4168 + $0x28] sm:$0xf]
        %v4180 = vld [vmem:[%s4168 + $0x2c] sm:$0xf]
        %v4181 = vld [vmem:[%s4168 + $0x30] sm:$0xf]
        %v4182 = vld [vmem:[%s4168 + $0x34] sm:$0xf]
        %v4183 = vld [vmem:[%s4168 + $0x38] sm:$0xf]
        %v4184 = vld [vmem:[%s4168 + $0x3c] sm:$0xf]
        %v4185 = vld [vmem:[%s4168 + $0x40] sm:$0xf]
        %v4186 = vld [vmem:[%s4168 + $0x44] sm:$0xf]
        %v4187 = vld [vmem:[%s4168 + $0x48] sm:$0xf]
        %v4188 = vld [vmem:[%s4168 + $0x4c] sm:$0xf]
        %v4209 = vunpack.c.l.b16 %v4169
        %v4210 = vunpack.c.l.b16 %v4170
        %v4211 = vunpack.c.l.b16 %v4171
        %v4212 = vunpack.c.l.b16 %v4172
        %v4213 = vunpack.c.l.b16 %v4173
        %v4214 = vunpack.c.l.b16 %v4174
        %v4215 = vunpack.c.l.b16 %v4175
        %v4216 = vunpack.c.l.b16 %v4176
        %v4217 = vunpack.c.l.b16 %v4177
        %v4218 = vunpack.c.l.b16 %v4178
        %v4219 = vunpack.c.l.b16 %v4179
        %v4220 = vunpack.c.l.b16 %v4180
        %v4221 = vunpack.c.l.b16 %v4181
        %v4222 = vunpack.c.l.b16 %v4182
        %v4223 = vunpack.c.l.b16 %v4183
        %v4224 = vunpack.c.l.b16 %v4184
        %v4225 = vunpack.c.l.b16 %v4185
        %v4226 = vunpack.c.l.b16 %v4186
        %v4227 = vunpack.c.l.b16 %v4187
        %v4228 = vunpack.c.l.b16 %v4188
        %v4229 = vpack.c.b16 %v4210, %v4209
        %v4230 = vpack.c.b16 %v4212, %v4211
        %v4231 = vpack.c.b16 %v4214, %v4213
        %v4232 = vpack.c.b16 %v4216, %v4215
        %v4233 = vpack.c.b16 %v4218, %v4217
        %v4234 = vpack.c.b16 %v4220, %v4219
        %v4235 = vpack.c.b16 %v4222, %v4221
        %v4236 = vpack.c.b16 %v4224, %v4223
        %v4237 = vpack.c.b16 %v4226, %v4225
        %v4238 = vpack.c.b16 %v4228, %v4227
        %v4250 = vsel %vm3672, %v4165, 0
        %v4253 = vsel %vm3672, %v4167, 0
        %4255 = vmatpush.bf16.msra.mxu0 %v4236
        %4256 = vmatpush.bf16.msra.mxu0 %v4235
        %4257 = vmatpush.bf16.msra.mxu0 %v4234
        %4258 = vmatpush.bf16.msra.mxu0 %v4233
        %4259 = vmatpush.bf16.msra.mxu0 %v4232
        %4260 = vmatpush.bf16.msra.mxu0 %v4231
        %4261 = vmatpush.bf16.msra.mxu0 %v4230
        %4262 = vmatpush.bf16.msra.mxu0 %v4229
        %4263 = vmatmul.bf16.gmra.mxu0 %v4164
        %v4264 = vpop.f32.mrf.mxu0
        %v4265 = vadd.f32 0.0, %v4264
        %v4266 = vpop.f32.mrf.mxu0
        %v4267 = vadd.f32 0.0, %v4266
        %4268 = vmatmul.bf16.gmra.mxu0 %v4166
        %v4269 = vpop.f32.mrf.mxu0
        %v4270 = vadd.f32 0.0, %v4269
        %v4271 = vpop.f32.mrf.mxu0
        %v4272 = vadd.f32 0.0, %v4271
        %4273 = vdwg.mxu0
        %4274 = vmatpush.bf16.msra.mxu0 0
        %4275 = vmatpush.bf16.msra.mxu0 0
        %4276 = vmatpush.bf16.msra.mxu0 0
        %4277 = vmatpush.bf16.msra.mxu0 0
        %4278 = vmatpush.bf16.msra.mxu0 0
        %4279 = vmatpush.bf16.msra.mxu0 0
        %4280 = vmatpush.bf16.msra.mxu0 %v4238
        %4281 = vmatpush.bf16.msra.mxu0 %v4237
        %4282 = vmatmul.bf16.gmra.mxu0 %v4250
        %v4283 = vpop.f32.mrf.mxu0
        %v4284 = vadd.f32 %v4265, %v4283
        %v4285 = vpop.f32.mrf.mxu0
        %v4286 = vadd.f32 %v4267, %v4285
        %4287 = vmatmul.bf16.gmra.mxu0 %v4253
        %v4288 = vpop.f32.mrf.mxu0
        %v4289 = vadd.f32 %v4270, %v4288
        %v4290 = vpop.f32.mrf.mxu0
        %v4291 = vadd.f32 %v4272, %v4290
        %4292 = vdwg.mxu0
        %v4293 = vadd.f32 %v4101, %v4284
        %v4294 = vadd.f32 %v4102, %v4286
        %v4295 = vadd.f32 %v4103, %v4289
        %v4296 = vadd.f32 %v4104, %v4291
        %v4297 = vmax.f32 %v4293, 0.0
        %v4298 = vmax.f32 %v4294, 0.0
        %v4299 = vmax.f32 %v4295, 0.0
        %v4300 = vmax.f32 %v4296, 0.0
        %v4301 = vrot.slane %v4297, 4
        %v4302 = vadd.f32 %v4297, %v4301
        %v4303 = vrot.slane %v4302, 2
        %v4304 = vadd.f32 %v4302, %v4303
        %v4305 = vrot.slane %v4304, 1
        %v4306 = vadd.f32 %v4304, %v4305
        %v4307 = vrot.slane %v4298, 4
        %v4308 = vadd.f32 %v4298, %v4307
        %v4309 = vrot.slane %v4308, 2
        %v4310 = vadd.f32 %v4308, %v4309
        %v4311 = vrot.slane %v4310, 1
        %v4312 = vadd.f32 %v4310, %v4311
        %v4313 = vrot.slane %v4299, 4
        %v4314 = vadd.f32 %v4299, %v4313
        %v4315 = vrot.slane %v4314, 2
        %v4316 = vadd.f32 %v4314, %v4315
        %v4317 = vrot.slane %v4316, 1
        %v4318 = vadd.f32 %v4316, %v4317
        %v4319 = vrot.slane %v4300, 4
        %v4320 = vadd.f32 %v4300, %v4319
        %v4321 = vrot.slane %v4320, 2
        %v4322 = vadd.f32 %v4320, %v4321
        %v4323 = vrot.slane %v4322, 1
        %v4324 = vadd.f32 %v4322, %v4323
        %v4325 = vpack.c.bf16 %v4306, %v4306
        %v4326 = vpack.c.bf16 %v4312, %v4312
        %v4327 = vpack.c.bf16 %v4318, %v4318
        %v4328 = vpack.c.bf16 %v4324, %v4324
        %v4329 = vld [vmem:[%s10] sm:$0xf]
        %v4330 = vld [vmem:[%s10 + $0x4] sm:$0xf]
        %v4331 = vld [vmem:[%s10 + $0x8] sm:$0xf]
        %v4332 = vld [vmem:[%s10 + $0xc] sm:$0xf]
        %v4333 = vld [vmem:[%s10 + $0x10] sm:$0xf]
        %v4334 = vld [vmem:[%s10 + $0x14] sm:$0xf]
        %v4335 = vld [vmem:[%s10 + $0x18] sm:$0xf]
        %v4336 = vld [vmem:[%s10 + $0x1c] sm:$0xf]
        %v4337 = vld [vmem:[%s10 + $0x20] sm:$0xf]
        %v4338 = vld [vmem:[%s10 + $0x24] sm:$0xf]
        %v4339 = vld [vmem:[%s10 + $0x28] sm:$0xf]
        %v4340 = vld [vmem:[%s10 + $0x2c] sm:$0xf]
        %v4341 = vld [vmem:[%s10 + $0x30] sm:$0xf]
        %v4342 = vld [vmem:[%s10 + $0x34] sm:$0xf]
        %v4343 = vld [vmem:[%s10 + $0x38] sm:$0xf]
        %v4344 = vld [vmem:[%s10 + $0x3c] sm:$0xf]
        %v4345 = vld [vmem:[%s11] sm:$0x1]
        %v4347 = vperm.slane %v4345, 0
        %v4353 = vunpack.c.l.b16 %v4325
        %v4354 = vunpack.c.l.b16 %v4326
        %v4355 = vunpack.c.l.b16 %v4327
        %v4356 = vunpack.c.l.b16 %v4328
        %vm4357 = vcmask 1041409
        %v4358 = vsel %vm4357, %v4354, %v4353
        %vm4359 = vcmask 1042434
        %v4360 = vsel %vm4359, %v4355, %v4358
        %vm4361 = vcmask 1043459
        %v4362 = vsel %vm4361, %v4356, %v4360
        %v4363 = vpack.c.b16 %v4362, %v4362
        %v4381 = vunpack.c.l.b16 %v4329
        %v4382 = vunpack.c.l.b16 %v4330
        %v4383 = vunpack.c.l.b16 %v4331
        %v4384 = vunpack.c.l.b16 %v4332
        %v4385 = vunpack.c.l.b16 %v4333
        %v4386 = vunpack.c.l.b16 %v4334
        %v4387 = vunpack.c.l.b16 %v4335
        %v4388 = vunpack.c.l.b16 %v4336
        %v4389 = vunpack.c.l.b16 %v4337
        %v4390 = vunpack.c.l.b16 %v4338
        %v4391 = vunpack.c.l.b16 %v4339
        %v4392 = vunpack.c.l.b16 %v4340
        %v4393 = vunpack.c.l.b16 %v4341
        %v4394 = vunpack.c.l.b16 %v4342
        %v4395 = vunpack.c.l.b16 %v4343
        %v4396 = vunpack.c.l.b16 %v4344
        %v4397 = vpack.c.b16 %v4382, %v4381
        %v4398 = vpack.c.b16 %v4384, %v4383
        %v4399 = vpack.c.b16 %v4386, %v4385
        %v4400 = vpack.c.b16 %v4388, %v4387
        %v4401 = vpack.c.b16 %v4390, %v4389
        %v4402 = vpack.c.b16 %v4392, %v4391
        %v4403 = vpack.c.b16 %v4394, %v4393
        %v4404 = vpack.c.b16 %v4396, %v4395
        %4413 = vmatpush.bf16.msra.mxu0 %v4404
        %4414 = vmatpush.bf16.msra.mxu0 %v4403
        %4415 = vmatpush.bf16.msra.mxu0 %v4402
        %4416 = vmatpush.bf16.msra.mxu0 %v4401
        %4417 = vmatpush.bf16.msra.mxu0 %v4400
        %4418 = vmatpush.bf16.msra.mxu0 %v4399
        %4419 = vmatpush.bf16.msra.mxu0 %v4398
        %4420 = vmatpush.bf16.msra.mxu0 %v4397
        %4421 = vmatmul.bf16.gmra.mxu0 %v4363
        %v4422 = vpop.f32.mrf.mxu0
        %v4423 = vadd.f32 %v4347, %v4422
        %v4424 = vpop.f32.mrf.mxu0
        %4425 = vdwg.mxu0
        %4426 = vst [vmem:[%s407] sm:$0xf] %v4423
        %s4427 = sand.u32 %s291, 1
        %s4428 = scalar_lea.sflag [#allocation3], %s4427
        %s4429 = sand.u32 %s291, 1
        %s4430 = smul.addr %s4429, 4
        %s4431 = scalar_lea.vmem [#allocation2], %s4430
        // Predicated region
        $region69: #{style_encoder_forward.1} parent=67 // pred_check
          %p4432 = pneg %p301
        $region70: #{style_encoder_forward.1} parent=67 // pred_check_branch
          %4434 = sbr.rel (%p4432) target = $region72
        $region71: #{style_encoder_forward.1} parent=67 // pred_region
          %4436 = vsyncadd %s4428, 0
          %s4437 = smul.addr %s26, 4
          %s4438 = scalar_lea.hbm %s12, %s4437
          %s4440 = sshll.u32 %s4431, 4
          %s4441 = int_to_ptr.vmem [resolvable:$true] %s4440
          %s4442 = sshll.u32 %s4438, 4
          %s4443 = int_to_ptr.hbm [resolvable:$true] %s4442
          %4445 = dma.vmem_to_hbm [thread:$0]  %s4441, 64, %s4443, %s4428
        $region72: #{style_encoder_forward.1} parent=67 // pred_fallthru
          _
      $region68: #{style_encoder_forward.1} parent=5 // pred_fallthru
        _
      %p4446 = scmp.le.s32.totalorder 2, %s21
      // Predicated region
      $region73: #{style_encoder_forward.1} parent=5 // pred_check
        %p4447 = pneg %p4446
      $region74: #{style_encoder_forward.1} parent=5 // pred_check_branch
        %4449 = sbr.rel (%p4447) target = $region76
      $region75: #{style_encoder_forward.1} parent=5 // pred_region
        %s4450 = ssub.s32 %s21, 2
        // Predicated region
        $region77: #{style_encoder_forward.1} parent=75 // pred_check
          %p4451 = pneg %p307
        $region78: #{style_encoder_forward.1} parent=75 // pred_check_branch
          %4453 = sbr.rel (%p4451) target = $region80
        $region79: #{style_encoder_forward.1} parent=75 // pred_region
          %s4454 = sand.u32 %s292, 1
          %s4455 = scalar_lea.sflag [#allocation3], %s4454
          %s4456 = sand.u32 %s292, 1
          %s4457 = smul.addr %s4456, 4
          %s4458 = scalar_lea.vmem [#allocation2], %s4457
          %4460 = dma.done %s4455, 64
        $region80: #{style_encoder_forward.1} parent=75 // pred_fallthru
          _
      $region76: #{style_encoder_forward.1} parent=5 // pred_fallthru
        _
    $region6: #{style_encoder_forward.1} parent=1 // loop_footer
      %s25 = sadd.s32 1, %s21
    $region7: #{style_encoder_forward.1} parent=1 // loop_footer_branch
      %20 = sbr.rel target = $region3
    $region8: #{style_encoder_forward.1} parent=1 // loop_exit
      _
    %4461 = vsyncpa [#allocation3], 1
    %s4462 = scalar_lea.sflag [#allocation3], 1
    %4463 = vsyncpa %s4462, 1

// kernel: style_encoder_forward.1
$region0: #{style_encoder_forward.1}
  #allocation0 [shape = 'u32[]', space=smem, size = 0x4, offset = 0x4, fixed_abs, tag = 'smem constant byte address 0x4 - core index']
  #allocation1 [shape = 'u32[72,128]{1,0:T(1,128)}', space=vmem, size = 0x9000, scoped, tag = 'internal scratch']
  %s0 = inlined_call_operand.vmem [shape: f32[192,66], index: 0, kind: input, shape index: {}]
  %s1 = inlined_call_operand.vmem [shape: bf16[7,66,144], index: 1, kind: input, shape index: {}]
  %s2 = inlined_call_operand.vmem [shape: bf16[7,96,96], index: 2, kind: input, shape index: {}]
  %s3 = inlined_call_operand.vmem [shape: f32[96,144], index: 3, kind: input, shape index: {}]
  %s4 = inlined_call_operand.vmem [shape: bf16[4,144,160], index: 4, kind: input, shape index: {}]
  %s5 = inlined_call_operand.vmem [shape: bf16[4,64,96], index: 5, kind: input, shape index: {}]
  %s6 = inlined_call_operand.vmem [shape: f32[64,160], index: 6, kind: input, shape index: {}]
  %s7 = inlined_call_operand.vmem [shape: bf16[4,160,128], index: 7, kind: input, shape index: {}]
  %s8 = inlined_call_operand.vmem [shape: bf16[4,32,64], index: 8, kind: input, shape index: {}]
  %s9 = inlined_call_operand.vmem [shape: f32[32,128], index: 9, kind: input, shape index: {}]
  %s10 = inlined_call_operand.vmem [shape: bf16[128,128], index: 10, kind: input, shape index: {}]
  %s11 = inlined_call_operand.vmem [shape: f32[1,128], index: 11, kind: input, shape index: {}]
  %s12 = inlined_call_operand.hbm [shape: f32[2,4,128], index: 12, kind: output, shape index: {}]
  %s13 = sld [smem:[#allocation0]]
  $region81: #{style_encoder_forward.1} parent=0
    _
  %s15 = ssub.s32 1, %s13
  %s16 = scalar_select 0, %s15, %s13
  $region1: #{style_encoder_forward.1} parent=0
    #allocation2 [shape = 'u8[4096]{0}', space=vmem, size = 0x1000, scoped, tag = 'output window, operand 0']
    #allocation3 [shape = 's32[2]{0}', space=sflag, size = 0x8, scoped, tag = 'scoped memory for style_encoder_forward.1']
    %17 = vsyncpa [#allocation3], 0
    %s18 = scalar_lea.sflag [#allocation3], 1
    %19 = vsyncpa %s18, 0
    loop: start=0, step=1, limit=4
    $region2: #{style_encoder_forward.1} parent=1 // loop_pre_header
      _
    $region3: #{style_encoder_forward.1} parent=1 // loop_header
      %s21 = sphi 0, %s25
      %p22 = scmp.ge.s32.totalorder %s21, 4
      %s31 = sphi 0, %s33
      %s34 = sphi 0, %s31
      %s35 = sphi 0, %s34
      %s51 = sphi 0, %s35
      %s55 = sphi 0, %s55
      %s57 = sphi 0, %s55
      %s58 = sphi 0, %s57
      %s72 = sphi 0, %s58
      %s76 = sphi 0, %s76
      %s78 = sphi 0, %s76
      %s79 = sphi 0, %s78
      %s93 = sphi 0, %s79
      %s97 = sphi 0, %s97
      %s99 = sphi 0, %s97
      %s100 = sphi 0, %s99
      %s114 = sphi 0, %s100
      %s118 = sphi 0, %s118
      %s120 = sphi 0, %s118
      %s121 = sphi 0, %s120
      %s135 = sphi 0, %s121
      %s139 = sphi 0, %s139
      %s141 = sphi 0, %s139
      %s142 = sphi 0, %s141
      %s156 = sphi 0, %s142
      %s160 = sphi 0, %s160
      %s162 = sphi 0, %s160
      %s163 = sphi 0, %s162
      %s177 = sphi 0, %s163
      %s181 = sphi 0, %s181
      %s183 = sphi 0, %s181
      %s184 = sphi 0, %s183
      %s198 = sphi 0, %s184
      %s202 = sphi 0, %s202
      %s204 = sphi 0, %s202
      %s205 = sphi 0, %s204
      %s219 = sphi 0, %s205
      %s223 = sphi 0, %s223
      %s225 = sphi 0, %s223
      %s226 = sphi 0, %s225
      %s240 = sphi 0, %s226
      %s244 = sphi 0, %s244
      %s246 = sphi 0, %s244
      %s247 = sphi 0, %s246
      %s261 = sphi 0, %s247
      %s265 = sphi 0, %s265
      %s267 = sphi 0, %s265
      %s268 = sphi 0, %s267
      %s282 = sphi 0, %s268
      %s288 = sphi 0, %s290
      %s291 = sphi 0, %s288
      %s292 = sphi 0, %s291
      %s308 = sphi 0, %s292
    $region4: #{style_encoder_forward.1} parent=1 // loop_header_branch
      %24 = sbr.rel (%p22) target = $region8
    $region5: #{style_encoder_forward.1} parent=1 // loop_body
      %s26 = ssub.s32 %s21, 1
      %s27 = ssub.s32 %s21, 2
      %s28 = sadd.s32 %s21, 1
      %s29 = ssub.s32 %s21, %s28
      %p30 = scmp.eq.s32.totalorder %s29, 0
      %s32 = sadd.s32 %s31, 1
      %s33 = scalar_select %p30, %s31, %s32
      %p36 = pneg %p30
      %p37 = scmp.eq.s32.totalorder %s21, 1
      %p38 = por %p36, %p37
      %p39 = scmp.ne.s32.totalorder %s31, %s34
      %p40 = scmp.eq.s32.totalorder %s21, 0
      %p41 = por %p39, %p40
      %p42 = scmp.ne.s32.totalorder %s31, %s34
      %p43 = scmp.eq.s32.totalorder %s26, 1
      %p44 = por %p42, %p43
      %p45 = scmp.ne.s32.totalorder %s34, %s35
      %p46 = scmp.eq.s32.totalorder %s26, 0
      %p47 = por %p45, %p46
      %p48 = scmp.ne.s32.totalorder %s34, %s35
      %p49 = scmp.eq.s32.totalorder %s27, 1
      %p50 = por %p48, %p49
      %p52 = scmp.ne.s32.totalorder %s35, %s51
      %p53 = scmp.eq.s32.totalorder %s27, 0
      %p54 = por %p52, %p53
      %s56 = sadd.s32 %s55, 1
      %p59 = scmp.eq.s32.totalorder %s21, 1
      %p60 = scmp.ne.s32.totalorder %s55, %s57
      %p61 = scmp.eq.s32.totalorder %s21, 0
      %p62 = por %p60, %p61
      %p63 = scmp.ne.s32.totalorder %s55, %s57
      %p64 = scmp.eq.s32.totalorder %s26, 1
      %p65 = por %p63, %p64
      %p66 = scmp.ne.s32.totalorder %s57, %s58
      %p67 = scmp.eq.s32.totalorder %s26, 0
      %p68 = por %p66, %p67
      %p69 = scmp.ne.s32.totalorder %s57, %s58
      %p70 = scmp.eq.s32.totalorder %s27, 1
      %p71 = por %p69, %p70
      %p73 = scmp.ne.s32.totalorder %s58, %s72
      %p74 = scmp.eq.s32.totalorder %s27, 0
      %p75 = por %p73, %p74
      %s77 = sadd.s32 %s76, 1
      %p80 = scmp.eq.s32.totalorder %s21, 1
      %p81 = scmp.ne.s32.totalorder %s76, %s78
      %p82 = scmp.eq.s32.totalorder %s21, 0
      %p83 = por %p81, %p82
      %p84 = scmp.ne.s32.totalorder %s76, %s78
      %p85 = scmp.eq.s32.totalorder %s26, 1
      %p86 = por %p84, %p85
      %p87 = scmp.ne.s32.totalorder %s78, %s79
      %p88 = scmp.eq.s32.totalorder %s26, 0
      %p89 = por %p87, %p88
      %p90 = scmp.ne.s32.totalorder %s78, %s79
      %p91 = scmp.eq.s32.totalorder %s27, 1
      %p92 = por %p90, %p91
      %p94 = scmp.ne.s32.totalorder %s79, %s93
      %p95 = scmp.eq.s32.totalorder %s27, 0
      %p96 = por %p94, %p95
      %s98 = sadd.s32 %s97, 1
      %p101 = scmp.eq.s32.totalorder %s21, 1
      %p102 = scmp.ne.s32.totalorder %s97, %s99
      %p103 = scmp.eq.s32.totalorder %s21, 0
      %p104 = por %p102, %p103
      %p105 = scmp.ne.s32.totalorder %s97, %s99
      %p106 = scmp.eq.s32.totalorder %s26, 1
      %p107 = por %p105, %p106
      %p108 = scmp.ne.s32.totalorder %s99, %s100
      %p109 = scmp.eq.s32.totalorder %s26, 0
      %p110 = por %p108, %p109
      %p111 = scmp.ne.s32.totalorder %s99, %s100
      %p112 = scmp.eq.s32.totalorder %s27, 1
      %p113 = por %p111, %p112
      %p115 = scmp.ne.s32.totalorder %s100, %s114
      %p116 = scmp.eq.s32.totalorder %s27, 0
      %p117 = por %p115, %p116
      %s119 = sadd.s32 %s118, 1
      %p122 = scmp.eq.s32.totalorder %s21, 1
      %p123 = scmp.ne.s32.totalorder %s118, %s120
      %p124 = scmp.eq.s32.totalorder %s21, 0
      %p125 = por %p123, %p124
      %p126 = scmp.ne.s32.totalorder %s118, %s120
      %p127 = scmp.eq.s32.totalorder %s26, 1
      %p128 = por %p126, %p127
      %p129 = scmp.ne.s32.totalorder %s120, %s121
      %p130 = scmp.eq.s32.totalorder %s26, 0
      %p131 = por %p129, %p130
      %p132 = scmp.ne.s32.totalorder %s120, %s121
      %p133 = scmp.eq.s32.totalorder %s27, 1
      %p134 = por %p132, %p133
      %p136 = scmp.ne.s32.totalorder %s121, %s135
      %p137 = scmp.eq.s32.totalorder %s27, 0
      %p138 = por %p136, %p137
      %s140 = sadd.s32 %s139, 1
      %p143 = scmp.eq.s32.totalorder %s21, 1
      %p144 = scmp.ne.s32.totalorder %s139, %s141
      %p145 = scmp.eq.s32.totalorder %s21, 0
      %p146 = por %p144, %p145
      %p147 = scmp.ne.s32.totalorder %s139, %s141
      %p148 = scmp.eq.s32.totalorder %s26, 1
      %p149 = por %p147, %p148
      %p150 = scmp.ne.s32.totalorder %s141, %s142
      %p151 = scmp.eq.s32.totalorder %s26, 0
      %p152 = por %p150, %p151
      %p153 = scmp.ne.s32.totalorder %s141, %s142
      %p154 = scmp.eq.s32.totalorder %s27, 1
      %p155 = por %p153, %p154
      %p157 = scmp.ne.s32.totalorder %s142, %s156
      %p158 = scmp.eq.s32.totalorder %s27, 0
      %p159 = por %p157, %p158
      %s161 = sadd.s32 %s160, 1
      %p164 = scmp.eq.s32.totalorder %s21, 1
      %p165 = scmp.ne.s32.totalorder %s160, %s162
      %p166 = scmp.eq.s32.totalorder %s21, 0
      %p167 = por %p165, %p166
      %p168 = scmp.ne.s32.totalorder %s160, %s162
      %p169 = scmp.eq.s32.totalorder %s26, 1
      %p170 = por %p168, %p169
      %p171 = scmp.ne.s32.totalorder %s162, %s163
      %p172 = scmp.eq.s32.totalorder %s26, 0
      %p173 = por %p171, %p172
      %p174 = scmp.ne.s32.totalorder %s162, %s163
      %p175 = scmp.eq.s32.totalorder %s27, 1
      %p176 = por %p174, %p175
      %p178 = scmp.ne.s32.totalorder %s163, %s177
      %p179 = scmp.eq.s32.totalorder %s27, 0
      %p180 = por %p178, %p179
      %s182 = sadd.s32 %s181, 1
      %p185 = scmp.eq.s32.totalorder %s21, 1
      %p186 = scmp.ne.s32.totalorder %s181, %s183
      %p187 = scmp.eq.s32.totalorder %s21, 0
      %p188 = por %p186, %p187
      %p189 = scmp.ne.s32.totalorder %s181, %s183
      %p190 = scmp.eq.s32.totalorder %s26, 1
      %p191 = por %p189, %p190
      %p192 = scmp.ne.s32.totalorder %s183, %s184
      %p193 = scmp.eq.s32.totalorder %s26, 0
      %p194 = por %p192, %p193
      %p195 = scmp.ne.s32.totalorder %s183, %s184
      %p196 = scmp.eq.s32.totalorder %s27, 1
      %p197 = por %p195, %p196
      %p199 = scmp.ne.s32.totalorder %s184, %s198
      %p200 = scmp.eq.s32.totalorder %s27, 0
      %p201 = por %p199, %p200
      %s203 = sadd.s32 %s202, 1
      %p206 = scmp.eq.s32.totalorder %s21, 1
      %p207 = scmp.ne.s32.totalorder %s202, %s204
      %p208 = scmp.eq.s32.totalorder %s21, 0
      %p209 = por %p207, %p208
      %p210 = scmp.ne.s32.totalorder %s202, %s204
      %p211 = scmp.eq.s32.totalorder %s26, 1
      %p212 = por %p210, %p211
      %p213 = scmp.ne.s32.totalorder %s204, %s205
      %p214 = scmp.eq.s32.totalorder %s26, 0
      %p215 = por %p213, %p214
      %p216 = scmp.ne.s32.totalorder %s204, %s205
      %p217 = scmp.eq.s32.totalorder %s27, 1
      %p218 = por %p216, %p217
      %p220 = scmp.ne.s32.totalorder %s205, %s219
      %p221 = scmp.eq.s32.totalorder %s27, 0
      %p222 = por %p220, %p221
      %s224 = sadd.s32 %s223, 1
      %p227 = scmp.eq.s32.totalorder %s21, 1
      %p228 = scmp.ne.s32.totalorder %s223, %s225
      %p229 = scmp.eq.s32.totalorder %s21, 0
      %p230 = por %p228, %p229
      %p231 = scmp.ne.s32.totalorder %s223, %s225
      %p232 = scmp.eq.s32.totalorder %s26, 1
      %p233 = por %p231, %p232
      %p234 = scmp.ne.s32.totalorder %s225, %s226
      %p235 = scmp.eq.s32.totalorder %s26, 0
      %p236 = por %p234, %p235
      %p237 = scmp.ne.s32.totalorder %s225, %s226
      %p238 = scmp.eq.s32.totalorder %s27, 1
      %p239 = por %p237, %p238
      %p241 = scmp.ne.s32.totalorder %s226, %s240
      %p242 = scmp.eq.s32.totalorder %s27, 0
      %p243 = por %p241, %p242
      %s245 = sadd.s32 %s244, 1
      %p248 = scmp.eq.s32.totalorder %s21, 1
      %p249 = scmp.ne.s32.totalorder %s244, %s246
      %p250 = scmp.eq.s32.totalorder %s21, 0
      %p251 = por %p249, %p250
      %p252 = scmp.ne.s32.totalorder %s244, %s246
      %p253 = scmp.eq.s32.totalorder %s26, 1
      %p254 = por %p252, %p253
      %p255 = scmp.ne.s32.totalorder %s246, %s247
      %p256 = scmp.eq.s32.totalorder %s26, 0
      %p257 = por %p255, %p256
      %p258 = scmp.ne.s32.totalorder %s246, %s247
      %p259 = scmp.eq.s32.totalorder %s27, 1
      %p260 = por %p258, %p259
      %p262 = scmp.ne.s32.totalorder %s247, %s261
      %p263 = scmp.eq.s32.totalorder %s27, 0
      %p264 = por %p262, %p263
      %s266 = sadd.s32 %s265, 1
      %p269 = scmp.eq.s32.totalorder %s21, 1
      %p270 = scmp.ne.s32.totalorder %s265, %s267
      %p271 = scmp.eq.s32.totalorder %s21, 0
      %p272 = por %p270, %p271
      %p273 = scmp.ne.s32.totalorder %s265, %s267
      %p274 = scmp.eq.s32.totalorder %s26, 1
      %p275 = por %p273, %p274
      %p276 = scmp.ne.s32.totalorder %s267, %s268
      %p277 = scmp.eq.s32.totalorder %s26, 0
      %p278 = por %p276, %p277
      %p279 = scmp.ne.s32.totalorder %s267, %s268
      %p280 = scmp.eq.s32.totalorder %s27, 1
      %p281 = por %p279, %p280
      %p283 = scmp.ne.s32.totalorder %s268, %s282
      %p284 = scmp.eq.s32.totalorder %s27, 0
      %p285 = por %p283, %p284
      %s286 = ssub.s32 %s21, %s28
      %p287 = scmp.eq.s32.totalorder %s286, 0
      %s289 = sadd.s32 %s288, 1
      %s290 = scalar_select %p287, %s288, %s289
      %p293 = pneg %p287
      %p294 = scmp.eq.s32.totalorder %s21, 1
      %p295 = por %p293, %p294
      %p296 = scmp.ne.s32.totalorder %s288, %s291
      %p297 = scmp.eq.s32.totalorder %s21, 0
      %p298 = por %p296, %p297
      %p299 = scmp.ne.s32.totalorder %s288, %s291
      %p300 = scmp.eq.s32.totalorder %s26, 1
      %p301 = por %p299, %p300
      %p302 = scmp.ne.s32.totalorder %s291, %s292
      %p303 = scmp.eq.s32.totalorder %s26, 0
      %p304 = por %p302, %p303
      %p305 = scmp.ne.s32.totalorder %s291, %s292
      %p306 = scmp.eq.s32.totalorder %s27, 1
      %p307 = por %p305, %p306
      %p309 = scmp.ne.s32.totalorder %s292, %s308
      %p310 = scmp.eq.s32.totalorder %s27, 0
      %p311 = por %p309, %p310
      %p312 = scmp.le.s32.totalorder 1, %s21
      %p313 = scmp.lt.s32.totalorder %s21, 3
      %p314 = pnand %p312, %p313
      %p315 = pneg %p314
      // Predicated region
      $region9: #{style_encoder_forward.1} parent=5 // pred_check
        _
      $region10: #{style_encoder_forward.1} parent=5 // pred_check_branch
        %317 = sbr.rel (%p314) target = $region12
      $region11: #{style_encoder_forward.1} parent=5 // pred_region
        %s318 = ssub.s32 %s21, 1
        // Predicated region
        $region13: #{style_encoder_forward.1} parent=11 // pred_check
          %p319 = pneg %p68
        $region14: #{style_encoder_forward.1} parent=11 // pred_check_branch
          %321 = sbr.rel (%p319) target = $region16
        $region15: #{style_encoder_forward.1} parent=11 // pred_region
          _
        $region16: #{style_encoder_forward.1} parent=11 // pred_fallthru
          _
        // Predicated region
        $region17: #{style_encoder_forward.1} parent=11 // pred_check
          %p322 = pneg %p89
        $region18: #{style_encoder_forward.1} parent=11 // pred_check_branch
          %324 = sbr.rel (%p322) target = $region20
        $region19: #{style_encoder_forward.1} parent=11 // pred_region
          _
        $region20: #{style_encoder_forward.1} parent=11 // pred_fallthru
          _
        // Predicated region
        $region21: #{style_encoder_forward.1} parent=11 // pred_check
          %p325 = pneg %p110
        $region22: #{style_encoder_forward.1} parent=11 // pred_check_branch
          %327 = sbr.rel (%p325) target = $region24
        $region23: #{style_encoder_forward.1} parent=11 // pred_region
          _
        $region24: #{style_encoder_forward.1} parent=11 // pred_fallthru
          _
        // Predicated region
        $region25: #{style_encoder_forward.1} parent=11 // pred_check
          %p328 = pneg %p131
        $region26: #{style_encoder_forward.1} parent=11 // pred_check_branch
          %330 = sbr.rel (%p328) target = $region28
        $region27: #{style_encoder_forward.1} parent=11 // pred_region
          _
        $region28: #{style_encoder_forward.1} parent=11 // pred_fallthru
          _
        // Predicated region
        $region29: #{style_encoder_forward.1} parent=11 // pred_check
          %p331 = pneg %p152
        $region30: #{style_encoder_forward.1} parent=11 // pred_check_branch
          %333 = sbr.rel (%p331) target = $region32
        $region31: #{style_encoder_forward.1} parent=11 // pred_region
          _
        $region32: #{style_encoder_forward.1} parent=11 // pred_fallthru
          _
        // Predicated region
        $region33: #{style_encoder_forward.1} parent=11 // pred_check
          %p334 = pneg %p173
        $region34: #{style_encoder_forward.1} parent=11 // pred_check_branch
          %336 = sbr.rel (%p334) target = $region36
        $region35: #{style_encoder_forward.1} parent=11 // pred_region
          _
        $region36: #{style_encoder_forward.1} parent=11 // pred_fallthru
          _
        // Predicated region
        $region37: #{style_encoder_forward.1} parent=11 // pred_check
          %p337 = pneg %p194
        $region38: #{style_encoder_forward.1} parent=11 // pred_check_branch
          %339 = sbr.rel (%p337) target = $region40
        $region39: #{style_encoder_forward.1} parent=11 // pred_region
          _
        $region40: #{style_encoder_forward.1} parent=11 // pred_fallthru
          _
        // Predicated region
        $region41: #{style_encoder_forward.1} parent=11 // pred_check
          %p340 = pneg %p215
        $region42: #{style_encoder_forward.1} parent=11 // pred_check_branch
          %342 = sbr.rel (%p340) target = $region44
        $region43: #{style_encoder_forward.1} parent=11 // pred_region
          _
        $region44: #{style_encoder_forward.1} parent=11 // pred_fallthru
          _
        // Predicated region
        $region45: #{style_encoder_forward.1} parent=11 // pred_check
          %p343 = pneg %p236
        $region46: #{style_encoder_forward.1} parent=11 // pred_check_branch
          %345 = sbr.rel (%p343) target = $region48
        $region47: #{style_encoder_forward.1} parent=11 // pred_region
          _
        $region48: #{style_encoder_forward.1} parent=11 // pred_fallthru
          _
        // Predicated region
        $region49: #{style_encoder_forward.1} parent=11 // pred_check
          %p346 = pneg %p257
        $region50: #{style_encoder_forward.1} parent=11 // pred_check_branch
          %348 = sbr.rel (%p346) target = $region52
        $region51: #{style_encoder_forward.1} parent=11 // pred_region
          _
        $region52: #{style_encoder_forward.1} parent=11 // pred_fallthru
          _
        // Predicated region
        $region53: #{style_encoder_forward.1} parent=11 // pred_check
          %p349 = pneg %p278
        $region54: #{style_encoder_forward.1} parent=11 // pred_check_branch
          %351 = sbr.rel (%p349) target = $region56
        $region55: #{style_encoder_forward.1} parent=11 // pred_region
          _
        $region56: #{style_encoder_forward.1} parent=11 // pred_fallthru
          _
      $region12: #{style_encoder_forward.1} parent=5 // pred_fallthru
        _
      %p352 = scmp.lt.s32.totalorder %s21, 2
      // Predicated region
      $region57: #{style_encoder_forward.1} parent=5 // pred_check
        %p353 = pneg %p352
      $region58: #{style_encoder_forward.1} parent=5 // pred_check_branch
        %355 = sbr.rel (%p353) target = $region60
      $region59: #{style_encoder_forward.1} parent=5 // pred_region
        // Predicated region
        $region61: #{style_encoder_forward.1} parent=59 // pred_check
          %p356 = pneg %p41
        $region62: #{style_encoder_forward.1} parent=59 // pred_check_branch
          %358 = sbr.rel (%p356) target = $region64
        $region63: #{style_encoder_forward.1} parent=59 // pred_region
          %s359 = smul.u32 12, %s21
          %p360 = scmp.lt.s32.totalorder %s359, 23
          %s361 = scalar_select %p360, %s359, 23
          %s362 = smul.addr %s361, 8
          %s363 = scalar_lea.vmem %s0, %s362
          %s364 = smul.u32 12, %s21
        $region64: #{style_encoder_forward.1} parent=59 // pred_fallthru
          _
      $region60: #{style_encoder_forward.1} parent=5 // pred_fallthru
        _
      %p365 = scmp.le.s32.totalorder 1, %s21
      %p366 = scmp.lt.s32.totalorder %s21, 3
      %p367 = pnand %p365, %p366
      %p368 = pneg %p367
      // Predicated region
      $region65: #{style_encoder_forward.1} parent=5 // pred_check
        _
      $region66: #{style_encoder_forward.1} parent=5 // pred_check_branch
        %370 = sbr.rel (%p367) target = $region68
      $region67: #{style_encoder_forward.1} parent=5 // pred_region
        %s371 = ssub.s32 %s21, 1
        %s372 = smul.u32 12, %s26
        %p373 = scmp.lt.s32.totalorder %s372, 23
        %s374 = scalar_select %p373, %s372, 23
        %s375 = smul.addr %s374, 8
        %s376 = scalar_lea.vmem %s0, %s375
        %p377 = pneg %p47
        %p378 = pneg %p44
        %p379 = pneg %p68
        %p380 = pneg %p65
        %p381 = pneg %p89
        %p382 = pneg %p86
        %p383 = pneg %p110
        %p384 = pneg %p107
        %p385 = pneg %p131
        %p386 = pneg %p128
        %p387 = pneg %p152
        %p388 = pneg %p149
        %p389 = pneg %p173
        %p390 = pneg %p170
        %p391 = pneg %p194
        %p392 = pneg %p191
        %p393 = pneg %p215
        %p394 = pneg %p212
        %p395 = pneg %p236
        %p396 = pneg %p233
        %p397 = pneg %p257
        %p398 = pneg %p254
        %p399 = pneg %p278
        %p400 = pneg %p275
        %p401 = pneg %p304
        %p402 = pneg %p301
        %s403 = sand.u32 %s291, 1
        %s404 = scalar_lea.sflag [#allocation3], %s403
        %s405 = sand.u32 %s291, 1
        %s406 = smul.addr %s405, 4
        %s407 = scalar_lea.vmem [#allocation2], %s406
        %s408 = smul.u32 12, %s26
        %p409 = scmp.lt.s32.totalorder %s408, 23
        %s410 = scalar_select %p409, %s408, 23
        %s411 = smul.addr %s410, 8
        %s412 = scalar_lea.vmem %s0, %s411
        %s413 = smul.u32 12, %s26
        %v415 = vld [vmem:[%s412] sm:$0xff]
        %v416 = vld [vmem:[%s412 + $0x8] sm:$0xff]
        %v417 = vld [vmem:[%s412 + $0x10] sm:$0xff]
        %v418 = vld [vmem:[%s412 + $0x18] sm:$0xff]
        %v419 = vld [vmem:[%s412 + $0x20] sm:$0xff]
        %v420 = vld [vmem:[%s412 + $0x28] sm:$0xff]
        %v421 = vld [vmem:[%s412 + $0x30] sm:$0xff]
        %v422 = vld [vmem:[%s412 + $0x38] sm:$0xff]
        %v423 = vld [vmem:[%s412 + $0x40] sm:$0xff]
        %v424 = vld [vmem:[%s412 + $0x48] sm:$0xff]
        %v425 = vld [vmem:[%s412 + $0x50] sm:$0xff]
        %v426 = vld [vmem:[%s412 + $0x58] sm:$0xff]
        %v427 = vpack.c.bf16 %v416, %v415
        %v428 = vpack.c.bf16 %v418, %v417
        %v429 = vpack.c.bf16 %v420, %v419
        %v430 = vpack.c.bf16 %v422, %v421
        %v431 = vpack.c.bf16 %v424, %v423
        %v432 = vpack.c.bf16 %v426, %v425
        %v433 = vld [vmem:[%s3] sm:$0xff]
        %v434 = vld [vmem:[%s3 + $0x8] sm:$0xff]
        %v435 = vld [vmem:[%s3 + $0x10] sm:$0xff]
        %v436 = vld [vmem:[%s3 + $0x18] sm:$0xff]
        %v437 = vld [vmem:[%s3 + $0x20] sm:$0xff]
        %v438 = vld [vmem:[%s3 + $0x28] sm:$0xff]
        %v439 = vld [vmem:[%s3 + $0x30] sm:$0xff]
        %v440 = vld [vmem:[%s3 + $0x38] sm:$0xff]
        %v441 = vld [vmem:[%s3 + $0x40] sm:$0xff]
        %v442 = vld [vmem:[%s3 + $0x48] sm:$0xff]
        %v443 = vld [vmem:[%s3 + $0x50] sm:$0xff]
        %v444 = vld [vmem:[%s3 + $0x58] sm:$0xff]
        %v445 = vld [vmem:[%s3 + $0x60] sm:$0xff]
        %v446 = vld [vmem:[%s3 + $0x68] sm:$0xff]
        %v447 = vld [vmem:[%s3 + $0x70] sm:$0xff]
        %v448 = vld [vmem:[%s3 + $0x78] sm:$0xff]
        %v449 = vld [vmem:[%s3 + $0x80] sm:$0xff]
        %v450 = vld [vmem:[%s3 + $0x88] sm:$0xff]
        %v451 = vld [vmem:[%s3 + $0x90] sm:$0xff]
        %v452 = vld [vmem:[%s3 + $0x98] sm:$0xff]
        %v453 = vld [vmem:[%s3 + $0xa0] sm:$0xff]
        %v454 = vld [vmem:[%s3 + $0xa8] sm:$0xff]
        %v455 = vld [vmem:[%s3 + $0xb0] sm:$0xff]
        %v456 = vld [vmem:[%s3 + $0xb8] sm:$0xff]
        %v457 = vld [vmem:[%s2] sm:$0xf]
        %v458 = vld [vmem:[%s2 + $0x4] sm:$0xf]
        %v459 = vld [vmem:[%s2 + $0x8] sm:$0xf]
        %v460 = vld [vmem:[%s2 + $0xc] sm:$0xf]
        %v461 = vld [vmem:[%s2 + $0x10] sm:$0xf]
        %v462 = vld [vmem:[%s2 + $0x14] sm:$0xf]
        %v463 = vld [vmem:[%s2 + $0x18] sm:$0xf]
        %v464 = vld [vmem:[%s2 + $0x1c] sm:$0xf]
        %v465 = vld [vmem:[%s2 + $0x20] sm:$0xf]
        %v466 = vld [vmem:[%s2 + $0x24] sm:$0xf]
        %v467 = vld [vmem:[%s2 + $0x28] sm:$0xf]
        %v468 = vld [vmem:[%s2 + $0x2c] sm:$0xf]
        %v481 = vunpack.c.l.b16 %v457
        %v482 = vunpack.c.l.b16 %v458
        %v483 = vunpack.c.l.b16 %v459
        %v484 = vunpack.c.l.b16 %v460
        %v485 = vunpack.c.l.b16 %v461
        %v486 = vunpack.c.l.b16 %v462
        %v487 = vunpack.c.l.b16 %v463
        %v488 = vunpack.c.l.b16 %v464
        %v489 = vunpack.c.l.b16 %v465
        %v490 = vunpack.c.l.b16 %v466
        %v491 = vunpack.c.l.b16 %v467
        %v492 = vunpack.c.l.b16 %v468
        %v493 = vpack.c.b16 %v482, %v481
        %v494 = vpack.c.b16 %v484, %v483
        %v495 = vpack.c.b16 %v486, %v485
        %v496 = vpack.c.b16 %v488, %v487
        %v497 = vpack.c.b16 %v490, %v489
        %v498 = vpack.c.b16 %v492, %v491
        %vm499 = vcmask 785408
        %v501 = vsel %vm499, %v493, 0
        %v504 = vsel %vm499, %v494, 0
        %v507 = vsel %vm499, %v495, 0
        %v510 = vsel %vm499, %v496, 0
        %v513 = vsel %vm499, %v497, 0
        %v516 = vsel %vm499, %v498, 0
        %518 = vmatpush.bf16.msra.mxu0 0
        %519 = vmatpush.bf16.msra.mxu0 0
        %520 = vmatpush.bf16.msra.mxu0 %v432
        %521 = vmatpush.bf16.msra.mxu0 %v431
        %522 = vmatpush.bf16.msra.mxu0 %v430
        %523 = vmatpush.bf16.msra.mxu0 %v429
        %524 = vmatpush.bf16.msra.mxu0 %v428
        %525 = vmatpush.bf16.msra.mxu0 %v427
        %526 = vmatmul.bf16.gmra.mxu0 %v501
        %v527 = vpop.f32.mrf.mxu0
        %v528 = vadd.f32 0.0, %v527
        %v529 = vpop.f32.mrf.mxu0
        %v530 = vadd.f32 0.0, %v529
        %531 = vmatmul.bf16.gmra.mxu0 %v504
        %v532 = vpop.f32.mrf.mxu0
        %v533 = vadd.f32 0.0, %v532
        %v534 = vpop.f32.mrf.mxu0
        %v535 = vadd.f32 0.0, %v534
        %536 = vmatmul.bf16.gmra.mxu0 %v507
        %v537 = vpop.f32.mrf.mxu0
        %v538 = vadd.f32 0.0, %v537
        %v539 = vpop.f32.mrf.mxu0
        %v540 = vadd.f32 0.0, %v539
        %541 = vmatmul.bf16.gmra.mxu0 %v510
        %v542 = vpop.f32.mrf.mxu0
        %v543 = vadd.f32 0.0, %v542
        %v544 = vpop.f32.mrf.mxu0
        %v545 = vadd.f32 0.0, %v544
        %546 = vmatmul.bf16.gmra.mxu0 %v513
        %v547 = vpop.f32.mrf.mxu0
        %v548 = vadd.f32 0.0, %v547
        %v549 = vpop.f32.mrf.mxu0
        %v550 = vadd.f32 0.0, %v549
        %551 = vmatmul.bf16.gmra.mxu0 %v516
        %v552 = vpop.f32.mrf.mxu0
        %v553 = vadd.f32 0.0, %v552
        %v554 = vpop.f32.mrf.mxu0
        %v555 = vadd.f32 0.0, %v554
        %556 = vdwg.mxu0
        %v557 = vpack.c.bf16 %v530, %v528
        %v558 = vpack.c.bf16 %v535, %v533
        %v559 = vpack.c.bf16 %v540, %v538
        %v560 = vpack.c.bf16 %v545, %v543
        %v561 = vpack.c.bf16 %v550, %v548
        %v562 = vpack.c.bf16 %v555, %v553
        %v563 = vld [vmem:[%s1] sm:$0xff]
        %v564 = vld [vmem:[%s1 + $0x8] sm:$0xff]
        %v565 = vld [vmem:[%s1 + $0x10] sm:$0xff]
        %v566 = vld [vmem:[%s1 + $0x18] sm:$0xff]
        %v567 = vld [vmem:[%s1 + $0x20] sm:$0xff]
        %v568 = vld [vmem:[%s1 + $0x28] sm:$0xff]
        %v569 = vld [vmem:[%s1 + $0x30] sm:$0xff]
        %v570 = vld [vmem:[%s1 + $0x38] sm:$0xff]
        %v571 = vld [vmem:[%s1 + $0x40] sm:$0x11]
        %v581 = vunpack.c.l.b16 %v563
        %v582 = vunpack.c.h.b16 %v563
        %v583 = vunpack.c.l.b16 %v564
        %v584 = vunpack.c.h.b16 %v564
        %v585 = vunpack.c.l.b16 %v565
        %v586 = vunpack.c.h.b16 %v565
        %v587 = vunpack.c.l.b16 %v566
        %v588 = vunpack.c.h.b16 %v566
        %v589 = vunpack.c.l.b16 %v567
        %v590 = vunpack.c.h.b16 %v567
        %v591 = vunpack.c.l.b16 %v568
        %v592 = vunpack.c.h.b16 %v568
        %v593 = vunpack.c.l.b16 %v569
        %v594 = vunpack.c.h.b16 %v569
        %v595 = vunpack.c.l.b16 %v570
        %v596 = vunpack.c.h.b16 %v570
        %v597 = vunpack.c.l.b16 %v571
        %v598 = vunpack.c.h.b16 %v571
        %v599 = vpack.c.b16 %v583, %v581
        %v600 = vpack.c.b16 %v584, %v582
        %v601 = vpack.c.b16 %v587, %v585
        %v602 = vpack.c.b16 %v588, %v586
        %v603 = vpack.c.b16 %v591, %v589
        %v604 = vpack.c.b16 %v592, %v590
        %v605 = vpack.c.b16 %v595, %v593
        %v606 = vpack.c.b16 %v596, %v594
        %v607 = vpack.c.b16 %v597, %v597
        %v608 = vpack.c.b16 %v598, %v598
        %vm617 = vcmask 539648
        %v619 = vsel %vm617, %v557, 0
        %v622 = vsel %vm617, %v558, 0
        %v625 = vsel %vm617, %v559, 0
        %v628 = vsel %vm617, %v560, 0
        %v631 = vsel %vm617, %v561, 0
        %v634 = vsel %vm617, %v562, 0
        %vm636 = vcmask 1040384
        %v638 = vsel %vm636, %v607, 0
        %v641 = vsel %vm636, %v608, 0
        %643 = vmatpush.bf16.msra.mxu0 0
        %644 = vmatpush.bf16.msra.mxu0 0
        %645 = vmatpush.bf16.msra.mxu0 0
        %646 = vmatpush.bf16.msra.mxu0 %v638
        %647 = vmatpush.bf16.msra.mxu0 %v605
        %648 = vmatpush.bf16.msra.mxu0 %v603
        %649 = vmatpush.bf16.msra.mxu0 %v601
        %650 = vmatpush.bf16.msra.mxu0 %v599
        %651 = vmatmul.bf16.gmra.mxu0 %v619
        %v652 = vpop.f32.mrf.mxu0
        %v653 = vadd.f32 0.0, %v652
        %v654 = vpop.f32.mrf.mxu0
        %v655 = vadd.f32 0.0, %v654
        %656 = vmatmul.bf16.gmra.mxu0 %v622
        %v657 = vpop.f32.mrf.mxu0
        %v658 = vadd.f32 0.0, %v657
        %v659 = vpop.f32.mrf.mxu0
        %v660 = vadd.f32 0.0, %v659
        %661 = vmatmul.bf16.gmra.mxu0 %v625
        %v662 = vpop.f32.mrf.mxu0
        %v663 = vadd.f32 0.0, %v662
        %v664 = vpop.f32.mrf.mxu0
        %v665 = vadd.f32 0.0, %v664
        %666 = vmatmul.bf16.gmra.mxu0 %v628
        %v667 = vpop.f32.mrf.mxu0
        %v668 = vadd.f32 0.0, %v667
        %v669 = vpop.f32.mrf.mxu0
        %v670 = vadd.f32 0.0, %v669
        %671 = vmatmul.bf16.gmra.mxu0 %v631
        %v672 = vpop.f32.mrf.mxu0
        %v673 = vadd.f32 0.0, %v672
        %v674 = vpop.f32.mrf.mxu0
        %v675 = vadd.f32 0.0, %v674
        %676 = vmatmul.bf16.gmra.mxu0 %v634
        %v677 = vpop.f32.mrf.mxu0
        %v678 = vadd.f32 0.0, %v677
        %v679 = vpop.f32.mrf.mxu0
        %v680 = vadd.f32 0.0, %v679
        %681 = vdwg.mxu0
        %682 = vmatpush.bf16.msra.mxu0 0
        %683 = vmatpush.bf16.msra.mxu0 0
        %684 = vmatpush.bf16.msra.mxu0 0
        %685 = vmatpush.bf16.msra.mxu0 %v641
        %686 = vmatpush.bf16.msra.mxu0 %v606
        %687 = vmatpush.bf16.msra.mxu0 %v604
        %688 = vmatpush.bf16.msra.mxu0 %v602
        %689 = vmatpush.bf16.msra.mxu0 %v600
        %690 = vmatmul.bf16.gmra.mxu0 %v619
        %v691 = vpop.f32.mrf.mxu0
        %v692 = vadd.f32 0.0, %v691
        %v693 = vpop.f32.mrf.mxu0
        %v694 = vadd.f32 0.0, %v693
        %695 = vmatmul.bf16.gmra.mxu0 %v622
        %v696 = vpop.f32.mrf.mxu0
        %v697 = vadd.f32 0.0, %v696
        %v698 = vpop.f32.mrf.mxu0
        %v699 = vadd.f32 0.0, %v698
        %700 = vmatmul.bf16.gmra.mxu0 %v625
        %v701 = vpop.f32.mrf.mxu0
        %v702 = vadd.f32 0.0, %v701
        %v703 = vpop.f32.mrf.mxu0
        %v704 = vadd.f32 0.0, %v703
        %705 = vmatmul.bf16.gmra.mxu0 %v628
        %v706 = vpop.f32.mrf.mxu0
        %v707 = vadd.f32 0.0, %v706
        %v708 = vpop.f32.mrf.mxu0
        %v709 = vadd.f32 0.0, %v708
        %710 = vmatmul.bf16.gmra.mxu0 %v631
        %v711 = vpop.f32.mrf.mxu0
        %v712 = vadd.f32 0.0, %v711
        %v713 = vpop.f32.mrf.mxu0
        %v714 = vadd.f32 0.0, %v713
        %715 = vmatmul.bf16.gmra.mxu0 %v634
        %v716 = vpop.f32.mrf.mxu0
        %v717 = vadd.f32 0.0, %v716
        %v718 = vpop.f32.mrf.mxu0
        %v719 = vadd.f32 0.0, %v718
        %720 = vdwg.mxu0
        %v721 = vadd.f32 %v433, %v653
        %v722 = vadd.f32 %v434, %v692
        %v723 = vadd.f32 %v435, %v655
        %v724 = vadd.f32 %v436, %v694
        %v725 = vadd.f32 %v437, %v658
        %v726 = vadd.f32 %v438, %v697
        %v727 = vadd.f32 %v439, %v660
        %v728 = vadd.f32 %v440, %v699
        %v729 = vadd.f32 %v441, %v663
        %v730 = vadd.f32 %v442, %v702
        %v731 = vadd.f32 %v443, %v665
        %v732 = vadd.f32 %v444, %v704
        %v733 = vadd.f32 %v445, %v668
        %v734 = vadd.f32 %v446, %v707
        %v735 = vadd.f32 %v447, %v670
        %v736 = vadd.f32 %v448, %v709
        %v737 = vadd.f32 %v449, %v673
        %v738 = vadd.f32 %v450, %v712
        %v739 = vadd.f32 %v451, %v675
        %v740 = vadd.f32 %v452, %v714
        %v741 = vadd.f32 %v453, %v678
        %v742 = vadd.f32 %v454, %v717
        %v743 = vadd.f32 %v455, %v680
        %v744 = vadd.f32 %v456, %v719
        %s745 = scalar_lea.vmem %s2, 48
        %v746 = vld [vmem:[%s745] sm:$0xf]
        %v747 = vld [vmem:[%s745 + $0x4] sm:$0xf]
        %v748 = vld [vmem:[%s745 + $0x8] sm:$0xf]
        %v749 = vld [vmem:[%s745 + $0xc] sm:$0xf]
        %v750 = vld [vmem:[%s745 + $0x10] sm:$0xf]
        %v751 = vld [vmem:[%s745 + $0x14] sm:$0xf]
        %v752 = vld [vmem:[%s745 + $0x18] sm:$0xf]
        %v753 = vld [vmem:[%s745 + $0x1c] sm:$0xf]
        %v754 = vld [vmem:[%s745 + $0x20] sm:$0xf]
        %v755 = vld [vmem:[%s745 + $0x24] sm:$0xf]
        %v756 = vld [vmem:[%s745 + $0x28] sm:$0xf]
        %v757 = vld [vmem:[%s745 + $0x2c] sm:$0xf]
        %v770 = vunpack.c.l.b16 %v746
        %v771 = vunpack.c.l.b16 %v747
        %v772 = vunpack.c.l.b16 %v748
        %v773 = vunpack.c.l.b16 %v749
        %v774 = vunpack.c.l.b16 %v750
        %v775 = vunpack.c.l.b16 %v751
        %v776 = vunpack.c.l.b16 %v752
        %v777 = vunpack.c.l.b16 %v753
        %v778 = vunpack.c.l.b16 %v754
        %v779 = vunpack.c.l.b16 %v755
        %v780 = vunpack.c.l.b16 %v756
        %v781 = vunpack.c.l.b16 %v757
        %v782 = vpack.c.b16 %v771, %v770
        %v783 = vpack.c.b16 %v773, %v772
        %v784 = vpack.c.b16 %v775, %v774
        %v785 = vpack.c.b16 %v777, %v776
        %v786 = vpack.c.b16 %v779, %v778
        %v787 = vpack.c.b16 %v781, %v780
        %v789 = vsel %vm499, %v782, 0
        %v792 = vsel %vm499, %v783, 0
        %v795 = vsel %vm499, %v784, 0
        %v798 = vsel %vm499, %v785, 0
        %v801 = vsel %vm499, %v786, 0
        %v804 = vsel %vm499, %v787, 0
        %806 = vmatpush.bf16.msra.mxu0 0
        %807 = vmatpush.bf16.msra.mxu0 0
        %808 = vmatpush.bf16.msra.mxu0 %v432
        %809 = vmatpush.bf16.msra.mxu0 %v431
        %810 = vmatpush.bf16.msra.mxu0 %v430
        %811 = vmatpush.bf16.msra.mxu0 %v429
        %812 = vmatpush.bf16.msra.mxu0 %v428
        %813 = vmatpush.bf16.msra.mxu0 %v427
        %814 = vmatmul.bf16.gmra.mxu0 %v789
        %v815 = vpop.f32.mrf.mxu0
        %v816 = vadd.f32 0.0, %v815
        %v817 = vpop.f32.mrf.mxu0
        %v818 = vadd.f32 0.0, %v817
        %819 = vmatmul.bf16.gmra.mxu0 %v792
        %v820 = vpop.f32.mrf.mxu0
        %v821 = vadd.f32 0.0, %v820
        %v822 = vpop.f32.mrf.mxu0
        %v823 = vadd.f32 0.0, %v822
        %824 = vmatmul.bf16.gmra.mxu0 %v795
        %v825 = vpop.f32.mrf.mxu0
        %v826 = vadd.f32 0.0, %v825
        %v827 = vpop.f32.mrf.mxu0
        %v828 = vadd.f32 0.0, %v827
        %829 = vmatmul.bf16.gmra.mxu0 %v798
        %v830 = vpop.f32.mrf.mxu0
        %v831 = vadd.f32 0.0, %v830
        %v832 = vpop.f32.mrf.mxu0
        %v833 = vadd.f32 0.0, %v832
        %834 = vmatmul.bf16.gmra.mxu0 %v801
        %v835 = vpop.f32.mrf.mxu0
        %v836 = vadd.f32 0.0, %v835
        %v837 = vpop.f32.mrf.mxu0
        %v838 = vadd.f32 0.0, %v837
        %839 = vmatmul.bf16.gmra.mxu0 %v804
        %v840 = vpop.f32.mrf.mxu0
        %v841 = vadd.f32 0.0, %v840
        %v842 = vpop.f32.mrf.mxu0
        %v843 = vadd.f32 0.0, %v842
        %844 = vdwg.mxu0
        %v845 = vpack.c.bf16 %v818, %v816
        %v846 = vpack.c.bf16 %v823, %v821
        %v847 = vpack.c.bf16 %v828, %v826
        %v848 = vpack.c.bf16 %v833, %v831
        %v849 = vpack.c.bf16 %v838, %v836
        %v850 = vpack.c.bf16 %v843, %v841
        %s851 = scalar_lea.vmem %s1, 72
        %v852 = vld [vmem:[%s851] sm:$0xff]
        %v853 = vld [vmem:[%s851 + $0x8] sm:$0xff]
        %v854 = vld [vmem:[%s851 + $0x10] sm:$0xff]
        %v855 = vld [vmem:[%s851 + $0x18] sm:$0xff]
        %v856 = vld [vmem:[%s851 + $0x20] sm:$0xff]
        %v857 = vld [vmem:[%s851 + $0x28] sm:$0xff]
        %v858 = vld [vmem:[%s851 + $0x30] sm:$0xff]
        %v859 = vld [vmem:[%s851 + $0x38] sm:$0xff]
        %v860 = vld [vmem:[%s851 + $0x40] sm:$0x11]
        %v870 = vunpack.c.l.b16 %v852
        %v871 = vunpack.c.h.b16 %v852
        %v872 = vunpack.c.l.b16 %v853
        %v873 = vunpack.c.h.b16 %v853
        %v874 = vunpack.c.l.b16 %v854
        %v875 = vunpack.c.h.b16 %v854
        %v876 = vunpack.c.l.b16 %v855
        %v877 = vunpack.c.h.b16 %v855
        %v878 = vunpack.c.l.b16 %v856
        %v879 = vunpack.c.h.b16 %v856
        %v880 = vunpack.c.l.b16 %v857
        %v881 = vunpack.c.h.b16 %v857
        %v882 = vunpack.c.l.b16 %v858
        %v883 = vunpack.c.h.b16 %v858
        %v884 = vunpack.c.l.b16 %v859
        %v885 = vunpack.c.h.b16 %v859
        %v886 = vunpack.c.l.b16 %v860
        %v887 = vunpack.c.h.b16 %v860
        %v888 = vpack.c.b16 %v872, %v870
        %v889 = vpack.c.b16 %v873, %v871
        %v890 = vpack.c.b16 %v876, %v874
        %v891 = vpack.c.b16 %v877, %v875
        %v892 = vpack.c.b16 %v880, %v878
        %v893 = vpack.c.b16 %v881, %v879
        %v894 = vpack.c.b16 %v884, %v882
        %v895 = vpack.c.b16 %v885, %v883
        %v896 = vpack.c.b16 %v886, %v886
        %v897 = vpack.c.b16 %v887, %v887
        %v907 = vsel %vm617, %v845, 0
        %v910 = vsel %vm617, %v846, 0
        %v913 = vsel %vm617, %v847, 0
        %v916 = vsel %vm617, %v848, 0
        %v919 = vsel %vm617, %v849, 0
        %v922 = vsel %vm617, %v850, 0
        %v925 = vsel %vm636, %v896, 0
        %v928 = vsel %vm636, %v897, 0
        %930 = vmatpush.bf16.msra.mxu0 0
        %931 = vmatpush.bf16.msra.mxu0 0
        %932 = vmatpush.bf16.msra.mxu0 0
        %933 = vmatpush.bf16.msra.mxu0 %v925
        %934 = vmatpush.bf16.msra.mxu0 %v894
        %935 = vmatpush.bf16.msra.mxu0 %v892
        %936 = vmatpush.bf16.msra.mxu0 %v890
        %937 = vmatpush.bf16.msra.mxu0 %v888
        %938 = vmatmul.bf16.gmra.mxu0 %v907
        %v939 = vpop.f32.mrf.mxu0
        %v940 = vadd.f32 0.0, %v939
        %v941 = vpop.f32.mrf.mxu0
        %v942 = vadd.f32 0.0, %v941
        %943 = vmatmul.bf16.gmra.mxu0 %v910
        %v944 = vpop.f32.mrf.mxu0
        %v945 = vadd.f32 0.0, %v944
        %v946 = vpop.f32.mrf.mxu0
        %v947 = vadd.f32 0.0, %v946
        %948 = vmatmul.bf16.gmra.mxu0 %v913
        %v949 = vpop.f32.mrf.mxu0
        %v950 = vadd.f32 0.0, %v949
        %v951 = vpop.f32.mrf.mxu0
        %v952 = vadd.f32 0.0, %v951
        %953 = vmatmul.bf16.gmra.mxu0 %v916
        %v954 = vpop.f32.mrf.mxu0
        %v955 = vadd.f32 0.0, %v954
        %v956 = vpop.f32.mrf.mxu0
        %v957 = vadd.f32 0.0, %v956
        %958 = vmatmul.bf16.gmra.mxu0 %v919
        %v959 = vpop.f32.mrf.mxu0
        %v960 = vadd.f32 0.0, %v959
        %v961 = vpop.f32.mrf.mxu0
        %v962 = vadd.f32 0.0, %v961
        %963 = vmatmul.bf16.gmra.mxu0 %v922
        %v964 = vpop.f32.mrf.mxu0
        %v965 = vadd.f32 0.0, %v964
        %v966 = vpop.f32.mrf.mxu0
        %v967 = vadd.f32 0.0, %v966
        %968 = vdwg.mxu0
        %969 = vmatpush.bf16.msra.mxu0 0
        %970 = vmatpush.bf16.msra.mxu0 0
        %971 = vmatpush.bf16.msra.mxu0 0
        %972 = vmatpush.bf16.msra.mxu0 %v928
        %973 = vmatpush.bf16.msra.mxu0 %v895
        %974 = vmatpush.bf16.msra.mxu0 %v893
        %975 = vmatpush.bf16.msra.mxu0 %v891
        %976 = vmatpush.bf16.msra.mxu0 %v889
        %977 = vmatmul.bf16.gmra.mxu0 %v907
        %v978 = vpop.f32.mrf.mxu0
        %v979 = vadd.f32 0.0, %v978
        %v980 = vpop.f32.mrf.mxu0
        %v981 = vadd.f32 0.0, %v980
        %982 = vmatmul.bf16.gmra.mxu0 %v910
        %v983 = vpop.f32.mrf.mxu0
        %v984 = vadd.f32 0.0, %v983
        %v985 = vpop.f32.mrf.mxu0
        %v986 = vadd.f32 0.0, %v985
        %987 = vmatmul.bf16.gmra.mxu0 %v913
        %v988 = vpop.f32.mrf.mxu0
        %v989 = vadd.f32 0.0, %v988
        %v990 = vpop.f32.mrf.mxu0
        %v991 = vadd.f32 0.0, %v990
        %992 = vmatmul.bf16.gmra.mxu0 %v916
        %v993 = vpop.f32.mrf.mxu0
        %v994 = vadd.f32 0.0, %v993
        %v995 = vpop.f32.mrf.mxu0
        %v996 = vadd.f32 0.0, %v995
        %997 = vmatmul.bf16.gmra.mxu0 %v919
        %v998 = vpop.f32.mrf.mxu0
        %v999 = vadd.f32 0.0, %v998
        %v1000 = vpop.f32.mrf.mxu0
        %v1001 = vadd.f32 0.0, %v1000
        %1002 = vmatmul.bf16.gmra.mxu0 %v922
        %v1003 = vpop.f32.mrf.mxu0
        %v1004 = vadd.f32 0.0, %v1003
        %v1005 = vpop.f32.mrf.mxu0
        %v1006 = vadd.f32 0.0, %v1005
        %1007 = vdwg.mxu0
        %v1008 = vadd.f32 %v721, %v940
        %v1009 = vadd.f32 %v722, %v979
        %v1010 = vadd.f32 %v723, %v942
        %v1011 = vadd.f32 %v724, %v981
        %v1012 = vadd.f32 %v725, %v945
        %v1013 = vadd.f32 %v726, %v984
        %v1014 = vadd.f32 %v727, %v947
        %v1015 = vadd.f32 %v728, %v986
        %v1016 = vadd.f32 %v729, %v950
        %v1017 = vadd.f32 %v730, %v989
        %v1018 = vadd.f32 %v731, %v952
        %v1019 = vadd.f32 %v732, %v991
        %v1020 = vadd.f32 %v733, %v955
        %v1021 = vadd.f32 %v734, %v994
        %v1022 = vadd.f32 %v735, %v957
        %v1023 = vadd.f32 %v736, %v996
        %v1024 = vadd.f32 %v737, %v960
        %v1025 = vadd.f32 %v738, %v999
        %v1026 = vadd.f32 %v739, %v962
        %v1027 = vadd.f32 %v740, %v1001
        %v1028 = vadd.f32 %v741, %v965
        %v1029 = vadd.f32 %v742, %v1004
        %v1030 = vadd.f32 %v743, %v967
        %v1031 = vadd.f32 %v744, %v1006
        %s1032 = scalar_lea.vmem %s2, 96
        %v1033 = vld [vmem:[%s1032] sm:$0xf]
        %v1034 = vld [vmem:[%s1032 + $0x4] sm:$0xf]
        %v1035 = vld [vmem:[%s1032 + $0x8] sm:$0xf]
        %v1036 = vld [vmem:[%s1032 + $0xc] sm:$0xf]
        %v1037 = vld [vmem:[%s1032 + $0x10] sm:$0xf]
        %v1038 = vld [vmem:[%s1032 + $0x14] sm:$0xf]
        %v1039 = vld [vmem:[%s1032 + $0x18] sm:$0xf]
        %v1040 = vld [vmem:[%s1032 + $0x1c] sm:$0xf]
        %v1041 = vld [vmem:[%s1032 + $0x20] sm:$0xf]
        %v1042 = vld [vmem:[%s1032 + $0x24] sm:$0xf]
        %v1043 = vld [vmem:[%s1032 + $0x28] sm:$0xf]
        %v1044 = vld [vmem:[%s1032 + $0x2c] sm:$0xf]
        %v1057 = vunpack.c.l.b16 %v1033
        %v1058 = vunpack.c.l.b16 %v1034
        %v1059 = vunpack.c.l.b16 %v1035
        %v1060 = vunpack.c.l.b16 %v1036
        %v1061 = vunpack.c.l.b16 %v1037
        %v1062 = vunpack.c.l.b16 %v1038
        %v1063 = vunpack.c.l.b16 %v1039
        %v1064 = vunpack.c.l.b16 %v1040
        %v1065 = vunpack.c.l.b16 %v1041
        %v1066 = vunpack.c.l.b16 %v1042
        %v1067 = vunpack.c.l.b16 %v1043
        %v1068 = vunpack.c.l.b16 %v1044
        %v1069 = vpack.c.b16 %v1058, %v1057
        %v1070 = vpack.c.b16 %v1060, %v1059
        %v1071 = vpack.c.b16 %v1062, %v1061
        %v1072 = vpack.c.b16 %v1064, %v1063
        %v1073 = vpack.c.b16 %v1066, %v1065
        %v1074 = vpack.c.b16 %v1068, %v1067
        %v1076 = vsel %vm499, %v1069, 0
        %v1079 = vsel %vm499, %v1070, 0
        %v1082 = vsel %vm499, %v1071, 0
        %v1085 = vsel %vm499, %v1072, 0
        %v1088 = vsel %vm499, %v1073, 0
        %v1091 = vsel %vm499, %v1074, 0
        %1093 = vmatpush.bf16.msra.mxu0 0
        %1094 = vmatpush.bf16.msra.mxu0 0
        %1095 = vmatpush.bf16.msra.mxu0 %v432
        %1096 = vmatpush.bf16.msra.mxu0 %v431
        %1097 = vmatpush.bf16.msra.mxu0 %v430
        %1098 = vmatpush.bf16.msra.mxu0 %v429
        %1099 = vmatpush.bf16.msra.mxu0 %v428
        %1100 = vmatpush.bf16.msra.mxu0 %v427
        %1101 = vmatmul.bf16.gmra.mxu0 %v1076
        %v1102 = vpop.f32.mrf.mxu0
        %v1103 = vadd.f32 0.0, %v1102
        %v1104 = vpop.f32.mrf.mxu0
        %v1105 = vadd.f32 0.0, %v1104
        %1106 = vmatmul.bf16.gmra.mxu0 %v1079
        %v1107 = vpop.f32.mrf.mxu0
        %v1108 = vadd.f32 0.0, %v1107
        %v1109 = vpop.f32.mrf.mxu0
        %v1110 = vadd.f32 0.0, %v1109
        %1111 = vmatmul.bf16.gmra.mxu0 %v1082
        %v1112 = vpop.f32.mrf.mxu0
        %v1113 = vadd.f32 0.0, %v1112
        %v1114 = vpop.f32.mrf.mxu0
        %v1115 = vadd.f32 0.0, %v1114
        %1116 = vmatmul.bf16.gmra.mxu0 %v1085
        %v1117 = vpop.f32.mrf.mxu0
        %v1118 = vadd.f32 0.0, %v1117
        %v1119 = vpop.f32.mrf.mxu0
        %v1120 = vadd.f32 0.0, %v1119
        %1121 = vmatmul.bf16.gmra.mxu0 %v1088
        %v1122 = vpop.f32.mrf.mxu0
        %v1123 = vadd.f32 0.0, %v1122
        %v1124 = vpop.f32.mrf.mxu0
        %v1125 = vadd.f32 0.0, %v1124
        %1126 = vmatmul.bf16.gmra.mxu0 %v1091
        %v1127 = vpop.f32.mrf.mxu0
        %v1128 = vadd.f32 0.0, %v1127
        %v1129 = vpop.f32.mrf.mxu0
        %v1130 = vadd.f32 0.0, %v1129
        %1131 = vdwg.mxu0
        %v1132 = vpack.c.bf16 %v1105, %v1103
        %v1133 = vpack.c.bf16 %v1110, %v1108
        %v1134 = vpack.c.bf16 %v1115, %v1113
        %v1135 = vpack.c.bf16 %v1120, %v1118
        %v1136 = vpack.c.bf16 %v1125, %v1123
        %v1137 = vpack.c.bf16 %v1130, %v1128
        %s1138 = scalar_lea.vmem %s1, 144
        %v1139 = vld [vmem:[%s1138] sm:$0xff]
        %v1140 = vld [vmem:[%s1138 + $0x8] sm:$0xff]
        %v1141 = vld [vmem:[%s1138 + $0x10] sm:$0xff]
        %v1142 = vld [vmem:[%s1138 + $0x18] sm:$0xff]
        %v1143 = vld [vmem:[%s1138 + $0x20] sm:$0xff]
        %v1144 = vld [vmem:[%s1138 + $0x28] sm:$0xff]
        %v1145 = vld [vmem:[%s1138 + $0x30] sm:$0xff]
        %v1146 = vld [vmem:[%s1138 + $0x38] sm:$0xff]
        %v1147 = vld [vmem:[%s1138 + $0x40] sm:$0x11]
        %v1157 = vunpack.c.l.b16 %v1139
        %v1158 = vunpack.c.h.b16 %v1139
        %v1159 = vunpack.c.l.b16 %v1140
        %v1160 = vunpack.c.h.b16 %v1140
        %v1161 = vunpack.c.l.b16 %v1141
        %v1162 = vunpack.c.h.b16 %v1141
        %v1163 = vunpack.c.l.b16 %v1142
        %v1164 = vunpack.c.h.b16 %v1142
        %v1165 = vunpack.c.l.b16 %v1143
        %v1166 = vunpack.c.h.b16 %v1143
        %v1167 = vunpack.c.l.b16 %v1144
        %v1168 = vunpack.c.h.b16 %v1144
        %v1169 = vunpack.c.l.b16 %v1145
        %v1170 = vunpack.c.h.b16 %v1145
        %v1171 = vunpack.c.l.b16 %v1146
        %v1172 = vunpack.c.h.b16 %v1146
        %v1173 = vunpack.c.l.b16 %v1147
        %v1174 = vunpack.c.h.b16 %v1147
        %v1175 = vpack.c.b16 %v1159, %v1157
        %v1176 = vpack.c.b16 %v1160, %v1158
        %v1177 = vpack.c.b16 %v1163, %v1161
        %v1178 = vpack.c.b16 %v1164, %v1162
        %v1179 = vpack.c.b16 %v1167, %v1165
        %v1180 = vpack.c.b16 %v1168, %v1166
        %v1181 = vpack.c.b16 %v1171, %v1169
        %v1182 = vpack.c.b16 %v1172, %v1170
        %v1183 = vpack.c.b16 %v1173, %v1173
        %v1184 = vpack.c.b16 %v1174, %v1174
        %v1194 = vsel %vm617, %v1132, 0
        %v1197 = vsel %vm617, %v1133, 0
        %v1200 = vsel %vm617, %v1134, 0
        %v1203 = vsel %vm617, %v1135, 0
        %v1206 = vsel %vm617, %v1136, 0
        %v1209 = vsel %vm617, %v1137, 0
        %v1212 = vsel %vm636, %v1183, 0
        %v1215 = vsel %vm636, %v1184, 0
        %1217 = vmatpush.bf16.msra.mxu0 0
        %1218 = vmatpush.bf16.msra.mxu0 0
        %1219 = vmatpush.bf16.msra.mxu0 0
        %1220 = vmatpush.bf16.msra.mxu0 %v1212
        %1221 = vmatpush.bf16.msra.mxu0 %v1181
        %1222 = vmatpush.bf16.msra.mxu0 %v1179
        %1223 = vmatpush.bf16.msra.mxu0 %v1177
        %1224 = vmatpush.bf16.msra.mxu0 %v1175
        %1225 = vmatmul.bf16.gmra.mxu0 %v1194
        %v1226 = vpop.f32.mrf.mxu0
        %v1227 = vadd.f32 0.0, %v1226
        %v1228 = vpop.f32.mrf.mxu0
        %v1229 = vadd.f32 0.0, %v1228
        %1230 = vmatmul.bf16.gmra.mxu0 %v1197
        %v1231 = vpop.f32.mrf.mxu0
        %v1232 = vadd.f32 0.0, %v1231
        %v1233 = vpop.f32.mrf.mxu0
        %v1234 = vadd.f32 0.0, %v1233
        %1235 = vmatmul.bf16.gmra.mxu0 %v1200
        %v1236 = vpop.f32.mrf.mxu0
        %v1237 = vadd.f32 0.0, %v1236
        %v1238 = vpop.f32.mrf.mxu0
        %v1239 = vadd.f32 0.0, %v1238
        %1240 = vmatmul.bf16.gmra.mxu0 %v1203
        %v1241 = vpop.f32.mrf.mxu0
        %v1242 = vadd.f32 0.0, %v1241
        %v1243 = vpop.f32.mrf.mxu0
        %v1244 = vadd.f32 0.0, %v1243
        %1245 = vmatmul.bf16.gmra.mxu0 %v1206
        %v1246 = vpop.f32.mrf.mxu0
        %v1247 = vadd.f32 0.0, %v1246
        %v1248 = vpop.f32.mrf.mxu0
        %v1249 = vadd.f32 0.0, %v1248
        %1250 = vmatmul.bf16.gmra.mxu0 %v1209
        %v1251 = vpop.f32.mrf.mxu0
        %v1252 = vadd.f32 0.0, %v1251
        %v1253 = vpop.f32.mrf.mxu0
        %v1254 = vadd.f32 0.0, %v1253
        %1255 = vdwg.mxu0
        %1256 = vmatpush.bf16.msra.mxu0 0
        %1257 = vmatpush.bf16.msra.mxu0 0
        %1258 = vmatpush.bf16.msra.mxu0 0
        %1259 = vmatpush.bf16.msra.mxu0 %v1215
        %1260 = vmatpush.bf16.msra.mxu0 %v1182
        %1261 = vmatpush.bf16.msra.mxu0 %v1180
        %1262 = vmatpush.bf16.msra.mxu0 %v1178
        %1263 = vmatpush.bf16.msra.mxu0 %v1176
        %1264 = vmatmul.bf16.gmra.mxu0 %v1194
        %v1265 = vpop.f32.mrf.mxu0
        %v1266 = vadd.f32 0.0, %v1265
        %v1267 = vpop.f32.mrf.mxu0
        %v1268 = vadd.f32 0.0, %v1267
        %1269 = vmatmul.bf16.gmra.mxu0 %v1197
        %v1270 = vpop.f32.mrf.mxu0
        %v1271 = vadd.f32 0.0, %v1270
        %v1272 = vpop.f32.mrf.mxu0
        %v1273 = vadd.f32 0.0, %v1272
        %1274 = vmatmul.bf16.gmra.mxu0 %v1200
        %v1275 = vpop.f32.mrf.mxu0
        %v1276 = vadd.f32 0.0, %v1275
        %v1277 = vpop.f32.mrf.mxu0
        %v1278 = vadd.f32 0.0, %v1277
        %1279 = vmatmul.bf16.gmra.mxu0 %v1203
        %v1280 = vpop.f32.mrf.mxu0
        %v1281 = vadd.f32 0.0, %v1280
        %v1282 = vpop.f32.mrf.mxu0
        %v1283 = vadd.f32 0.0, %v1282
        %1284 = vmatmul.bf16.gmra.mxu0 %v1206
        %v1285 = vpop.f32.mrf.mxu0
        %v1286 = vadd.f32 0.0, %v1285
        %v1287 = vpop.f32.mrf.mxu0
        %v1288 = vadd.f32 0.0, %v1287
        %1289 = vmatmul.bf16.gmra.mxu0 %v1209
        %v1290 = vpop.f32.mrf.mxu0
        %v1291 = vadd.f32 0.0, %v1290
        %v1292 = vpop.f32.mrf.mxu0
        %v1293 = vadd.f32 0.0, %v1292
        %1294 = vdwg.mxu0
        %v1295 = vadd.f32 %v1008, %v1227
        %v1296 = vadd.f32 %v1009, %v1266
        %v1297 = vadd.f32 %v1010, %v1229
        %v1298 = vadd.f32 %v1011, %v1268
        %v1299 = vadd.f32 %v1012, %v1232
        %v1300 = vadd.f32 %v1013, %v1271
        %v1301 = vadd.f32 %v1014, %v1234
        %v1302 = vadd.f32 %v1015, %v1273
        %v1303 = vadd.f32 %v1016, %v1237
        %v1304 = vadd.f32 %v1017, %v1276
        %v1305 = vadd.f32 %v1018, %v1239
        %v1306 = vadd.f32 %v1019, %v1278
        %v1307 = vadd.f32 %v1020, %v1242
        %v1308 = vadd.f32 %v1021, %v1281
        %v1309 = vadd.f32 %v1022, %v1244
        %v1310 = vadd.f32 %v1023, %v1283
        %v1311 = vadd.f32 %v1024, %v1247
        %v1312 = vadd.f32 %v1025, %v1286
        %v1313 = vadd.f32 %v1026, %v1249
        %v1314 = vadd.f32 %v1027, %v1288
        %v1315 = vadd.f32 %v1028, %v1252
        %v1316 = vadd.f32 %v1029, %v1291
        %v1317 = vadd.f32 %v1030, %v1254
        %v1318 = vadd.f32 %v1031, %v1293
        %s1319 = scalar_lea.vmem %s2, 144
        %v1320 = vld [vmem:[%s1319] sm:$0xf]
        %v1321 = vld [vmem:[%s1319 + $0x4] sm:$0xf]
        %v1322 = vld [vmem:[%s1319 + $0x8] sm:$0xf]
        %v1323 = vld [vmem:[%s1319 + $0xc] sm:$0xf]
        %v1324 = vld [vmem:[%s1319 + $0x10] sm:$0xf]
        %v1325 = vld [vmem:[%s1319 + $0x14] sm:$0xf]
        %v1326 = vld [vmem:[%s1319 + $0x18] sm:$0xf]
        %v1327 = vld [vmem:[%s1319 + $0x1c] sm:$0xf]
        %v1328 = vld [vmem:[%s1319 + $0x20] sm:$0xf]
        %v1329 = vld [vmem:[%s1319 + $0x24] sm:$0xf]
        %v1330 = vld [vmem:[%s1319 + $0x28] sm:$0xf]
        %v1331 = vld [vmem:[%s1319 + $0x2c] sm:$0xf]
        %v1344 = vunpack.c.l.b16 %v1320
        %v1345 = vunpack.c.l.b16 %v1321
        %v1346 = vunpack.c.l.b16 %v1322
        %v1347 = vunpack.c.l.b16 %v1323
        %v1348 = vunpack.c.l.b16 %v1324
        %v1349 = vunpack.c.l.b16 %v1325
        %v1350 = vunpack.c.l.b16 %v1326
        %v1351 = vunpack.c.l.b16 %v1327
        %v1352 = vunpack.c.l.b16 %v1328
        %v1353 = vunpack.c.l.b16 %v1329
        %v1354 = vunpack.c.l.b16 %v1330
        %v1355 = vunpack.c.l.b16 %v1331
        %v1356 = vpack.c.b16 %v1345, %v1344
        %v1357 = vpack.c.b16 %v1347, %v1346
        %v1358 = vpack.c.b16 %v1349, %v1348
        %v1359 = vpack.c.b16 %v1351, %v1350
        %v1360 = vpack.c.b16 %v1353, %v1352
        %v1361 = vpack.c.b16 %v1355, %v1354
        %v1363 = vsel %vm499, %v1356, 0
        %v1366 = vsel %vm499, %v1357, 0
        %v1369 = vsel %vm499, %v1358, 0
        %v1372 = vsel %vm499, %v1359, 0
        %v1375 = vsel %vm499, %v1360, 0
        %v1378 = vsel %vm499, %v1361, 0
        %1380 = vmatpush.bf16.msra.mxu0 0
        %1381 = vmatpush.bf16.msra.mxu0 0
        %1382 = vmatpush.bf16.msra.mxu0 %v432
        %1383 = vmatpush.bf16.msra.mxu0 %v431
        %1384 = vmatpush.bf16.msra.mxu0 %v430
        %1385 = vmatpush.bf16.msra.mxu0 %v429
        %1386 = vmatpush.bf16.msra.mxu0 %v428
        %1387 = vmatpush.bf16.msra.mxu0 %v427
        %1388 = vmatmul.bf16.gmra.mxu0 %v1363
        %v1389 = vpop.f32.mrf.mxu0
        %v1390 = vadd.f32 0.0, %v1389
        %v1391 = vpop.f32.mrf.mxu0
        %v1392 = vadd.f32 0.0, %v1391
        %1393 = vmatmul.bf16.gmra.mxu0 %v1366
        %v1394 = vpop.f32.mrf.mxu0
        %v1395 = vadd.f32 0.0, %v1394
        %v1396 = vpop.f32.mrf.mxu0
        %v1397 = vadd.f32 0.0, %v1396
        %1398 = vmatmul.bf16.gmra.mxu0 %v1369
        %v1399 = vpop.f32.mrf.mxu0
        %v1400 = vadd.f32 0.0, %v1399
        %v1401 = vpop.f32.mrf.mxu0
        %v1402 = vadd.f32 0.0, %v1401
        %1403 = vmatmul.bf16.gmra.mxu0 %v1372
        %v1404 = vpop.f32.mrf.mxu0
        %v1405 = vadd.f32 0.0, %v1404
        %v1406 = vpop.f32.mrf.mxu0
        %v1407 = vadd.f32 0.0, %v1406
        %1408 = vmatmul.bf16.gmra.mxu0 %v1375
        %v1409 = vpop.f32.mrf.mxu0
        %v1410 = vadd.f32 0.0, %v1409
        %v1411 = vpop.f32.mrf.mxu0
        %v1412 = vadd.f32 0.0, %v1411
        %1413 = vmatmul.bf16.gmra.mxu0 %v1378
        %v1414 = vpop.f32.mrf.mxu0
        %v1415 = vadd.f32 0.0, %v1414
        %v1416 = vpop.f32.mrf.mxu0
        %v1417 = vadd.f32 0.0, %v1416
        %1418 = vdwg.mxu0
        %v1419 = vpack.c.bf16 %v1392, %v1390
        %v1420 = vpack.c.bf16 %v1397, %v1395
        %v1421 = vpack.c.bf16 %v1402, %v1400
        %v1422 = vpack.c.bf16 %v1407, %v1405
        %v1423 = vpack.c.bf16 %v1412, %v1410
        %v1424 = vpack.c.bf16 %v1417, %v1415
        %s1425 = scalar_lea.vmem %s1, 216
        %v1426 = vld [vmem:[%s1425] sm:$0xff]
        %v1427 = vld [vmem:[%s1425 + $0x8] sm:$0xff]
        %v1428 = vld [vmem:[%s1425 + $0x10] sm:$0xff]
        %v1429 = vld [vmem:[%s1425 + $0x18] sm:$0xff]
        %v1430 = vld [vmem:[%s1425 + $0x20] sm:$0xff]
        %v1431 = vld [vmem:[%s1425 + $0x28] sm:$0xff]
        %v1432 = vld [vmem:[%s1425 + $0x30] sm:$0xff]
        %v1433 = vld [vmem:[%s1425 + $0x38] sm:$0xff]
        %v1434 = vld [vmem:[%s1425 + $0x40] sm:$0x11]
        %v1444 = vunpack.c.l.b16 %v1426
        %v1445 = vunpack.c.h.b16 %v1426
        %v1446 = vunpack.c.l.b16 %v1427
        %v1447 = vunpack.c.h.b16 %v1427
        %v1448 = vunpack.c.l.b16 %v1428
        %v1449 = vunpack.c.h.b16 %v1428
        %v1450 = vunpack.c.l.b16 %v1429
        %v1451 = vunpack.c.h.b16 %v1429
        %v1452 = vunpack.c.l.b16 %v1430
        %v1453 = vunpack.c.h.b16 %v1430
        %v1454 = vunpack.c.l.b16 %v1431
        %v1455 = vunpack.c.h.b16 %v1431
        %v1456 = vunpack.c.l.b16 %v1432
        %v1457 = vunpack.c.h.b16 %v1432
        %v1458 = vunpack.c.l.b16 %v1433
        %v1459 = vunpack.c.h.b16 %v1433
        %v1460 = vunpack.c.l.b16 %v1434
        %v1461 = vunpack.c.h.b16 %v1434
        %v1462 = vpack.c.b16 %v1446, %v1444
        %v1463 = vpack.c.b16 %v1447, %v1445
        %v1464 = vpack.c.b16 %v1450, %v1448
        %v1465 = vpack.c.b16 %v1451, %v1449
        %v1466 = vpack.c.b16 %v1454, %v1452
        %v1467 = vpack.c.b16 %v1455, %v1453
        %v1468 = vpack.c.b16 %v1458, %v1456
        %v1469 = vpack.c.b16 %v1459, %v1457
        %v1470 = vpack.c.b16 %v1460, %v1460
        %v1471 = vpack.c.b16 %v1461, %v1461
        %v1481 = vsel %vm617, %v1419, 0
        %v1484 = vsel %vm617, %v1420, 0
        %v1487 = vsel %vm617, %v1421, 0
        %v1490 = vsel %vm617, %v1422, 0
        %v1493 = vsel %vm617, %v1423, 0
        %v1496 = vsel %vm617, %v1424, 0
        %v1499 = vsel %vm636, %v1470, 0
        %v1502 = vsel %vm636, %v1471, 0
        %1504 = vmatpush.bf16.msra.mxu0 0
        %1505 = vmatpush.bf16.msra.mxu0 0
        %1506 = vmatpush.bf16.msra.mxu0 0
        %1507 = vmatpush.bf16.msra.mxu0 %v1499
        %1508 = vmatpush.bf16.msra.mxu0 %v1468
        %1509 = vmatpush.bf16.msra.mxu0 %v1466
        %1510 = vmatpush.bf16.msra.mxu0 %v1464
        %1511 = vmatpush.bf16.msra.mxu0 %v1462
        %1512 = vmatmul.bf16.gmra.mxu0 %v1481
        %v1513 = vpop.f32.mrf.mxu0
        %v1514 = vadd.f32 0.0, %v1513
        %v1515 = vpop.f32.mrf.mxu0
        %v1516 = vadd.f32 0.0, %v1515
        %1517 = vmatmul.bf16.gmra.mxu0 %v1484
        %v1518 = vpop.f32.mrf.mxu0
        %v1519 = vadd.f32 0.0, %v1518
        %v1520 = vpop.f32.mrf.mxu0
        %v1521 = vadd.f32 0.0, %v1520
        %1522 = vmatmul.bf16.gmra.mxu0 %v1487
        %v1523 = vpop.f32.mrf.mxu0
        %v1524 = vadd.f32 0.0, %v1523
        %v1525 = vpop.f32.mrf.mxu0
        %v1526 = vadd.f32 0.0, %v1525
        %1527 = vmatmul.bf16.gmra.mxu0 %v1490
        %v1528 = vpop.f32.mrf.mxu0
        %v1529 = vadd.f32 0.0, %v1528
        %v1530 = vpop.f32.mrf.mxu0
        %v1531 = vadd.f32 0.0, %v1530
        %1532 = vmatmul.bf16.gmra.mxu0 %v1493
        %v1533 = vpop.f32.mrf.mxu0
        %v1534 = vadd.f32 0.0, %v1533
        %v1535 = vpop.f32.mrf.mxu0
        %v1536 = vadd.f32 0.0, %v1535
        %1537 = vmatmul.bf16.gmra.mxu0 %v1496
        %v1538 = vpop.f32.mrf.mxu0
        %v1539 = vadd.f32 0.0, %v1538
        %v1540 = vpop.f32.mrf.mxu0
        %v1541 = vadd.f32 0.0, %v1540
        %1542 = vdwg.mxu0
        %1543 = vmatpush.bf16.msra.mxu0 0
        %1544 = vmatpush.bf16.msra.mxu0 0
        %1545 = vmatpush.bf16.msra.mxu0 0
        %1546 = vmatpush.bf16.msra.mxu0 %v1502
        %1547 = vmatpush.bf16.msra.mxu0 %v1469
        %1548 = vmatpush.bf16.msra.mxu0 %v1467
        %1549 = vmatpush.bf16.msra.mxu0 %v1465
        %1550 = vmatpush.bf16.msra.mxu0 %v1463
        %1551 = vmatmul.bf16.gmra.mxu0 %v1481
        %v1552 = vpop.f32.mrf.mxu0
        %v1553 = vadd.f32 0.0, %v1552
        %v1554 = vpop.f32.mrf.mxu0
        %v1555 = vadd.f32 0.0, %v1554
        %1556 = vmatmul.bf16.gmra.mxu0 %v1484
        %v1557 = vpop.f32.mrf.mxu0
        %v1558 = vadd.f32 0.0, %v1557
        %v1559 = vpop.f32.mrf.mxu0
        %v1560 = vadd.f32 0.0, %v1559
        %1561 = vmatmul.bf16.gmra.mxu0 %v1487
        %v1562 = vpop.f32.mrf.mxu0
        %v1563 = vadd.f32 0.0, %v1562
        %v1564 = vpop.f32.mrf.mxu0
        %v1565 = vadd.f32 0.0, %v1564
        %1566 = vmatmul.bf16.gmra.mxu0 %v1490
        %v1567 = vpop.f32.mrf.mxu0
        %v1568 = vadd.f32 0.0, %v1567
        %v1569 = vpop.f32.mrf.mxu0
        %v1570 = vadd.f32 0.0, %v1569
        %1571 = vmatmul.bf16.gmra.mxu0 %v1493
        %v1572 = vpop.f32.mrf.mxu0
        %v1573 = vadd.f32 0.0, %v1572
        %v1574 = vpop.f32.mrf.mxu0
        %v1575 = vadd.f32 0.0, %v1574
        %1576 = vmatmul.bf16.gmra.mxu0 %v1496
        %v1577 = vpop.f32.mrf.mxu0
        %v1578 = vadd.f32 0.0, %v1577
        %v1579 = vpop.f32.mrf.mxu0
        %v1580 = vadd.f32 0.0, %v1579
        %1581 = vdwg.mxu0
        %v1582 = vadd.f32 %v1295, %v1514
        %v1583 = vadd.f32 %v1296, %v1553
        %v1584 = vadd.f32 %v1297, %v1516
        %v1585 = vadd.f32 %v1298, %v1555
        %v1586 = vadd.f32 %v1299, %v1519
        %v1587 = vadd.f32 %v1300, %v1558
        %v1588 = vadd.f32 %v1301, %v1521
        %v1589 = vadd.f32 %v1302, %v1560
        %v1590 = vadd.f32 %v1303, %v1524
        %v1591 = vadd.f32 %v1304, %v1563
        %v1592 = vadd.f32 %v1305, %v1526
        %v1593 = vadd.f32 %v1306, %v1565
        %v1594 = vadd.f32 %v1307, %v1529
        %v1595 = vadd.f32 %v1308, %v1568
        %v1596 = vadd.f32 %v1309, %v1531
        %v1597 = vadd.f32 %v1310, %v1570
        %v1598 = vadd.f32 %v1311, %v1534
        %v1599 = vadd.f32 %v1312, %v1573
        %v1600 = vadd.f32 %v1313, %v1536
        %v1601 = vadd.f32 %v1314, %v1575
        %v1602 = vadd.f32 %v1315, %v1539
        %v1603 = vadd.f32 %v1316, %v1578
        %v1604 = vadd.f32 %v1317, %v1541
        %v1605 = vadd.f32 %v1318, %v1580
        %s1606 = scalar_lea.vmem %s2, 192
        %v1607 = vld [vmem:[%s1606] sm:$0xf]
        %v1608 = vld [vmem:[%s1606 + $0x4] sm:$0xf]
        %v1609 = vld [vmem:[%s1606 + $0x8] sm:$0xf]
        %v1610 = vld [vmem:[%s1606 + $0xc] sm:$0xf]
        %v1611 = vld [vmem:[%s1606 + $0x10] sm:$0xf]
        %v1612 = vld [vmem:[%s1606 + $0x14] sm:$0xf]
        %v1613 = vld [vmem:[%s1606 + $0x18] sm:$0xf]
        %v1614 = vld [vmem:[%s1606 + $0x1c] sm:$0xf]
        %v1615 = vld [vmem:[%s1606 + $0x20] sm:$0xf]
        %v1616 = vld [vmem:[%s1606 + $0x24] sm:$0xf]
        %v1617 = vld [vmem:[%s1606 + $0x28] sm:$0xf]
        %v1618 = vld [vmem:[%s1606 + $0x2c] sm:$0xf]
        %v1631 = vunpack.c.l.b16 %v1607
        %v1632 = vunpack.c.l.b16 %v1608
        %v1633 = vunpack.c.l.b16 %v1609
        %v1634 = vunpack.c.l.b16 %v1610
        %v1635 = vunpack.c.l.b16 %v1611
        %v1636 = vunpack.c.l.b16 %v1612
        %v1637 = vunpack.c.l.b16 %v1613
        %v1638 = vunpack.c.l.b16 %v1614
        %v1639 = vunpack.c.l.b16 %v1615
        %v1640 = vunpack.c.l.b16 %v1616
        %v1641 = vunpack.c.l.b16 %v1617
        %v1642 = vunpack.c.l.b16 %v1618
        %v1643 = vpack.c.b16 %v1632, %v1631
        %v1644 = vpack.c.b16 %v1634, %v1633
        %v1645 = vpack.c.b16 %v1636, %v1635
        %v1646 = vpack.c.b16 %v1638, %v1637
        %v1647 = vpack.c.b16 %v1640, %v1639
        %v1648 = vpack.c.b16 %v1642, %v1641
        %v1650 = vsel %vm499, %v1643, 0
        %v1653 = vsel %vm499, %v1644, 0
        %v1656 = vsel %vm499, %v1645, 0
        %v1659 = vsel %vm499, %v1646, 0
        %v1662 = vsel %vm499, %v1647, 0
        %v1665 = vsel %vm499, %v1648, 0
        %1667 = vmatpush.bf16.msra.mxu0 0
        %1668 = vmatpush.bf16.msra.mxu0 0
        %1669 = vmatpush.bf16.msra.mxu0 %v432
        %1670 = vmatpush.bf16.msra.mxu0 %v431
        %1671 = vmatpush.bf16.msra.mxu0 %v430
        %1672 = vmatpush.bf16.msra.mxu0 %v429
        %1673 = vmatpush.bf16.msra.mxu0 %v428
        %1674 = vmatpush.bf16.msra.mxu0 %v427
        %1675 = vmatmul.bf16.gmra.mxu0 %v1650
        %v1676 = vpop.f32.mrf.mxu0
        %v1677 = vadd.f32 0.0, %v1676
        %v1678 = vpop.f32.mrf.mxu0
        %v1679 = vadd.f32 0.0, %v1678
        %1680 = vmatmul.bf16.gmra.mxu0 %v1653
        %v1681 = vpop.f32.mrf.mxu0
        %v1682 = vadd.f32 0.0, %v1681
        %v1683 = vpop.f32.mrf.mxu0
        %v1684 = vadd.f32 0.0, %v1683
        %1685 = vmatmul.bf16.gmra.mxu0 %v1656
        %v1686 = vpop.f32.mrf.mxu0
        %v1687 = vadd.f32 0.0, %v1686
        %v1688 = vpop.f32.mrf.mxu0
        %v1689 = vadd.f32 0.0, %v1688
        %1690 = vmatmul.bf16.gmra.mxu0 %v1659
        %v1691 = vpop.f32.mrf.mxu0
        %v1692 = vadd.f32 0.0, %v1691
        %v1693 = vpop.f32.mrf.mxu0
        %v1694 = vadd.f32 0.0, %v1693
        %1695 = vmatmul.bf16.gmra.mxu0 %v1662
        %v1696 = vpop.f32.mrf.mxu0
        %v1697 = vadd.f32 0.0, %v1696
        %v1698 = vpop.f32.mrf.mxu0
        %v1699 = vadd.f32 0.0, %v1698
        %1700 = vmatmul.bf16.gmra.mxu0 %v1665
        %v1701 = vpop.f32.mrf.mxu0
        %v1702 = vadd.f32 0.0, %v1701
        %v1703 = vpop.f32.mrf.mxu0
        %v1704 = vadd.f32 0.0, %v1703
        %1705 = vdwg.mxu0
        %v1706 = vpack.c.bf16 %v1679, %v1677
        %v1707 = vpack.c.bf16 %v1684, %v1682
        %v1708 = vpack.c.bf16 %v1689, %v1687
        %v1709 = vpack.c.bf16 %v1694, %v1692
        %v1710 = vpack.c.bf16 %v1699, %v1697
        %v1711 = vpack.c.bf16 %v1704, %v1702
        %s1712 = scalar_lea.vmem %s1, 288
        %v1713 = vld [vmem:[%s1712] sm:$0xff]
        %v1714 = vld [vmem:[%s1712 + $0x8] sm:$0xff]
        %v1715 = vld [vmem:[%s1712 + $0x10] sm:$0xff]
        %v1716 = vld [vmem:[%s1712 + $0x18] sm:$0xff]
        %v1717 = vld [vmem:[%s1712 + $0x20] sm:$0xff]
        %v1718 = vld [vmem:[%s1712 + $0x28] sm:$0xff]
        %v1719 = vld [vmem:[%s1712 + $0x30] sm:$0xff]
        %v1720 = vld [vmem:[%s1712 + $0x38] sm:$0xff]
        %v1721 = vld [vmem:[%s1712 + $0x40] sm:$0x11]
        %v1731 = vunpack.c.l.b16 %v1713
        %v1732 = vunpack.c.h.b16 %v1713
        %v1733 = vunpack.c.l.b16 %v1714
        %v1734 = vunpack.c.h.b16 %v1714
        %v1735 = vunpack.c.l.b16 %v1715
        %v1736 = vunpack.c.h.b16 %v1715
        %v1737 = vunpack.c.l.b16 %v1716
        %v1738 = vunpack.c.h.b16 %v1716
        %v1739 = vunpack.c.l.b16 %v1717
        %v1740 = vunpack.c.h.b16 %v1717
        %v1741 = vunpack.c.l.b16 %v1718
        %v1742 = vunpack.c.h.b16 %v1718
        %v1743 = vunpack.c.l.b16 %v1719
        %v1744 = vunpack.c.h.b16 %v1719
        %v1745 = vunpack.c.l.b16 %v1720
        %v1746 = vunpack.c.h.b16 %v1720
        %v1747 = vunpack.c.l.b16 %v1721
        %v1748 = vunpack.c.h.b16 %v1721
        %v1749 = vpack.c.b16 %v1733, %v1731
        %v1750 = vpack.c.b16 %v1734, %v1732
        %v1751 = vpack.c.b16 %v1737, %v1735
        %v1752 = vpack.c.b16 %v1738, %v1736
        %v1753 = vpack.c.b16 %v1741, %v1739
        %v1754 = vpack.c.b16 %v1742, %v1740
        %v1755 = vpack.c.b16 %v1745, %v1743
        %v1756 = vpack.c.b16 %v1746, %v1744
        %v1757 = vpack.c.b16 %v1747, %v1747
        %v1758 = vpack.c.b16 %v1748, %v1748
        %v1768 = vsel %vm617, %v1706, 0
        %v1771 = vsel %vm617, %v1707, 0
        %v1774 = vsel %vm617, %v1708, 0
        %v1777 = vsel %vm617, %v1709, 0
        %v1780 = vsel %vm617, %v1710, 0
        %v1783 = vsel %vm617, %v1711, 0
        %v1786 = vsel %vm636, %v1757, 0
        %v1789 = vsel %vm636, %v1758, 0
        %1791 = vmatpush.bf16.msra.mxu0 0
        %1792 = vmatpush.bf16.msra.mxu0 0
        %1793 = vmatpush.bf16.msra.mxu0 0
        %1794 = vmatpush.bf16.msra.mxu0 %v1786
        %1795 = vmatpush.bf16.msra.mxu0 %v1755
        %1796 = vmatpush.bf16.msra.mxu0 %v1753
        %1797 = vmatpush.bf16.msra.mxu0 %v1751
        %1798 = vmatpush.bf16.msra.mxu0 %v1749
        %1799 = vmatmul.bf16.gmra.mxu0 %v1768
        %v1800 = vpop.f32.mrf.mxu0
        %v1801 = vadd.f32 0.0, %v1800
        %v1802 = vpop.f32.mrf.mxu0
        %v1803 = vadd.f32 0.0, %v1802
        %1804 = vmatmul.bf16.gmra.mxu0 %v1771
        %v1805 = vpop.f32.mrf.mxu0
        %v1806 = vadd.f32 0.0, %v1805
        %v1807 = vpop.f32.mrf.mxu0
        %v1808 = vadd.f32 0.0, %v1807
        %1809 = vmatmul.bf16.gmra.mxu0 %v1774
        %v1810 = vpop.f32.mrf.mxu0
        %v1811 = vadd.f32 0.0, %v1810
        %v1812 = vpop.f32.mrf.mxu0
        %v1813 = vadd.f32 0.0, %v1812
        %1814 = vmatmul.bf16.gmra.mxu0 %v1777
        %v1815 = vpop.f32.mrf.mxu0
        %v1816 = vadd.f32 0.0, %v1815
        %v1817 = vpop.f32.mrf.mxu0
        %v1818 = vadd.f32 0.0, %v1817
        %1819 = vmatmul.bf16.gmra.mxu0 %v1780
        %v1820 = vpop.f32.mrf.mxu0
        %v1821 = vadd.f32 0.0, %v1820
        %v1822 = vpop.f32.mrf.mxu0
        %v1823 = vadd.f32 0.0, %v1822
        %1824 = vmatmul.bf16.gmra.mxu0 %v1783
        %v1825 = vpop.f32.mrf.mxu0
        %v1826 = vadd.f32 0.0, %v1825
        %v1827 = vpop.f32.mrf.mxu0
        %v1828 = vadd.f32 0.0, %v1827
        %1829 = vdwg.mxu0
        %1830 = vmatpush.bf16.msra.mxu0 0
        %1831 = vmatpush.bf16.msra.mxu0 0
        %1832 = vmatpush.bf16.msra.mxu0 0
        %1833 = vmatpush.bf16.msra.mxu0 %v1789
        %1834 = vmatpush.bf16.msra.mxu0 %v1756
        %1835 = vmatpush.bf16.msra.mxu0 %v1754
        %1836 = vmatpush.bf16.msra.mxu0 %v1752
        %1837 = vmatpush.bf16.msra.mxu0 %v1750
        %1838 = vmatmul.bf16.gmra.mxu0 %v1768
        %v1839 = vpop.f32.mrf.mxu0
        %v1840 = vadd.f32 0.0, %v1839
        %v1841 = vpop.f32.mrf.mxu0
        %v1842 = vadd.f32 0.0, %v1841
        %1843 = vmatmul.bf16.gmra.mxu0 %v1771
        %v1844 = vpop.f32.mrf.mxu0
        %v1845 = vadd.f32 0.0, %v1844
        %v1846 = vpop.f32.mrf.mxu0
        %v1847 = vadd.f32 0.0, %v1846
        %1848 = vmatmul.bf16.gmra.mxu0 %v1774
        %v1849 = vpop.f32.mrf.mxu0
        %v1850 = vadd.f32 0.0, %v1849
        %v1851 = vpop.f32.mrf.mxu0
        %v1852 = vadd.f32 0.0, %v1851
        %1853 = vmatmul.bf16.gmra.mxu0 %v1777
        %v1854 = vpop.f32.mrf.mxu0
        %v1855 = vadd.f32 0.0, %v1854
        %v1856 = vpop.f32.mrf.mxu0
        %v1857 = vadd.f32 0.0, %v1856
        %1858 = vmatmul.bf16.gmra.mxu0 %v1780
        %v1859 = vpop.f32.mrf.mxu0
        %v1860 = vadd.f32 0.0, %v1859
        %v1861 = vpop.f32.mrf.mxu0
        %v1862 = vadd.f32 0.0, %v1861
        %1863 = vmatmul.bf16.gmra.mxu0 %v1783
        %v1864 = vpop.f32.mrf.mxu0
        %v1865 = vadd.f32 0.0, %v1864
        %v1866 = vpop.f32.mrf.mxu0
        %v1867 = vadd.f32 0.0, %v1866
        %1868 = vdwg.mxu0
        %v1869 = vadd.f32 %v1582, %v1801
        %v1870 = vadd.f32 %v1583, %v1840
        %v1871 = vadd.f32 %v1584, %v1803
        %v1872 = vadd.f32 %v1585, %v1842
        %v1873 = vadd.f32 %v1586, %v1806
        %v1874 = vadd.f32 %v1587, %v1845
        %v1875 = vadd.f32 %v1588, %v1808
        %v1876 = vadd.f32 %v1589, %v1847
        %v1877 = vadd.f32 %v1590, %v1811
        %v1878 = vadd.f32 %v1591, %v1850
        %v1879 = vadd.f32 %v1592, %v1813
        %v1880 = vadd.f32 %v1593, %v1852
        %v1881 = vadd.f32 %v1594, %v1816
        %v1882 = vadd.f32 %v1595, %v1855
        %v1883 = vadd.f32 %v1596, %v1818
        %v1884 = vadd.f32 %v1597, %v1857
        %v1885 = vadd.f32 %v1598, %v1821
        %v1886 = vadd.f32 %v1599, %v1860
        %v1887 = vadd.f32 %v1600, %v1823
        %v1888 = vadd.f32 %v1601, %v1862
        %v1889 = vadd.f32 %v1602, %v1826
        %v1890 = vadd.f32 %v1603, %v1865
        %v1891 = vadd.f32 %v1604, %v1828
        %v1892 = vadd.f32 %v1605, %v1867
        %s1893 = scalar_lea.vmem %s2, 240
        %v1894 = vld [vmem:[%s1893] sm:$0xf]
        %v1895 = vld [vmem:[%s1893 + $0x4] sm:$0xf]
        %v1896 = vld [vmem:[%s1893 + $0x8] sm:$0xf]
        %v1897 = vld [vmem:[%s1893 + $0xc] sm:$0xf]
        %v1898 = vld [vmem:[%s1893 + $0x10] sm:$0xf]
        %v1899 = vld [vmem:[%s1893 + $0x14] sm:$0xf]
        %v1900 = vld [vmem:[%s1893 + $0x18] sm:$0xf]
        %v1901 = vld [vmem:[%s1893 + $0x1c] sm:$0xf]
        %v1902 = vld [vmem:[%s1893 + $0x20] sm:$0xf]
        %v1903 = vld [vmem:[%s1893 + $0x24] sm:$0xf]
        %v1904 = vld [vmem:[%s1893 + $0x28] sm:$0xf]
        %v1905 = vld [vmem:[%s1893 + $0x2c] sm:$0xf]
        %v1918 = vunpack.c.l.b16 %v1894
        %v1919 = vunpack.c.l.b16 %v1895
        %v1920 = vunpack.c.l.b16 %v1896
        %v1921 = vunpack.c.l.b16 %v1897
        %v1922 = vunpack.c.l.b16 %v1898
        %v1923 = vunpack.c.l.b16 %v1899
        %v1924 = vunpack.c.l.b16 %v1900
        %v1925 = vunpack.c.l.b16 %v1901
        %v1926 = vunpack.c.l.b16 %v1902
        %v1927 = vunpack.c.l.b16 %v1903
        %v1928 = vunpack.c.l.b16 %v1904
        %v1929 = vunpack.c.l.b16 %v1905
        %v1930 = vpack.c.b16 %v1919, %v1918
        %v1931 = vpack.c.b16 %v1921, %v1920
        %v1932 = vpack.c.b16 %v1923, %v1922
        %v1933 = vpack.c.b16 %v1925, %v1924
        %v1934 = vpack.c.b16 %v1927, %v1926
        %v1935 = vpack.c.b16 %v1929, %v1928
        %v1937 = vsel %vm499, %v1930, 0
        %v1940 = vsel %vm499, %v1931, 0
        %v1943 = vsel %vm499, %v1932, 0
        %v1946 = vsel %vm499, %v1933, 0
        %v1949 = vsel %vm499, %v1934, 0
        %v1952 = vsel %vm499, %v1935, 0
        %1954 = vmatpush.bf16.msra.mxu0 0
        %1955 = vmatpush.bf16.msra.mxu0 0
        %1956 = vmatpush.bf16.msra.mxu0 %v432
        %1957 = vmatpush.bf16.msra.mxu0 %v431
        %1958 = vmatpush.bf16.msra.mxu0 %v430
        %1959 = vmatpush.bf16.msra.mxu0 %v429
        %1960 = vmatpush.bf16.msra.mxu0 %v428
        %1961 = vmatpush.bf16.msra.mxu0 %v427
        %1962 = vmatmul.bf16.gmra.mxu0 %v1937
        %v1963 = vpop.f32.mrf.mxu0
        %v1964 = vadd.f32 0.0, %v1963
        %v1965 = vpop.f32.mrf.mxu0
        %v1966 = vadd.f32 0.0, %v1965
        %1967 = vmatmul.bf16.gmra.mxu0 %v1940
        %v1968 = vpop.f32.mrf.mxu0
        %v1969 = vadd.f32 0.0, %v1968
        %v1970 = vpop.f32.mrf.mxu0
        %v1971 = vadd.f32 0.0, %v1970
        %1972 = vmatmul.bf16.gmra.mxu0 %v1943
        %v1973 = vpop.f32.mrf.mxu0
        %v1974 = vadd.f32 0.0, %v1973
        %v1975 = vpop.f32.mrf.mxu0
        %v1976 = vadd.f32 0.0, %v1975
        %1977 = vmatmul.bf16.gmra.mxu0 %v1946
        %v1978 = vpop.f32.mrf.mxu0
        %v1979 = vadd.f32 0.0, %v1978
        %v1980 = vpop.f32.mrf.mxu0
        %v1981 = vadd.f32 0.0, %v1980
        %1982 = vmatmul.bf16.gmra.mxu0 %v1949
        %v1983 = vpop.f32.mrf.mxu0
        %v1984 = vadd.f32 0.0, %v1983
        %v1985 = vpop.f32.mrf.mxu0
        %v1986 = vadd.f32 0.0, %v1985
        %1987 = vmatmul.bf16.gmra.mxu0 %v1952
        %v1988 = vpop.f32.mrf.mxu0
        %v1989 = vadd.f32 0.0, %v1988
        %v1990 = vpop.f32.mrf.mxu0
        %v1991 = vadd.f32 0.0, %v1990
        %1992 = vdwg.mxu0
        %v1993 = vpack.c.bf16 %v1966, %v1964
        %v1994 = vpack.c.bf16 %v1971, %v1969
        %v1995 = vpack.c.bf16 %v1976, %v1974
        %v1996 = vpack.c.bf16 %v1981, %v1979
        %v1997 = vpack.c.bf16 %v1986, %v1984
        %v1998 = vpack.c.bf16 %v1991, %v1989
        %s1999 = scalar_lea.vmem %s1, 360
        %v2000 = vld [vmem:[%s1999] sm:$0xff]
        %v2001 = vld [vmem:[%s1999 + $0x8] sm:$0xff]
        %v2002 = vld [vmem:[%s1999 + $0x10] sm:$0xff]
        %v2003 = vld [vmem:[%s1999 + $0x18] sm:$0xff]
        %v2004 = vld [vmem:[%s1999 + $0x20] sm:$0xff]
        %v2005 = vld [vmem:[%s1999 + $0x28] sm:$0xff]
        %v2006 = vld [vmem:[%s1999 + $0x30] sm:$0xff]
        %v2007 = vld [vmem:[%s1999 + $0x38] sm:$0xff]
        %v2008 = vld [vmem:[%s1999 + $0x40] sm:$0x11]
        %v2018 = vunpack.c.l.b16 %v2000
        %v2019 = vunpack.c.h.b16 %v2000
        %v2020 = vunpack.c.l.b16 %v2001
        %v2021 = vunpack.c.h.b16 %v2001
        %v2022 = vunpack.c.l.b16 %v2002
        %v2023 = vunpack.c.h.b16 %v2002
        %v2024 = vunpack.c.l.b16 %v2003
        %v2025 = vunpack.c.h.b16 %v2003
        %v2026 = vunpack.c.l.b16 %v2004
        %v2027 = vunpack.c.h.b16 %v2004
        %v2028 = vunpack.c.l.b16 %v2005
        %v2029 = vunpack.c.h.b16 %v2005
        %v2030 = vunpack.c.l.b16 %v2006
        %v2031 = vunpack.c.h.b16 %v2006
        %v2032 = vunpack.c.l.b16 %v2007
        %v2033 = vunpack.c.h.b16 %v2007
        %v2034 = vunpack.c.l.b16 %v2008
        %v2035 = vunpack.c.h.b16 %v2008
        %v2036 = vpack.c.b16 %v2020, %v2018
        %v2037 = vpack.c.b16 %v2021, %v2019
        %v2038 = vpack.c.b16 %v2024, %v2022
        %v2039 = vpack.c.b16 %v2025, %v2023
        %v2040 = vpack.c.b16 %v2028, %v2026
        %v2041 = vpack.c.b16 %v2029, %v2027
        %v2042 = vpack.c.b16 %v2032, %v2030
        %v2043 = vpack.c.b16 %v2033, %v2031
        %v2044 = vpack.c.b16 %v2034, %v2034
        %v2045 = vpack.c.b16 %v2035, %v2035
        %v2055 = vsel %vm617, %v1993, 0
        %v2058 = vsel %vm617, %v1994, 0
        %v2061 = vsel %vm617, %v1995, 0
        %v2064 = vsel %vm617, %v1996, 0
        %v2067 = vsel %vm617, %v1997, 0
        %v2070 = vsel %vm617, %v1998, 0
        %v2073 = vsel %vm636, %v2044, 0
        %v2076 = vsel %vm636, %v2045, 0
        %2078 = vmatpush.bf16.msra.mxu0 0
        %2079 = vmatpush.bf16.msra.mxu0 0
        %2080 = vmatpush.bf16.msra.mxu0 0
        %2081 = vmatpush.bf16.msra.mxu0 %v2073
        %2082 = vmatpush.bf16.msra.mxu0 %v2042
        %2083 = vmatpush.bf16.msra.mxu0 %v2040
        %2084 = vmatpush.bf16.msra.mxu0 %v2038
        %2085 = vmatpush.bf16.msra.mxu0 %v2036
        %2086 = vmatmul.bf16.gmra.mxu0 %v2055
        %v2087 = vpop.f32.mrf.mxu0
        %v2088 = vadd.f32 0.0, %v2087
        %v2089 = vpop.f32.mrf.mxu0
        %v2090 = vadd.f32 0.0, %v2089
        %2091 = vmatmul.bf16.gmra.mxu0 %v2058
        %v2092 = vpop.f32.mrf.mxu0
        %v2093 = vadd.f32 0.0, %v2092
        %v2094 = vpop.f32.mrf.mxu0
        %v2095 = vadd.f32 0.0, %v2094
        %2096 = vmatmul.bf16.gmra.mxu0 %v2061
        %v2097 = vpop.f32.mrf.mxu0
        %v2098 = vadd.f32 0.0, %v2097
        %v2099 = vpop.f32.mrf.mxu0
        %v2100 = vadd.f32 0.0, %v2099
        %2101 = vmatmul.bf16.gmra.mxu0 %v2064
        %v2102 = vpop.f32.mrf.mxu0
        %v2103 = vadd.f32 0.0, %v2102
        %v2104 = vpop.f32.mrf.mxu0
        %v2105 = vadd.f32 0.0, %v2104
        %2106 = vmatmul.bf16.gmra.mxu0 %v2067
        %v2107 = vpop.f32.mrf.mxu0
        %v2108 = vadd.f32 0.0, %v2107
        %v2109 = vpop.f32.mrf.mxu0
        %v2110 = vadd.f32 0.0, %v2109
        %2111 = vmatmul.bf16.gmra.mxu0 %v2070
        %v2112 = vpop.f32.mrf.mxu0
        %v2113 = vadd.f32 0.0, %v2112
        %v2114 = vpop.f32.mrf.mxu0
        %v2115 = vadd.f32 0.0, %v2114
        %2116 = vdwg.mxu0
        %2117 = vmatpush.bf16.msra.mxu0 0
        %2118 = vmatpush.bf16.msra.mxu0 0
        %2119 = vmatpush.bf16.msra.mxu0 0
        %2120 = vmatpush.bf16.msra.mxu0 %v2076
        %2121 = vmatpush.bf16.msra.mxu0 %v2043
        %2122 = vmatpush.bf16.msra.mxu0 %v2041
        %2123 = vmatpush.bf16.msra.mxu0 %v2039
        %2124 = vmatpush.bf16.msra.mxu0 %v2037
        %2125 = vmatmul.bf16.gmra.mxu0 %v2055
        %v2126 = vpop.f32.mrf.mxu0
        %v2127 = vadd.f32 0.0, %v2126
        %v2128 = vpop.f32.mrf.mxu0
        %v2129 = vadd.f32 0.0, %v2128
        %2130 = vmatmul.bf16.gmra.mxu0 %v2058
        %v2131 = vpop.f32.mrf.mxu0
        %v2132 = vadd.f32 0.0, %v2131
        %v2133 = vpop.f32.mrf.mxu0
        %v2134 = vadd.f32 0.0, %v2133
        %2135 = vmatmul.bf16.gmra.mxu0 %v2061
        %v2136 = vpop.f32.mrf.mxu0
        %v2137 = vadd.f32 0.0, %v2136
        %v2138 = vpop.f32.mrf.mxu0
        %v2139 = vadd.f32 0.0, %v2138
        %2140 = vmatmul.bf16.gmra.mxu0 %v2064
        %v2141 = vpop.f32.mrf.mxu0
        %v2142 = vadd.f32 0.0, %v2141
        %v2143 = vpop.f32.mrf.mxu0
        %v2144 = vadd.f32 0.0, %v2143
        %2145 = vmatmul.bf16.gmra.mxu0 %v2067
        %v2146 = vpop.f32.mrf.mxu0
        %v2147 = vadd.f32 0.0, %v2146
        %v2148 = vpop.f32.mrf.mxu0
        %v2149 = vadd.f32 0.0, %v2148
        %2150 = vmatmul.bf16.gmra.mxu0 %v2070
        %v2151 = vpop.f32.mrf.mxu0
        %v2152 = vadd.f32 0.0, %v2151
        %v2153 = vpop.f32.mrf.mxu0
        %v2154 = vadd.f32 0.0, %v2153
        %2155 = vdwg.mxu0
        %v2156 = vadd.f32 %v1869, %v2088
        %v2157 = vadd.f32 %v1870, %v2127
        %v2158 = vadd.f32 %v1871, %v2090
        %v2159 = vadd.f32 %v1872, %v2129
        %v2160 = vadd.f32 %v1873, %v2093
        %v2161 = vadd.f32 %v1874, %v2132
        %v2162 = vadd.f32 %v1875, %v2095
        %v2163 = vadd.f32 %v1876, %v2134
        %v2164 = vadd.f32 %v1877, %v2098
        %v2165 = vadd.f32 %v1878, %v2137
        %v2166 = vadd.f32 %v1879, %v2100
        %v2167 = vadd.f32 %v1880, %v2139
        %v2168 = vadd.f32 %v1881, %v2103
        %v2169 = vadd.f32 %v1882, %v2142
        %v2170 = vadd.f32 %v1883, %v2105
        %v2171 = vadd.f32 %v1884, %v2144
        %v2172 = vadd.f32 %v1885, %v2108
        %v2173 = vadd.f32 %v1886, %v2147
        %v2174 = vadd.f32 %v1887, %v2110
        %v2175 = vadd.f32 %v1888, %v2149
        %v2176 = vadd.f32 %v1889, %v2113
        %v2177 = vadd.f32 %v1890, %v2152
        %v2178 = vadd.f32 %v1891, %v2115
        %v2179 = vadd.f32 %v1892, %v2154
        %s2180 = scalar_lea.vmem %s2, 288
        %v2181 = vld [vmem:[%s2180] sm:$0xf]
        %v2182 = vld [vmem:[%s2180 + $0x4] sm:$0xf]
        %v2183 = vld [vmem:[%s2180 + $0x8] sm:$0xf]
        %v2184 = vld [vmem:[%s2180 + $0xc] sm:$0xf]
        %v2185 = vld [vmem:[%s2180 + $0x10] sm:$0xf]
        %v2186 = vld [vmem:[%s2180 + $0x14] sm:$0xf]
        %v2187 = vld [vmem:[%s2180 + $0x18] sm:$0xf]
        %v2188 = vld [vmem:[%s2180 + $0x1c] sm:$0xf]
        %v2189 = vld [vmem:[%s2180 + $0x20] sm:$0xf]
        %v2190 = vld [vmem:[%s2180 + $0x24] sm:$0xf]
        %v2191 = vld [vmem:[%s2180 + $0x28] sm:$0xf]
        %v2192 = vld [vmem:[%s2180 + $0x2c] sm:$0xf]
        %v2205 = vunpack.c.l.b16 %v2181
        %v2206 = vunpack.c.l.b16 %v2182
        %v2207 = vunpack.c.l.b16 %v2183
        %v2208 = vunpack.c.l.b16 %v2184
        %v2209 = vunpack.c.l.b16 %v2185
        %v2210 = vunpack.c.l.b16 %v2186
        %v2211 = vunpack.c.l.b16 %v2187
        %v2212 = vunpack.c.l.b16 %v2188
        %v2213 = vunpack.c.l.b16 %v2189
        %v2214 = vunpack.c.l.b16 %v2190
        %v2215 = vunpack.c.l.b16 %v2191
        %v2216 = vunpack.c.l.b16 %v2192
        %v2217 = vpack.c.b16 %v2206, %v2205
        %v2218 = vpack.c.b16 %v2208, %v2207
        %v2219 = vpack.c.b16 %v2210, %v2209
        %v2220 = vpack.c.b16 %v2212, %v2211
        %v2221 = vpack.c.b16 %v2214, %v2213
        %v2222 = vpack.c.b16 %v2216, %v2215
        %v2224 = vsel %vm499, %v2217, 0
        %v2227 = vsel %vm499, %v2218, 0
        %v2230 = vsel %vm499, %v2219, 0
        %v2233 = vsel %vm499, %v2220, 0
        %v2236 = vsel %vm499, %v2221, 0
        %v2239 = vsel %vm499, %v2222, 0
        %2241 = vmatpush.bf16.msra.mxu0 0
        %2242 = vmatpush.bf16.msra.mxu0 0
        %2243 = vmatpush.bf16.msra.mxu0 %v432
        %2244 = vmatpush.bf16.msra.mxu0 %v431
        %2245 = vmatpush.bf16.msra.mxu0 %v430
        %2246 = vmatpush.bf16.msra.mxu0 %v429
        %2247 = vmatpush.bf16.msra.mxu0 %v428
        %2248 = vmatpush.bf16.msra.mxu0 %v427
        %2249 = vmatmul.bf16.gmra.mxu0 %v2224
        %v2250 = vpop.f32.mrf.mxu0
        %v2251 = vadd.f32 0.0, %v2250
        %v2252 = vpop.f32.mrf.mxu0
        %v2253 = vadd.f32 0.0, %v2252
        %2254 = vmatmul.bf16.gmra.mxu0 %v2227
        %v2255 = vpop.f32.mrf.mxu0
        %v2256 = vadd.f32 0.0, %v2255
        %v2257 = vpop.f32.mrf.mxu0
        %v2258 = vadd.f32 0.0, %v2257
        %2259 = vmatmul.bf16.gmra.mxu0 %v2230
        %v2260 = vpop.f32.mrf.mxu0
        %v2261 = vadd.f32 0.0, %v2260
        %v2262 = vpop.f32.mrf.mxu0
        %v2263 = vadd.f32 0.0, %v2262
        %2264 = vmatmul.bf16.gmra.mxu0 %v2233
        %v2265 = vpop.f32.mrf.mxu0
        %v2266 = vadd.f32 0.0, %v2265
        %v2267 = vpop.f32.mrf.mxu0
        %v2268 = vadd.f32 0.0, %v2267
        %2269 = vmatmul.bf16.gmra.mxu0 %v2236
        %v2270 = vpop.f32.mrf.mxu0
        %v2271 = vadd.f32 0.0, %v2270
        %v2272 = vpop.f32.mrf.mxu0
        %v2273 = vadd.f32 0.0, %v2272
        %2274 = vmatmul.bf16.gmra.mxu0 %v2239
        %v2275 = vpop.f32.mrf.mxu0
        %v2276 = vadd.f32 0.0, %v2275
        %v2277 = vpop.f32.mrf.mxu0
        %v2278 = vadd.f32 0.0, %v2277
        %2279 = vdwg.mxu0
        %v2280 = vpack.c.bf16 %v2253, %v2251
        %v2281 = vpack.c.bf16 %v2258, %v2256
        %v2282 = vpack.c.bf16 %v2263, %v2261
        %v2283 = vpack.c.bf16 %v2268, %v2266
        %v2284 = vpack.c.bf16 %v2273, %v2271
        %v2285 = vpack.c.bf16 %v2278, %v2276
        %s2286 = scalar_lea.vmem %s1, 432
        %v2287 = vld [vmem:[%s2286] sm:$0xff]
        %v2288 = vld [vmem:[%s2286 + $0x8] sm:$0xff]
        %v2289 = vld [vmem:[%s2286 + $0x10] sm:$0xff]
        %v2290 = vld [vmem:[%s2286 + $0x18] sm:$0xff]
        %v2291 = vld [vmem:[%s2286 + $0x20] sm:$0xff]
        %v2292 = vld [vmem:[%s2286 + $0x28] sm:$0xff]
        %v2293 = vld [vmem:[%s2286 + $0x30] sm:$0xff]
        %v2294 = vld [vmem:[%s2286 + $0x38] sm:$0xff]
        %v2295 = vld [vmem:[%s2286 + $0x40] sm:$0x11]
        %v2305 = vunpack.c.l.b16 %v2287
        %v2306 = vunpack.c.h.b16 %v2287
        %v2307 = vunpack.c.l.b16 %v2288
        %v2308 = vunpack.c.h.b16 %v2288
        %v2309 = vunpack.c.l.b16 %v2289
        %v2310 = vunpack.c.h.b16 %v2289
        %v2311 = vunpack.c.l.b16 %v2290
        %v2312 = vunpack.c.h.b16 %v2290
        %v2313 = vunpack.c.l.b16 %v2291
        %v2314 = vunpack.c.h.b16 %v2291
        %v2315 = vunpack.c.l.b16 %v2292
        %v2316 = vunpack.c.h.b16 %v2292
        %v2317 = vunpack.c.l.b16 %v2293
        %v2318 = vunpack.c.h.b16 %v2293
        %v2319 = vunpack.c.l.b16 %v2294
        %v2320 = vunpack.c.h.b16 %v2294
        %v2321 = vunpack.c.l.b16 %v2295
        %v2322 = vunpack.c.h.b16 %v2295
        %v2323 = vpack.c.b16 %v2307, %v2305
        %v2324 = vpack.c.b16 %v2308, %v2306
        %v2325 = vpack.c.b16 %v2311, %v2309
        %v2326 = vpack.c.b16 %v2312, %v2310
        %v2327 = vpack.c.b16 %v2315, %v2313
        %v2328 = vpack.c.b16 %v2316, %v2314
        %v2329 = vpack.c.b16 %v2319, %v2317
        %v2330 = vpack.c.b16 %v2320, %v2318
        %v2331 = vpack.c.b16 %v2321, %v2321
        %v2332 = vpack.c.b16 %v2322, %v2322
        %v2342 = vsel %vm617, %v2280, 0
        %v2345 = vsel %vm617, %v2281, 0
        %v2348 = vsel %vm617, %v2282, 0
        %v2351 = vsel %vm617, %v2283, 0
        %v2354 = vsel %vm617, %v2284, 0
        %v2357 = vsel %vm617, %v2285, 0
        %v2360 = vsel %vm636, %v2331, 0
        %v2363 = vsel %vm636, %v2332, 0
        %2365 = vmatpush.bf16.msra.mxu0 0
        %2366 = vmatpush.bf16.msra.mxu0 0
        %2367 = vmatpush.bf16.msra.mxu0 0
        %2368 = vmatpush.bf16.msra.mxu0 %v2360
        %2369 = vmatpush.bf16.msra.mxu0 %v2329
        %2370 = vmatpush.bf16.msra.mxu0 %v2327
        %2371 = vmatpush.bf16.msra.mxu0 %v2325
        %2372 = vmatpush.bf16.msra.mxu0 %v2323
        %2373 = vmatmul.bf16.gmra.mxu0 %v2342
        %v2374 = vpop.f32.mrf.mxu0
        %v2375 = vadd.f32 0.0, %v2374
        %v2376 = vpop.f32.mrf.mxu0
        %v2377 = vadd.f32 0.0, %v2376
        %2378 = vmatmul.bf16.gmra.mxu0 %v2345
        %v2379 = vpop.f32.mrf.mxu0
        %v2380 = vadd.f32 0.0, %v2379
        %v2381 = vpop.f32.mrf.mxu0
        %v2382 = vadd.f32 0.0, %v2381
        %2383 = vmatmul.bf16.gmra.mxu0 %v2348
        %v2384 = vpop.f32.mrf.mxu0
        %v2385 = vadd.f32 0.0, %v2384
        %v2386 = vpop.f32.mrf.mxu0
        %v2387 = vadd.f32 0.0, %v2386
        %2388 = vmatmul.bf16.gmra.mxu0 %v2351
        %v2389 = vpop.f32.mrf.mxu0
        %v2390 = vadd.f32 0.0, %v2389
        %v2391 = vpop.f32.mrf.mxu0
        %v2392 = vadd.f32 0.0, %v2391
        %2393 = vmatmul.bf16.gmra.mxu0 %v2354
        %v2394 = vpop.f32.mrf.mxu0
        %v2395 = vadd.f32 0.0, %v2394
        %v2396 = vpop.f32.mrf.mxu0
        %v2397 = vadd.f32 0.0, %v2396
        %2398 = vmatmul.bf16.gmra.mxu0 %v2357
        %v2399 = vpop.f32.mrf.mxu0
        %v2400 = vadd.f32 0.0, %v2399
        %v2401 = vpop.f32.mrf.mxu0
        %v2402 = vadd.f32 0.0, %v2401
        %2403 = vdwg.mxu0
        %2404 = vmatpush.bf16.msra.mxu0 0
        %2405 = vmatpush.bf16.msra.mxu0 0
        %2406 = vmatpush.bf16.msra.mxu0 0
        %2407 = vmatpush.bf16.msra.mxu0 %v2363
        %2408 = vmatpush.bf16.msra.mxu0 %v2330
        %2409 = vmatpush.bf16.msra.mxu0 %v2328
        %2410 = vmatpush.bf16.msra.mxu0 %v2326
        %2411 = vmatpush.bf16.msra.mxu0 %v2324
        %2412 = vmatmul.bf16.gmra.mxu0 %v2342
        %v2413 = vpop.f32.mrf.mxu0
        %v2414 = vadd.f32 0.0, %v2413
        %v2415 = vpop.f32.mrf.mxu0
        %v2416 = vadd.f32 0.0, %v2415
        %2417 = vmatmul.bf16.gmra.mxu0 %v2345
        %v2418 = vpop.f32.mrf.mxu0
        %v2419 = vadd.f32 0.0, %v2418
        %v2420 = vpop.f32.mrf.mxu0
        %v2421 = vadd.f32 0.0, %v2420
        %2422 = vmatmul.bf16.gmra.mxu0 %v2348
        %v2423 = vpop.f32.mrf.mxu0
        %v2424 = vadd.f32 0.0, %v2423
        %v2425 = vpop.f32.mrf.mxu0
        %v2426 = vadd.f32 0.0, %v2425
        %2427 = vmatmul.bf16.gmra.mxu0 %v2351
        %v2428 = vpop.f32.mrf.mxu0
        %v2429 = vadd.f32 0.0, %v2428
        %v2430 = vpop.f32.mrf.mxu0
        %v2431 = vadd.f32 0.0, %v2430
        %2432 = vmatmul.bf16.gmra.mxu0 %v2354
        %v2433 = vpop.f32.mrf.mxu0
        %v2434 = vadd.f32 0.0, %v2433
        %v2435 = vpop.f32.mrf.mxu0
        %v2436 = vadd.f32 0.0, %v2435
        %2437 = vmatmul.bf16.gmra.mxu0 %v2357
        %v2438 = vpop.f32.mrf.mxu0
        %v2439 = vadd.f32 0.0, %v2438
        %v2440 = vpop.f32.mrf.mxu0
        %v2441 = vadd.f32 0.0, %v2440
        %2442 = vdwg.mxu0
        %v2443 = vadd.f32 %v2156, %v2375
        %v2444 = vadd.f32 %v2157, %v2414
        %v2445 = vadd.f32 %v2158, %v2377
        %v2446 = vadd.f32 %v2159, %v2416
        %v2447 = vadd.f32 %v2160, %v2380
        %v2448 = vadd.f32 %v2161, %v2419
        %v2449 = vadd.f32 %v2162, %v2382
        %v2450 = vadd.f32 %v2163, %v2421
        %v2451 = vadd.f32 %v2164, %v2385
        %v2452 = vadd.f32 %v2165, %v2424
        %v2453 = vadd.f32 %v2166, %v2387
        %v2454 = vadd.f32 %v2167, %v2426
        %v2455 = vadd.f32 %v2168, %v2390
        %v2456 = vadd.f32 %v2169, %v2429
        %v2457 = vadd.f32 %v2170, %v2392
        %v2458 = vadd.f32 %v2171, %v2431
        %v2459 = vadd.f32 %v2172, %v2395
        %v2460 = vadd.f32 %v2173, %v2434
        %v2461 = vadd.f32 %v2174, %v2397
        %v2462 = vadd.f32 %v2175, %v2436
        %v2463 = vadd.f32 %v2176, %v2400
        %v2464 = vadd.f32 %v2177, %v2439
        %v2465 = vadd.f32 %v2178, %v2402
        %v2466 = vadd.f32 %v2179, %v2441
        %v2467 = vmax.f32 %v2443, 0.0
        %v2468 = vmax.f32 %v2444, 0.0
        %v2469 = vmax.f32 %v2445, 0.0
        %v2470 = vmax.f32 %v2446, 0.0
        %v2471 = vmax.f32 %v2447, 0.0
        %v2472 = vmax.f32 %v2448, 0.0
        %v2473 = vmax.f32 %v2449, 0.0
        %v2474 = vmax.f32 %v2450, 0.0
        %v2475 = vmax.f32 %v2451, 0.0
        %v2476 = vmax.f32 %v2452, 0.0
        %v2477 = vmax.f32 %v2453, 0.0
        %v2478 = vmax.f32 %v2454, 0.0
        %v2479 = vmax.f32 %v2455, 0.0
        %v2480 = vmax.f32 %v2456, 0.0
        %v2481 = vmax.f32 %v2457, 0.0
        %v2482 = vmax.f32 %v2458, 0.0
        %v2483 = vmax.f32 %v2459, 0.0
        %v2484 = vmax.f32 %v2460, 0.0
        %v2485 = vmax.f32 %v2461, 0.0
        %v2486 = vmax.f32 %v2462, 0.0
        %v2487 = vmax.f32 %v2463, 0.0
        %v2488 = vmax.f32 %v2464, 0.0
        %v2489 = vmax.f32 %v2465, 0.0
        %v2490 = vmax.f32 %v2466, 0.0
        %v2491 = vpack.c.bf16 %v2469, %v2467
        %v2492 = vpack.c.bf16 %v2470, %v2468
        %v2493 = vpack.c.bf16 %v2473, %v2471
        %v2494 = vpack.c.bf16 %v2474, %v2472
        %v2495 = vpack.c.bf16 %v2477, %v2475
        %v2496 = vpack.c.bf16 %v2478, %v2476
        %v2497 = vpack.c.bf16 %v2481, %v2479
        %v2498 = vpack.c.bf16 %v2482, %v2480
        %v2499 = vpack.c.bf16 %v2485, %v2483
        %v2500 = vpack.c.bf16 %v2486, %v2484
        %v2501 = vpack.c.bf16 %v2489, %v2487
        %v2502 = vpack.c.bf16 %v2490, %v2488
        %v2503 = vld [vmem:[%s6] sm:$0xff]
        %v2504 = vld [vmem:[%s6 + $0x8] sm:$0xff]
        %v2505 = vld [vmem:[%s6 + $0x10] sm:$0xff]
        %v2506 = vld [vmem:[%s6 + $0x18] sm:$0xff]
        %v2507 = vld [vmem:[%s6 + $0x20] sm:$0xff]
        %v2508 = vld [vmem:[%s6 + $0x28] sm:$0xff]
        %v2509 = vld [vmem:[%s6 + $0x30] sm:$0xff]
        %v2510 = vld [vmem:[%s6 + $0x38] sm:$0xff]
        %v2511 = vld [vmem:[%s6 + $0x40] sm:$0xff]
        %v2512 = vld [vmem:[%s6 + $0x48] sm:$0xff]
        %v2513 = vld [vmem:[%s6 + $0x50] sm:$0xff]
        %v2514 = vld [vmem:[%s6 + $0x58] sm:$0xff]
        %v2515 = vld [vmem:[%s6 + $0x60] sm:$0xff]
        %v2516 = vld [vmem:[%s6 + $0x68] sm:$0xff]
        %v2517 = vld [vmem:[%s6 + $0x70] sm:$0xff]
        %v2518 = vld [vmem:[%s6 + $0x78] sm:$0xff]
        %v2519 = vld [vmem:[%s5] sm:$0xf]
        %v2520 = vld [vmem:[%s5 + $0x4] sm:$0xf]
        %v2521 = vld [vmem:[%s5 + $0x8] sm:$0xf]
        %v2522 = vld [vmem:[%s5 + $0xc] sm:$0xf]
        %v2523 = vld [vmem:[%s5 + $0x10] sm:$0xf]
        %v2524 = vld [vmem:[%s5 + $0x14] sm:$0xf]
        %v2525 = vld [vmem:[%s5 + $0x18] sm:$0xf]
        %v2526 = vld [vmem:[%s5 + $0x1c] sm:$0xf]
        %v2535 = vunpack.c.l.b16 %v2519
        %v2536 = vunpack.c.l.b16 %v2520
        %v2537 = vunpack.c.l.b16 %v2521
        %v2538 = vunpack.c.l.b16 %v2522
        %v2539 = vunpack.c.l.b16 %v2523
        %v2540 = vunpack.c.l.b16 %v2524
        %v2541 = vunpack.c.l.b16 %v2525
        %v2542 = vunpack.c.l.b16 %v2526
        %v2543 = vpack.c.b16 %v2536, %v2535
        %v2544 = vpack.c.b16 %v2538, %v2537
        %v2545 = vpack.c.b16 %v2540, %v2539
        %v2546 = vpack.c.b16 %v2542, %v2541
        %v2548 = vsel %vm499, %v2543, 0
        %v2551 = vsel %vm499, %v2544, 0
        %v2554 = vsel %vm499, %v2545, 0
        %v2557 = vsel %vm499, %v2546, 0
        %2559 = vmatpush.bf16.msra.mxu0 0
        %2560 = vmatpush.bf16.msra.mxu0 0
        %2561 = vmatpush.bf16.msra.mxu0 %v2501
        %2562 = vmatpush.bf16.msra.mxu0 %v2499
        %2563 = vmatpush.bf16.msra.mxu0 %v2497
        %2564 = vmatpush.bf16.msra.mxu0 %v2495
        %2565 = vmatpush.bf16.msra.mxu0 %v2493
        %2566 = vmatpush.bf16.msra.mxu0 %v2491
        %2567 = vmatmul.bf16.gmra.mxu0 %v2548
        %v2568 = vpop.f32.mrf.mxu0
        %v2569 = vadd.f32 0.0, %v2568
        %v2570 = vpop.f32.mrf.mxu0
        %v2571 = vadd.f32 0.0, %v2570
        %2572 = vmatmul.bf16.gmra.mxu0 %v2551
        %v2573 = vpop.f32.mrf.mxu0
        %v2574 = vadd.f32 0.0, %v2573
        %v2575 = vpop.f32.mrf.mxu0
        %v2576 = vadd.f32 0.0, %v2575
        %2577 = vmatmul.bf16.gmra.mxu0 %v2554
        %v2578 = vpop.f32.mrf.mxu0
        %v2579 = vadd.f32 0.0, %v2578
        %v2580 = vpop.f32.mrf.mxu0
        %v2581 = vadd.f32 0.0, %v2580
        %2582 = vmatmul.bf16.gmra.mxu0 %v2557
        %v2583 = vpop.f32.mrf.mxu0
        %v2584 = vadd.f32 0.0, %v2583
        %v2585 = vpop.f32.mrf.mxu0
        %v2586 = vadd.f32 0.0, %v2585
        %2587 = vdwg.mxu0
        %2588 = vmatpush.bf16.msra.mxu0 0
        %2589 = vmatpush.bf16.msra.mxu0 0
        %2590 = vmatpush.bf16.msra.mxu0 %v2502
        %2591 = vmatpush.bf16.msra.mxu0 %v2500
        %2592 = vmatpush.bf16.msra.mxu0 %v2498
        %2593 = vmatpush.bf16.msra.mxu0 %v2496
        %2594 = vmatpush.bf16.msra.mxu0 %v2494
        %2595 = vmatpush.bf16.msra.mxu0 %v2492
        %2596 = vmatmul.bf16.gmra.mxu0 %v2548
        %v2597 = vpop.f32.mrf.mxu0
        %v2598 = vadd.f32 0.0, %v2597
        %v2599 = vpop.f32.mrf.mxu0
        %v2600 = vadd.f32 0.0, %v2599
        %2601 = vmatmul.bf16.gmra.mxu0 %v2551
        %v2602 = vpop.f32.mrf.mxu0
        %v2603 = vadd.f32 0.0, %v2602
        %v2604 = vpop.f32.mrf.mxu0
        %v2605 = vadd.f32 0.0, %v2604
        %2606 = vmatmul.bf16.gmra.mxu0 %v2554
        %v2607 = vpop.f32.mrf.mxu0
        %v2608 = vadd.f32 0.0, %v2607
        %v2609 = vpop.f32.mrf.mxu0
        %v2610 = vadd.f32 0.0, %v2609
        %2611 = vmatmul.bf16.gmra.mxu0 %v2557
        %v2612 = vpop.f32.mrf.mxu0
        %v2613 = vadd.f32 0.0, %v2612
        %v2614 = vpop.f32.mrf.mxu0
        %v2615 = vadd.f32 0.0, %v2614
        %2616 = vdwg.mxu0
        %v2617 = vpack.c.bf16 %v2571, %v2569
        %v2618 = vpack.c.bf16 %v2600, %v2598
        %v2619 = vpack.c.bf16 %v2576, %v2574
        %v2620 = vpack.c.bf16 %v2605, %v2603
        %v2621 = vpack.c.bf16 %v2581, %v2579
        %v2622 = vpack.c.bf16 %v2610, %v2608
        %v2623 = vpack.c.bf16 %v2586, %v2584
        %v2624 = vpack.c.bf16 %v2615, %v2613
        %v2625 = vld [vmem:[%s4] sm:$0xff]
        %v2626 = vld [vmem:[%s4 + $0x8] sm:$0xff]
        %v2627 = vld [vmem:[%s4 + $0x10] sm:$0xff]
        %v2628 = vld [vmem:[%s4 + $0x18] sm:$0xff]
        %v2629 = vld [vmem:[%s4 + $0x20] sm:$0xff]
        %v2630 = vld [vmem:[%s4 + $0x28] sm:$0xff]
        %v2631 = vld [vmem:[%s4 + $0x30] sm:$0xff]
        %v2632 = vld [vmem:[%s4 + $0x38] sm:$0xff]
        %v2633 = vld [vmem:[%s4 + $0x40] sm:$0xff]
        %v2634 = vld [vmem:[%s4 + $0x48] sm:$0xff]
        %v2635 = vld [vmem:[%s4 + $0x50] sm:$0xff]
        %v2636 = vld [vmem:[%s4 + $0x58] sm:$0xff]
        %v2637 = vld [vmem:[%s4 + $0x60] sm:$0xff]
        %v2638 = vld [vmem:[%s4 + $0x68] sm:$0xff]
        %v2639 = vld [vmem:[%s4 + $0x70] sm:$0xff]
        %v2640 = vld [vmem:[%s4 + $0x78] sm:$0xff]
        %v2641 = vld [vmem:[%s4 + $0x80] sm:$0xff]
        %v2642 = vld [vmem:[%s4 + $0x88] sm:$0xff]
        %v2661 = vunpack.c.l.b16 %v2625
        %v2662 = vunpack.c.h.b16 %v2625
        %v2663 = vunpack.c.l.b16 %v2626
        %v2664 = vunpack.c.h.b16 %v2626
        %v2665 = vunpack.c.l.b16 %v2627
        %v2666 = vunpack.c.h.b16 %v2627
        %v2667 = vunpack.c.l.b16 %v2628
        %v2668 = vunpack.c.h.b16 %v2628
        %v2669 = vunpack.c.l.b16 %v2629
        %v2670 = vunpack.c.h.b16 %v2629
        %v2671 = vunpack.c.l.b16 %v2630
        %v2672 = vunpack.c.h.b16 %v2630
        %v2673 = vunpack.c.l.b16 %v2631
        %v2674 = vunpack.c.h.b16 %v2631
        %v2675 = vunpack.c.l.b16 %v2632
        %v2676 = vunpack.c.h.b16 %v2632
        %v2677 = vunpack.c.l.b16 %v2633
        %v2678 = vunpack.c.h.b16 %v2633
        %v2679 = vunpack.c.l.b16 %v2634
        %v2680 = vunpack.c.h.b16 %v2634
        %v2681 = vunpack.c.l.b16 %v2635
        %v2682 = vunpack.c.h.b16 %v2635
        %v2683 = vunpack.c.l.b16 %v2636
        %v2684 = vunpack.c.h.b16 %v2636
        %v2685 = vunpack.c.l.b16 %v2637
        %v2686 = vunpack.c.h.b16 %v2637
        %v2687 = vunpack.c.l.b16 %v2638
        %v2688 = vunpack.c.h.b16 %v2638
        %v2689 = vunpack.c.l.b16 %v2639
        %v2690 = vunpack.c.h.b16 %v2639
        %v2691 = vunpack.c.l.b16 %v2640
        %v2692 = vunpack.c.h.b16 %v2640
        %v2693 = vunpack.c.l.b16 %v2641
        %v2694 = vunpack.c.h.b16 %v2641
        %v2695 = vunpack.c.l.b16 %v2642
        %v2696 = vunpack.c.h.b16 %v2642
        %v2697 = vpack.c.b16 %v2663, %v2661
        %v2698 = vpack.c.b16 %v2664, %v2662
        %v2699 = vpack.c.b16 %v2667, %v2665
        %v2700 = vpack.c.b16 %v2668, %v2666
        %v2701 = vpack.c.b16 %v2671, %v2669
        %v2702 = vpack.c.b16 %v2672, %v2670
        %v2703 = vpack.c.b16 %v2675, %v2673
        %v2704 = vpack.c.b16 %v2676, %v2674
        %v2705 = vpack.c.b16 %v2679, %v2677
        %v2706 = vpack.c.b16 %v2680, %v2678
        %v2707 = vpack.c.b16 %v2683, %v2681
        %v2708 = vpack.c.b16 %v2684, %v2682
        %v2709 = vpack.c.b16 %v2687, %v2685
        %v2710 = vpack.c.b16 %v2688, %v2686
        %v2711 = vpack.c.b16 %v2691, %v2689
        %v2712 = vpack.c.b16 %v2692, %v2690
        %v2713 = vpack.c.b16 %v2695, %v2693
        %v2714 = vpack.c.b16 %v2696, %v2694
        %vm2733 = vcmask 130048
        %v2735 = vsel %vm2733, %v2618, 0
        %v2738 = vsel %vm2733, %v2620, 0
        %v2741 = vsel %vm2733, %v2622, 0
        %v2744 = vsel %vm2733, %v2624, 0
        %2746 = vmatpush.bf16.msra.mxu0 %v2711
        %2747 = vmatpush.bf16.msra.mxu0 %v2709
        %2748 = vmatpush.bf16.msra.mxu0 %v2707
        %2749 = vmatpush.bf16.msra.mxu0 %v2705
        %2750 = vmatpush.bf16.msra.mxu0 %v2703
        %2751 = vmatpush.bf16.msra.mxu0 %v2701
        %2752 = vmatpush.bf16.msra.mxu0 %v2699
        %2753 = vmatpush.bf16.msra.mxu0 %v2697
        %2754 = vmatmul.bf16.gmra.mxu0 %v2617
        %v2755 = vpop.f32.mrf.mxu0
        %v2756 = vadd.f32 0.0, %v2755
        %v2757 = vpop.f32.mrf.mxu0
        %v2758 = vadd.f32 0.0, %v2757
        %2759 = vmatmul.bf16.gmra.mxu0 %v2619
        %v2760 = vpop.f32.mrf.mxu0
        %v2761 = vadd.f32 0.0, %v2760
        %v2762 = vpop.f32.mrf.mxu0
        %v2763 = vadd.f32 0.0, %v2762
        %2764 = vmatmul.bf16.gmra.mxu0 %v2621
        %v2765 = vpop.f32.mrf.mxu0
        %v2766 = vadd.f32 0.0, %v2765
        %v2767 = vpop.f32.mrf.mxu0
        %v2768 = vadd.f32 0.0, %v2767
        %2769 = vmatmul.bf16.gmra.mxu0 %v2623
        %v2770 = vpop.f32.mrf.mxu0
        %v2771 = vadd.f32 0.0, %v2770
        %v2772 = vpop.f32.mrf.mxu0
        %v2773 = vadd.f32 0.0, %v2772
        %2774 = vdwg.mxu0
        %2775 = vmatpush.bf16.msra.mxu0 0
        %2776 = vmatpush.bf16.msra.mxu0 0
        %2777 = vmatpush.bf16.msra.mxu0 0
        %2778 = vmatpush.bf16.msra.mxu0 0
        %2779 = vmatpush.bf16.msra.mxu0 0
        %2780 = vmatpush.bf16.msra.mxu0 0
        %2781 = vmatpush.bf16.msra.mxu0 0
        %2782 = vmatpush.bf16.msra.mxu0 %v2713
        %2783 = vmatmul.bf16.gmra.mxu0 %v2735
        %v2784 = vpop.f32.mrf.mxu0
        %v2785 = vadd.f32 %v2756, %v2784
        %v2786 = vpop.f32.mrf.mxu0
        %v2787 = vadd.f32 %v2758, %v2786
        %2788 = vmatmul.bf16.gmra.mxu0 %v2738
        %v2789 = vpop.f32.mrf.mxu0
        %v2790 = vadd.f32 %v2761, %v2789
        %v2791 = vpop.f32.mrf.mxu0
        %v2792 = vadd.f32 %v2763, %v2791
        %2793 = vmatmul.bf16.gmra.mxu0 %v2741
        %v2794 = vpop.f32.mrf.mxu0
        %v2795 = vadd.f32 %v2766, %v2794
        %v2796 = vpop.f32.mrf.mxu0
        %v2797 = vadd.f32 %v2768, %v2796
        %2798 = vmatmul.bf16.gmra.mxu0 %v2744
        %v2799 = vpop.f32.mrf.mxu0
        %v2800 = vadd.f32 %v2771, %v2799
        %v2801 = vpop.f32.mrf.mxu0
        %v2802 = vadd.f32 %v2773, %v2801
        %2803 = vdwg.mxu0
        %2804 = vmatpush.bf16.msra.mxu0 %v2712
        %2805 = vmatpush.bf16.msra.mxu0 %v2710
        %2806 = vmatpush.bf16.msra.mxu0 %v2708
        %2807 = vmatpush.bf16.msra.mxu0 %v2706
        %2808 = vmatpush.bf16.msra.mxu0 %v2704
        %2809 = vmatpush.bf16.msra.mxu0 %v2702
        %2810 = vmatpush.bf16.msra.mxu0 %v2700
        %2811 = vmatpush.bf16.msra.mxu0 %v2698
        %2812 = vmatmul.bf16.gmra.mxu0 %v2617
        %v2813 = vpop.f32.mrf.mxu0
        %v2814 = vadd.f32 0.0, %v2813
        %v2815 = vpop.f32.mrf.mxu0
        %v2816 = vadd.f32 0.0, %v2815
        %2817 = vmatmul.bf16.gmra.mxu0 %v2619
        %v2818 = vpop.f32.mrf.mxu0
        %v2819 = vadd.f32 0.0, %v2818
        %v2820 = vpop.f32.mrf.mxu0
        %v2821 = vadd.f32 0.0, %v2820
        %2822 = vmatmul.bf16.gmra.mxu0 %v2621
        %v2823 = vpop.f32.mrf.mxu0
        %v2824 = vadd.f32 0.0, %v2823
        %v2825 = vpop.f32.mrf.mxu0
        %v2826 = vadd.f32 0.0, %v2825
        %2827 = vmatmul.bf16.gmra.mxu0 %v2623
        %v2828 = vpop.f32.mrf.mxu0
        %v2829 = vadd.f32 0.0, %v2828
        %v2830 = vpop.f32.mrf.mxu0
        %v2831 = vadd.f32 0.0, %v2830
        %2832 = vdwg.mxu0
        %2833 = vmatpush.bf16.msra.mxu0 0
        %2834 = vmatpush.bf16.msra.mxu0 0
        %2835 = vmatpush.bf16.msra.mxu0 0
        %2836 = vmatpush.bf16.msra.mxu0 0
        %2837 = vmatpush.bf16.msra.mxu0 0
        %2838 = vmatpush.bf16.msra.mxu0 0
        %2839 = vmatpush.bf16.msra.mxu0 0
        %2840 = vmatpush.bf16.msra.mxu0 %v2714
        %2841 = vmatmul.bf16.gmra.mxu0 %v2735
        %v2842 = vpop.f32.mrf.mxu0
        %v2843 = vadd.f32 %v2814, %v2842
        %v2844 = vpop.f32.mrf.mxu0
        %v2845 = vadd.f32 %v2816, %v2844
        %2846 = vmatmul.bf16.gmra.mxu0 %v2738
        %v2847 = vpop.f32.mrf.mxu0
        %v2848 = vadd.f32 %v2819, %v2847
        %v2849 = vpop.f32.mrf.mxu0
        %v2850 = vadd.f32 %v2821, %v2849
        %2851 = vmatmul.bf16.gmra.mxu0 %v2741
        %v2852 = vpop.f32.mrf.mxu0
        %v2853 = vadd.f32 %v2824, %v2852
        %v2854 = vpop.f32.mrf.mxu0
        %v2855 = vadd.f32 %v2826, %v2854
        %2856 = vmatmul.bf16.gmra.mxu0 %v2744
        %v2857 = vpop.f32.mrf.mxu0
        %v2858 = vadd.f32 %v2829, %v2857
        %v2859 = vpop.f32.mrf.mxu0
        %v2860 = vadd.f32 %v2831, %v2859
        %2861 = vdwg.mxu0
        %v2862 = vadd.f32 %v2503, %v2785
        %v2863 = vadd.f32 %v2504, %v2843
        %v2864 = vadd.f32 %v2505, %v2787
        %v2865 = vadd.f32 %v2506, %v2845
        %v2866 = vadd.f32 %v2507, %v2790
        %v2867 = vadd.f32 %v2508, %v2848
        %v2868 = vadd.f32 %v2509, %v2792
        %v2869 = vadd.f32 %v2510, %v2850
        %v2870 = vadd.f32 %v2511, %v2795
        %v2871 = vadd.f32 %v2512, %v2853
        %v2872 = vadd.f32 %v2513, %v2797
        %v2873 = vadd.f32 %v2514, %v2855
        %v2874 = vadd.f32 %v2515, %v2800
        %v2875 = vadd.f32 %v2516, %v2858
        %v2876 = vadd.f32 %v2517, %v2802
        %v2877 = vadd.f32 %v2518, %v2860
        %s2878 = scalar_lea.vmem %s5, 32
        %v2879 = vld [vmem:[%s2878] sm:$0xf]
        %v2880 = vld [vmem:[%s2878 + $0x4] sm:$0xf]
        %v2881 = vld [vmem:[%s2878 + $0x8] sm:$0xf]
        %v2882 = vld [vmem:[%s2878 + $0xc] sm:$0xf]
        %v2883 = vld [vmem:[%s2878 + $0x10] sm:$0xf]
        %v2884 = vld [vmem:[%s2878 + $0x14] sm:$0xf]
        %v2885 = vld [vmem:[%s2878 + $0x18] sm:$0xf]
        %v2886 = vld [vmem:[%s2878 + $0x1c] sm:$0xf]
        %v2895 = vunpack.c.l.b16 %v2879
        %v2896 = vunpack.c.l.b16 %v2880
        %v2897 = vunpack.c.l.b16 %v2881
        %v2898 = vunpack.c.l.b16 %v2882
        %v2899 = vunpack.c.l.b16 %v2883
        %v2900 = vunpack.c.l.b16 %v2884
        %v2901 = vunpack.c.l.b16 %v2885
        %v2902 = vunpack.c.l.b16 %v2886
        %v2903 = vpack.c.b16 %v2896, %v2895
        %v2904 = vpack.c.b16 %v2898, %v2897
        %v2905 = vpack.c.b16 %v2900, %v2899
        %v2906 = vpack.c.b16 %v2902, %v2901
        %v2908 = vsel %vm499, %v2903, 0
        %v2911 = vsel %vm499, %v2904, 0
        %v2914 = vsel %vm499, %v2905, 0
        %v2917 = vsel %vm499, %v2906, 0
        %2919 = vmatpush.bf16.msra.mxu0 0
        %2920 = vmatpush.bf16.msra.mxu0 0
        %2921 = vmatpush.bf16.msra.mxu0 %v2501
        %2922 = vmatpush.bf16.msra.mxu0 %v2499
        %2923 = vmatpush.bf16.msra.mxu0 %v2497
        %2924 = vmatpush.bf16.msra.mxu0 %v2495
        %2925 = vmatpush.bf16.msra.mxu0 %v2493
        %2926 = vmatpush.bf16.msra.mxu0 %v2491
        %2927 = vmatmul.bf16.gmra.mxu0 %v2908
        %v2928 = vpop.f32.mrf.mxu0
        %v2929 = vadd.f32 0.0, %v2928
        %v2930 = vpop.f32.mrf.mxu0
        %v2931 = vadd.f32 0.0, %v2930
        %2932 = vmatmul.bf16.gmra.mxu0 %v2911
        %v2933 = vpop.f32.mrf.mxu0
        %v2934 = vadd.f32 0.0, %v2933
        %v2935 = vpop.f32.mrf.mxu0
        %v2936 = vadd.f32 0.0, %v2935
        %2937 = vmatmul.bf16.gmra.mxu0 %v2914
        %v2938 = vpop.f32.mrf.mxu0
        %v2939 = vadd.f32 0.0, %v2938
        %v2940 = vpop.f32.mrf.mxu0
        %v2941 = vadd.f32 0.0, %v2940
        %2942 = vmatmul.bf16.gmra.mxu0 %v2917
        %v2943 = vpop.f32.mrf.mxu0
        %v2944 = vadd.f32 0.0, %v2943
        %v2945 = vpop.f32.mrf.mxu0
        %v2946 = vadd.f32 0.0, %v2945
        %2947 = vdwg.mxu0
        %2948 = vmatpush.bf16.msra.mxu0 0
        %2949 = vmatpush.bf16.msra.mxu0 0
        %2950 = vmatpush.bf16.msra.mxu0 %v2502
        %2951 = vmatpush.bf16.msra.mxu0 %v2500
        %2952 = vmatpush.bf16.msra.mxu0 %v2498
        %2953 = vmatpush.bf16.msra.mxu0 %v2496
        %2954 = vmatpush.bf16.msra.mxu0 %v2494
        %2955 = vmatpush.bf16.msra.mxu0 %v2492
        %2956 = vmatmul.bf16.gmra.mxu0 %v2908
        %v2957 = vpop.f32.mrf.mxu0
        %v2958 = vadd.f32 0.0, %v2957
        %v2959 = vpop.f32.mrf.mxu0
        %v2960 = vadd.f32 0.0, %v2959
        %2961 = vmatmul.bf16.gmra.mxu0 %v2911
        %v2962 = vpop.f32.mrf.mxu0
        %v2963 = vadd.f32 0.0, %v2962
        %v2964 = vpop.f32.mrf.mxu0
        %v2965 = vadd.f32 0.0, %v2964
        %2966 = vmatmul.bf16.gmra.mxu0 %v2914
        %v2967 = vpop.f32.mrf.mxu0
        %v2968 = vadd.f32 0.0, %v2967
        %v2969 = vpop.f32.mrf.mxu0
        %v2970 = vadd.f32 0.0, %v2969
        %2971 = vmatmul.bf16.gmra.mxu0 %v2917
        %v2972 = vpop.f32.mrf.mxu0
        %v2973 = vadd.f32 0.0, %v2972
        %v2974 = vpop.f32.mrf.mxu0
        %v2975 = vadd.f32 0.0, %v2974
        %2976 = vdwg.mxu0
        %v2977 = vpack.c.bf16 %v2931, %v2929
        %v2978 = vpack.c.bf16 %v2960, %v2958
        %v2979 = vpack.c.bf16 %v2936, %v2934
        %v2980 = vpack.c.bf16 %v2965, %v2963
        %v2981 = vpack.c.bf16 %v2941, %v2939
        %v2982 = vpack.c.bf16 %v2970, %v2968
        %v2983 = vpack.c.bf16 %v2946, %v2944
        %v2984 = vpack.c.bf16 %v2975, %v2973
        %s2985 = scalar_lea.vmem %s4, 144
        %v2986 = vld [vmem:[%s2985] sm:$0xff]
        %v2987 = vld [vmem:[%s2985 + $0x8] sm:$0xff]
        %v2988 = vld [vmem:[%s2985 + $0x10] sm:$0xff]
        %v2989 = vld [vmem:[%s2985 + $0x18] sm:$0xff]
        %v2990 = vld [vmem:[%s2985 + $0x20] sm:$0xff]
        %v2991 = vld [vmem:[%s2985 + $0x28] sm:$0xff]
        %v2992 = vld [vmem:[%s2985 + $0x30] sm:$0xff]
        %v2993 = vld [vmem:[%s2985 + $0x38] sm:$0xff]
        %v2994 = vld [vmem:[%s2985 + $0x40] sm:$0xff]
        %v2995 = vld [vmem:[%s2985 + $0x48] sm:$0xff]
        %v2996 = vld [vmem:[%s2985 + $0x50] sm:$0xff]
        %v2997 = vld [vmem:[%s2985 + $0x58] sm:$0xff]
        %v2998 = vld [vmem:[%s2985 + $0x60] sm:$0xff]
        %v2999 = vld [vmem:[%s2985 + $0x68] sm:$0xff]
        %v3000 = vld [vmem:[%s2985 + $0x70] sm:$0xff]
        %v3001 = vld [vmem:[%s2985 + $0x78] sm:$0xff]
        %v3002 = vld [vmem:[%s2985 + $0x80] sm:$0xff]
        %v3003 = vld [vmem:[%s2985 + $0x88] sm:$0xff]
        %v3022 = vunpack.c.l.b16 %v2986
        %v3023 = vunpack.c.h.b16 %v2986
        %v3024 = vunpack.c.l.b16 %v2987
        %v3025 = vunpack.c.h.b16 %v2987
        %v3026 = vunpack.c.l.b16 %v2988
        %v3027 = vunpack.c.h.b16 %v2988
        %v3028 = vunpack.c.l.b16 %v2989
        %v3029 = vunpack.c.h.b16 %v2989
        %v3030 = vunpack.c.l.b16 %v2990
        %v3031 = vunpack.c.h.b16 %v2990
        %v3032 = vunpack.c.l.b16 %v2991
        %v3033 = vunpack.c.h.b16 %v2991
        %v3034 = vunpack.c.l.b16 %v2992
        %v3035 = vunpack.c.h.b16 %v2992
        %v3036 = vunpack.c.l.b16 %v2993
        %v3037 = vunpack.c.h.b16 %v2993
        %v3038 = vunpack.c.l.b16 %v2994
        %v3039 = vunpack.c.h.b16 %v2994
        %v3040 = vunpack.c.l.b16 %v2995
        %v3041 = vunpack.c.h.b16 %v2995
        %v3042 = vunpack.c.l.b16 %v2996
        %v3043 = vunpack.c.h.b16 %v2996
        %v3044 = vunpack.c.l.b16 %v2997
        %v3045 = vunpack.c.h.b16 %v2997
        %v3046 = vunpack.c.l.b16 %v2998
        %v3047 = vunpack.c.h.b16 %v2998
        %v3048 = vunpack.c.l.b16 %v2999
        %v3049 = vunpack.c.h.b16 %v2999
        %v3050 = vunpack.c.l.b16 %v3000
        %v3051 = vunpack.c.h.b16 %v3000
        %v3052 = vunpack.c.l.b16 %v3001
        %v3053 = vunpack.c.h.b16 %v3001
        %v3054 = vunpack.c.l.b16 %v3002
        %v3055 = vunpack.c.h.b16 %v3002
        %v3056 = vunpack.c.l.b16 %v3003
        %v3057 = vunpack.c.h.b16 %v3003
        %v3058 = vpack.c.b16 %v3024, %v3022
        %v3059 = vpack.c.b16 %v3025, %v3023
        %v3060 = vpack.c.b16 %v3028, %v3026
        %v3061 = vpack.c.b16 %v3029, %v3027
        %v3062 = vpack.c.b16 %v3032, %v3030
        %v3063 = vpack.c.b16 %v3033, %v3031
        %v3064 = vpack.c.b16 %v3036, %v3034
        %v3065 = vpack.c.b16 %v3037, %v3035
        %v3066 = vpack.c.b16 %v3040, %v3038
        %v3067 = vpack.c.b16 %v3041, %v3039
        %v3068 = vpack.c.b16 %v3044, %v3042
        %v3069 = vpack.c.b16 %v3045, %v3043
        %v3070 = vpack.c.b16 %v3048, %v3046
        %v3071 = vpack.c.b16 %v3049, %v3047
        %v3072 = vpack.c.b16 %v3052, %v3050
        %v3073 = vpack.c.b16 %v3053, %v3051
        %v3074 = vpack.c.b16 %v3056, %v3054
        %v3075 = vpack.c.b16 %v3057, %v3055
        %v3095 = vsel %vm2733, %v2978, 0
        %v3098 = vsel %vm2733, %v2980, 0
        %v3101 = vsel %vm2733, %v2982, 0
        %v3104 = vsel %vm2733, %v2984, 0
        %3106 = vmatpush.bf16.msra.mxu0 %v3072
        %3107 = vmatpush.bf16.msra.mxu0 %v3070
        %3108 = vmatpush.bf16.msra.mxu0 %v3068
        %3109 = vmatpush.bf16.msra.mxu0 %v3066
        %3110 = vmatpush.bf16.msra.mxu0 %v3064
        %3111 = vmatpush.bf16.msra.mxu0 %v3062
        %3112 = vmatpush.bf16.msra.mxu0 %v3060
        %3113 = vmatpush.bf16.msra.mxu0 %v3058
        %3114 = vmatmul.bf16.gmra.mxu0 %v2977
        %v3115 = vpop.f32.mrf.mxu0
        %v3116 = vadd.f32 0.0, %v3115
        %v3117 = vpop.f32.mrf.mxu0
        %v3118 = vadd.f32 0.0, %v3117
        %3119 = vmatmul.bf16.gmra.mxu0 %v2979
        %v3120 = vpop.f32.mrf.mxu0
        %v3121 = vadd.f32 0.0, %v3120
        %v3122 = vpop.f32.mrf.mxu0
        %v3123 = vadd.f32 0.0, %v3122
        %3124 = vmatmul.bf16.gmra.mxu0 %v2981
        %v3125 = vpop.f32.mrf.mxu0
        %v3126 = vadd.f32 0.0, %v3125
        %v3127 = vpop.f32.mrf.mxu0
        %v3128 = vadd.f32 0.0, %v3127
        %3129 = vmatmul.bf16.gmra.mxu0 %v2983
        %v3130 = vpop.f32.mrf.mxu0
        %v3131 = vadd.f32 0.0, %v3130
        %v3132 = vpop.f32.mrf.mxu0
        %v3133 = vadd.f32 0.0, %v3132
        %3134 = vdwg.mxu0
        %3135 = vmatpush.bf16.msra.mxu0 0
        %3136 = vmatpush.bf16.msra.mxu0 0
        %3137 = vmatpush.bf16.msra.mxu0 0
        %3138 = vmatpush.bf16.msra.mxu0 0
        %3139 = vmatpush.bf16.msra.mxu0 0
        %3140 = vmatpush.bf16.msra.mxu0 0
        %3141 = vmatpush.bf16.msra.mxu0 0
        %3142 = vmatpush.bf16.msra.mxu0 %v3074
        %3143 = vmatmul.bf16.gmra.mxu0 %v3095
        %v3144 = vpop.f32.mrf.mxu0
        %v3145 = vadd.f32 %v3116, %v3144
        %v3146 = vpop.f32.mrf.mxu0
        %v3147 = vadd.f32 %v3118, %v3146
        %3148 = vmatmul.bf16.gmra.mxu0 %v3098
        %v3149 = vpop.f32.mrf.mxu0
        %v3150 = vadd.f32 %v3121, %v3149
        %v3151 = vpop.f32.mrf.mxu0
        %v3152 = vadd.f32 %v3123, %v3151
        %3153 = vmatmul.bf16.gmra.mxu0 %v3101
        %v3154 = vpop.f32.mrf.mxu0
        %v3155 = vadd.f32 %v3126, %v3154
        %v3156 = vpop.f32.mrf.mxu0
        %v3157 = vadd.f32 %v3128, %v3156
        %3158 = vmatmul.bf16.gmra.mxu0 %v3104
        %v3159 = vpop.f32.mrf.mxu0
        %v3160 = vadd.f32 %v3131, %v3159
        %v3161 = vpop.f32.mrf.mxu0
        %v3162 = vadd.f32 %v3133, %v3161
        %3163 = vdwg.mxu0
        %3164 = vmatpush.bf16.msra.mxu0 %v3073
        %3165 = vmatpush.bf16.msra.mxu0 %v3071
        %3166 = vmatpush.bf16.msra.mxu0 %v3069
        %3167 = vmatpush.bf16.msra.mxu0 %v3067
        %3168 = vmatpush.bf16.msra.mxu0 %v3065
        %3169 = vmatpush.bf16.msra.mxu0 %v3063
        %3170 = vmatpush.bf16.msra.mxu0 %v3061
        %3171 = vmatpush.bf16.msra.mxu0 %v3059
        %3172 = vmatmul.bf16.gmra.mxu0 %v2977
        %v3173 = vpop.f32.mrf.mxu0
        %v3174 = vadd.f32 0.0, %v3173
        %v3175 = vpop.f32.mrf.mxu0
        %v3176 = vadd.f32 0.0, %v3175
        %3177 = vmatmul.bf16.gmra.mxu0 %v2979
        %v3178 = vpop.f32.mrf.mxu0
        %v3179 = vadd.f32 0.0, %v3178
        %v3180 = vpop.f32.mrf.mxu0
        %v3181 = vadd.f32 0.0, %v3180
        %3182 = vmatmul.bf16.gmra.mxu0 %v2981
        %v3183 = vpop.f32.mrf.mxu0
        %v3184 = vadd.f32 0.0, %v3183
        %v3185 = vpop.f32.mrf.mxu0
        %v3186 = vadd.f32 0.0, %v3185
        %3187 = vmatmul.bf16.gmra.mxu0 %v2983
        %v3188 = vpop.f32.mrf.mxu0
        %v3189 = vadd.f32 0.0, %v3188
        %v3190 = vpop.f32.mrf.mxu0
        %v3191 = vadd.f32 0.0, %v3190
        %3192 = vdwg.mxu0
        %3193 = vmatpush.bf16.msra.mxu0 0
        %3194 = vmatpush.bf16.msra.mxu0 0
        %3195 = vmatpush.bf16.msra.mxu0 0
        %3196 = vmatpush.bf16.msra.mxu0 0
        %3197 = vmatpush.bf16.msra.mxu0 0
        %3198 = vmatpush.bf16.msra.mxu0 0
        %3199 = vmatpush.bf16.msra.mxu0 0
        %3200 = vmatpush.bf16.msra.mxu0 %v3075
        %3201 = vmatmul.bf16.gmra.mxu0 %v3095
        %v3202 = vpop.f32.mrf.mxu0
        %v3203 = vadd.f32 %v3174, %v3202
        %v3204 = vpop.f32.mrf.mxu0
        %v3205 = vadd.f32 %v3176, %v3204
        %3206 = vmatmul.bf16.gmra.mxu0 %v3098
        %v3207 = vpop.f32.mrf.mxu0
        %v3208 = vadd.f32 %v3179, %v3207
        %v3209 = vpop.f32.mrf.mxu0
        %v3210 = vadd.f32 %v3181, %v3209
        %3211 = vmatmul.bf16.gmra.mxu0 %v3101
        %v3212 = vpop.f32.mrf.mxu0
        %v3213 = vadd.f32 %v3184, %v3212
        %v3214 = vpop.f32.mrf.mxu0
        %v3215 = vadd.f32 %v3186, %v3214
        %3216 = vmatmul.bf16.gmra.mxu0 %v3104
        %v3217 = vpop.f32.mrf.mxu0
        %v3218 = vadd.f32 %v3189, %v3217
        %v3219 = vpop.f32.mrf.mxu0
        %v3220 = vadd.f32 %v3191, %v3219
        %3221 = vdwg.mxu0
        %v3222 = vadd.f32 %v2862, %v3145
        %v3223 = vadd.f32 %v2863, %v3203
        %v3224 = vadd.f32 %v2864, %v3147
        %v3225 = vadd.f32 %v2865, %v3205
        %v3226 = vadd.f32 %v2866, %v3150
        %v3227 = vadd.f32 %v2867, %v3208
        %v3228 = vadd.f32 %v2868, %v3152
        %v3229 = vadd.f32 %v2869, %v3210
        %v3230 = vadd.f32 %v2870, %v3155
        %v3231 = vadd.f32 %v2871, %v3213
        %v3232 = vadd.f32 %v2872, %v3157
        %v3233 = vadd.f32 %v2873, %v3215
        %v3234 = vadd.f32 %v2874, %v3160
        %v3235 = vadd.f32 %v2875, %v3218
        %v3236 = vadd.f32 %v2876, %v3162
        %v3237 = vadd.f32 %v2877, %v3220
        %s3238 = scalar_lea.vmem %s5, 64
        %v3239 = vld [vmem:[%s3238] sm:$0xf]
        %v3240 = vld [vmem:[%s3238 + $0x4] sm:$0xf]
        %v3241 = vld [vmem:[%s3238 + $0x8] sm:$0xf]
        %v3242 = vld [vmem:[%s3238 + $0xc] sm:$0xf]
        %v3243 = vld [vmem:[%s3238 + $0x10] sm:$0xf]
        %v3244 = vld [vmem:[%s3238 + $0x14] sm:$0xf]
        %v3245 = vld [vmem:[%s3238 + $0x18] sm:$0xf]
        %v3246 = vld [vmem:[%s3238 + $0x1c] sm:$0xf]
        %v3255 = vunpack.c.l.b16 %v3239
        %v3256 = vunpack.c.l.b16 %v3240
        %v3257 = vunpack.c.l.b16 %v3241
        %v3258 = vunpack.c.l.b16 %v3242
        %v3259 = vunpack.c.l.b16 %v3243
        %v3260 = vunpack.c.l.b16 %v3244
        %v3261 = vunpack.c.l.b16 %v3245
        %v3262 = vunpack.c.l.b16 %v3246
        %v3263 = vpack.c.b16 %v3256, %v3255
        %v3264 = vpack.c.b16 %v3258, %v3257
        %v3265 = vpack.c.b16 %v3260, %v3259
        %v3266 = vpack.c.b16 %v3262, %v3261
        %v3268 = vsel %vm499, %v3263, 0
        %v3271 = vsel %vm499, %v3264, 0
        %v3274 = vsel %vm499, %v3265, 0
        %v3277 = vsel %vm499, %v3266, 0
        %3279 = vmatpush.bf16.msra.mxu0 0
        %3280 = vmatpush.bf16.msra.mxu0 0
        %3281 = vmatpush.bf16.msra.mxu0 %v2501
        %3282 = vmatpush.bf16.msra.mxu0 %v2499
        %3283 = vmatpush.bf16.msra.mxu0 %v2497
        %3284 = vmatpush.bf16.msra.mxu0 %v2495
        %3285 = vmatpush.bf16.msra.mxu0 %v2493
        %3286 = vmatpush.bf16.msra.mxu0 %v2491
        %3287 = vmatmul.bf16.gmra.mxu0 %v3268
        %v3288 = vpop.f32.mrf.mxu0
        %v3289 = vadd.f32 0.0, %v3288
        %v3290 = vpop.f32.mrf.mxu0
        %v3291 = vadd.f32 0.0, %v3290
        %3292 = vmatmul.bf16.gmra.mxu0 %v3271
        %v3293 = vpop.f32.mrf.mxu0
        %v3294 = vadd.f32 0.0, %v3293
        %v3295 = vpop.f32.mrf.mxu0
        %v3296 = vadd.f32 0.0, %v3295
        %3297 = vmatmul.bf16.gmra.mxu0 %v3274
        %v3298 = vpop.f32.mrf.mxu0
        %v3299 = vadd.f32 0.0, %v3298
        %v3300 = vpop.f32.mrf.mxu0
        %v3301 = vadd.f32 0.0, %v3300
        %3302 = vmatmul.bf16.gmra.mxu0 %v3277
        %v3303 = vpop.f32.mrf.mxu0
        %v3304 = vadd.f32 0.0, %v3303
        %v3305 = vpop.f32.mrf.mxu0
        %v3306 = vadd.f32 0.0, %v3305
        %3307 = vdwg.mxu0
        %3308 = vmatpush.bf16.msra.mxu0 0
        %3309 = vmatpush.bf16.msra.mxu0 0
        %3310 = vmatpush.bf16.msra.mxu0 %v2502
        %3311 = vmatpush.bf16.msra.mxu0 %v2500
        %3312 = vmatpush.bf16.msra.mxu0 %v2498
        %3313 = vmatpush.bf16.msra.mxu0 %v2496
        %3314 = vmatpush.bf16.msra.mxu0 %v2494
        %3315 = vmatpush.bf16.msra.mxu0 %v2492
        %3316 = vmatmul.bf16.gmra.mxu0 %v3268
        %v3317 = vpop.f32.mrf.mxu0
        %v3318 = vadd.f32 0.0, %v3317
        %v3319 = vpop.f32.mrf.mxu0
        %v3320 = vadd.f32 0.0, %v3319
        %3321 = vmatmul.bf16.gmra.mxu0 %v3271
        %v3322 = vpop.f32.mrf.mxu0
        %v3323 = vadd.f32 0.0, %v3322
        %v3324 = vpop.f32.mrf.mxu0
        %v3325 = vadd.f32 0.0, %v3324
        %3326 = vmatmul.bf16.gmra.mxu0 %v3274
        %v3327 = vpop.f32.mrf.mxu0
        %v3328 = vadd.f32 0.0, %v3327
        %v3329 = vpop.f32.mrf.mxu0
        %v3330 = vadd.f32 0.0, %v3329
        %3331 = vmatmul.bf16.gmra.mxu0 %v3277
        %v3332 = vpop.f32.mrf.mxu0
        %v3333 = vadd.f32 0.0, %v3332
        %v3334 = vpop.f32.mrf.mxu0
        %v3335 = vadd.f32 0.0, %v3334
        %3336 = vdwg.mxu0
        %v3337 = vpack.c.bf16 %v3291, %v3289
        %v3338 = vpack.c.bf16 %v3320, %v3318
        %v3339 = vpack.c.bf16 %v3296, %v3294
        %v3340 = vpack.c.bf16 %v3325, %v3323
        %v3341 = vpack.c.bf16 %v3301, %v3299
        %v3342 = vpack.c.bf16 %v3330, %v3328
        %v3343 = vpack.c.bf16 %v3306, %v3304
        %v3344 = vpack.c.bf16 %v3335, %v3333
        %s3345 = scalar_lea.vmem %s4, 288
        %v3346 = vld [vmem:[%s3345] sm:$0xff]
        %v3347 = vld [vmem:[%s3345 + $0x8] sm:$0xff]
        %v3348 = vld [vmem:[%s3345 + $0x10] sm:$0xff]
        %v3349 = vld [vmem:[%s3345 + $0x18] sm:$0xff]
        %v3350 = vld [vmem:[%s3345 + $0x20] sm:$0xff]
        %v3351 = vld [vmem:[%s3345 + $0x28] sm:$0xff]
        %v3352 = vld [vmem:[%s3345 + $0x30] sm:$0xff]
        %v3353 = vld [vmem:[%s3345 + $0x38] sm:$0xff]
        %v3354 = vld [vmem:[%s3345 + $0x40] sm:$0xff]
        %v3355 = vld [vmem:[%s3345 + $0x48] sm:$0xff]
        %v3356 = vld [vmem:[%s3345 + $0x50] sm:$0xff]
        %v3357 = vld [vmem:[%s3345 + $0x58] sm:$0xff]
        %v3358 = vld [vmem:[%s3345 + $0x60] sm:$0xff]
        %v3359 = vld [vmem:[%s3345 + $0x68] sm:$0xff]
        %v3360 = vld [vmem:[%s3345 + $0x70] sm:$0xff]
        %v3361 = vld [vmem:[%s3345 + $0x78] sm:$0xff]
        %v3362 = vld [vmem:[%s3345 + $0x80] sm:$0xff]
        %v3363 = vld [vmem:[%s3345 + $0x88] sm:$0xff]
        %v3382 = vunpack.c.l.b16 %v3346
        %v3383 = vunpack.c.h.b16 %v3346
        %v3384 = vunpack.c.l.b16 %v3347
        %v3385 = vunpack.c.h.b16 %v3347
        %v3386 = vunpack.c.l.b16 %v3348
        %v3387 = vunpack.c.h.b16 %v3348
        %v3388 = vunpack.c.l.b16 %v3349
        %v3389 = vunpack.c.h.b16 %v3349
        %v3390 = vunpack.c.l.b16 %v3350
        %v3391 = vunpack.c.h.b16 %v3350
        %v3392 = vunpack.c.l.b16 %v3351
        %v3393 = vunpack.c.h.b16 %v3351
        %v3394 = vunpack.c.l.b16 %v3352
        %v3395 = vunpack.c.h.b16 %v3352
        %v3396 = vunpack.c.l.b16 %v3353
        %v3397 = vunpack.c.h.b16 %v3353
        %v3398 = vunpack.c.l.b16 %v3354
        %v3399 = vunpack.c.h.b16 %v3354
        %v3400 = vunpack.c.l.b16 %v3355
        %v3401 = vunpack.c.h.b16 %v3355
        %v3402 = vunpack.c.l.b16 %v3356
        %v3403 = vunpack.c.h.b16 %v3356
        %v3404 = vunpack.c.l.b16 %v3357
        %v3405 = vunpack.c.h.b16 %v3357
        %v3406 = vunpack.c.l.b16 %v3358
        %v3407 = vunpack.c.h.b16 %v3358
        %v3408 = vunpack.c.l.b16 %v3359
        %v3409 = vunpack.c.h.b16 %v3359
        %v3410 = vunpack.c.l.b16 %v3360
        %v3411 = vunpack.c.h.b16 %v3360
        %v3412 = vunpack.c.l.b16 %v3361
        %v3413 = vunpack.c.h.b16 %v3361
        %v3414 = vunpack.c.l.b16 %v3362
        %v3415 = vunpack.c.h.b16 %v3362
        %v3416 = vunpack.c.l.b16 %v3363
        %v3417 = vunpack.c.h.b16 %v3363
        %v3418 = vpack.c.b16 %v3384, %v3382
        %v3419 = vpack.c.b16 %v3385, %v3383
        %v3420 = vpack.c.b16 %v3388, %v3386
        %v3421 = vpack.c.b16 %v3389, %v3387
        %v3422 = vpack.c.b16 %v3392, %v3390
        %v3423 = vpack.c.b16 %v3393, %v3391
        %v3424 = vpack.c.b16 %v3396, %v3394
        %v3425 = vpack.c.b16 %v3397, %v3395
        %v3426 = vpack.c.b16 %v3400, %v3398
        %v3427 = vpack.c.b16 %v3401, %v3399
        %v3428 = vpack.c.b16 %v3404, %v3402
        %v3429 = vpack.c.b16 %v3405, %v3403
        %v3430 = vpack.c.b16 %v3408, %v3406
        %v3431 = vpack.c.b16 %v3409, %v3407
        %v3432 = vpack.c.b16 %v3412, %v3410
        %v3433 = vpack.c.b16 %v3413, %v3411
        %v3434 = vpack.c.b16 %v3416, %v3414
        %v3435 = vpack.c.b16 %v3417, %v3415
        %v3455 = vsel %vm2733, %v3338, 0
        %v3458 = vsel %vm2733, %v3340, 0
        %v3461 = vsel %vm2733, %v3342, 0
        %v3464 = vsel %vm2733, %v3344, 0
        %3466 = vmatpush.bf16.msra.mxu0 %v3432
        %3467 = vmatpush.bf16.msra.mxu0 %v3430
        %3468 = vmatpush.bf16.msra.mxu0 %v3428
        %3469 = vmatpush.bf16.msra.mxu0 %v3426
        %3470 = vmatpush.bf16.msra.mxu0 %v3424
        %3471 = vmatpush.bf16.msra.mxu0 %v3422
        %3472 = vmatpush.bf16.msra.mxu0 %v3420
        %3473 = vmatpush.bf16.msra.mxu0 %v3418
        %3474 = vmatmul.bf16.gmra.mxu0 %v3337
        %v3475 = vpop.f32.mrf.mxu0
        %v3476 = vadd.f32 0.0, %v3475
        %v3477 = vpop.f32.mrf.mxu0
        %v3478 = vadd.f32 0.0, %v3477
        %3479 = vmatmul.bf16.gmra.mxu0 %v3339
        %v3480 = vpop.f32.mrf.mxu0
        %v3481 = vadd.f32 0.0, %v3480
        %v3482 = vpop.f32.mrf.mxu0
        %v3483 = vadd.f32 0.0, %v3482
        %3484 = vmatmul.bf16.gmra.mxu0 %v3341
        %v3485 = vpop.f32.mrf.mxu0
        %v3486 = vadd.f32 0.0, %v3485
        %v3487 = vpop.f32.mrf.mxu0
        %v3488 = vadd.f32 0.0, %v3487
        %3489 = vmatmul.bf16.gmra.mxu0 %v3343
        %v3490 = vpop.f32.mrf.mxu0
        %v3491 = vadd.f32 0.0, %v3490
        %v3492 = vpop.f32.mrf.mxu0
        %v3493 = vadd.f32 0.0, %v3492
        %3494 = vdwg.mxu0
        %3495 = vmatpush.bf16.msra.mxu0 0
        %3496 = vmatpush.bf16.msra.mxu0 0
        %3497 = vmatpush.bf16.msra.mxu0 0
        %3498 = vmatpush.bf16.msra.mxu0 0
        %3499 = vmatpush.bf16.msra.mxu0 0
        %3500 = vmatpush.bf16.msra.mxu0 0
        %3501 = vmatpush.bf16.msra.mxu0 0
        %3502 = vmatpush.bf16.msra.mxu0 %v3434
        %3503 = vmatmul.bf16.gmra.mxu0 %v3455
        %v3504 = vpop.f32.mrf.mxu0
        %v3505 = vadd.f32 %v3476, %v3504
        %v3506 = vpop.f32.mrf.mxu0
        %v3507 = vadd.f32 %v3478, %v3506
        %3508 = vmatmul.bf16.gmra.mxu0 %v3458
        %v3509 = vpop.f32.mrf.mxu0
        %v3510 = vadd.f32 %v3481, %v3509
        %v3511 = vpop.f32.mrf.mxu0
        %v3512 = vadd.f32 %v3483, %v3511
        %3513 = vmatmul.bf16.gmra.mxu0 %v3461
        %v3514 = vpop.f32.mrf.mxu0
        %v3515 = vadd.f32 %v3486, %v3514
        %v3516 = vpop.f32.mrf.mxu0
        %v3517 = vadd.f32 %v3488, %v3516
        %3518 = vmatmul.bf16.gmra.mxu0 %v3464
        %v3519 = vpop.f32.mrf.mxu0
        %v3520 = vadd.f32 %v3491, %v3519
        %v3521 = vpop.f32.mrf.mxu0
        %v3522 = vadd.f32 %v3493, %v3521
        %3523 = vdwg.mxu0
        %3524 = vmatpush.bf16.msra.mxu0 %v3433
        %3525 = vmatpush.bf16.msra.mxu0 %v3431
        %3526 = vmatpush.bf16.msra.mxu0 %v3429
        %3527 = vmatpush.bf16.msra.mxu0 %v3427
        %3528 = vmatpush.bf16.msra.mxu0 %v3425
        %3529 = vmatpush.bf16.msra.mxu0 %v3423
        %3530 = vmatpush.bf16.msra.mxu0 %v3421
        %3531 = vmatpush.bf16.msra.mxu0 %v3419
        %3532 = vmatmul.bf16.gmra.mxu0 %v3337
        %v3533 = vpop.f32.mrf.mxu0
        %v3534 = vadd.f32 0.0, %v3533
        %v3535 = vpop.f32.mrf.mxu0
        %v3536 = vadd.f32 0.0, %v3535
        %3537 = vmatmul.bf16.gmra.mxu0 %v3339
        %v3538 = vpop.f32.mrf.mxu0
        %v3539 = vadd.f32 0.0, %v3538
        %v3540 = vpop.f32.mrf.mxu0
        %v3541 = vadd.f32 0.0, %v3540
        %3542 = vmatmul.bf16.gmra.mxu0 %v3341
        %v3543 = vpop.f32.mrf.mxu0
        %v3544 = vadd.f32 0.0, %v3543
        %v3545 = vpop.f32.mrf.mxu0
        %v3546 = vadd.f32 0.0, %v3545
        %3547 = vmatmul.bf16.gmra.mxu0 %v3343
        %v3548 = vpop.f32.mrf.mxu0
        %v3549 = vadd.f32 0.0, %v3548
        %v3550 = vpop.f32.mrf.mxu0
        %v3551 = vadd.f32 0.0, %v3550
        %3552 = vdwg.mxu0
        %3553 = vmatpush.bf16.msra.mxu0 0
        %3554 = vmatpush.bf16.msra.mxu0 0
        %3555 = vmatpush.bf16.msra.mxu0 0
        %3556 = vmatpush.bf16.msra.mxu0 0
        %3557 = vmatpush.bf16.msra.mxu0 0
        %3558 = vmatpush.bf16.msra.mxu0 0
        %3559 = vmatpush.bf16.msra.mxu0 0
        %3560 = vmatpush.bf16.msra.mxu0 %v3435
        %3561 = vmatmul.bf16.gmra.mxu0 %v3455
        %v3562 = vpop.f32.mrf.mxu0
        %v3563 = vadd.f32 %v3534, %v3562
        %v3564 = vpop.f32.mrf.mxu0
        %v3565 = vadd.f32 %v3536, %v3564
        %3566 = vmatmul.bf16.gmra.mxu0 %v3458
        %v3567 = vpop.f32.mrf.mxu0
        %v3568 = vadd.f32 %v3539, %v3567
        %v3569 = vpop.f32.mrf.mxu0
        %v3570 = vadd.f32 %v3541, %v3569
        %3571 = vmatmul.bf16.gmra.mxu0 %v3461
        %v3572 = vpop.f32.mrf.mxu0
        %v3573 = vadd.f32 %v3544, %v3572
        %v3574 = vpop.f32.mrf.mxu0
        %v3575 = vadd.f32 %v3546, %v3574
        %3576 = vmatmul.bf16.gmra.mxu0 %v3464
        %v3577 = vpop.f32.mrf.mxu0
        %v3578 = vadd.f32 %v3549, %v3577
        %v3579 = vpop.f32.mrf.mxu0
        %v3580 = vadd.f32 %v3551, %v3579
        %3581 = vdwg.mxu0
        %v3582 = vadd.f32 %v3222, %v3505
        %v3583 = vadd.f32 %v3223, %v3563
        %v3584 = vadd.f32 %v3224, %v3507
        %v3585 = vadd.f32 %v3225, %v3565
        %v3586 = vadd.f32 %v3226, %v3510
        %v3587 = vadd.f32 %v3227, %v3568
        %v3588 = vadd.f32 %v3228, %v3512
        %v3589 = vadd.f32 %v3229, %v3570
        %v3590 = vadd.f32 %v3230, %v3515
        %v3591 = vadd.f32 %v3231, %v3573
        %v3592 = vadd.f32 %v3232, %v3517
        %v3593 = vadd.f32 %v3233, %v3575
        %v3594 = vadd.f32 %v3234, %v3520
        %v3595 = vadd.f32 %v3235, %v3578
        %v3596 = vadd.f32 %v3236, %v3522
        %v3597 = vadd.f32 %v3237, %v3580
        %s3598 = scalar_lea.vmem %s5, 96
        %v3599 = vld [vmem:[%s3598] sm:$0xf]
        %v3600 = vld [vmem:[%s3598 + $0x4] sm:$0xf]
        %v3601 = vld [vmem:[%s3598 + $0x8] sm:$0xf]
        %v3602 = vld [vmem:[%s3598 + $0xc] sm:$0xf]
        %v3603 = vld [vmem:[%s3598 + $0x10] sm:$0xf]
        %v3604 = vld [vmem:[%s3598 + $0x14] sm:$0xf]
        %v3605 = vld [vmem:[%s3598 + $0x18] sm:$0xf]
        %v3606 = vld [vmem:[%s3598 + $0x1c] sm:$0xf]
        %v3615 = vunpack.c.l.b16 %v3599
        %v3616 = vunpack.c.l.b16 %v3600
        %v3617 = vunpack.c.l.b16 %v3601
        %v3618 = vunpack.c.l.b16 %v3602
        %v3619 = vunpack.c.l.b16 %v3603
        %v3620 = vunpack.c.l.b16 %v3604
        %v3621 = vunpack.c.l.b16 %v3605
        %v3622 = vunpack.c.l.b16 %v3606
        %v3623 = vpack.c.b16 %v3616, %v3615
        %v3624 = vpack.c.b16 %v3618, %v3617
        %v3625 = vpack.c.b16 %v3620, %v3619
        %v3626 = vpack.c.b16 %v3622, %v3621
        %v3628 = vsel %vm499, %v3623, 0
        %v3631 = vsel %vm499, %v3624, 0
        %v3634 = vsel %vm499, %v3625, 0
        %v3637 = vsel %vm499, %v3626, 0
        %3639 = vmatpush.bf16.msra.mxu0 0
        %3640 = vmatpush.bf16.msra.mxu0 0
        %3641 = vmatpush.bf16.msra.mxu0 %v2501
        %3642 = vmatpush.bf16.msra.mxu0 %v2499
        %3643 = vmatpush.bf16.msra.mxu0 %v2497
        %3644 = vmatpush.bf16.msra.mxu0 %v2495
        %3645 = vmatpush.bf16.msra.mxu0 %v2493
        %3646 = vmatpush.bf16.msra.mxu0 %v2491
        %3647 = vmatmul.bf16.gmra.mxu0 %v3628
        %v3648 = vpop.f32.mrf.mxu0
        %v3649 = vadd.f32 0.0, %v3648
        %v3650 = vpop.f32.mrf.mxu0
        %v3651 = vadd.f32 0.0, %v3650
        %3652 = vmatmul.bf16.gmra.mxu0 %v3631
        %v3653 = vpop.f32.mrf.mxu0
        %v3654 = vadd.f32 0.0, %v3653
        %v3655 = vpop.f32.mrf.mxu0
        %v3656 = vadd.f32 0.0, %v3655
        %3657 = vmatmul.bf16.gmra.mxu0 %v3634
        %v3658 = vpop.f32.mrf.mxu0
        %v3659 = vadd.f32 0.0, %v3658
        %v3660 = vpop.f32.mrf.mxu0
        %v3661 = vadd.f32 0.0, %v3660
        %3662 = vmatmul.bf16.gmra.mxu0 %v3637
        %v3663 = vpop.f32.mrf.mxu0
        %v3664 = vadd.f32 0.0, %v3663
        %v3665 = vpop.f32.mrf.mxu0
        %v3666 = vadd.f32 0.0, %v3665
        %3667 = vdwg.mxu0
        %3668 = vmatpush.bf16.msra.mxu0 0
        %3669 = vmatpush.bf16.msra.mxu0 0
        %3670 = vmatpush.bf16.msra.mxu0 %v2502
        %3671 = vmatpush.bf16.msra.mxu0 %v2500
        %3672 = vmatpush.bf16.msra.mxu0 %v2498
        %3673 = vmatpush.bf16.msra.mxu0 %v2496
        %3674 = vmatpush.bf16.msra.mxu0 %v2494
        %3675 = vmatpush.bf16.msra.mxu0 %v2492
        %3676 = vmatmul.bf16.gmra.mxu0 %v3628
        %v3677 = vpop.f32.mrf.mxu0
        %v3678 = vadd.f32 0.0, %v3677
        %v3679 = vpop.f32.mrf.mxu0
        %v3680 = vadd.f32 0.0, %v3679
        %3681 = vmatmul.bf16.gmra.mxu0 %v3631
        %v3682 = vpop.f32.mrf.mxu0
        %v3683 = vadd.f32 0.0, %v3682
        %v3684 = vpop.f32.mrf.mxu0
        %v3685 = vadd.f32 0.0, %v3684
        %3686 = vmatmul.bf16.gmra.mxu0 %v3634
        %v3687 = vpop.f32.mrf.mxu0
        %v3688 = vadd.f32 0.0, %v3687
        %v3689 = vpop.f32.mrf.mxu0
        %v3690 = vadd.f32 0.0, %v3689
        %3691 = vmatmul.bf16.gmra.mxu0 %v3637
        %v3692 = vpop.f32.mrf.mxu0
        %v3693 = vadd.f32 0.0, %v3692
        %v3694 = vpop.f32.mrf.mxu0
        %v3695 = vadd.f32 0.0, %v3694
        %3696 = vdwg.mxu0
        %v3697 = vpack.c.bf16 %v3651, %v3649
        %v3698 = vpack.c.bf16 %v3680, %v3678
        %v3699 = vpack.c.bf16 %v3656, %v3654
        %v3700 = vpack.c.bf16 %v3685, %v3683
        %v3701 = vpack.c.bf16 %v3661, %v3659
        %v3702 = vpack.c.bf16 %v3690, %v3688
        %v3703 = vpack.c.bf16 %v3666, %v3664
        %v3704 = vpack.c.bf16 %v3695, %v3693
        %s3705 = scalar_lea.vmem %s4, 432
        %v3706 = vld [vmem:[%s3705] sm:$0xff]
        %v3707 = vld [vmem:[%s3705 + $0x8] sm:$0xff]
        %v3708 = vld [vmem:[%s3705 + $0x10] sm:$0xff]
        %v3709 = vld [vmem:[%s3705 + $0x18] sm:$0xff]
        %v3710 = vld [vmem:[%s3705 + $0x20] sm:$0xff]
        %v3711 = vld [vmem:[%s3705 + $0x28] sm:$0xff]
        %v3712 = vld [vmem:[%s3705 + $0x30] sm:$0xff]
        %v3713 = vld [vmem:[%s3705 + $0x38] sm:$0xff]
        %v3714 = vld [vmem:[%s3705 + $0x40] sm:$0xff]
        %v3715 = vld [vmem:[%s3705 + $0x48] sm:$0xff]
        %v3716 = vld [vmem:[%s3705 + $0x50] sm:$0xff]
        %v3717 = vld [vmem:[%s3705 + $0x58] sm:$0xff]
        %v3718 = vld [vmem:[%s3705 + $0x60] sm:$0xff]
        %v3719 = vld [vmem:[%s3705 + $0x68] sm:$0xff]
        %v3720 = vld [vmem:[%s3705 + $0x70] sm:$0xff]
        %v3721 = vld [vmem:[%s3705 + $0x78] sm:$0xff]
        %v3722 = vld [vmem:[%s3705 + $0x80] sm:$0xff]
        %v3723 = vld [vmem:[%s3705 + $0x88] sm:$0xff]
        %v3742 = vunpack.c.l.b16 %v3706
        %v3743 = vunpack.c.h.b16 %v3706
        %v3744 = vunpack.c.l.b16 %v3707
        %v3745 = vunpack.c.h.b16 %v3707
        %v3746 = vunpack.c.l.b16 %v3708
        %v3747 = vunpack.c.h.b16 %v3708
        %v3748 = vunpack.c.l.b16 %v3709
        %v3749 = vunpack.c.h.b16 %v3709
        %v3750 = vunpack.c.l.b16 %v3710
        %v3751 = vunpack.c.h.b16 %v3710
        %v3752 = vunpack.c.l.b16 %v3711
        %v3753 = vunpack.c.h.b16 %v3711
        %v3754 = vunpack.c.l.b16 %v3712
        %v3755 = vunpack.c.h.b16 %v3712
        %v3756 = vunpack.c.l.b16 %v3713
        %v3757 = vunpack.c.h.b16 %v3713
        %v3758 = vunpack.c.l.b16 %v3714
        %v3759 = vunpack.c.h.b16 %v3714
        %v3760 = vunpack.c.l.b16 %v3715
        %v3761 = vunpack.c.h.b16 %v3715
        %v3762 = vunpack.c.l.b16 %v3716
        %v3763 = vunpack.c.h.b16 %v3716
        %v3764 = vunpack.c.l.b16 %v3717
        %v3765 = vunpack.c.h.b16 %v3717
        %v3766 = vunpack.c.l.b16 %v3718
        %v3767 = vunpack.c.h.b16 %v3718
        %v3768 = vunpack.c.l.b16 %v3719
        %v3769 = vunpack.c.h.b16 %v3719
        %v3770 = vunpack.c.l.b16 %v3720
        %v3771 = vunpack.c.h.b16 %v3720
        %v3772 = vunpack.c.l.b16 %v3721
        %v3773 = vunpack.c.h.b16 %v3721
        %v3774 = vunpack.c.l.b16 %v3722
        %v3775 = vunpack.c.h.b16 %v3722
        %v3776 = vunpack.c.l.b16 %v3723
        %v3777 = vunpack.c.h.b16 %v3723
        %v3778 = vpack.c.b16 %v3744, %v3742
        %v3779 = vpack.c.b16 %v3745, %v3743
        %v3780 = vpack.c.b16 %v3748, %v3746
        %v3781 = vpack.c.b16 %v3749, %v3747
        %v3782 = vpack.c.b16 %v3752, %v3750
        %v3783 = vpack.c.b16 %v3753, %v3751
        %v3784 = vpack.c.b16 %v3756, %v3754
        %v3785 = vpack.c.b16 %v3757, %v3755
        %v3786 = vpack.c.b16 %v3760, %v3758
        %v3787 = vpack.c.b16 %v3761, %v3759
        %v3788 = vpack.c.b16 %v3764, %v3762
        %v3789 = vpack.c.b16 %v3765, %v3763
        %v3790 = vpack.c.b16 %v3768, %v3766
        %v3791 = vpack.c.b16 %v3769, %v3767
        %v3792 = vpack.c.b16 %v3772, %v3770
        %v3793 = vpack.c.b16 %v3773, %v3771
        %v3794 = vpack.c.b16 %v3776, %v3774
        %v3795 = vpack.c.b16 %v3777, %v3775
        %v3815 = vsel %vm2733, %v3698, 0
        %v3818 = vsel %vm2733, %v3700, 0
        %v3821 = vsel %vm2733, %v3702, 0
        %v3824 = vsel %vm2733, %v3704, 0
        %3826 = vmatpush.bf16.msra.mxu0 %v3792
        %3827 = vmatpush.bf16.msra.mxu0 %v3790
        %3828 = vmatpush.bf16.msra.mxu0 %v3788
        %3829 = vmatpush.bf16.msra.mxu0 %v3786
        %3830 = vmatpush.bf16.msra.mxu0 %v3784
        %3831 = vmatpush.bf16.msra.mxu0 %v3782
        %3832 = vmatpush.bf16.msra.mxu0 %v3780
        %3833 = vmatpush.bf16.msra.mxu0 %v3778
        %3834 = vmatmul.bf16.gmra.mxu0 %v3697
        %v3835 = vpop.f32.mrf.mxu0
        %v3836 = vadd.f32 0.0, %v3835
        %v3837 = vpop.f32.mrf.mxu0
        %v3838 = vadd.f32 0.0, %v3837
        %3839 = vmatmul.bf16.gmra.mxu0 %v3699
        %v3840 = vpop.f32.mrf.mxu0
        %v3841 = vadd.f32 0.0, %v3840
        %v3842 = vpop.f32.mrf.mxu0
        %v3843 = vadd.f32 0.0, %v3842
        %3844 = vmatmul.bf16.gmra.mxu0 %v3701
        %v3845 = vpop.f32.mrf.mxu0
        %v3846 = vadd.f32 0.0, %v3845
        %v3847 = vpop.f32.mrf.mxu0
        %v3848 = vadd.f32 0.0, %v3847
        %3849 = vmatmul.bf16.gmra.mxu0 %v3703
        %v3850 = vpop.f32.mrf.mxu0
        %v3851 = vadd.f32 0.0, %v3850
        %v3852 = vpop.f32.mrf.mxu0
        %v3853 = vadd.f32 0.0, %v3852
        %3854 = vdwg.mxu0
        %3855 = vmatpush.bf16.msra.mxu0 0
        %3856 = vmatpush.bf16.msra.mxu0 0
        %3857 = vmatpush.bf16.msra.mxu0 0
        %3858 = vmatpush.bf16.msra.mxu0 0
        %3859 = vmatpush.bf16.msra.mxu0 0
        %3860 = vmatpush.bf16.msra.mxu0 0
        %3861 = vmatpush.bf16.msra.mxu0 0
        %3862 = vmatpush.bf16.msra.mxu0 %v3794
        %3863 = vmatmul.bf16.gmra.mxu0 %v3815
        %v3864 = vpop.f32.mrf.mxu0
        %v3865 = vadd.f32 %v3836, %v3864
        %v3866 = vpop.f32.mrf.mxu0
        %v3867 = vadd.f32 %v3838, %v3866
        %3868 = vmatmul.bf16.gmra.mxu0 %v3818
        %v3869 = vpop.f32.mrf.mxu0
        %v3870 = vadd.f32 %v3841, %v3869
        %v3871 = vpop.f32.mrf.mxu0
        %v3872 = vadd.f32 %v3843, %v3871
        %3873 = vmatmul.bf16.gmra.mxu0 %v3821
        %v3874 = vpop.f32.mrf.mxu0
        %v3875 = vadd.f32 %v3846, %v3874
        %v3876 = vpop.f32.mrf.mxu0
        %v3877 = vadd.f32 %v3848, %v3876
        %3878 = vmatmul.bf16.gmra.mxu0 %v3824
        %v3879 = vpop.f32.mrf.mxu0
        %v3880 = vadd.f32 %v3851, %v3879
        %v3881 = vpop.f32.mrf.mxu0
        %v3882 = vadd.f32 %v3853, %v3881
        %3883 = vdwg.mxu0
        %3884 = vmatpush.bf16.msra.mxu0 %v3793
        %3885 = vmatpush.bf16.msra.mxu0 %v3791
        %3886 = vmatpush.bf16.msra.mxu0 %v3789
        %3887 = vmatpush.bf16.msra.mxu0 %v3787
        %3888 = vmatpush.bf16.msra.mxu0 %v3785
        %3889 = vmatpush.bf16.msra.mxu0 %v3783
        %3890 = vmatpush.bf16.msra.mxu0 %v3781
        %3891 = vmatpush.bf16.msra.mxu0 %v3779
        %3892 = vmatmul.bf16.gmra.mxu0 %v3697
        %v3893 = vpop.f32.mrf.mxu0
        %v3894 = vadd.f32 0.0, %v3893
        %v3895 = vpop.f32.mrf.mxu0
        %v3896 = vadd.f32 0.0, %v3895
        %3897 = vmatmul.bf16.gmra.mxu0 %v3699
        %v3898 = vpop.f32.mrf.mxu0
        %v3899 = vadd.f32 0.0, %v3898
        %v3900 = vpop.f32.mrf.mxu0
        %v3901 = vadd.f32 0.0, %v3900
        %3902 = vmatmul.bf16.gmra.mxu0 %v3701
        %v3903 = vpop.f32.mrf.mxu0
        %v3904 = vadd.f32 0.0, %v3903
        %v3905 = vpop.f32.mrf.mxu0
        %v3906 = vadd.f32 0.0, %v3905
        %3907 = vmatmul.bf16.gmra.mxu0 %v3703
        %v3908 = vpop.f32.mrf.mxu0
        %v3909 = vadd.f32 0.0, %v3908
        %v3910 = vpop.f32.mrf.mxu0
        %v3911 = vadd.f32 0.0, %v3910
        %3912 = vdwg.mxu0
        %3913 = vmatpush.bf16.msra.mxu0 0
        %3914 = vmatpush.bf16.msra.mxu0 0
        %3915 = vmatpush.bf16.msra.mxu0 0
        %3916 = vmatpush.bf16.msra.mxu0 0
        %3917 = vmatpush.bf16.msra.mxu0 0
        %3918 = vmatpush.bf16.msra.mxu0 0
        %3919 = vmatpush.bf16.msra.mxu0 0
        %3920 = vmatpush.bf16.msra.mxu0 %v3795
        %3921 = vmatmul.bf16.gmra.mxu0 %v3815
        %v3922 = vpop.f32.mrf.mxu0
        %v3923 = vadd.f32 %v3894, %v3922
        %v3924 = vpop.f32.mrf.mxu0
        %v3925 = vadd.f32 %v3896, %v3924
        %3926 = vmatmul.bf16.gmra.mxu0 %v3818
        %v3927 = vpop.f32.mrf.mxu0
        %v3928 = vadd.f32 %v3899, %v3927
        %v3929 = vpop.f32.mrf.mxu0
        %v3930 = vadd.f32 %v3901, %v3929
        %3931 = vmatmul.bf16.gmra.mxu0 %v3821
        %v3932 = vpop.f32.mrf.mxu0
        %v3933 = vadd.f32 %v3904, %v3932
        %v3934 = vpop.f32.mrf.mxu0
        %v3935 = vadd.f32 %v3906, %v3934
        %3936 = vmatmul.bf16.gmra.mxu0 %v3824
        %v3937 = vpop.f32.mrf.mxu0
        %v3938 = vadd.f32 %v3909, %v3937
        %v3939 = vpop.f32.mrf.mxu0
        %v3940 = vadd.f32 %v3911, %v3939
        %3941 = vdwg.mxu0
        %v3942 = vadd.f32 %v3582, %v3865
        %v3943 = vadd.f32 %v3583, %v3923
        %v3944 = vadd.f32 %v3584, %v3867
        %v3945 = vadd.f32 %v3585, %v3925
        %v3946 = vadd.f32 %v3586, %v3870
        %v3947 = vadd.f32 %v3587, %v3928
        %v3948 = vadd.f32 %v3588, %v3872
        %v3949 = vadd.f32 %v3589, %v3930
        %v3950 = vadd.f32 %v3590, %v3875
        %v3951 = vadd.f32 %v3591, %v3933
        %v3952 = vadd.f32 %v3592, %v3877
        %v3953 = vadd.f32 %v3593, %v3935
        %v3954 = vadd.f32 %v3594, %v3880
        %v3955 = vadd.f32 %v3595, %v3938
        %v3956 = vadd.f32 %v3596, %v3882
        %v3957 = vadd.f32 %v3597, %v3940
        %v3958 = vmax.f32 %v3942, 0.0
        %v3959 = vmax.f32 %v3943, 0.0
        %v3960 = vmax.f32 %v3944, 0.0
        %v3961 = vmax.f32 %v3945, 0.0
        %v3962 = vmax.f32 %v3946, 0.0
        %v3963 = vmax.f32 %v3947, 0.0
        %v3964 = vmax.f32 %v3948, 0.0
        %v3965 = vmax.f32 %v3949, 0.0
        %v3966 = vmax.f32 %v3950, 0.0
        %v3967 = vmax.f32 %v3951, 0.0
        %v3968 = vmax.f32 %v3952, 0.0
        %v3969 = vmax.f32 %v3953, 0.0
        %v3970 = vmax.f32 %v3954, 0.0
        %v3971 = vmax.f32 %v3955, 0.0
        %v3972 = vmax.f32 %v3956, 0.0
        %v3973 = vmax.f32 %v3957, 0.0
        %v3974 = vpack.c.bf16 %v3960, %v3958
        %v3975 = vpack.c.bf16 %v3961, %v3959
        %v3976 = vpack.c.bf16 %v3964, %v3962
        %v3977 = vpack.c.bf16 %v3965, %v3963
        %v3978 = vpack.c.bf16 %v3968, %v3966
        %v3979 = vpack.c.bf16 %v3969, %v3967
        %v3980 = vpack.c.bf16 %v3972, %v3970
        %v3981 = vpack.c.bf16 %v3973, %v3971
        %v3982 = vld [vmem:[%s9] sm:$0xff]
        %v3983 = vld [vmem:[%s9 + $0x8] sm:$0xff]
        %v3984 = vld [vmem:[%s9 + $0x10] sm:$0xff]
        %v3985 = vld [vmem:[%s9 + $0x18] sm:$0xff]
        %v3986 = vld [vmem:[%s8] sm:$0xf]
        %v3987 = vld [vmem:[%s8 + $0x4] sm:$0xf]
        %v3988 = vld [vmem:[%s8 + $0x8] sm:$0xf]
        %v3989 = vld [vmem:[%s8 + $0xc] sm:$0xf]
        %v3994 = vunpack.c.l.b16 %v3986
        %v3995 = vunpack.c.l.b16 %v3987
        %v3996 = vunpack.c.l.b16 %v3988
        %v3997 = vunpack.c.l.b16 %v3989
        %v3998 = vpack.c.b16 %v3995, %v3994
        %v3999 = vpack.c.b16 %v3997, %v3996
        %vm4000 = vcmask 523264
        %v4002 = vsel %vm4000, %v3998, 0
        %v4005 = vsel %vm4000, %v3999, 0
        %4007 = vmatpush.bf16.msra.mxu0 0
        %4008 = vmatpush.bf16.msra.mxu0 0
        %4009 = vmatpush.bf16.msra.mxu0 0
        %4010 = vmatpush.bf16.msra.mxu0 0
        %4011 = vmatpush.bf16.msra.mxu0 %v3980
        %4012 = vmatpush.bf16.msra.mxu0 %v3978
        %4013 = vmatpush.bf16.msra.mxu0 %v3976
        %4014 = vmatpush.bf16.msra.mxu0 %v3974
        %4015 = vmatmul.bf16.gmra.mxu0 %v4002
        %v4016 = vpop.f32.mrf.mxu0
        %v4017 = vadd.f32 0.0, %v4016
        %v4018 = vpop.f32.mrf.mxu0
        %v4019 = vadd.f32 0.0, %v4018
        %4020 = vmatmul.bf16.gmra.mxu0 %v4005
        %v4021 = vpop.f32.mrf.mxu0
        %v4022 = vadd.f32 0.0, %v4021
        %v4023 = vpop.f32.mrf.mxu0
        %v4024 = vadd.f32 0.0, %v4023
        %4025 = vdwg.mxu0
        %4026 = vmatpush.bf16.msra.mxu0 0
        %4027 = vmatpush.bf16.msra.mxu0 0
        %4028 = vmatpush.bf16.msra.mxu0 0
        %4029 = vmatpush.bf16.msra.mxu0 0
        %4030 = vmatpush.bf16.msra.mxu0 %v3981
        %4031 = vmatpush.bf16.msra.mxu0 %v3979
        %4032 = vmatpush.bf16.msra.mxu0 %v3977
        %4033 = vmatpush.bf16.msra.mxu0 %v3975
        %4034 = vmatmul.bf16.gmra.mxu0 %v4002
        %v4035 = vpop.f32.mrf.mxu0
        %v4036 = vadd.f32 0.0, %v4035
        %v4037 = vpop.f32.mrf.mxu0
        %v4038 = vadd.f32 0.0, %v4037
        %4039 = vmatmul.bf16.gmra.mxu0 %v4005
        %v4040 = vpop.f32.mrf.mxu0
        %v4041 = vadd.f32 0.0, %v4040
        %v4042 = vpop.f32.mrf.mxu0
        %v4043 = vadd.f32 0.0, %v4042
        %4044 = vdwg.mxu0
        %v4045 = vpack.c.bf16 %v4019, %v4017
        %v4046 = vpack.c.bf16 %v4038, %v4036
        %v4047 = vpack.c.bf16 %v4024, %v4022
        %v4048 = vpack.c.bf16 %v4043, %v4041
        %v4049 = vld [vmem:[%s7] sm:$0xf]
        %v4050 = vld [vmem:[%s7 + $0x4] sm:$0xf]
        %v4051 = vld [vmem:[%s7 + $0x8] sm:$0xf]
        %v4052 = vld [vmem:[%s7 + $0xc] sm:$0xf]
        %v4053 = vld [vmem:[%s7 + $0x10] sm:$0xf]
        %v4054 = vld [vmem:[%s7 + $0x14] sm:$0xf]
        %v4055 = vld [vmem:[%s7 + $0x18] sm:$0xf]
        %v4056 = vld [vmem:[%s7 + $0x1c] sm:$0xf]
        %v4057 = vld [vmem:[%s7 + $0x20] sm:$0xf]
        %v4058 = vld [vmem:[%s7 + $0x24] sm:$0xf]
        %v4059 = vld [vmem:[%s7 + $0x28] sm:$0xf]
        %v4060 = vld [vmem:[%s7 + $0x2c] sm:$0xf]
        %v4061 = vld [vmem:[%s7 + $0x30] sm:$0xf]
        %v4062 = vld [vmem:[%s7 + $0x34] sm:$0xf]
        %v4063 = vld [vmem:[%s7 + $0x38] sm:$0xf]
        %v4064 = vld [vmem:[%s7 + $0x3c] sm:$0xf]
        %v4065 = vld [vmem:[%s7 + $0x40] sm:$0xf]
        %v4066 = vld [vmem:[%s7 + $0x44] sm:$0xf]
        %v4067 = vld [vmem:[%s7 + $0x48] sm:$0xf]
        %v4068 = vld [vmem:[%s7 + $0x4c] sm:$0xf]
        %v4089 = vunpack.c.l.b16 %v4049
        %v4090 = vunpack.c.l.b16 %v4050
        %v4091 = vunpack.c.l.b16 %v4051
        %v4092 = vunpack.c.l.b16 %v4052
        %v4093 = vunpack.c.l.b16 %v4053
        %v4094 = vunpack.c.l.b16 %v4054
        %v4095 = vunpack.c.l.b16 %v4055
        %v4096 = vunpack.c.l.b16 %v4056
        %v4097 = vunpack.c.l.b16 %v4057
        %v4098 = vunpack.c.l.b16 %v4058
        %v4099 = vunpack.c.l.b16 %v4059
        %v4100 = vunpack.c.l.b16 %v4060
        %v4101 = vunpack.c.l.b16 %v4061
        %v4102 = vunpack.c.l.b16 %v4062
        %v4103 = vunpack.c.l.b16 %v4063
        %v4104 = vunpack.c.l.b16 %v4064
        %v4105 = vunpack.c.l.b16 %v4065
        %v4106 = vunpack.c.l.b16 %v4066
        %v4107 = vunpack.c.l.b16 %v4067
        %v4108 = vunpack.c.l.b16 %v4068
        %v4109 = vpack.c.b16 %v4090, %v4089
        %v4110 = vpack.c.b16 %v4092, %v4091
        %v4111 = vpack.c.b16 %v4094, %v4093
        %v4112 = vpack.c.b16 %v4096, %v4095
        %v4113 = vpack.c.b16 %v4098, %v4097
        %v4114 = vpack.c.b16 %v4100, %v4099
        %v4115 = vpack.c.b16 %v4102, %v4101
        %v4116 = vpack.c.b16 %v4104, %v4103
        %v4117 = vpack.c.b16 %v4106, %v4105
        %v4118 = vpack.c.b16 %v4108, %v4107
        %vm4129 = vcmask 261120
        %v4131 = vsel %vm4129, %v4046, 0
        %v4134 = vsel %vm4129, %v4048, 0
        %4136 = vmatpush.bf16.msra.mxu0 %v4116
        %4137 = vmatpush.bf16.msra.mxu0 %v4115
        %4138 = vmatpush.bf16.msra.mxu0 %v4114
        %4139 = vmatpush.bf16.msra.mxu0 %v4113
        %4140 = vmatpush.bf16.msra.mxu0 %v4112
        %4141 = vmatpush.bf16.msra.mxu0 %v4111
        %4142 = vmatpush.bf16.msra.mxu0 %v4110
        %4143 = vmatpush.bf16.msra.mxu0 %v4109
        %4144 = vmatmul.bf16.gmra.mxu0 %v4045
        %v4145 = vpop.f32.mrf.mxu0
        %v4146 = vadd.f32 0.0, %v4145
        %v4147 = vpop.f32.mrf.mxu0
        %v4148 = vadd.f32 0.0, %v4147
        %4149 = vmatmul.bf16.gmra.mxu0 %v4047
        %v4150 = vpop.f32.mrf.mxu0
        %v4151 = vadd.f32 0.0, %v4150
        %v4152 = vpop.f32.mrf.mxu0
        %v4153 = vadd.f32 0.0, %v4152
        %4154 = vdwg.mxu0
        %4155 = vmatpush.bf16.msra.mxu0 0
        %4156 = vmatpush.bf16.msra.mxu0 0
        %4157 = vmatpush.bf16.msra.mxu0 0
        %4158 = vmatpush.bf16.msra.mxu0 0
        %4159 = vmatpush.bf16.msra.mxu0 0
        %4160 = vmatpush.bf16.msra.mxu0 0
        %4161 = vmatpush.bf16.msra.mxu0 %v4118
        %4162 = vmatpush.bf16.msra.mxu0 %v4117
        %4163 = vmatmul.bf16.gmra.mxu0 %v4131
        %v4164 = vpop.f32.mrf.mxu0
        %v4165 = vadd.f32 %v4146, %v4164
        %v4166 = vpop.f32.mrf.mxu0
        %v4167 = vadd.f32 %v4148, %v4166
        %4168 = vmatmul.bf16.gmra.mxu0 %v4134
        %v4169 = vpop.f32.mrf.mxu0
        %v4170 = vadd.f32 %v4151, %v4169
        %v4171 = vpop.f32.mrf.mxu0
        %v4172 = vadd.f32 %v4153, %v4171
        %4173 = vdwg.mxu0
        %v4174 = vadd.f32 %v3982, %v4165
        %v4175 = vadd.f32 %v3983, %v4167
        %v4176 = vadd.f32 %v3984, %v4170
        %v4177 = vadd.f32 %v3985, %v4172
        %s4178 = scalar_lea.vmem %s8, 16
        %v4179 = vld [vmem:[%s4178] sm:$0xf]
        %v4180 = vld [vmem:[%s4178 + $0x4] sm:$0xf]
        %v4181 = vld [vmem:[%s4178 + $0x8] sm:$0xf]
        %v4182 = vld [vmem:[%s4178 + $0xc] sm:$0xf]
        %v4187 = vunpack.c.l.b16 %v4179
        %v4188 = vunpack.c.l.b16 %v4180
        %v4189 = vunpack.c.l.b16 %v4181
        %v4190 = vunpack.c.l.b16 %v4182
        %v4191 = vpack.c.b16 %v4188, %v4187
        %v4192 = vpack.c.b16 %v4190, %v4189
        %v4194 = vsel %vm4000, %v4191, 0
        %v4197 = vsel %vm4000, %v4192, 0
        %4199 = vmatpush.bf16.msra.mxu0 0
        %4200 = vmatpush.bf16.msra.mxu0 0
        %4201 = vmatpush.bf16.msra.mxu0 0
        %4202 = vmatpush.bf16.msra.mxu0 0
        %4203 = vmatpush.bf16.msra.mxu0 %v3980
        %4204 = vmatpush.bf16.msra.mxu0 %v3978
        %4205 = vmatpush.bf16.msra.mxu0 %v3976
        %4206 = vmatpush.bf16.msra.mxu0 %v3974
        %4207 = vmatmul.bf16.gmra.mxu0 %v4194
        %v4208 = vpop.f32.mrf.mxu0
        %v4209 = vadd.f32 0.0, %v4208
        %v4210 = vpop.f32.mrf.mxu0
        %v4211 = vadd.f32 0.0, %v4210
        %4212 = vmatmul.bf16.gmra.mxu0 %v4197
        %v4213 = vpop.f32.mrf.mxu0
        %v4214 = vadd.f32 0.0, %v4213
        %v4215 = vpop.f32.mrf.mxu0
        %v4216 = vadd.f32 0.0, %v4215
        %4217 = vdwg.mxu0
        %4218 = vmatpush.bf16.msra.mxu0 0
        %4219 = vmatpush.bf16.msra.mxu0 0
        %4220 = vmatpush.bf16.msra.mxu0 0
        %4221 = vmatpush.bf16.msra.mxu0 0
        %4222 = vmatpush.bf16.msra.mxu0 %v3981
        %4223 = vmatpush.bf16.msra.mxu0 %v3979
        %4224 = vmatpush.bf16.msra.mxu0 %v3977
        %4225 = vmatpush.bf16.msra.mxu0 %v3975
        %4226 = vmatmul.bf16.gmra.mxu0 %v4194
        %v4227 = vpop.f32.mrf.mxu0
        %v4228 = vadd.f32 0.0, %v4227
        %v4229 = vpop.f32.mrf.mxu0
        %v4230 = vadd.f32 0.0, %v4229
        %4231 = vmatmul.bf16.gmra.mxu0 %v4197
        %v4232 = vpop.f32.mrf.mxu0
        %v4233 = vadd.f32 0.0, %v4232
        %v4234 = vpop.f32.mrf.mxu0
        %v4235 = vadd.f32 0.0, %v4234
        %4236 = vdwg.mxu0
        %v4237 = vpack.c.bf16 %v4211, %v4209
        %v4238 = vpack.c.bf16 %v4230, %v4228
        %v4239 = vpack.c.bf16 %v4216, %v4214
        %v4240 = vpack.c.bf16 %v4235, %v4233
        %s4241 = scalar_lea.vmem %s7, 80
        %v4242 = vld [vmem:[%s4241] sm:$0xf]
        %v4243 = vld [vmem:[%s4241 + $0x4] sm:$0xf]
        %v4244 = vld [vmem:[%s4241 + $0x8] sm:$0xf]
        %v4245 = vld [vmem:[%s4241 + $0xc] sm:$0xf]
        %v4246 = vld [vmem:[%s4241 + $0x10] sm:$0xf]
        %v4247 = vld [vmem:[%s4241 + $0x14] sm:$0xf]
        %v4248 = vld [vmem:[%s4241 + $0x18] sm:$0xf]
        %v4249 = vld [vmem:[%s4241 + $0x1c] sm:$0xf]
        %v4250 = vld [vmem:[%s4241 + $0x20] sm:$0xf]
        %v4251 = vld [vmem:[%s4241 + $0x24] sm:$0xf]
        %v4252 = vld [vmem:[%s4241 + $0x28] sm:$0xf]
        %v4253 = vld [vmem:[%s4241 + $0x2c] sm:$0xf]
        %v4254 = vld [vmem:[%s4241 + $0x30] sm:$0xf]
        %v4255 = vld [vmem:[%s4241 + $0x34] sm:$0xf]
        %v4256 = vld [vmem:[%s4241 + $0x38] sm:$0xf]
        %v4257 = vld [vmem:[%s4241 + $0x3c] sm:$0xf]
        %v4258 = vld [vmem:[%s4241 + $0x40] sm:$0xf]
        %v4259 = vld [vmem:[%s4241 + $0x44] sm:$0xf]
        %v4260 = vld [vmem:[%s4241 + $0x48] sm:$0xf]
        %v4261 = vld [vmem:[%s4241 + $0x4c] sm:$0xf]
        %v4282 = vunpack.c.l.b16 %v4242
        %v4283 = vunpack.c.l.b16 %v4243
        %v4284 = vunpack.c.l.b16 %v4244
        %v4285 = vunpack.c.l.b16 %v4245
        %v4286 = vunpack.c.l.b16 %v4246
        %v4287 = vunpack.c.l.b16 %v4247
        %v4288 = vunpack.c.l.b16 %v4248
        %v4289 = vunpack.c.l.b16 %v4249
        %v4290 = vunpack.c.l.b16 %v4250
        %v4291 = vunpack.c.l.b16 %v4251
        %v4292 = vunpack.c.l.b16 %v4252
        %v4293 = vunpack.c.l.b16 %v4253
        %v4294 = vunpack.c.l.b16 %v4254
        %v4295 = vunpack.c.l.b16 %v4255
        %v4296 = vunpack.c.l.b16 %v4256
        %v4297 = vunpack.c.l.b16 %v4257
        %v4298 = vunpack.c.l.b16 %v4258
        %v4299 = vunpack.c.l.b16 %v4259
        %v4300 = vunpack.c.l.b16 %v4260
        %v4301 = vunpack.c.l.b16 %v4261
        %v4302 = vpack.c.b16 %v4283, %v4282
        %v4303 = vpack.c.b16 %v4285, %v4284
        %v4304 = vpack.c.b16 %v4287, %v4286
        %v4305 = vpack.c.b16 %v4289, %v4288
        %v4306 = vpack.c.b16 %v4291, %v4290
        %v4307 = vpack.c.b16 %v4293, %v4292
        %v4308 = vpack.c.b16 %v4295, %v4294
        %v4309 = vpack.c.b16 %v4297, %v4296
        %v4310 = vpack.c.b16 %v4299, %v4298
        %v4311 = vpack.c.b16 %v4301, %v4300
        %v4323 = vsel %vm4129, %v4238, 0
        %v4326 = vsel %vm4129, %v4240, 0
        %4328 = vmatpush.bf16.msra.mxu0 %v4309
        %4329 = vmatpush.bf16.msra.mxu0 %v4308
        %4330 = vmatpush.bf16.msra.mxu0 %v4307
        %4331 = vmatpush.bf16.msra.mxu0 %v4306
        %4332 = vmatpush.bf16.msra.mxu0 %v4305
        %4333 = vmatpush.bf16.msra.mxu0 %v4304
        %4334 = vmatpush.bf16.msra.mxu0 %v4303
        %4335 = vmatpush.bf16.msra.mxu0 %v4302
        %4336 = vmatmul.bf16.gmra.mxu0 %v4237
        %v4337 = vpop.f32.mrf.mxu0
        %v4338 = vadd.f32 0.0, %v4337
        %v4339 = vpop.f32.mrf.mxu0
        %v4340 = vadd.f32 0.0, %v4339
        %4341 = vmatmul.bf16.gmra.mxu0 %v4239
        %v4342 = vpop.f32.mrf.mxu0
        %v4343 = vadd.f32 0.0, %v4342
        %v4344 = vpop.f32.mrf.mxu0
        %v4345 = vadd.f32 0.0, %v4344
        %4346 = vdwg.mxu0
        %4347 = vmatpush.bf16.msra.mxu0 0
        %4348 = vmatpush.bf16.msra.mxu0 0
        %4349 = vmatpush.bf16.msra.mxu0 0
        %4350 = vmatpush.bf16.msra.mxu0 0
        %4351 = vmatpush.bf16.msra.mxu0 0
        %4352 = vmatpush.bf16.msra.mxu0 0
        %4353 = vmatpush.bf16.msra.mxu0 %v4311
        %4354 = vmatpush.bf16.msra.mxu0 %v4310
        %4355 = vmatmul.bf16.gmra.mxu0 %v4323
        %v4356 = vpop.f32.mrf.mxu0
        %v4357 = vadd.f32 %v4338, %v4356
        %v4358 = vpop.f32.mrf.mxu0
        %v4359 = vadd.f32 %v4340, %v4358
        %4360 = vmatmul.bf16.gmra.mxu0 %v4326
        %v4361 = vpop.f32.mrf.mxu0
        %v4362 = vadd.f32 %v4343, %v4361
        %v4363 = vpop.f32.mrf.mxu0
        %v4364 = vadd.f32 %v4345, %v4363
        %4365 = vdwg.mxu0
        %v4366 = vadd.f32 %v4174, %v4357
        %v4367 = vadd.f32 %v4175, %v4359
        %v4368 = vadd.f32 %v4176, %v4362
        %v4369 = vadd.f32 %v4177, %v4364
        %s4370 = scalar_lea.vmem %s8, 32
        %v4371 = vld [vmem:[%s4370] sm:$0xf]
        %v4372 = vld [vmem:[%s4370 + $0x4] sm:$0xf]
        %v4373 = vld [vmem:[%s4370 + $0x8] sm:$0xf]
        %v4374 = vld [vmem:[%s4370 + $0xc] sm:$0xf]
        %v4379 = vunpack.c.l.b16 %v4371
        %v4380 = vunpack.c.l.b16 %v4372
        %v4381 = vunpack.c.l.b16 %v4373
        %v4382 = vunpack.c.l.b16 %v4374
        %v4383 = vpack.c.b16 %v4380, %v4379
        %v4384 = vpack.c.b16 %v4382, %v4381
        %v4386 = vsel %vm4000, %v4383, 0
        %v4389 = vsel %vm4000, %v4384, 0
        %4391 = vmatpush.bf16.msra.mxu0 0
        %4392 = vmatpush.bf16.msra.mxu0 0
        %4393 = vmatpush.bf16.msra.mxu0 0
        %4394 = vmatpush.bf16.msra.mxu0 0
        %4395 = vmatpush.bf16.msra.mxu0 %v3980
        %4396 = vmatpush.bf16.msra.mxu0 %v3978
        %4397 = vmatpush.bf16.msra.mxu0 %v3976
        %4398 = vmatpush.bf16.msra.mxu0 %v3974
        %4399 = vmatmul.bf16.gmra.mxu0 %v4386
        %v4400 = vpop.f32.mrf.mxu0
        %v4401 = vadd.f32 0.0, %v4400
        %v4402 = vpop.f32.mrf.mxu0
        %v4403 = vadd.f32 0.0, %v4402
        %4404 = vmatmul.bf16.gmra.mxu0 %v4389
        %v4405 = vpop.f32.mrf.mxu0
        %v4406 = vadd.f32 0.0, %v4405
        %v4407 = vpop.f32.mrf.mxu0
        %v4408 = vadd.f32 0.0, %v4407
        %4409 = vdwg.mxu0
        %4410 = vmatpush.bf16.msra.mxu0 0
        %4411 = vmatpush.bf16.msra.mxu0 0
        %4412 = vmatpush.bf16.msra.mxu0 0
        %4413 = vmatpush.bf16.msra.mxu0 0
        %4414 = vmatpush.bf16.msra.mxu0 %v3981
        %4415 = vmatpush.bf16.msra.mxu0 %v3979
        %4416 = vmatpush.bf16.msra.mxu0 %v3977
        %4417 = vmatpush.bf16.msra.mxu0 %v3975
        %4418 = vmatmul.bf16.gmra.mxu0 %v4386
        %v4419 = vpop.f32.mrf.mxu0
        %v4420 = vadd.f32 0.0, %v4419
        %v4421 = vpop.f32.mrf.mxu0
        %v4422 = vadd.f32 0.0, %v4421
        %4423 = vmatmul.bf16.gmra.mxu0 %v4389
        %v4424 = vpop.f32.mrf.mxu0
        %v4425 = vadd.f32 0.0, %v4424
        %v4426 = vpop.f32.mrf.mxu0
        %v4427 = vadd.f32 0.0, %v4426
        %4428 = vdwg.mxu0
        %v4429 = vpack.c.bf16 %v4403, %v4401
        %v4430 = vpack.c.bf16 %v4422, %v4420
        %v4431 = vpack.c.bf16 %v4408, %v4406
        %v4432 = vpack.c.bf16 %v4427, %v4425
        %s4433 = scalar_lea.vmem %s7, 160
        %v4434 = vld [vmem:[%s4433] sm:$0xf]
        %v4435 = vld [vmem:[%s4433 + $0x4] sm:$0xf]
        %v4436 = vld [vmem:[%s4433 + $0x8] sm:$0xf]
        %v4437 = vld [vmem:[%s4433 + $0xc] sm:$0xf]
        %v4438 = vld [vmem:[%s4433 + $0x10] sm:$0xf]
        %v4439 = vld [vmem:[%s4433 + $0x14] sm:$0xf]
        %v4440 = vld [vmem:[%s4433 + $0x18] sm:$0xf]
        %v4441 = vld [vmem:[%s4433 + $0x1c] sm:$0xf]
        %v4442 = vld [vmem:[%s4433 + $0x20] sm:$0xf]
        %v4443 = vld [vmem:[%s4433 + $0x24] sm:$0xf]
        %v4444 = vld [vmem:[%s4433 + $0x28] sm:$0xf]
        %v4445 = vld [vmem:[%s4433 + $0x2c] sm:$0xf]
        %v4446 = vld [vmem:[%s4433 + $0x30] sm:$0xf]
        %v4447 = vld [vmem:[%s4433 + $0x34] sm:$0xf]
        %v4448 = vld [vmem:[%s4433 + $0x38] sm:$0xf]
        %v4449 = vld [vmem:[%s4433 + $0x3c] sm:$0xf]
        %v4450 = vld [vmem:[%s4433 + $0x40] sm:$0xf]
        %v4451 = vld [vmem:[%s4433 + $0x44] sm:$0xf]
        %v4452 = vld [vmem:[%s4433 + $0x48] sm:$0xf]
        %v4453 = vld [vmem:[%s4433 + $0x4c] sm:$0xf]
        %v4474 = vunpack.c.l.b16 %v4434
        %v4475 = vunpack.c.l.b16 %v4435
        %v4476 = vunpack.c.l.b16 %v4436
        %v4477 = vunpack.c.l.b16 %v4437
        %v4478 = vunpack.c.l.b16 %v4438
        %v4479 = vunpack.c.l.b16 %v4439
        %v4480 = vunpack.c.l.b16 %v4440
        %v4481 = vunpack.c.l.b16 %v4441
        %v4482 = vunpack.c.l.b16 %v4442
        %v4483 = vunpack.c.l.b16 %v4443
        %v4484 = vunpack.c.l.b16 %v4444
        %v4485 = vunpack.c.l.b16 %v4445
        %v4486 = vunpack.c.l.b16 %v4446
        %v4487 = vunpack.c.l.b16 %v4447
        %v4488 = vunpack.c.l.b16 %v4448
        %v4489 = vunpack.c.l.b16 %v4449
        %v4490 = vunpack.c.l.b16 %v4450
        %v4491 = vunpack.c.l.b16 %v4451
        %v4492 = vunpack.c.l.b16 %v4452
        %v4493 = vunpack.c.l.b16 %v4453
        %v4494 = vpack.c.b16 %v4475, %v4474
        %v4495 = vpack.c.b16 %v4477, %v4476
        %v4496 = vpack.c.b16 %v4479, %v4478
        %v4497 = vpack.c.b16 %v4481, %v4480
        %v4498 = vpack.c.b16 %v4483, %v4482
        %v4499 = vpack.c.b16 %v4485, %v4484
        %v4500 = vpack.c.b16 %v4487, %v4486
        %v4501 = vpack.c.b16 %v4489, %v4488
        %v4502 = vpack.c.b16 %v4491, %v4490
        %v4503 = vpack.c.b16 %v4493, %v4492
        %v4515 = vsel %vm4129, %v4430, 0
        %v4518 = vsel %vm4129, %v4432, 0
        %4520 = vmatpush.bf16.msra.mxu0 %v4501
        %4521 = vmatpush.bf16.msra.mxu0 %v4500
        %4522 = vmatpush.bf16.msra.mxu0 %v4499
        %4523 = vmatpush.bf16.msra.mxu0 %v4498
        %4524 = vmatpush.bf16.msra.mxu0 %v4497
        %4525 = vmatpush.bf16.msra.mxu0 %v4496
        %4526 = vmatpush.bf16.msra.mxu0 %v4495
        %4527 = vmatpush.bf16.msra.mxu0 %v4494
        %4528 = vmatmul.bf16.gmra.mxu0 %v4429
        %v4529 = vpop.f32.mrf.mxu0
        %v4530 = vadd.f32 0.0, %v4529
        %v4531 = vpop.f32.mrf.mxu0
        %v4532 = vadd.f32 0.0, %v4531
        %4533 = vmatmul.bf16.gmra.mxu0 %v4431
        %v4534 = vpop.f32.mrf.mxu0
        %v4535 = vadd.f32 0.0, %v4534
        %v4536 = vpop.f32.mrf.mxu0
        %v4537 = vadd.f32 0.0, %v4536
        %4538 = vdwg.mxu0
        %4539 = vmatpush.bf16.msra.mxu0 0
        %4540 = vmatpush.bf16.msra.mxu0 0
        %4541 = vmatpush.bf16.msra.mxu0 0
        %4542 = vmatpush.bf16.msra.mxu0 0
        %4543 = vmatpush.bf16.msra.mxu0 0
        %4544 = vmatpush.bf16.msra.mxu0 0
        %4545 = vmatpush.bf16.msra.mxu0 %v4503
        %4546 = vmatpush.bf16.msra.mxu0 %v4502
        %4547 = vmatmul.bf16.gmra.mxu0 %v4515
        %v4548 = vpop.f32.mrf.mxu0
        %v4549 = vadd.f32 %v4530, %v4548
        %v4550 = vpop.f32.mrf.mxu0
        %v4551 = vadd.f32 %v4532, %v4550
        %4552 = vmatmul.bf16.gmra.mxu0 %v4518
        %v4553 = vpop.f32.mrf.mxu0
        %v4554 = vadd.f32 %v4535, %v4553
        %v4555 = vpop.f32.mrf.mxu0
        %v4556 = vadd.f32 %v4537, %v4555
        %4557 = vdwg.mxu0
        %v4558 = vadd.f32 %v4366, %v4549
        %v4559 = vadd.f32 %v4367, %v4551
        %v4560 = vadd.f32 %v4368, %v4554
        %v4561 = vadd.f32 %v4369, %v4556
        %s4562 = scalar_lea.vmem %s8, 48
        %v4563 = vld [vmem:[%s4562] sm:$0xf]
        %v4564 = vld [vmem:[%s4562 + $0x4] sm:$0xf]
        %v4565 = vld [vmem:[%s4562 + $0x8] sm:$0xf]
        %v4566 = vld [vmem:[%s4562 + $0xc] sm:$0xf]
        %v4571 = vunpack.c.l.b16 %v4563
        %v4572 = vunpack.c.l.b16 %v4564
        %v4573 = vunpack.c.l.b16 %v4565
        %v4574 = vunpack.c.l.b16 %v4566
        %v4575 = vpack.c.b16 %v4572, %v4571
        %v4576 = vpack.c.b16 %v4574, %v4573
        %v4578 = vsel %vm4000, %v4575, 0
        %v4581 = vsel %vm4000, %v4576, 0
        %4583 = vmatpush.bf16.msra.mxu0 0
        %4584 = vmatpush.bf16.msra.mxu0 0
        %4585 = vmatpush.bf16.msra.mxu0 0
        %4586 = vmatpush.bf16.msra.mxu0 0
        %4587 = vmatpush.bf16.msra.mxu0 %v3980
        %4588 = vmatpush.bf16.msra.mxu0 %v3978
        %4589 = vmatpush.bf16.msra.mxu0 %v3976
        %4590 = vmatpush.bf16.msra.mxu0 %v3974
        %4591 = vmatmul.bf16.gmra.mxu0 %v4578
        %v4592 = vpop.f32.mrf.mxu0
        %v4593 = vadd.f32 0.0, %v4592
        %v4594 = vpop.f32.mrf.mxu0
        %v4595 = vadd.f32 0.0, %v4594
        %4596 = vmatmul.bf16.gmra.mxu0 %v4581
        %v4597 = vpop.f32.mrf.mxu0
        %v4598 = vadd.f32 0.0, %v4597
        %v4599 = vpop.f32.mrf.mxu0
        %v4600 = vadd.f32 0.0, %v4599
        %4601 = vdwg.mxu0
        %4602 = vmatpush.bf16.msra.mxu0 0
        %4603 = vmatpush.bf16.msra.mxu0 0
        %4604 = vmatpush.bf16.msra.mxu0 0
        %4605 = vmatpush.bf16.msra.mxu0 0
        %4606 = vmatpush.bf16.msra.mxu0 %v3981
        %4607 = vmatpush.bf16.msra.mxu0 %v3979
        %4608 = vmatpush.bf16.msra.mxu0 %v3977
        %4609 = vmatpush.bf16.msra.mxu0 %v3975
        %4610 = vmatmul.bf16.gmra.mxu0 %v4578
        %v4611 = vpop.f32.mrf.mxu0
        %v4612 = vadd.f32 0.0, %v4611
        %v4613 = vpop.f32.mrf.mxu0
        %v4614 = vadd.f32 0.0, %v4613
        %4615 = vmatmul.bf16.gmra.mxu0 %v4581
        %v4616 = vpop.f32.mrf.mxu0
        %v4617 = vadd.f32 0.0, %v4616
        %v4618 = vpop.f32.mrf.mxu0
        %v4619 = vadd.f32 0.0, %v4618
        %4620 = vdwg.mxu0
        %v4621 = vpack.c.bf16 %v4595, %v4593
        %v4622 = vpack.c.bf16 %v4614, %v4612
        %v4623 = vpack.c.bf16 %v4600, %v4598
        %v4624 = vpack.c.bf16 %v4619, %v4617
        %s4625 = scalar_lea.vmem %s7, 240
        %v4626 = vld [vmem:[%s4625] sm:$0xf]
        %v4627 = vld [vmem:[%s4625 + $0x4] sm:$0xf]
        %v4628 = vld [vmem:[%s4625 + $0x8] sm:$0xf]
        %v4629 = vld [vmem:[%s4625 + $0xc] sm:$0xf]
        %v4630 = vld [vmem:[%s4625 + $0x10] sm:$0xf]
        %v4631 = vld [vmem:[%s4625 + $0x14] sm:$0xf]
        %v4632 = vld [vmem:[%s4625 + $0x18] sm:$0xf]
        %v4633 = vld [vmem:[%s4625 + $0x1c] sm:$0xf]
        %v4634 = vld [vmem:[%s4625 + $0x20] sm:$0xf]
        %v4635 = vld [vmem:[%s4625 + $0x24] sm:$0xf]
        %v4636 = vld [vmem:[%s4625 + $0x28] sm:$0xf]
        %v4637 = vld [vmem:[%s4625 + $0x2c] sm:$0xf]
        %v4638 = vld [vmem:[%s4625 + $0x30] sm:$0xf]
        %v4639 = vld [vmem:[%s4625 + $0x34] sm:$0xf]
        %v4640 = vld [vmem:[%s4625 + $0x38] sm:$0xf]
        %v4641 = vld [vmem:[%s4625 + $0x3c] sm:$0xf]
        %v4642 = vld [vmem:[%s4625 + $0x40] sm:$0xf]
        %v4643 = vld [vmem:[%s4625 + $0x44] sm:$0xf]
        %v4644 = vld [vmem:[%s4625 + $0x48] sm:$0xf]
        %v4645 = vld [vmem:[%s4625 + $0x4c] sm:$0xf]
        %v4666 = vunpack.c.l.b16 %v4626
        %v4667 = vunpack.c.l.b16 %v4627
        %v4668 = vunpack.c.l.b16 %v4628
        %v4669 = vunpack.c.l.b16 %v4629
        %v4670 = vunpack.c.l.b16 %v4630
        %v4671 = vunpack.c.l.b16 %v4631
        %v4672 = vunpack.c.l.b16 %v4632
        %v4673 = vunpack.c.l.b16 %v4633
        %v4674 = vunpack.c.l.b16 %v4634
        %v4675 = vunpack.c.l.b16 %v4635
        %v4676 = vunpack.c.l.b16 %v4636
        %v4677 = vunpack.c.l.b16 %v4637
        %v4678 = vunpack.c.l.b16 %v4638
        %v4679 = vunpack.c.l.b16 %v4639
        %v4680 = vunpack.c.l.b16 %v4640
        %v4681 = vunpack.c.l.b16 %v4641
        %v4682 = vunpack.c.l.b16 %v4642
        %v4683 = vunpack.c.l.b16 %v4643
        %v4684 = vunpack.c.l.b16 %v4644
        %v4685 = vunpack.c.l.b16 %v4645
        %v4686 = vpack.c.b16 %v4667, %v4666
        %v4687 = vpack.c.b16 %v4669, %v4668
        %v4688 = vpack.c.b16 %v4671, %v4670
        %v4689 = vpack.c.b16 %v4673, %v4672
        %v4690 = vpack.c.b16 %v4675, %v4674
        %v4691 = vpack.c.b16 %v4677, %v4676
        %v4692 = vpack.c.b16 %v4679, %v4678
        %v4693 = vpack.c.b16 %v4681, %v4680
        %v4694 = vpack.c.b16 %v4683, %v4682
        %v4695 = vpack.c.b16 %v4685, %v4684
        %v4707 = vsel %vm4129, %v4622, 0
        %v4710 = vsel %vm4129, %v4624, 0
        %4712 = vmatpush.bf16.msra.mxu0 %v4693
        %4713 = vmatpush.bf16.msra.mxu0 %v4692
        %4714 = vmatpush.bf16.msra.mxu0 %v4691
        %4715 = vmatpush.bf16.msra.mxu0 %v4690
        %4716 = vmatpush.bf16.msra.mxu0 %v4689
        %4717 = vmatpush.bf16.msra.mxu0 %v4688
        %4718 = vmatpush.bf16.msra.mxu0 %v4687
        %4719 = vmatpush.bf16.msra.mxu0 %v4686
        %4720 = vmatmul.bf16.gmra.mxu0 %v4621
        %v4721 = vpop.f32.mrf.mxu0
        %v4722 = vadd.f32 0.0, %v4721
        %v4723 = vpop.f32.mrf.mxu0
        %v4724 = vadd.f32 0.0, %v4723
        %4725 = vmatmul.bf16.gmra.mxu0 %v4623
        %v4726 = vpop.f32.mrf.mxu0
        %v4727 = vadd.f32 0.0, %v4726
        %v4728 = vpop.f32.mrf.mxu0
        %v4729 = vadd.f32 0.0, %v4728
        %4730 = vdwg.mxu0
        %4731 = vmatpush.bf16.msra.mxu0 0
        %4732 = vmatpush.bf16.msra.mxu0 0
        %4733 = vmatpush.bf16.msra.mxu0 0
        %4734 = vmatpush.bf16.msra.mxu0 0
        %4735 = vmatpush.bf16.msra.mxu0 0
        %4736 = vmatpush.bf16.msra.mxu0 0
        %4737 = vmatpush.bf16.msra.mxu0 %v4695
        %4738 = vmatpush.bf16.msra.mxu0 %v4694
        %4739 = vmatmul.bf16.gmra.mxu0 %v4707
        %v4740 = vpop.f32.mrf.mxu0
        %v4741 = vadd.f32 %v4722, %v4740
        %v4742 = vpop.f32.mrf.mxu0
        %v4743 = vadd.f32 %v4724, %v4742
        %4744 = vmatmul.bf16.gmra.mxu0 %v4710
        %v4745 = vpop.f32.mrf.mxu0
        %v4746 = vadd.f32 %v4727, %v4745
        %v4747 = vpop.f32.mrf.mxu0
        %v4748 = vadd.f32 %v4729, %v4747
        %4749 = vdwg.mxu0
        %v4750 = vadd.f32 %v4558, %v4741
        %v4751 = vadd.f32 %v4559, %v4743
        %v4752 = vadd.f32 %v4560, %v4746
        %v4753 = vadd.f32 %v4561, %v4748
        %v4754 = vmax.f32 %v4750, 0.0
        %v4755 = vmax.f32 %v4751, 0.0
        %v4756 = vmax.f32 %v4752, 0.0
        %v4757 = vmax.f32 %v4753, 0.0
        %v4758 = vrot.slane %v4754, 4
        %v4759 = vadd.f32 %v4754, %v4758
        %v4760 = vrot.slane %v4759, 2
        %v4761 = vadd.f32 %v4759, %v4760
        %v4762 = vrot.slane %v4761, 1
        %v4763 = vadd.f32 %v4761, %v4762
        %v4764 = vrot.slane %v4755, 4
        %v4765 = vadd.f32 %v4755, %v4764
        %v4766 = vrot.slane %v4765, 2
        %v4767 = vadd.f32 %v4765, %v4766
        %v4768 = vrot.slane %v4767, 1
        %v4769 = vadd.f32 %v4767, %v4768
        %v4770 = vrot.slane %v4756, 4
        %v4771 = vadd.f32 %v4756, %v4770
        %v4772 = vrot.slane %v4771, 2
        %v4773 = vadd.f32 %v4771, %v4772
        %v4774 = vrot.slane %v4773, 1
        %v4775 = vadd.f32 %v4773, %v4774
        %v4776 = vrot.slane %v4757, 4
        %v4777 = vadd.f32 %v4757, %v4776
        %v4778 = vrot.slane %v4777, 2
        %v4779 = vadd.f32 %v4777, %v4778
        %v4780 = vrot.slane %v4779, 1
        %v4781 = vadd.f32 %v4779, %v4780
        %v4782 = vpack.c.bf16 %v4763, %v4763
        %v4783 = vpack.c.bf16 %v4769, %v4769
        %v4784 = vpack.c.bf16 %v4775, %v4775
        %v4785 = vpack.c.bf16 %v4781, %v4781
        %v4786 = vld [vmem:[%s10] sm:$0xf]
        %v4787 = vld [vmem:[%s10 + $0x4] sm:$0xf]
        %v4788 = vld [vmem:[%s10 + $0x8] sm:$0xf]
        %v4789 = vld [vmem:[%s10 + $0xc] sm:$0xf]
        %v4790 = vld [vmem:[%s10 + $0x10] sm:$0xf]
        %v4791 = vld [vmem:[%s10 + $0x14] sm:$0xf]
        %v4792 = vld [vmem:[%s10 + $0x18] sm:$0xf]
        %v4793 = vld [vmem:[%s10 + $0x1c] sm:$0xf]
        %v4794 = vld [vmem:[%s10 + $0x20] sm:$0xf]
        %v4795 = vld [vmem:[%s10 + $0x24] sm:$0xf]
        %v4796 = vld [vmem:[%s10 + $0x28] sm:$0xf]
        %v4797 = vld [vmem:[%s10 + $0x2c] sm:$0xf]
        %v4798 = vld [vmem:[%s10 + $0x30] sm:$0xf]
        %v4799 = vld [vmem:[%s10 + $0x34] sm:$0xf]
        %v4800 = vld [vmem:[%s10 + $0x38] sm:$0xf]
        %v4801 = vld [vmem:[%s10 + $0x3c] sm:$0xf]
        %v4802 = vld [vmem:[%s11] sm:$0x1]
        %v4804 = vperm.slane %v4802, 0
        %v4810 = vunpack.c.l.b16 %v4782
        %v4811 = vunpack.c.l.b16 %v4783
        %v4812 = vunpack.c.l.b16 %v4784
        %v4813 = vunpack.c.l.b16 %v4785
        %vm4814 = vcmask 1041409
        %v4815 = vsel %vm4814, %v4811, %v4810
        %vm4816 = vcmask 1042434
        %v4817 = vsel %vm4816, %v4812, %v4815
        %vm4818 = vcmask 1043459
        %v4819 = vsel %vm4818, %v4813, %v4817
        %v4820 = vpack.c.b16 %v4819, %v4819
        %v4838 = vunpack.c.l.b16 %v4786
        %v4839 = vunpack.c.l.b16 %v4787
        %v4840 = vunpack.c.l.b16 %v4788
        %v4841 = vunpack.c.l.b16 %v4789
        %v4842 = vunpack.c.l.b16 %v4790
        %v4843 = vunpack.c.l.b16 %v4791
        %v4844 = vunpack.c.l.b16 %v4792
        %v4845 = vunpack.c.l.b16 %v4793
        %v4846 = vunpack.c.l.b16 %v4794
        %v4847 = vunpack.c.l.b16 %v4795
        %v4848 = vunpack.c.l.b16 %v4796
        %v4849 = vunpack.c.l.b16 %v4797
        %v4850 = vunpack.c.l.b16 %v4798
        %v4851 = vunpack.c.l.b16 %v4799
        %v4852 = vunpack.c.l.b16 %v4800
        %v4853 = vunpack.c.l.b16 %v4801
        %v4854 = vpack.c.b16 %v4839, %v4838
        %v4855 = vpack.c.b16 %v4841, %v4840
        %v4856 = vpack.c.b16 %v4843, %v4842
        %v4857 = vpack.c.b16 %v4845, %v4844
        %v4858 = vpack.c.b16 %v4847, %v4846
        %v4859 = vpack.c.b16 %v4849, %v4848
        %v4860 = vpack.c.b16 %v4851, %v4850
        %v4861 = vpack.c.b16 %v4853, %v4852
        %4870 = vmatpush.bf16.msra.mxu0 %v4861
        %4871 = vmatpush.bf16.msra.mxu0 %v4860
        %4872 = vmatpush.bf16.msra.mxu0 %v4859
        %4873 = vmatpush.bf16.msra.mxu0 %v4858
        %4874 = vmatpush.bf16.msra.mxu0 %v4857
        %4875 = vmatpush.bf16.msra.mxu0 %v4856
        %4876 = vmatpush.bf16.msra.mxu0 %v4855
        %4877 = vmatpush.bf16.msra.mxu0 %v4854
        %4878 = vmatmul.bf16.gmra.mxu0 %v4820
        %v4879 = vpop.f32.mrf.mxu0
        %v4880 = vadd.f32 %v4804, %v4879
        %v4881 = vpop.f32.mrf.mxu0
        %4882 = vdwg.mxu0
        %4883 = vst [vmem:[%s407] sm:$0xf] %v4880
        %s4884 = sand.u32 %s291, 1
        %s4885 = scalar_lea.sflag [#allocation3], %s4884
        %s4886 = sand.u32 %s291, 1
        %s4887 = smul.addr %s4886, 4
        %s4888 = scalar_lea.vmem [#allocation2], %s4887
        // Predicated region
        $region69: #{style_encoder_forward.1} parent=67 // pred_check
          %p4889 = pneg %p301
        $region70: #{style_encoder_forward.1} parent=67 // pred_check_branch
          %4891 = sbr.rel (%p4889) target = $region72
        $region71: #{style_encoder_forward.1} parent=67 // pred_region
          %4893 = vsyncadd %s4885, 0
          %s4894 = smul.addr %s26, 4
          %s4895 = scalar_lea.hbm %s12, %s4894
          %s4897 = sshll.u32 %s4888, 4
          %s4898 = int_to_ptr.vmem [resolvable:$true] %s4897
          %s4899 = sshll.u32 %s4895, 4
          %s4900 = int_to_ptr.hbm [resolvable:$true] %s4899
          %4902 = dma.vmem_to_hbm [thread:$0]  %s4898, 64, %s4900, %s4885
        $region72: #{style_encoder_forward.1} parent=67 // pred_fallthru
          _
      $region68: #{style_encoder_forward.1} parent=5 // pred_fallthru
        _
      %p4903 = scmp.le.s32.totalorder 2, %s21
      // Predicated region
      $region73: #{style_encoder_forward.1} parent=5 // pred_check
        %p4904 = pneg %p4903
      $region74: #{style_encoder_forward.1} parent=5 // pred_check_branch
        %4906 = sbr.rel (%p4904) target = $region76
      $region75: #{style_encoder_forward.1} parent=5 // pred_region
        %s4907 = ssub.s32 %s21, 2
        // Predicated region
        $region77: #{style_encoder_forward.1} parent=75 // pred_check
          %p4908 = pneg %p307
        $region78: #{style_encoder_forward.1} parent=75 // pred_check_branch
          %4910 = sbr.rel (%p4908) target = $region80
        $region79: #{style_encoder_forward.1} parent=75 // pred_region
          %s4911 = sand.u32 %s292, 1
          %s4912 = scalar_lea.sflag [#allocation3], %s4911
          %s4913 = sand.u32 %s292, 1
          %s4914 = smul.addr %s4913, 4
          %s4915 = scalar_lea.vmem [#allocation2], %s4914
          %4917 = dma.done %s4912, 64
        $region80: #{style_encoder_forward.1} parent=75 // pred_fallthru
          _
      $region76: #{style_encoder_forward.1} parent=5 // pred_fallthru
        _
    $region6: #{style_encoder_forward.1} parent=1 // loop_footer
      %s25 = sadd.s32 1, %s21
    $region7: #{style_encoder_forward.1} parent=1 // loop_footer_branch
      %20 = sbr.rel target = $region3
    $region8: #{style_encoder_forward.1} parent=1 // loop_exit
      _
    %4918 = vsyncpa [#allocation3], 1
    %s4919 = scalar_lea.sflag [#allocation3], 1
    %4920 = vsyncpa %s4919, 1

</llo_original>
